<compile_context>
chip_gen: v7x
topology: tpu7x:2x2x1
jax: 0.10.0
libtpu: 0.0.40
codegen_flags: <defaults>
</compile_context>

<pallas_src>
import functools
import numpy as np
import jax
import jax.numpy as jnp
from jax import lax
from jax.experimental import pallas as pl
from jax.experimental.pallas import tpu as pltpu

PAD = 0
N_HEADS = 2
_NEG_INF = -1e9


# ----------------------------------------------------------------------------
# In-kernel helpers
# ----------------------------------------------------------------------------
def _layernorm(x, g, b, eps=1e-5):          # PyTorch nn.LayerNorm default eps
    mu = jnp.mean(x, axis=-1, keepdims=True)
    var = jnp.mean((x - mu) ** 2, axis=-1, keepdims=True)
    return (x - mu) * lax.rsqrt(var + eps) * g + b


def _softmax_lastdim(s):
    s = s - jnp.max(s, axis=-1, keepdims=True)
    e = jnp.exp(s)
    return e * pl.reciprocal(jnp.sum(e, axis=-1, keepdims=True), approx=True)


def _qkt(q, k):
    # q (Lq, dk), k (Lk, dk) -> (Lq, Lk), contracting last dims (no transpose)
    return lax.dot_general(q, k, (((1,), (1,)), ((), ())),
                           preferred_element_type=jnp.float32)


# ----------------------------------------------------------------------------
# Pallas kernels
# ----------------------------------------------------------------------------
def _preamble_kernel(coordA_ref, coordB_ref, pA_ref, pB_ref, type_e_ref, player_e_ref,
                     scw_ref, scb_ref, lpw_ref, lpb_ref, cw_ref, cb_ref, tpw_ref, tpb_ref,
                     coord_out_ref, type_out_ref, *, ld, pd, td):
    f32 = jnp.float32
    scw, scb = scw_ref[...], scb_ref[...]
    cA = jnp.maximum(jnp.dot(coordA_ref[...], scw, preferred_element_type=f32) + scb, 0.0)
    cB = jnp.maximum(jnp.dot(coordB_ref[...], scw, preferred_element_type=f32) + scb, 0.0)

    S = cA.shape[0]
    lpw, lpb = lpw_ref[...], lpb_ref[...]
    w_loc, w_ply = lpw[0:ld, :], lpw[ld:ld + pd, :]
    pA = jnp.broadcast_to(pA_ref[...], (S, pd))
    pB = jnp.broadcast_to(pB_ref[...], (S, pd))
    pA_loc = (jnp.dot(cA, w_loc, preferred_element_type=f32)
              + jnp.dot(pA, w_ply, preferred_element_type=f32) + lpb)
    pB_loc = (jnp.dot(cB, w_loc, preferred_element_type=f32)
              + jnp.dot(pB, w_ply, preferred_element_type=f32) + lpb)

    cw = cw_ref[...]
    coord_out_ref[...] = (jnp.dot(pA_loc, cw[0:ld, :], preferred_element_type=f32)
                          + jnp.dot(pB_loc, cw[ld:2 * ld, :], preferred_element_type=f32)
                          + cb_ref[...])

    tpw = tpw_ref[...]
    type_out_ref[...] = (jnp.dot(type_e_ref[...], tpw[0:td, :], preferred_element_type=f32)
                         + jnp.dot(player_e_ref[...], tpw[td:td + pd, :],
                                   preferred_element_type=f32)
                         + tpb_ref[...])


def _decoder_layer_kernel(area_ref, shot_ref, enc_ref, mask_ref,
                          w_qkv_area_ref, w_qkv_shot_ref, fc_slf_ref, ln1_g_ref, ln1_b_ref,
                          w_q_ref, w_kv_ref, fc_enc_ref, ln2_g_ref, ln2_b_ref,
                          ffn_w1_ref, ffn_b1_ref, ffn_w2_ref, ffn_b2_ref, ln3_g_ref, ln3_b_ref,
                          o_ref, *, n_head, d_k, d_v, ta_scale, sdp_scale):
    f32 = jnp.float32
    area = area_ref[...]
    shot = shot_ref[...]
    enc = enc_ref[...]
    mask = mask_ref[...]
    HD = n_head * d_k
    HV = n_head * d_v

    # --- disentangled type-area self-attention -------------------------------
    # fused QKV projections (lane-dense 3*HD wide), then
    # (qa+qs)(ka+ks)^T  ==  qa ka^T + qa ks^T + qs ka^T + qs ks^T  (exact)
    qkv = (jnp.dot(area, w_qkv_area_ref[...], preferred_element_type=f32)
           + jnp.dot(shot, w_qkv_shot_ref[...], preferred_element_type=f32))
    q_sum = qkv[:, 0:HD] * ta_scale          # scale folded into Q
    k_sum = qkv[:, HD:2 * HD]
    v_sum = qkv[:, 2 * HD:2 * HD + HV]       # va + vs

    fc_slf = fc_slf_ref[...]
    attn_proj = jnp.zeros(area.shape, f32)
    for h in range(n_head):                  # static unroll (n_head == 2)
        qh = q_sum[:, h * d_k:(h + 1) * d_k]
        kh = k_sum[:, h * d_k:(h + 1) * d_k]
        vh = v_sum[:, h * d_v:(h + 1) * d_v]
        s = _qkt(qh, kh)
        s = jnp.where(mask == 0.0, _NEG_INF, s)
        p = _softmax_lastdim(s)
        oh = jnp.dot(p, vh, preferred_element_type=f32)
        attn_proj = attn_proj + jnp.dot(oh, fc_slf[h * d_v:(h + 1) * d_v, :],
                                        preferred_element_type=f32)

    x1 = _layernorm(attn_proj + area + shot, ln1_g_ref[...], ln1_b_ref[...])

    # --- decoder-encoder attention (dec_enc_attn_mask is None in reference) --
    q_c = jnp.dot(x1, w_q_ref[...], preferred_element_type=f32) * sdp_scale
    kv_c = jnp.dot(enc, w_kv_ref[...], preferred_element_type=f32)   # (Le, HD+HV)
    fc_enc = fc_enc_ref[...]
    enc_proj = jnp.zeros(area.shape, f32)
    for h in range(n_head):
        qh = q_c[:, h * d_k:(h + 1) * d_k]
        kh = kv_c[:, h * d_k:(h + 1) * d_k]
        vh = kv_c[:, HD + h * d_v:HD + (h + 1) * d_v]
        s = _qkt(qh, kh)
        p = _softmax_lastdim(s)
        oh = jnp.dot(p, vh, preferred_element_type=f32)
        enc_proj = enc_proj + jnp.dot(oh, fc_enc[h * d_v:(h + 1) * d_v, :],
                                      preferred_element_type=f32)

    x2 = _layernorm(enc_proj + x1, ln2_g_ref[...], ln2_b_ref[...])

    # --- position-wise feed-forward ------------------------------------------
    hdn = jnp.maximum(jnp.dot(x2, ffn_w1_ref[...], preferred_element_type=f32)
                      + ffn_b1_ref[...], 0.0)
    y = jnp.dot(hdn, ffn_w2_ref[...], preferred_element_type=f32) + ffn_b2_ref[...]
    o_ref[...] = _layernorm(y + x2, ln3_g_ref[...], ln3_b_ref[...])


def _gated_fusion_kernel(a_ref, b_ref, l_ref, h1_ref, h2_ref, h3_ref,
                         g1_ref, g2_ref, g3_ref, wA_ref, wB_ref, wL_ref, o_ref, *, d):
    f32 = jnp.float32
    a, b, l = a_ref[...], b_ref[...], l_ref[...]
    hA = jnp.tanh(jnp.dot(a, h1_ref[...], preferred_element_type=f32))
    hB = jnp.tanh(jnp.dot(b, h2_ref[...], preferred_element_type=f32))
    hL = jnp.tanh(jnp.dot(l, h3_ref[...], preferred_element_type=f32))

    def gate(g_ref):
        # sigmoid(cat(a,b,l) @ g) == sigmoid(a@g[0:d] + b@g[d:2d] + l@g[2d:3d])
        g = g_ref[...]
        return jax.nn.sigmoid(jnp.dot(a, g[0:d, :], preferred_element_type=f32)
                              + jnp.dot(b, g[d:2 * d, :], preferred_element_type=f32)
                              + jnp.dot(l, g[2 * d:3 * d, :], preferred_element_type=f32))

    z1 = gate(g1_ref) * hA
    z2 = gate(g2_ref) * hB
    z3 = gate(g3_ref) * hL
    o_ref[...] = jax.nn.sigmoid(wA_ref[...] * z1 + wB_ref[...] * z2 + wL_ref[...] * z3)


# ----------------------------------------------------------------------------
# Pallas wrappers (grid over batch; weights replicated; all tiles fit VMEM)
# ----------------------------------------------------------------------------
def _batched(shape):
    return pl.BlockSpec((None,) + shape, lambda b: (b,) + (0,) * len(shape))


def _rep(shape):
    nd = len(shape)
    return pl.BlockSpec(shape, lambda b: (0,) * nd)


def _row(v):
    return v.reshape(1, -1).astype(jnp.float32)


_PARALLEL = pltpu.CompilerParams(dimension_semantics=("parallel",))


def preamble(params, coordA, coordB, two_p, type_e, player_e, cfg):
    B, S, _ = coordA.shape
    ld, pd = cfg["location_dim"], cfg["player_dim"]
    td, hd = cfg["type_dim"], cfg["hidden_size"]
    kernel = functools.partial(_preamble_kernel, ld=ld, pd=pd, td=td)
    coord_tr, type_out = pl.pallas_call(
        kernel,
        grid=(B,),
        out_shape=(jax.ShapeDtypeStruct((B, S, ld), jnp.float32),
                   jax.ShapeDtypeStruct((B, S, hd), jnp.float32)),
        in_specs=[_batched((S, 2)), _batched((S, 2)),
                  _batched((1, pd)), _batched((1, pd)),
                  _batched((S, td)), _batched((S, pd)),
                  _rep((2, ld)), _rep((1, ld)),
                  _rep((ld + pd, hd)), _rep((1, hd)),
                  _rep((2 * ld, ld)), _rep((1, ld)),
                  _rep((td + pd, hd)), _rep((1, hd))],
        out_specs=(_batched((S, ld)), _batched((S, hd))),
        compiler_params=_PARALLEL,
    )(coordA, coordB, two_p[:, 0:1, :], two_p[:, 1:2, :],
      type_e.astype(jnp.float32), player_e.astype(jnp.float32),
      params["self_coord_w"], _row(params["self_coord_b"]),
      params["loc_player_w"], _row(params["loc_player_b"]),
      params["coord_w"], _row(params["coord_b"]),
      params["type_player_w"], _row(params["type_player_b"]))
    return coord_tr, type_out


def decoder_layer_fused(lp, dec_area, dec_shot, enc_out, slf_mask, n_head, d_k, d_v):
    Bt, L, d = dec_area.shape
    Le = enc_out.shape[1]
    HD, HV = n_head * d_k, n_head * d_v
    d_inner = lp["ffn_w1"].shape[1]

    # fuse Q/K/V weights along the output dim (lane-dense projections)
    w_qkv_area = jnp.concatenate([lp["w_qs_area"], lp["w_ks_area"], lp["w_vs_area"]], axis=1)
    w_qkv_shot = jnp.concatenate([lp["w_qs_shot"], lp["w_ks_shot"], lp["w_vs_shot"]], axis=1)
    w_kv = jnp.concatenate([lp["w_ks"], lp["w_vs"]], axis=1)

    kernel = functools.partial(
        _decoder_layer_kernel, n_head=n_head, d_k=d_k, d_v=d_v,
        ta_scale=1.0 / (2.0 * float(np.sqrt(d_k))),
        sdp_scale=1.0 / float(np.sqrt(d_k)))

    return pl.pallas_call(
        kernel,
        grid=(Bt,),
        out_shape=jax.ShapeDtypeStruct((Bt, L, d), jnp.float32),
        in_specs=[_batched((L, d)), _batched((L, d)), _batched((Le, d)), _batched((L, L)),
                  _rep((d, 3 * HD)), _rep((d, 3 * HD)), _rep((HV, d)),
                  _rep((1, d)), _rep((1, d)),
                  _rep((d, HD)), _rep((d, HD + HV)), _rep((HV, d)),
                  _rep((1, d)), _rep((1, d)),
                  _rep((d, d_inner)), _rep((1, d_inner)), _rep((d_inner, d)), _rep((1, d)),
                  _rep((1, d)), _rep((1, d))],
        out_specs=_batched((L, d)),
        compiler_params=_PARALLEL,
    )(dec_area.astype(jnp.float32), dec_shot.astype(jnp.float32),
      enc_out.astype(jnp.float32), slf_mask.astype(jnp.float32),
      w_qkv_area, w_qkv_shot, lp["fc_slf"], _row(lp["ln1_g"]), _row(lp["ln1_b"]),
      lp["w_qs"], w_kv, lp["fc_enc"], _row(lp["ln2_g"]), _row(lp["ln2_b"]),
      lp["ffn_w1"], _row(lp["ffn_b1"]), lp["ffn_w2"], _row(lp["ffn_b2"]),
      _row(lp["ln3_g"]), _row(lp["ln3_b"]))


def gated_fusion(fp, x_A, x_B, x_L):
    B, S, d = x_A.shape
    kernel = functools.partial(_gated_fusion_kernel, d=d)
    return pl.pallas_call(
        kernel,
        grid=(B,),
        out_shape=jax.ShapeDtypeStruct((B, S, d), jnp.float32),
        in_specs=[_batched((S, d))] * 3
                 + [_rep((d, d))] * 3
                 + [_rep((3 * d, d))] * 3
                 + [_rep((S, d))] * 3,          # w tables shared across batch, no pre-broadcast
        out_specs=_batched((S, d)),
        compiler_params=_PARALLEL,
    )(x_A.astype(jnp.float32), x_B.astype(jnp.float32), x_L.astype(jnp.float32),
      fp["hidden1"], fp["hidden2"], fp["hidden3"],
      fp["gated1"], fp["gated2"], fp["gated3"],
      fp["w_A"][:S], fp["w_B"][:S], fp["w_L"][:S])


# ----------------------------------------------------------------------------
# Model glue (embeddings, masks, positional encoding, layer composition)
# ----------------------------------------------------------------------------
def sinusoid_table(n_position, d_hid):
    pos = np.arange(n_position)[:, None].astype(np.float64)
    hid = np.arange(d_hid)[None, :]
    angle = pos / np.power(10000.0, 2.0 * (hid // 2) / d_hid)
    table = np.zeros((n_position, d_hid))
    table[:, 0::2] = np.sin(angle[:, 0::2])
    table[:, 1::2] = np.cos(angle[:, 1::2])
    return jnp.asarray(table, jnp.float32)


def get_pad_mask(seq):
    return (seq != PAD)[:, None, :]             # (B, 1, L)


def get_subsequent_mask(L):
    return jnp.tril(jnp.ones((1, L, L), bool))  # (1, L, L)


def alternatemerge(seq_A, seq_B, merge_len, player):
    B, L, D = seq_A.shape
    merged = jnp.zeros((B, merge_len, D), jnp.float32)
    if L * 2 == merge_len - 1:
        merged = merged.at[:, 1::2, :].set(seq_A[:, :L, :])
        merged = merged.at[:, 2::2, :].set(seq_B[:, :L, :])
    elif L * 2 - 1 == merge_len:
        merged = merged.at[:, ::2, :].set(seq_A[:, :L, :])
        merged = merged.at[:, 1::2, :].set(seq_B[:, :merge_len - L, :])
    elif L * 2 == merge_len:
        if player == "A":
            merged = merged.at[:, ::2, :].set(seq_A[:, :L, :])
            merged = merged.at[:, 1::2, :].set(seq_B[:, :L, :])
        elif player == "B":
            merged = merged.at[:, 1::2, :].set(seq_A[:, :L, :])
            merged = merged.at[:, 2::2, :].set(seq_B[:, :L - 1, :])
        else:
            raise NotImplementedError
    else:
        raise NotImplementedError
    return merged


def shotgen_decoder_forward(params, cfg, player, a_x, a_y, b_x, b_y, shot_type,
                            enc_local, enc_gA, enc_gB, two_player):
    B, S = player.shape
    hd = cfg["hidden_size"]
    n_head, d_k, d_v = N_HEADS, hd, hd
    enc_len = cfg["encode_length"]
    pos_table = params["pos_table"]

    # embedding gathers (plain-JAX glue)
    player_emb = params["player_emb"][player]     # (B, S, pd)
    two_p = params["player_emb"][two_player]      # (B, 2, pd)
    type_e = params["type_emb"][shot_type]        # (B, S, td)

    coordA = jnp.stack([a_x, a_y], axis=2).astype(jnp.float32)   # (B, S, 2)
    coordB = jnp.stack([b_x, b_y], axis=2).astype(jnp.float32)

    # fused preamble: coord transforms + location/player + type/player linears
    coord_tr, type_emb = preamble(params, coordA, coordB, two_p, type_e, player_emb, cfg)

    mask_A = shot_type[:, ::2]
    mask_B = shot_type[:, 1::2]
    trg_local_mask = (get_pad_mask(shot_type) & get_subsequent_mask(S)).astype(jnp.float32)
    trg_gA_mask = (get_pad_mask(mask_A) & get_subsequent_mask(mask_A.shape[1])).astype(jnp.float32)
    trg_gB_mask = (get_pad_mask(mask_B) & get_subsequent_mask(mask_B.shape[1])).astype(jnp.float32)

    h_a_A, h_a_B = coord_tr[:, ::2], coord_tr[:, 1::2]
    h_s_A, h_s_B = type_emb[:, ::2], type_emb[:, 1::2]

    def pos_decode(x):          # dropout is identity in eval mode
        L = x.shape[1]
        return x + pos_table[enc_len:enc_len + L][None, :, :]

    dec_area = pos_decode(coord_tr)
    dec_shot = pos_decode(type_emb)
    dec_area_A, dec_area_B = pos_decode(h_a_A), pos_decode(h_a_B)
    dec_shot_A, dec_shot_B = pos_decode(h_s_A), pos_decode(h_s_B)

    L_A, L_B = dec_area_A.shape[1], dec_area_B.shape[1]
    gp = params["global"]
    if L_B == L_A and L_B > 0:
        # batch the gA and gB passes into ONE fused call (same weights/length)
        dec_g = decoder_layer_fused(
            gp,
            jnp.concatenate([dec_area_A, dec_area_B], axis=0),
            jnp.concatenate([dec_shot_A, dec_shot_B], axis=0),
            jnp.concatenate([enc_gA, enc_gB], axis=0),
            jnp.concatenate([trg_gA_mask, trg_gB_mask], axis=0),
            n_head, d_k, d_v)
        dec_gA, dec_gB = dec_g[:B], dec_g[B:]
    else:
        dec_gA = decoder_layer_fused(gp, dec_area_A, dec_shot_A, enc_gA,
                                     trg_gA_mask, n_head, d_k, d_v)
        dec_gB = (decoder_layer_fused(gp, dec_area_B, dec_shot_B, enc_gB,
                                      trg_gB_mask, n_head, d_k, d_v)
                  if L_B > 0 else None)

    dec_local = decoder_layer_fused(params["local"], dec_area, dec_shot, enc_local,
                                    trg_local_mask, n_head, d_k, d_v)

    if L_B > 0:
        out_A = alternatemerge(dec_gA, dec_gA, dec_local.shape[1], "A")
        out_B = alternatemerge(dec_gB, dec_gB, dec_local.shape[1], "B")
    else:
        out_A = dec_gA
        out_B = jnp.zeros_like(dec_local)

    return gated_fusion(params["fusion"], out_A, out_B, dec_local)


# ----------------------------------------------------------------------------
# Deterministic parameter initialization
# ----------------------------------------------------------------------------
class KeyGen:
    def __init__(self, key):
        self.key = key

    def __call__(self):
        self.key, sub = jax.random.split(self.key)
        return sub


def init_linear(kg, fan_in, fan_out, bias=True):
    bound = 1.0 / np.sqrt(fan_in)
    w = jax.random.uniform(kg(), (fan_in, fan_out), jnp.float32, -bound, bound)
    b = jax.random.uniform(kg(), (fan_out,), jnp.float32, -bound, bound) if bias else None
    return w, b


def init_decoder_layer(kg, d_model, d_inner, n_head, d_k, d_v):
    lp = {}
    for name in ["w_qs_area", "w_ks_area", "w_vs_area", "w_qs_shot", "w_ks_shot", "w_vs_shot"]:
        lp[name] = init_linear(kg, d_model, n_head * d_k, bias=False)[0]
    lp["fc_slf"] = init_linear(kg, n_head * d_v, d_model, bias=False)[0]
    lp["ln1_g"], lp["ln1_b"] = jnp.ones((d_model,)), jnp.zeros((d_model,))
    for name in ["w_qs", "w_ks", "w_vs"]:
        lp[name] = init_linear(kg, d_model, n_head * d_k, bias=False)[0]
    lp["fc_enc"] = init_linear(kg, n_head * d_v, d_model, bias=False)[0]
    lp["ln2_g"], lp["ln2_b"] = jnp.ones((d_model,)), jnp.zeros((d_model,))
    lp["ffn_w1"], lp["ffn_b1"] = init_linear(kg, d_model, d_inner)
    lp["ffn_w2"], lp["ffn_b2"] = init_linear(kg, d_inner, d_model)
    lp["ln3_g"], lp["ln3_b"] = jnp.ones((d_model,)), jnp.zeros((d_model,))
    return lp


def init_params(kg, cfg):
    pd, td, ld, hd = cfg["player_dim"], cfg["type_dim"], cfg["location_dim"], cfg["hidden_size"]
    d_model, d_inner = hd, hd * 2
    p = {}
    p["player_emb"] = 0.1 * jax.random.normal(kg(), (cfg["player_num"], pd), jnp.float32)
    p["type_emb"] = 0.1 * jax.random.normal(kg(), (cfg["type_num"], td), jnp.float32)
    p["self_coord_w"], p["self_coord_b"] = init_linear(kg, 2, ld)
    p["coord_w"], p["coord_b"] = init_linear(kg, 2 * ld, ld)
    p["loc_player_w"], p["loc_player_b"] = init_linear(kg, ld + pd, hd)
    p["type_player_w"], p["type_player_b"] = init_linear(kg, td + pd, hd)
    p["global"] = init_decoder_layer(kg, d_model, d_inner, N_HEADS, hd, hd)
    p["local"] = init_decoder_layer(kg, d_model, d_inner, N_HEADS, hd, hd)
    dec_len = cfg["max_length"] - cfg["encode_length"]
    p["fusion"] = {
        "hidden1": init_linear(kg, d_model, d_model, bias=False)[0],
        "hidden2": init_linear(kg, d_model, d_model, bias=False)[0],
        "hidden3": init_linear(kg, d_model, d_model, bias=False)[0],
        "gated1": init_linear(kg, 3 * d_model, d_model, bias=False)[0],
        "gated2": init_linear(kg, 3 * d_model, d_model, bias=False)[0],
        "gated3": init_linear(kg, 3 * d_model, d_model, bias=False)[0],
        # reference inits these to zeros; use small random values so the output
        # is non-trivial (initialization is free per task statement)
        "w_A": 0.1 * jax.random.normal(kg(), (dec_len, d_model), jnp.float32),
        "w_B": 0.1 * jax.random.normal(kg(), (dec_len, d_model), jnp.float32),
        "w_L": 0.1 * jax.random.normal(kg(), (dec_len, d_model), jnp.float32),
    }
    p["pos_table"] = sinusoid_table(cfg["max_length"], td)
    return p


# ----------------------------------------------------------------------------
if __name__ == "__main__":
    cfg = dict(player_num=6, player_dim=32, type_num=10, type_dim=32,
               location_dim=32, hidden_size=32, encode_length=8, max_length=24)
    B, S = 2, 8

    kg = KeyGen(jax.random.PRNGKey(0))
    params = init_params(kg, cfg)

    ks = jax.random.split(jax.random.PRNGKey(0), 10)
    player = jax.random.randint(ks[0], (B, S), 1, cfg["player_num"], dtype=jnp.int32)
    shot_type = jax.random.randint(ks[1], (B, S), 1, cfg["type_num"], dtype=jnp.int32)
    player_A_x = jax.random.uniform(ks[2], (B, S), jnp.float32)
    player_A_y = jax.random.uniform(ks[3], (B, S), jnp.float32)
    player_B_x = jax.random.uniform(ks[4], (B, S), jnp.float32)
    player_B_y = jax.random.uniform(ks[5], (B, S), jnp.float32)
    enc_local = jax.random.normal(ks[6], (B, cfg["encode_length"], cfg["hidden_size"]), jnp.float32)
    enc_gA = jax.random.normal(ks[7], (B, cfg["encode_length"] // 2, cfg["hidden_size"]), jnp.float32)
    enc_gB = jax.random.normal(ks[8], (B, cfg["encode_length"] // 2, cfg["hidden_size"]), jnp.float32)
    two_player = jnp.array([[1, 2], [3, 4]], jnp.int32)

    fwd = jax.jit(lambda p, *args: shotgen_decoder_forward(p, cfg, *args))
    out = fwd(params, player, player_A_x, player_A_y, player_B_x, player_B_y,
              shot_type, enc_local, enc_gA, enc_gB, two_player)
    out = jax.block_until_ready(out)
    assert out.shape == (B, S, cfg["hidden_size"])
    assert bool(jnp.all(jnp.isfinite(out)))
    print("KERNEL_OK")
</pallas_src>

<mosaic_0001>
module attributes {stable_mosaic.version = 11 : i64} {
  func.func @_preamble_kernel(%arg0: i32, %arg1: memref<1x8x2xf32, #tpu.memory_space<vmem>>, %arg2: memref<1x8x2xf32, #tpu.memory_space<vmem>>, %arg3: memref<1x1x32xf32, #tpu.memory_space<vmem>>, %arg4: memref<1x1x32xf32, #tpu.memory_space<vmem>>, %arg5: memref<1x8x32xf32, #tpu.memory_space<vmem>>, %arg6: memref<1x8x32xf32, #tpu.memory_space<vmem>>, %arg7: memref<2x32xf32, #tpu.memory_space<vmem>>, %arg8: memref<1x32xf32, #tpu.memory_space<vmem>>, %arg9: memref<64x32xf32, #tpu.memory_space<vmem>>, %arg10: memref<1x32xf32, #tpu.memory_space<vmem>>, %arg11: memref<64x32xf32, #tpu.memory_space<vmem>>, %arg12: memref<1x32xf32, #tpu.memory_space<vmem>>, %arg13: memref<64x32xf32, #tpu.memory_space<vmem>>, %arg14: memref<1x32xf32, #tpu.memory_space<vmem>>, %arg15: memref<1x8x32xf32, #tpu.memory_space<vmem>>, %arg16: memref<1x8x32xf32, #tpu.memory_space<vmem>>) attributes {dimension_semantics = [#tpu.dimension_semantics<parallel>], iteration_bounds = array<i64: 2>, scalar_prefetch = 0 : i64, scratch_operands = 0 : i64, tpu.core_type = #tpu.core_type<tc>, window_params = [{transform_indices = @transform_0, window_bounds = array<i64: 1, 8, 2>}, {transform_indices = @transform_1, window_bounds = array<i64: 1, 8, 2>}, {transform_indices = @transform_2, window_bounds = array<i64: 1, 1, 32>}, {transform_indices = @transform_3, window_bounds = array<i64: 1, 1, 32>}, {transform_indices = @transform_4, window_bounds = array<i64: 1, 8, 32>}, {transform_indices = @transform_5, window_bounds = array<i64: 1, 8, 32>}, {pipeline_mode = #tpu.pipeline_mode<synchronous>, transform_indices = @transform_6, window_bounds = array<i64: 2, 32>}, {pipeline_mode = #tpu.pipeline_mode<synchronous>, transform_indices = @transform_7, window_bounds = array<i64: 1, 32>}, {pipeline_mode = #tpu.pipeline_mode<synchronous>, transform_indices = @transform_8, window_bounds = array<i64: 64, 32>}, {pipeline_mode = #tpu.pipeline_mode<synchronous>, transform_indices = @transform_9, window_bounds = array<i64: 1, 32>}, {pipeline_mode = #tpu.pipeline_mode<synchronous>, transform_indices = @transform_10, window_bounds = array<i64: 64, 32>}, {pipeline_mode = #tpu.pipeline_mode<synchronous>, transform_indices = @transform_11, window_bounds = array<i64: 1, 32>}, {pipeline_mode = #tpu.pipeline_mode<synchronous>, transform_indices = @transform_12, window_bounds = array<i64: 64, 32>}, {pipeline_mode = #tpu.pipeline_mode<synchronous>, transform_indices = @transform_13, window_bounds = array<i64: 1, 32>}, {transform_indices = @transform_14, window_bounds = array<i64: 1, 8, 32>}, {transform_indices = @transform_15, window_bounds = array<i64: 1, 8, 32>}]} {
    %c0 = arith.constant 0 : index
    %c0_0 = arith.constant 0 : index
    %0 = vector.load %arg7[%c0, %c0_0] : memref<2x32xf32, #tpu.memory_space<vmem>>, vector<2x32xf32>
    %c0_1 = arith.constant 0 : index
    %c0_2 = arith.constant 0 : index
    %1 = vector.load %arg8[%c0_1, %c0_2] : memref<1x32xf32, #tpu.memory_space<vmem>>, vector<1x32xf32>
    %c0_3 = arith.constant 0 : index
    %c0_4 = arith.constant 0 : index
    %c0_5 = arith.constant 0 : index
    %2 = vector.load %arg1[%c0_3, %c0_4, %c0_5] : memref<1x8x2xf32, #tpu.memory_space<vmem>>, vector<1x8x2xf32>
    %3 = vector.shape_cast %2 : vector<1x8x2xf32> to vector<8x2xf32>
    %cst = arith.constant dense<0.000000e+00> : vector<8x32xf32>
    %4 = tpu.matmul %3, %0, %cst {dimension_numbers = #tpu.dot_dimension_numbers<[1], [0], [0], [1], [0, 0, 1, 1], [], []>} : vector<8x2xf32>, vector<2x32xf32>, vector<8x32xf32> -> vector<8x32xf32>
    %5 = vector.broadcast %1 : vector<1x32xf32> to vector<8x32xf32>
    %6 = arith.addf %4, %5 : vector<8x32xf32>
    %cst_6 = arith.constant 0.000000e+00 : f32
    %7 = vector.broadcast %cst_6 : f32 to vector<8x32xf32>
    %8 = arith.maximumf %6, %7 : vector<8x32xf32>
    %c0_7 = arith.constant 0 : index
    %c0_8 = arith.constant 0 : index
    %c0_9 = arith.constant 0 : index
    %9 = vector.load %arg2[%c0_7, %c0_8, %c0_9] : memref<1x8x2xf32, #tpu.memory_space<vmem>>, vector<1x8x2xf32>
    %10 = vector.shape_cast %9 : vector<1x8x2xf32> to vector<8x2xf32>
    %cst_10 = arith.constant dense<0.000000e+00> : vector<8x32xf32>
    %11 = tpu.matmul %10, %0, %cst_10 {dimension_numbers = #tpu.dot_dimension_numbers<[1], [0], [0], [1], [0, 0, 1, 1], [], []>} : vector<8x2xf32>, vector<2x32xf32>, vector<8x32xf32> -> vector<8x32xf32>
    %12 = vector.broadcast %1 : vector<1x32xf32> to vector<8x32xf32>
    %13 = arith.addf %11, %12 : vector<8x32xf32>
    %cst_11 = arith.constant 0.000000e+00 : f32
    %14 = vector.broadcast %cst_11 : f32 to vector<8x32xf32>
    %15 = arith.maximumf %13, %14 : vector<8x32xf32>
    %c0_12 = arith.constant 0 : index
    %c0_13 = arith.constant 0 : index
    %16 = vector.load %arg9[%c0_12, %c0_13] : memref<64x32xf32, #tpu.memory_space<vmem>>, vector<64x32xf32>
    %c0_14 = arith.constant 0 : index
    %c0_15 = arith.constant 0 : index
    %17 = vector.load %arg10[%c0_14, %c0_15] : memref<1x32xf32, #tpu.memory_space<vmem>>, vector<1x32xf32>
    %18 = vector.extract_strided_slice %16 {offsets = [0, 0], sizes = [32, 32], strides = [1, 1]} : vector<64x32xf32> to vector<32x32xf32>
    %19 = vector.extract_strided_slice %16 {offsets = [32, 0], sizes = [32, 32], strides = [1, 1]} : vector<64x32xf32> to vector<32x32xf32>
    %c0_16 = arith.constant 0 : index
    %c0_17 = arith.constant 0 : index
    %c0_18 = arith.constant 0 : index
    %20 = vector.load %arg3[%c0_16, %c0_17, %c0_18] : memref<1x1x32xf32, #tpu.memory_space<vmem>>, vector<1x1x32xf32>
    %21 = vector.shape_cast %20 : vector<1x1x32xf32> to vector<1x32xf32>
    %22 = vector.shape_cast %21 : vector<1x32xf32> to vector<1x32xf32>
    %23 = vector.broadcast %22 : vector<1x32xf32> to vector<8x32xf32>
    %c0_19 = arith.constant 0 : index
    %c0_20 = arith.constant 0 : index
    %c0_21 = arith.constant 0 : index
    %24 = vector.load %arg4[%c0_19, %c0_20, %c0_21] : memref<1x1x32xf32, #tpu.memory_space<vmem>>, vector<1x1x32xf32>
    %25 = vector.shape_cast %24 : vector<1x1x32xf32> to vector<1x32xf32>
    %26 = vector.shape_cast %25 : vector<1x32xf32> to vector<1x32xf32>
    %27 = vector.broadcast %26 : vector<1x32xf32> to vector<8x32xf32>
    %cst_22 = arith.constant dense<0.000000e+00> : vector<8x32xf32>
    %28 = tpu.matmul %8, %18, %cst_22 {dimension_numbers = #tpu.dot_dimension_numbers<[1], [0], [0], [1], [0, 0, 1, 1], [], []>} : vector<8x32xf32>, vector<32x32xf32>, vector<8x32xf32> -> vector<8x32xf32>
    %cst_23 = arith.constant dense<0.000000e+00> : vector<8x32xf32>
    %29 = tpu.matmul %23, %19, %cst_23 {dimension_numbers = #tpu.dot_dimension_numbers<[1], [0], [0], [1], [0, 0, 1, 1], [], []>} : vector<8x32xf32>, vector<32x32xf32>, vector<8x32xf32> -> vector<8x32xf32>
    %30 = arith.addf %28, %29 : vector<8x32xf32>
    %31 = vector.broadcast %17 : vector<1x32xf32> to vector<8x32xf32>
    %32 = arith.addf %30, %31 : vector<8x32xf32>
    %cst_24 = arith.constant dense<0.000000e+00> : vector<8x32xf32>
    %33 = tpu.matmul %15, %18, %cst_24 {dimension_numbers = #tpu.dot_dimension_numbers<[1], [0], [0], [1], [0, 0, 1, 1], [], []>} : vector<8x32xf32>, vector<32x32xf32>, vector<8x32xf32> -> vector<8x32xf32>
    %cst_25 = arith.constant dense<0.000000e+00> : vector<8x32xf32>
    %34 = tpu.matmul %27, %19, %cst_25 {dimension_numbers = #tpu.dot_dimension_numbers<[1], [0], [0], [1], [0, 0, 1, 1], [], []>} : vector<8x32xf32>, vector<32x32xf32>, vector<8x32xf32> -> vector<8x32xf32>
    %35 = arith.addf %33, %34 : vector<8x32xf32>
    %36 = vector.broadcast %17 : vector<1x32xf32> to vector<8x32xf32>
    %37 = arith.addf %35, %36 : vector<8x32xf32>
    %c0_26 = arith.constant 0 : index
    %c0_27 = arith.constant 0 : index
    %38 = vector.load %arg11[%c0_26, %c0_27] : memref<64x32xf32, #tpu.memory_space<vmem>>, vector<64x32xf32>
    %39 = vector.extract_strided_slice %38 {offsets = [0, 0], sizes = [32, 32], strides = [1, 1]} : vector<64x32xf32> to vector<32x32xf32>
    %cst_28 = arith.constant dense<0.000000e+00> : vector<8x32xf32>
    %40 = tpu.matmul %32, %39, %cst_28 {dimension_numbers = #tpu.dot_dimension_numbers<[1], [0], [0], [1], [0, 0, 1, 1], [], []>} : vector<8x32xf32>, vector<32x32xf32>, vector<8x32xf32> -> vector<8x32xf32>
    %41 = vector.extract_strided_slice %38 {offsets = [32, 0], sizes = [32, 32], strides = [1, 1]} : vector<64x32xf32> to vector<32x32xf32>
    %cst_29 = arith.constant dense<0.000000e+00> : vector<8x32xf32>
    %42 = tpu.matmul %37, %41, %cst_29 {dimension_numbers = #tpu.dot_dimension_numbers<[1], [0], [0], [1], [0, 0, 1, 1], [], []>} : vector<8x32xf32>, vector<32x32xf32>, vector<8x32xf32> -> vector<8x32xf32>
    %43 = arith.addf %40, %42 : vector<8x32xf32>
    %c0_30 = arith.constant 0 : index
    %c0_31 = arith.constant 0 : index
    %44 = vector.load %arg12[%c0_30, %c0_31] : memref<1x32xf32, #tpu.memory_space<vmem>>, vector<1x32xf32>
    %45 = vector.broadcast %44 : vector<1x32xf32> to vector<8x32xf32>
    %46 = arith.addf %43, %45 : vector<8x32xf32>
    %c0_32 = arith.constant 0 : index
    %c0_33 = arith.constant 0 : index
    %c0_34 = arith.constant 0 : index
    %47 = vector.load %arg15[%c0_32, %c0_33, %c0_34] : memref<1x8x32xf32, #tpu.memory_space<vmem>>, vector<1x8x32xf32>
    %48 = vector.shape_cast %47 : vector<1x8x32xf32> to vector<8x32xf32>
    %49 = vector.shape_cast %46 : vector<8x32xf32> to vector<1x8x32xf32>
    tpu.vector_store %arg15[%c0_32, %c0_33, %c0_34], %49 {strides = array<i32>} : memref<1x8x32xf32, #tpu.memory_space<vmem>>, vector<1x8x32xf32>,
    %c0_35 = arith.constant 0 : index
    %c0_36 = arith.constant 0 : index
    %50 = vector.load %arg13[%c0_35, %c0_36] : memref<64x32xf32, #tpu.memory_space<vmem>>, vector<64x32xf32>
    %c0_37 = arith.constant 0 : index
    %c0_38 = arith.constant 0 : index
    %c0_39 = arith.constant 0 : index
    %51 = vector.load %arg5[%c0_37, %c0_38, %c0_39] : memref<1x8x32xf32, #tpu.memory_space<vmem>>, vector<1x8x32xf32>
    %52 = vector.shape_cast %51 : vector<1x8x32xf32> to vector<8x32xf32>
    %53 = vector.extract_strided_slice %50 {offsets = [0, 0], sizes = [32, 32], strides = [1, 1]} : vector<64x32xf32> to vector<32x32xf32>
    %cst_40 = arith.constant dense<0.000000e+00> : vector<8x32xf32>
    %54 = tpu.matmul %52, %53, %cst_40 {dimension_numbers = #tpu.dot_dimension_numbers<[1], [0], [0], [1], [0, 0, 1, 1], [], []>} : vector<8x32xf32>, vector<32x32xf32>, vector<8x32xf32> -> vector<8x32xf32>
    %c0_41 = arith.constant 0 : index
    %c0_42 = arith.constant 0 : index
    %c0_43 = arith.constant 0 : index
    %55 = vector.load %arg6[%c0_41, %c0_42, %c0_43] : memref<1x8x32xf32, #tpu.memory_space<vmem>>, vector<1x8x32xf32>
    %56 = vector.shape_cast %55 : vector<1x8x32xf32> to vector<8x32xf32>
    %57 = vector.extract_strided_slice %50 {offsets = [32, 0], sizes = [32, 32], strides = [1, 1]} : vector<64x32xf32> to vector<32x32xf32>
    %cst_44 = arith.constant dense<0.000000e+00> : vector<8x32xf32>
    %58 = tpu.matmul %56, %57, %cst_44 {dimension_numbers = #tpu.dot_dimension_numbers<[1], [0], [0], [1], [0, 0, 1, 1], [], []>} : vector<8x32xf32>, vector<32x32xf32>, vector<8x32xf32> -> vector<8x32xf32>
    %59 = arith.addf %54, %58 : vector<8x32xf32>
    %c0_45 = arith.constant 0 : index
    %c0_46 = arith.constant 0 : index
    %60 = vector.load %arg14[%c0_45, %c0_46] : memref<1x32xf32, #tpu.memory_space<vmem>>, vector<1x32xf32>
    %61 = vector.broadcast %60 : vector<1x32xf32> to vector<8x32xf32>
    %62 = arith.addf %59, %61 : vector<8x32xf32>
    %c0_47 = arith.constant 0 : index
    %c0_48 = arith.constant 0 : index
    %c0_49 = arith.constant 0 : index
    %63 = vector.load %arg16[%c0_47, %c0_48, %c0_49] : memref<1x8x32xf32, #tpu.memory_space<vmem>>, vector<1x8x32xf32>
    %64 = vector.shape_cast %63 : vector<1x8x32xf32> to vector<8x32xf32>
    %65 = vector.shape_cast %62 : vector<8x32xf32> to vector<1x8x32xf32>
    tpu.vector_store %arg16[%c0_47, %c0_48, %c0_49], %65 {strides = array<i32>} : memref<1x8x32xf32, #tpu.memory_space<vmem>>, vector<1x8x32xf32>,
    return
  }
  func.func @transform_0(%arg0: i32) -> (i32, i32, i32) {
    %c0_i32 = arith.constant 0 : i32
    %c0_i32_0 = arith.constant 0 : i32
    %c0_i32_1 = arith.constant 0 : i32
    return %arg0, %c0_i32, %c0_i32_0 : i32, i32, i32
  }
  func.func @transform_1(%arg0: i32) -> (i32, i32, i32) {
    %c0_i32 = arith.constant 0 : i32
    %c0_i32_0 = arith.constant 0 : i32
    %c0_i32_1 = arith.constant 0 : i32
    return %arg0, %c0_i32, %c0_i32_0 : i32, i32, i32
  }
  func.func @transform_2(%arg0: i32) -> (i32, i32, i32) {
    %c0_i32 = arith.constant 0 : i32
    %c0_i32_0 = arith.constant 0 : i32
    %c0_i32_1 = arith.constant 0 : i32
    return %arg0, %c0_i32, %c0_i32_0 : i32, i32, i32
  }
  func.func @transform_3(%arg0: i32) -> (i32, i32, i32) {
    %c0_i32 = arith.constant 0 : i32
    %c0_i32_0 = arith.constant 0 : i32
    %c0_i32_1 = arith.constant 0 : i32
    return %arg0, %c0_i32, %c0_i32_0 : i32, i32, i32
  }
  func.func @transform_4(%arg0: i32) -> (i32, i32, i32) {
    %c0_i32 = arith.constant 0 : i32
    %c0_i32_0 = arith.constant 0 : i32
    %c0_i32_1 = arith.constant 0 : i32
    return %arg0, %c0_i32, %c0_i32_0 : i32, i32, i32
  }
  func.func @transform_5(%arg0: i32) -> (i32, i32, i32) {
    %c0_i32 = arith.constant 0 : i32
    %c0_i32_0 = arith.constant 0 : i32
    %c0_i32_1 = arith.constant 0 : i32
    return %arg0, %c0_i32, %c0_i32_0 : i32, i32, i32
  }
  func.func @transform_6(%arg0: i32) -> (i32, i32) {
    %c0_i32 = arith.constant 0 : i32
    %c0_i32_0 = arith.constant 0 : i32
    %c0_i32_1 = arith.constant 0 : i32
    return %c0_i32, %c0_i32_0 : i32, i32
  }
  func.func @transform_7(%arg0: i32) -> (i32, i32) {
    %c0_i32 = arith.constant 0 : i32
    %c0_i32_0 = arith.constant 0 : i32
    %c0_i32_1 = arith.constant 0 : i32
    return %c0_i32, %c0_i32_0 : i32, i32
  }
  func.func @transform_8(%arg0: i32) -> (i32, i32) {
    %c0_i32 = arith.constant 0 : i32
    %c0_i32_0 = arith.constant 0 : i32
    %c0_i32_1 = arith.constant 0 : i32
    return %c0_i32, %c0_i32_0 : i32, i32
  }
  func.func @transform_9(%arg0: i32) -> (i32, i32) {
    %c0_i32 = arith.constant 0 : i32
    %c0_i32_0 = arith.constant 0 : i32
    %c0_i32_1 = arith.constant 0 : i32
    return %c0_i32, %c0_i32_0 : i32, i32
  }
  func.func @transform_10(%arg0: i32) -> (i32, i32) {
    %c0_i32 = arith.constant 0 : i32
    %c0_i32_0 = arith.constant 0 : i32
    %c0_i32_1 = arith.constant 0 : i32
    return %c0_i32, %c0_i32_0 : i32, i32
  }
  func.func @transform_11(%arg0: i32) -> (i32, i32) {
    %c0_i32 = arith.constant 0 : i32
    %c0_i32_0 = arith.constant 0 : i32
    %c0_i32_1 = arith.constant 0 : i32
    return %c0_i32, %c0_i32_0 : i32, i32
  }
  func.func @transform_12(%arg0: i32) -> (i32, i32) {
    %c0_i32 = arith.constant 0 : i32
    %c0_i32_0 = arith.constant 0 : i32
    %c0_i32_1 = arith.constant 0 : i32
    return %c0_i32, %c0_i32_0 : i32, i32
  }
  func.func @transform_13(%arg0: i32) -> (i32, i32) {
    %c0_i32 = arith.constant 0 : i32
    %c0_i32_0 = arith.constant 0 : i32
    %c0_i32_1 = arith.constant 0 : i32
    return %c0_i32, %c0_i32_0 : i32, i32
  }
  func.func @transform_14(%arg0: i32) -> (i32, i32, i32) {
    %c0_i32 = arith.constant 0 : i32
    %c0_i32_0 = arith.constant 0 : i32
    %c0_i32_1 = arith.constant 0 : i32
    return %arg0, %c0_i32, %c0_i32_0 : i32, i32, i32
  }
  func.func @transform_15(%arg0: i32) -> (i32, i32, i32) {
    %c0_i32 = arith.constant 0 : i32
    %c0_i32_0 = arith.constant 0 : i32
    %c0_i32_1 = arith.constant 0 : i32
    return %arg0, %c0_i32, %c0_i32_0 : i32, i32, i32
  }
}

module attributes {stable_mosaic.version = 11 : i64} {
  func.func @_decoder_layer_kernel(%arg0: i32, %arg1: memref<1x4x32xf32, #tpu.memory_space<vmem>>, %arg2: memref<1x4x32xf32, #tpu.memory_space<vmem>>, %arg3: memref<1x4x32xf32, #tpu.memory_space<vmem>>, %arg4: memref<1x4x4xf32, #tpu.memory_space<vmem>>, %arg5: memref<32x192xf32, #tpu.memory_space<vmem>>, %arg6: memref<32x192xf32, #tpu.memory_space<vmem>>, %arg7: memref<64x32xf32, #tpu.memory_space<vmem>>, %arg8: memref<1x32xf32, #tpu.memory_space<vmem>>, %arg9: memref<1x32xf32, #tpu.memory_space<vmem>>, %arg10: memref<32x64xf32, #tpu.memory_space<vmem>>, %arg11: memref<32x128xf32, #tpu.memory_space<vmem>>, %arg12: memref<64x32xf32, #tpu.memory_space<vmem>>, %arg13: memref<1x32xf32, #tpu.memory_space<vmem>>, %arg14: memref<1x32xf32, #tpu.memory_space<vmem>>, %arg15: memref<32x64xf32, #tpu.memory_space<vmem>>, %arg16: memref<1x64xf32, #tpu.memory_space<vmem>>, %arg17: memref<64x32xf32, #tpu.memory_space<vmem>>, %arg18: memref<1x32xf32, #tpu.memory_space<vmem>>, %arg19: memref<1x32xf32, #tpu.memory_space<vmem>>, %arg20: memref<1x32xf32, #tpu.memory_space<vmem>>, %arg21: memref<1x4x32xf32, #tpu.memory_space<vmem>>) attributes {dimension_semantics = [#tpu.dimension_semantics<parallel>], iteration_bounds = array<i64: 4>, scalar_prefetch = 0 : i64, scratch_operands = 0 : i64, tpu.core_type = #tpu.core_type<tc>, window_params = [{transform_indices = @transform_0, window_bounds = array<i64: 1, 4, 32>}, {transform_indices = @transform_1, window_bounds = array<i64: 1, 4, 32>}, {transform_indices = @transform_2, window_bounds = array<i64: 1, 4, 32>}, {transform_indices = @transform_3, window_bounds = array<i64: 1, 4, 4>}, {pipeline_mode = #tpu.pipeline_mode<synchronous>, transform_indices = @transform_4, window_bounds = array<i64: 32, 192>}, {pipeline_mode = #tpu.pipeline_mode<synchronous>, transform_indices = @transform_5, window_bounds = array<i64: 32, 192>}, {pipeline_mode = #tpu.pipeline_mode<synchronous>, transform_indices = @transform_6, window_bounds = array<i64: 64, 32>}, {pipeline_mode = #tpu.pipeline_mode<synchronous>, transform_indices = @transform_7, window_bounds = array<i64: 1, 32>}, {pipeline_mode = #tpu.pipeline_mode<synchronous>, transform_indices = @transform_8, window_bounds = array<i64: 1, 32>}, {pipeline_mode = #tpu.pipeline_mode<synchronous>, transform_indices = @transform_9, window_bounds = array<i64: 32, 64>}, {pipeline_mode = #tpu.pipeline_mode<synchronous>, transform_indices = @transform_10, window_bounds = array<i64: 32, 128>}, {pipeline_mode = #tpu.pipeline_mode<synchronous>, transform_indices = @transform_11, window_bounds = array<i64: 64, 32>}, {pipeline_mode = #tpu.pipeline_mode<synchronous>, transform_indices = @transform_12, window_bounds = array<i64: 1, 32>}, {pipeline_mode = #tpu.pipeline_mode<synchronous>, transform_indices = @transform_13, window_bounds = array<i64: 1, 32>}, {pipeline_mode = #tpu.pipeline_mode<synchronous>, transform_indices = @transform_14, window_bounds = array<i64: 32, 64>}, {pipeline_mode = #tpu.pipeline_mode<synchronous>, transform_indices = @transform_15, window_bounds = array<i64: 1, 64>}, {pipeline_mode = #tpu.pipeline_mode<synchronous>, transform_indices = @transform_16, window_bounds = array<i64: 64, 32>}, {pipeline_mode = #tpu.pipeline_mode<synchronous>, transform_indices = @transform_17, window_bounds = array<i64: 1, 32>}, {pipeline_mode = #tpu.pipeline_mode<synchronous>, transform_indices = @transform_18, window_bounds = array<i64: 1, 32>}, {pipeline_mode = #tpu.pipeline_mode<synchronous>, transform_indices = @transform_19, window_bounds = array<i64: 1, 32>}, {transform_indices = @transform_20, window_bounds = array<i64: 1, 4, 32>}]} {
    %c0 = arith.constant 0 : index
    %c0_0 = arith.constant 0 : index
    %c0_1 = arith.constant 0 : index
    %0 = vector.load %arg1[%c0, %c0_0, %c0_1] : memref<1x4x32xf32, #tpu.memory_space<vmem>>, vector<1x4x32xf32>
    %1 = vector.shape_cast %0 : vector<1x4x32xf32> to vector<4x32xf32>
    %c0_2 = arith.constant 0 : index
    %c0_3 = arith.constant 0 : index
    %c0_4 = arith.constant 0 : index
    %2 = vector.load %arg2[%c0_2, %c0_3, %c0_4] : memref<1x4x32xf32, #tpu.memory_space<vmem>>, vector<1x4x32xf32>
    %3 = vector.shape_cast %2 : vector<1x4x32xf32> to vector<4x32xf32>
    %c0_5 = arith.constant 0 : index
    %c0_6 = arith.constant 0 : index
    %c0_7 = arith.constant 0 : index
    %4 = vector.load %arg3[%c0_5, %c0_6, %c0_7] : memref<1x4x32xf32, #tpu.memory_space<vmem>>, vector<1x4x32xf32>
    %5 = vector.shape_cast %4 : vector<1x4x32xf32> to vector<4x32xf32>
    %c0_8 = arith.constant 0 : index
    %c0_9 = arith.constant 0 : index
    %c0_10 = arith.constant 0 : index
    %6 = vector.load %arg4[%c0_8, %c0_9, %c0_10] : memref<1x4x4xf32, #tpu.memory_space<vmem>>, vector<1x4x4xf32>
    %7 = vector.shape_cast %6 : vector<1x4x4xf32> to vector<4x4xf32>
    %c0_11 = arith.constant 0 : index
    %c0_12 = arith.constant 0 : index
    %8 = vector.load %arg5[%c0_11, %c0_12] : memref<32x192xf32, #tpu.memory_space<vmem>>, vector<32x192xf32>
    %cst = arith.constant dense<0.000000e+00> : vector<4x192xf32>
    %9 = tpu.matmul %1, %8, %cst {dimension_numbers = #tpu.dot_dimension_numbers<[1], [0], [0], [1], [0, 0, 1, 1], [], []>} : vector<4x32xf32>, vector<32x192xf32>, vector<4x192xf32> -> vector<4x192xf32>
    %c0_13 = arith.constant 0 : index
    %c0_14 = arith.constant 0 : index
    %10 = vector.load %arg6[%c0_13, %c0_14] : memref<32x192xf32, #tpu.memory_space<vmem>>, vector<32x192xf32>
    %cst_15 = arith.constant dense<0.000000e+00> : vector<4x192xf32>
    %11 = tpu.matmul %3, %10, %cst_15 {dimension_numbers = #tpu.dot_dimension_numbers<[1], [0], [0], [1], [0, 0, 1, 1], [], []>} : vector<4x32xf32>, vector<32x192xf32>, vector<4x192xf32> -> vector<4x192xf32>
    %12 = arith.addf %9, %11 : vector<4x192xf32>
    %13 = vector.extract_strided_slice %12 {offsets = [0, 0], sizes = [4, 64], strides = [1, 1]} : vector<4x192xf32> to vector<4x64xf32>
    %cst_16 = arith.constant 0.0883883461 : f32
    %14 = vector.broadcast %cst_16 : f32 to vector<4x64xf32>
    %15 = arith.mulf %13, %14 : vector<4x64xf32>
    %16 = vector.extract_strided_slice %12 {offsets = [0, 64], sizes = [4, 64], strides = [1, 1]} : vector<4x192xf32> to vector<4x64xf32>
    %17 = vector.extract_strided_slice %12 {offsets = [0, 128], sizes = [4, 64], strides = [1, 1]} : vector<4x192xf32> to vector<4x64xf32>
    %c0_17 = arith.constant 0 : index
    %c0_18 = arith.constant 0 : index
    %18 = vector.load %arg7[%c0_17, %c0_18] : memref<64x32xf32, #tpu.memory_space<vmem>>, vector<64x32xf32>
    %cst_19 = arith.constant 0.000000e+00 : f32
    %19 = vector.broadcast %cst_19 : f32 to vector<4x32xf32>
    %20 = vector.extract_strided_slice %15 {offsets = [0, 0], sizes = [4, 32], strides = [1, 1]} : vector<4x64xf32> to vector<4x32xf32>
    %21 = vector.extract_strided_slice %16 {offsets = [0, 0], sizes = [4, 32], strides = [1, 1]} : vector<4x64xf32> to vector<4x32xf32>
    %22 = vector.extract_strided_slice %17 {offsets = [0, 0], sizes = [4, 32], strides = [1, 1]} : vector<4x64xf32> to vector<4x32xf32>
    %cst_20 = arith.constant dense<0.000000e+00> : vector<4x4xf32>
    %23 = tpu.matmul %20, %21, %cst_20 {dimension_numbers = #tpu.dot_dimension_numbers<[1], [1], [0], [0], [0, 0, 1, 0], [], []>} : vector<4x32xf32>, vector<4x32xf32>, vector<4x4xf32> -> vector<4x4xf32>
    %cst_21 = arith.constant 0.000000e+00 : f32
    %24 = vector.broadcast %cst_21 : f32 to vector<4x4xf32>
    %25 = arith.cmpf oeq, %7, %24 : vector<4x4xf32>
    %cst_22 = arith.constant -1.000000e+09 : f32
    %26 = vector.broadcast %cst_22 : f32 to vector<4x4xf32>
    %27 = arith.select %25, %26, %23 : vector<4x4xi1>, vector<4x4xf32>
    %cst_23 = arith.constant dense<0xFF800000> : vector<4xf32>
    %28 = vector.multi_reduction <maximumf>, %27, %cst_23 [1] : vector<4x4xf32> to vector<4xf32>
    %29 = vector.shape_cast %28 : vector<4xf32> to vector<4x1xf32>
    %30 = vector.broadcast %29 : vector<4x1xf32> to vector<4x4xf32>
    %31 = arith.subf %27, %30 : vector<4x4xf32>
    %32 = math.exp %31 : vector<4x4xf32>
    %cst_24 = arith.constant dense<0.000000e+00> : vector<4xf32>
    %33 = vector.multi_reduction <add>, %32, %cst_24 [1] : vector<4x4xf32> to vector<4xf32>
    %34 = vector.shape_cast %33 : vector<4xf32> to vector<4x1xf32>
    %35 = tpu.reciprocal %34 {approx = true} : vector<4x1xf32> -> vector<4x1xf32>
    %36 = vector.broadcast %35 : vector<4x1xf32> to vector<4x4xf32>
    %37 = arith.mulf %32, %36 : vector<4x4xf32>
    %cst_25 = arith.constant dense<0.000000e+00> : vector<4x32xf32>
    %38 = tpu.matmul %37, %22, %cst_25 {dimension_numbers = #tpu.dot_dimension_numbers<[1], [0], [0], [1], [0, 0, 1, 1], [], []>} : vector<4x4xf32>, vector<4x32xf32>, vector<4x32xf32> -> vector<4x32xf32>
    %39 = vector.extract_strided_slice %18 {offsets = [0, 0], sizes = [32, 32], strides = [1, 1]} : vector<64x32xf32> to vector<32x32xf32>
    %cst_26 = arith.constant dense<0.000000e+00> : vector<4x32xf32>
    %40 = tpu.matmul %38, %39, %cst_26 {dimension_numbers = #tpu.dot_dimension_numbers<[1], [0], [0], [1], [0, 0, 1, 1], [], []>} : vector<4x32xf32>, vector<32x32xf32>, vector<4x32xf32> -> vector<4x32xf32>
    %41 = arith.addf %19, %40 : vector<4x32xf32>
    %42 = vector.extract_strided_slice %15 {offsets = [0, 32], sizes = [4, 32], strides = [1, 1]} : vector<4x64xf32> to vector<4x32xf32>
    %43 = vector.extract_strided_slice %16 {offsets = [0, 32], sizes = [4, 32], strides = [1, 1]} : vector<4x64xf32> to vector<4x32xf32>
    %44 = vector.extract_strided_slice %17 {offsets = [0, 32], sizes = [4, 32], strides = [1, 1]} : vector<4x64xf32> to vector<4x32xf32>
    %cst_27 = arith.constant dense<0.000000e+00> : vector<4x4xf32>
    %45 = tpu.matmul %42, %43, %cst_27 {dimension_numbers = #tpu.dot_dimension_numbers<[1], [1], [0], [0], [0, 0, 1, 0], [], []>} : vector<4x32xf32>, vector<4x32xf32>, vector<4x4xf32> -> vector<4x4xf32>
    %cst_28 = arith.constant 0.000000e+00 : f32
    %46 = vector.broadcast %cst_28 : f32 to vector<4x4xf32>
    %47 = arith.cmpf oeq, %7, %46 : vector<4x4xf32>
    %cst_29 = arith.constant -1.000000e+09 : f32
    %48 = vector.broadcast %cst_29 : f32 to vector<4x4xf32>
    %49 = arith.select %47, %48, %45 : vector<4x4xi1>, vector<4x4xf32>
    %cst_30 = arith.constant dense<0xFF800000> : vector<4xf32>
    %50 = vector.multi_reduction <maximumf>, %49, %cst_30 [1] : vector<4x4xf32> to vector<4xf32>
    %51 = vector.shape_cast %50 : vector<4xf32> to vector<4x1xf32>
    %52 = vector.broadcast %51 : vector<4x1xf32> to vector<4x4xf32>
    %53 = arith.subf %49, %52 : vector<4x4xf32>
    %54 = math.exp %53 : vector<4x4xf32>
    %cst_31 = arith.constant dense<0.000000e+00> : vector<4xf32>
    %55 = vector.multi_reduction <add>, %54, %cst_31 [1] : vector<4x4xf32> to vector<4xf32>
    %56 = vector.shape_cast %55 : vector<4xf32> to vector<4x1xf32>
    %57 = tpu.reciprocal %56 {approx = true} : vector<4x1xf32> -> vector<4x1xf32>
    %58 = vector.broadcast %57 : vector<4x1xf32> to vector<4x4xf32>
    %59 = arith.mulf %54, %58 : vector<4x4xf32>
    %cst_32 = arith.constant dense<0.000000e+00> : vector<4x32xf32>
    %60 = tpu.matmul %59, %44, %cst_32 {dimension_numbers = #tpu.dot_dimension_numbers<[1], [0], [0], [1], [0, 0, 1, 1], [], []>} : vector<4x4xf32>, vector<4x32xf32>, vector<4x32xf32> -> vector<4x32xf32>
    %61 = vector.extract_strided_slice %18 {offsets = [32, 0], sizes = [32, 32], strides = [1, 1]} : vector<64x32xf32> to vector<32x32xf32>
    %cst_33 = arith.constant dense<0.000000e+00> : vector<4x32xf32>
    %62 = tpu.matmul %60, %61, %cst_33 {dimension_numbers = #tpu.dot_dimension_numbers<[1], [0], [0], [1], [0, 0, 1, 1], [], []>} : vector<4x32xf32>, vector<32x32xf32>, vector<4x32xf32> -> vector<4x32xf32>
    %63 = arith.addf %41, %62 : vector<4x32xf32>
    %64 = arith.addf %63, %1 : vector<4x32xf32>
    %65 = arith.addf %64, %3 : vector<4x32xf32>
    %c0_34 = arith.constant 0 : index
    %c0_35 = arith.constant 0 : index
    %66 = vector.load %arg8[%c0_34, %c0_35] : memref<1x32xf32, #tpu.memory_space<vmem>>, vector<1x32xf32>
    %c0_36 = arith.constant 0 : index
    %c0_37 = arith.constant 0 : index
    %67 = vector.load %arg9[%c0_36, %c0_37] : memref<1x32xf32, #tpu.memory_space<vmem>>, vector<1x32xf32>
    %cst_38 = arith.constant dense<0.000000e+00> : vector<4xf32>
    %68 = vector.multi_reduction <add>, %65, %cst_38 [1] : vector<4x32xf32> to vector<4xf32>
    %69 = vector.shape_cast %68 : vector<4xf32> to vector<4x1xf32>
    %cst_39 = arith.constant 3.200000e+01 : f32
    %70 = vector.broadcast %cst_39 : f32 to vector<4x1xf32>
    %71 = arith.divf %69, %70 : vector<4x1xf32>
    %72 = vector.broadcast %71 : vector<4x1xf32> to vector<4x32xf32>
    %73 = arith.subf %65, %72 : vector<4x32xf32>
    %74 = arith.mulf %73, %73 : vector<4x32xf32>
    %cst_40 = arith.constant dense<0.000000e+00> : vector<4xf32>
    %75 = vector.multi_reduction <add>, %74, %cst_40 [1] : vector<4x32xf32> to vector<4xf32>
    %76 = vector.shape_cast %75 : vector<4xf32> to vector<4x1xf32>
    %cst_41 = arith.constant 3.200000e+01 : f32
    %77 = vector.broadcast %cst_41 : f32 to vector<4x1xf32>
    %78 = arith.divf %76, %77 : vector<4x1xf32>
    %79 = vector.broadcast %71 : vector<4x1xf32> to vector<4x32xf32>
    %80 = arith.subf %65, %79 : vector<4x32xf32>
    %cst_42 = arith.constant 9.99999974E-6 : f32
    %81 = vector.broadcast %cst_42 : f32 to vector<4x1xf32>
    %82 = arith.addf %78, %81 : vector<4x1xf32>
    %83 = math.rsqrt %82 : vector<4x1xf32>
    %84 = vector.broadcast %83 : vector<4x1xf32> to vector<4x32xf32>
    %85 = arith.mulf %80, %84 : vector<4x32xf32>
    %86 = vector.broadcast %66 : vector<1x32xf32> to vector<4x32xf32>
    %87 = arith.mulf %85, %86 : vector<4x32xf32>
    %88 = vector.broadcast %67 : vector<1x32xf32> to vector<4x32xf32>
    %89 = arith.addf %87, %88 : vector<4x32xf32>
    %c0_43 = arith.constant 0 : index
    %c0_44 = arith.constant 0 : index
    %90 = vector.load %arg10[%c0_43, %c0_44] : memref<32x64xf32, #tpu.memory_space<vmem>>, vector<32x64xf32>
    %cst_45 = arith.constant dense<0.000000e+00> : vector<4x64xf32>
    %91 = tpu.matmul %89, %90, %cst_45 {dimension_numbers = #tpu.dot_dimension_numbers<[1], [0], [0], [1], [0, 0, 1, 1], [], []>} : vector<4x32xf32>, vector<32x64xf32>, vector<4x64xf32> -> vector<4x64xf32>
    %cst_46 = arith.constant 0.176776692 : f32
    %92 = vector.broadcast %cst_46 : f32 to vector<4x64xf32>
    %93 = arith.mulf %91, %92 : vector<4x64xf32>
    %c0_47 = arith.constant 0 : index
    %c0_48 = arith.constant 0 : index
    %94 = vector.load %arg11[%c0_47, %c0_48] : memref<32x128xf32, #tpu.memory_space<vmem>>, vector<32x128xf32>
    %cst_49 = arith.constant dense<0.000000e+00> : vector<4x128xf32>
    %95 = tpu.matmul %5, %94, %cst_49 {dimension_numbers = #tpu.dot_dimension_numbers<[1], [0], [0], [1], [0, 0, 1, 1], [], []>} : vector<4x32xf32>, vector<32x128xf32>, vector<4x128xf32> -> vector<4x128xf32>
    %c0_50 = arith.constant 0 : index
    %c0_51 = arith.constant 0 : index
    %96 = vector.load %arg12[%c0_50, %c0_51] : memref<64x32xf32, #tpu.memory_space<vmem>>, vector<64x32xf32>
    %cst_52 = arith.constant 0.000000e+00 : f32
    %97 = vector.broadcast %cst_52 : f32 to vector<4x32xf32>
    %98 = vector.extract_strided_slice %93 {offsets = [0, 0], sizes = [4, 32], strides = [1, 1]} : vector<4x64xf32> to vector<4x32xf32>
    %99 = vector.extract_strided_slice %95 {offsets = [0, 0], sizes = [4, 32], strides = [1, 1]} : vector<4x128xf32> to vector<4x32xf32>
    %100 = vector.extract_strided_slice %95 {offsets = [0, 64], sizes = [4, 32], strides = [1, 1]} : vector<4x128xf32> to vector<4x32xf32>
    %cst_53 = arith.constant dense<0.000000e+00> : vector<4x4xf32>
    %101 = tpu.matmul %98, %99, %cst_53 {dimension_numbers = #tpu.dot_dimension_numbers<[1], [1], [0], [0], [0, 0, 1, 0], [], []>} : vector<4x32xf32>, vector<4x32xf32>, vector<4x4xf32> -> vector<4x4xf32>
    %cst_54 = arith.constant dense<0xFF800000> : vector<4xf32>
    %102 = vector.multi_reduction <maximumf>, %101, %cst_54 [1] : vector<4x4xf32> to vector<4xf32>
    %103 = vector.shape_cast %102 : vector<4xf32> to vector<4x1xf32>
    %104 = vector.broadcast %103 : vector<4x1xf32> to vector<4x4xf32>
    %105 = arith.subf %101, %104 : vector<4x4xf32>
    %106 = math.exp %105 : vector<4x4xf32>
    %cst_55 = arith.constant dense<0.000000e+00> : vector<4xf32>
    %107 = vector.multi_reduction <add>, %106, %cst_55 [1] : vector<4x4xf32> to vector<4xf32>
    %108 = vector.shape_cast %107 : vector<4xf32> to vector<4x1xf32>
    %109 = tpu.reciprocal %108 {approx = true} : vector<4x1xf32> -> vector<4x1xf32>
    %110 = vector.broadcast %109 : vector<4x1xf32> to vector<4x4xf32>
    %111 = arith.mulf %106, %110 : vector<4x4xf32>
    %cst_56 = arith.constant dense<0.000000e+00> : vector<4x32xf32>
    %112 = tpu.matmul %111, %100, %cst_56 {dimension_numbers = #tpu.dot_dimension_numbers<[1], [0], [0], [1], [0, 0, 1, 1], [], []>} : vector<4x4xf32>, vector<4x32xf32>, vector<4x32xf32> -> vector<4x32xf32>
    %113 = vector.extract_strided_slice %96 {offsets = [0, 0], sizes = [32, 32], strides = [1, 1]} : vector<64x32xf32> to vector<32x32xf32>
    %cst_57 = arith.constant dense<0.000000e+00> : vector<4x32xf32>
    %114 = tpu.matmul %112, %113, %cst_57 {dimension_numbers = #tpu.dot_dimension_numbers<[1], [0], [0], [1], [0, 0, 1, 1], [], []>} : vector<4x32xf32>, vector<32x32xf32>, vector<4x32xf32> -> vector<4x32xf32>
    %115 = arith.addf %97, %114 : vector<4x32xf32>
    %116 = vector.extract_strided_slice %93 {offsets = [0, 32], sizes = [4, 32], strides = [1, 1]} : vector<4x64xf32> to vector<4x32xf32>
    %117 = vector.extract_strided_slice %95 {offsets = [0, 32], sizes = [4, 32], strides = [1, 1]} : vector<4x128xf32> to vector<4x32xf32>
    %118 = vector.extract_strided_slice %95 {offsets = [0, 96], sizes = [4, 32], strides = [1, 1]} : vector<4x128xf32> to vector<4x32xf32>
    %cst_58 = arith.constant dense<0.000000e+00> : vector<4x4xf32>
    %119 = tpu.matmul %116, %117, %cst_58 {dimension_numbers = #tpu.dot_dimension_numbers<[1], [1], [0], [0], [0, 0, 1, 0], [], []>} : vector<4x32xf32>, vector<4x32xf32>, vector<4x4xf32> -> vector<4x4xf32>
    %cst_59 = arith.constant dense<0xFF800000> : vector<4xf32>
    %120 = vector.multi_reduction <maximumf>, %119, %cst_59 [1] : vector<4x4xf32> to vector<4xf32>
    %121 = vector.shape_cast %120 : vector<4xf32> to vector<4x1xf32>
    %122 = vector.broadcast %121 : vector<4x1xf32> to vector<4x4xf32>
    %123 = arith.subf %119, %122 : vector<4x4xf32>
    %124 = math.exp %123 : vector<4x4xf32>
    %cst_60 = arith.constant dense<0.000000e+00> : vector<4xf32>
    %125 = vector.multi_reduction <add>, %124, %cst_60 [1] : vector<4x4xf32> to vector<4xf32>
    %126 = vector.shape_cast %125 : vector<4xf32> to vector<4x1xf32>
    %127 = tpu.reciprocal %126 {approx = true} : vector<4x1xf32> -> vector<4x1xf32>
    %128 = vector.broadcast %127 : vector<4x1xf32> to vector<4x4xf32>
    %129 = arith.mulf %124, %128 : vector<4x4xf32>
    %cst_61 = arith.constant dense<0.000000e+00> : vector<4x32xf32>
    %130 = tpu.matmul %129, %118, %cst_61 {dimension_numbers = #tpu.dot_dimension_numbers<[1], [0], [0], [1], [0, 0, 1, 1], [], []>} : vector<4x4xf32>, vector<4x32xf32>, vector<4x32xf32> -> vector<4x32xf32>
    %131 = vector.extract_strided_slice %96 {offsets = [32, 0], sizes = [32, 32], strides = [1, 1]} : vector<64x32xf32> to vector<32x32xf32>
    %cst_62 = arith.constant dense<0.000000e+00> : vector<4x32xf32>
    %132 = tpu.matmul %130, %131, %cst_62 {dimension_numbers = #tpu.dot_dimension_numbers<[1], [0], [0], [1], [0, 0, 1, 1], [], []>} : vector<4x32xf32>, vector<32x32xf32>, vector<4x32xf32> -> vector<4x32xf32>
    %133 = arith.addf %115, %132 : vector<4x32xf32>
    %134 = arith.addf %133, %89 : vector<4x32xf32>
    %c0_63 = arith.constant 0 : index
    %c0_64 = arith.constant 0 : index
    %135 = vector.load %arg13[%c0_63, %c0_64] : memref<1x32xf32, #tpu.memory_space<vmem>>, vector<1x32xf32>
    %c0_65 = arith.constant 0 : index
    %c0_66 = arith.constant 0 : index
    %136 = vector.load %arg14[%c0_65, %c0_66] : memref<1x32xf32, #tpu.memory_space<vmem>>, vector<1x32xf32>
    %cst_67 = arith.constant dense<0.000000e+00> : vector<4xf32>
    %137 = vector.multi_reduction <add>, %134, %cst_67 [1] : vector<4x32xf32> to vector<4xf32>
    %138 = vector.shape_cast %137 : vector<4xf32> to vector<4x1xf32>
    %cst_68 = arith.constant 3.200000e+01 : f32
    %139 = vector.broadcast %cst_68 : f32 to vector<4x1xf32>
    %140 = arith.divf %138, %139 : vector<4x1xf32>
    %141 = vector.broadcast %140 : vector<4x1xf32> to vector<4x32xf32>
    %142 = arith.subf %134, %141 : vector<4x32xf32>
    %143 = arith.mulf %142, %142 : vector<4x32xf32>
    %cst_69 = arith.constant dense<0.000000e+00> : vector<4xf32>
    %144 = vector.multi_reduction <add>, %143, %cst_69 [1] : vector<4x32xf32> to vector<4xf32>
    %145 = vector.shape_cast %144 : vector<4xf32> to vector<4x1xf32>
    %cst_70 = arith.constant 3.200000e+01 : f32
    %146 = vector.broadcast %cst_70 : f32 to vector<4x1xf32>
    %147 = arith.divf %145, %146 : vector<4x1xf32>
    %148 = vector.broadcast %140 : vector<4x1xf32> to vector<4x32xf32>
    %149 = arith.subf %134, %148 : vector<4x32xf32>
    %cst_71 = arith.constant 9.99999974E-6 : f32
    %150 = vector.broadcast %cst_71 : f32 to vector<4x1xf32>
    %151 = arith.addf %147, %150 : vector<4x1xf32>
    %152 = math.rsqrt %151 : vector<4x1xf32>
    %153 = vector.broadcast %152 : vector<4x1xf32> to vector<4x32xf32>
    %154 = arith.mulf %149, %153 : vector<4x32xf32>
    %155 = vector.broadcast %135 : vector<1x32xf32> to vector<4x32xf32>
    %156 = arith.mulf %154, %155 : vector<4x32xf32>
    %157 = vector.broadcast %136 : vector<1x32xf32> to vector<4x32xf32>
    %158 = arith.addf %156, %157 : vector<4x32xf32>
    %c0_72 = arith.constant 0 : index
    %c0_73 = arith.constant 0 : index
    %159 = vector.load %arg15[%c0_72, %c0_73] : memref<32x64xf32, #tpu.memory_space<vmem>>, vector<32x64xf32>
    %cst_74 = arith.constant dense<0.000000e+00> : vector<4x64xf32>
    %160 = tpu.matmul %158, %159, %cst_74 {dimension_numbers = #tpu.dot_dimension_numbers<[1], [0], [0], [1], [0, 0, 1, 1], [], []>} : vector<4x32xf32>, vector<32x64xf32>, vector<4x64xf32> -> vector<4x64xf32>
    %c0_75 = arith.constant 0 : index
    %c0_76 = arith.constant 0 : index
    %161 = vector.load %arg16[%c0_75, %c0_76] : memref<1x64xf32, #tpu.memory_space<vmem>>, vector<1x64xf32>
    %162 = vector.broadcast %161 : vector<1x64xf32> to vector<4x64xf32>
    %163 = arith.addf %160, %162 : vector<4x64xf32>
    %cst_77 = arith.constant 0.000000e+00 : f32
    %164 = vector.broadcast %cst_77 : f32 to vector<4x64xf32>
    %165 = arith.maximumf %163, %164 : vector<4x64xf32>
    %c0_78 = arith.constant 0 : index
    %c0_79 = arith.constant 0 : index
    %166 = vector.load %arg17[%c0_78, %c0_79] : memref<64x32xf32, #tpu.memory_space<vmem>>, vector<64x32xf32>
    %cst_80 = arith.constant dense<0.000000e+00> : vector<4x32xf32>
    %167 = tpu.matmul %165, %166, %cst_80 {dimension_numbers = #tpu.dot_dimension_numbers<[1], [0], [0], [1], [0, 0, 1, 1], [], []>} : vector<4x64xf32>, vector<64x32xf32>, vector<4x32xf32> -> vector<4x32xf32>
    %c0_81 = arith.constant 0 : index
    %c0_82 = arith.constant 0 : index
    %168 = vector.load %arg18[%c0_81, %c0_82] : memref<1x32xf32, #tpu.memory_space<vmem>>, vector<1x32xf32>
    %169 = vector.broadcast %168 : vector<1x32xf32> to vector<4x32xf32>
    %170 = arith.addf %167, %169 : vector<4x32xf32>
    %171 = arith.addf %170, %158 : vector<4x32xf32>
    %c0_83 = arith.constant 0 : index
    %c0_84 = arith.constant 0 : index
    %172 = vector.load %arg19[%c0_83, %c0_84] : memref<1x32xf32, #tpu.memory_space<vmem>>, vector<1x32xf32>
    %c0_85 = arith.constant 0 : index
    %c0_86 = arith.constant 0 : index
    %173 = vector.load %arg20[%c0_85, %c0_86] : memref<1x32xf32, #tpu.memory_space<vmem>>, vector<1x32xf32>
    %cst_87 = arith.constant dense<0.000000e+00> : vector<4xf32>
    %174 = vector.multi_reduction <add>, %171, %cst_87 [1] : vector<4x32xf32> to vector<4xf32>
    %175 = vector.shape_cast %174 : vector<4xf32> to vector<4x1xf32>
    %cst_88 = arith.constant 3.200000e+01 : f32
    %176 = vector.broadcast %cst_88 : f32 to vector<4x1xf32>
    %177 = arith.divf %175, %176 : vector<4x1xf32>
    %178 = vector.broadcast %177 : vector<4x1xf32> to vector<4x32xf32>
    %179 = arith.subf %171, %178 : vector<4x32xf32>
    %180 = arith.mulf %179, %179 : vector<4x32xf32>
    %cst_89 = arith.constant dense<0.000000e+00> : vector<4xf32>
    %181 = vector.multi_reduction <add>, %180, %cst_89 [1] : vector<4x32xf32> to vector<4xf32>
    %182 = vector.shape_cast %181 : vector<4xf32> to vector<4x1xf32>
    %cst_90 = arith.constant 3.200000e+01 : f32
    %183 = vector.broadcast %cst_90 : f32 to vector<4x1xf32>
    %184 = arith.divf %182, %183 : vector<4x1xf32>
    %185 = vector.broadcast %177 : vector<4x1xf32> to vector<4x32xf32>
    %186 = arith.subf %171, %185 : vector<4x32xf32>
    %cst_91 = arith.constant 9.99999974E-6 : f32
    %187 = vector.broadcast %cst_91 : f32 to vector<4x1xf32>
    %188 = arith.addf %184, %187 : vector<4x1xf32>
    %189 = math.rsqrt %188 : vector<4x1xf32>
    %190 = vector.broadcast %189 : vector<4x1xf32> to vector<4x32xf32>
    %191 = arith.mulf %186, %190 : vector<4x32xf32>
    %192 = vector.broadcast %172 : vector<1x32xf32> to vector<4x32xf32>
    %193 = arith.mulf %191, %192 : vector<4x32xf32>
    %194 = vector.broadcast %173 : vector<1x32xf32> to vector<4x32xf32>
    %195 = arith.addf %193, %194 : vector<4x32xf32>
    %c0_92 = arith.constant 0 : index
    %c0_93 = arith.constant 0 : index
    %c0_94 = arith.constant 0 : index
    %196 = vector.load %arg21[%c0_92, %c0_93, %c0_94] : memref<1x4x32xf32, #tpu.memory_space<vmem>>, vector<1x4x32xf32>
    %197 = vector.shape_cast %196 : vector<1x4x32xf32> to vector<4x32xf32>
    %198 = vector.shape_cast %195 : vector<4x32xf32> to vector<1x4x32xf32>
    tpu.vector_store %arg21[%c0_92, %c0_93, %c0_94], %198 {strides = array<i32>} : memref<1x4x32xf32, #tpu.memory_space<vmem>>, vector<1x4x32xf32>,
    return
  }
  func.func @transform_0(%arg0: i32) -> (i32, i32, i32) {
    %c0_i32 = arith.constant 0 : i32
    %c0_i32_0 = arith.constant 0 : i32
    %c0_i32_1 = arith.constant 0 : i32
    return %arg0, %c0_i32, %c0_i32_0 : i32, i32, i32
  }
  func.func @transform_1(%arg0: i32) -> (i32, i32, i32) {
    %c0_i32 = arith.constant 0 : i32
    %c0_i32_0 = arith.constant 0 : i32
    %c0_i32_1 = arith.constant 0 : i32
    return %arg0, %c0_i32, %c0_i32_0 : i32, i32, i32
  }
  func.func @transform_2(%arg0: i32) -> (i32, i32, i32) {
    %c0_i32 = arith.constant 0 : i32
    %c0_i32_0 = arith.constant 0 : i32
    %c0_i32_1 = arith.constant 0 : i32
    return %arg0, %c0_i32, %c0_i32_0 : i32, i32, i32
  }
  func.func @transform_3(%arg0: i32) -> (i32, i32, i32) {
    %c0_i32 = arith.constant 0 : i32
    %c0_i32_0 = arith.constant 0 : i32
    %c0_i32_1 = arith.constant 0 : i32
    return %arg0, %c0_i32, %c0_i32_0 : i32, i32, i32
  }
  func.func @transform_4(%arg0: i32) -> (i32, i32) {
    %c0_i32 = arith.constant 0 : i32
    %c0_i32_0 = arith.constant 0 : i32
    %c0_i32_1 = arith.constant 0 : i32
    return %c0_i32, %c0_i32_0 : i32, i32
  }
  func.func @transform_5(%arg0: i32) -> (i32, i32) {
    %c0_i32 = arith.constant 0 : i32
    %c0_i32_0 = arith.constant 0 : i32
    %c0_i32_1 = arith.constant 0 : i32
    return %c0_i32, %c0_i32_0 : i32, i32
  }
  func.func @transform_6(%arg0: i32) -> (i32, i32) {
    %c0_i32 = arith.constant 0 : i32
    %c0_i32_0 = arith.constant 0 : i32
    %c0_i32_1 = arith.constant 0 : i32
    return %c0_i32, %c0_i32_0 : i32, i32
  }
  func.func @transform_7(%arg0: i32) -> (i32, i32) {
    %c0_i32 = arith.constant 0 : i32
    %c0_i32_0 = arith.constant 0 : i32
    %c0_i32_1 = arith.constant 0 : i32
    return %c0_i32, %c0_i32_0 : i32, i32
  }
  func.func @transform_8(%arg0: i32) -> (i32, i32) {
    %c0_i32 = arith.constant 0 : i32
    %c0_i32_0 = arith.constant 0 : i32
    %c0_i32_1 = arith.constant 0 : i32
    return %c0_i32, %c0_i32_0 : i32, i32
  }
  func.func @transform_9(%arg0: i32) -> (i32, i32) {
    %c0_i32 = arith.constant 0 : i32
    %c0_i32_0 = arith.constant 0 : i32
    %c0_i32_1 = arith.constant 0 : i32
    return %c0_i32, %c0_i32_0 : i32, i32
  }
  func.func @transform_10(%arg0: i32) -> (i32, i32) {
    %c0_i32 = arith.constant 0 : i32
    %c0_i32_0 = arith.constant 0 : i32
    %c0_i32_1 = arith.constant 0 : i32
    return %c0_i32, %c0_i32_0 : i32, i32
  }
  func.func @transform_11(%arg0: i32) -> (i32, i32) {
    %c0_i32 = arith.constant 0 : i32
    %c0_i32_0 = arith.constant 0 : i32
    %c0_i32_1 = arith.constant 0 : i32
    return %c0_i32, %c0_i32_0 : i32, i32
  }
  func.func @transform_12(%arg0: i32) -> (i32, i32) {
    %c0_i32 = arith.constant 0 : i32
    %c0_i32_0 = arith.constant 0 : i32
    %c0_i32_1 = arith.constant 0 : i32
    return %c0_i32, %c0_i32_0 : i32, i32
  }
  func.func @transform_13(%arg0: i32) -> (i32, i32) {
    %c0_i32 = arith.constant 0 : i32
    %c0_i32_0 = arith.constant 0 : i32
    %c0_i32_1 = arith.constant 0 : i32
    return %c0_i32, %c0_i32_0 : i32, i32
  }
  func.func @transform_14(%arg0: i32) -> (i32, i32) {
    %c0_i32 = arith.constant 0 : i32
    %c0_i32_0 = arith.constant 0 : i32
    %c0_i32_1 = arith.constant 0 : i32
    return %c0_i32, %c0_i32_0 : i32, i32
  }
  func.func @transform_15(%arg0: i32) -> (i32, i32) {
    %c0_i32 = arith.constant 0 : i32
    %c0_i32_0 = arith.constant 0 : i32
    %c0_i32_1 = arith.constant 0 : i32
    return %c0_i32, %c0_i32_0 : i32, i32
  }
  func.func @transform_16(%arg0: i32) -> (i32, i32) {
    %c0_i32 = arith.constant 0 : i32
    %c0_i32_0 = arith.constant 0 : i32
    %c0_i32_1 = arith.constant 0 : i32
    return %c0_i32, %c0_i32_0 : i32, i32
  }
  func.func @transform_17(%arg0: i32) -> (i32, i32) {
    %c0_i32 = arith.constant 0 : i32
    %c0_i32_0 = arith.constant 0 : i32
    %c0_i32_1 = arith.constant 0 : i32
    return %c0_i32, %c0_i32_0 : i32, i32
  }
  func.func @transform_18(%arg0: i32) -> (i32, i32) {
    %c0_i32 = arith.constant 0 : i32
    %c0_i32_0 = arith.constant 0 : i32
    %c0_i32_1 = arith.constant 0 : i32
    return %c0_i32, %c0_i32_0 : i32, i32
  }
  func.func @transform_19(%arg0: i32) -> (i32, i32) {
    %c0_i32 = arith.constant 0 : i32
    %c0_i32_0 = arith.constant 0 : i32
    %c0_i32_1 = arith.constant 0 : i32
    return %c0_i32, %c0_i32_0 : i32, i32
  }
  func.func @transform_20(%arg0: i32) -> (i32, i32, i32) {
    %c0_i32 = arith.constant 0 : i32
    %c0_i32_0 = arith.constant 0 : i32
    %c0_i32_1 = arith.constant 0 : i32
    return %arg0, %c0_i32, %c0_i32_0 : i32, i32, i32
  }
}

module attributes {stable_mosaic.version = 11 : i64} {
  func.func @_gated_fusion_kernel(%arg0: i32, %arg1: memref<1x8x32xf32, #tpu.memory_space<vmem>>, %arg2: memref<1x8x32xf32, #tpu.memory_space<vmem>>, %arg3: memref<1x8x32xf32, #tpu.memory_space<vmem>>, %arg4: memref<32x32xf32, #tpu.memory_space<vmem>>, %arg5: memref<32x32xf32, #tpu.memory_space<vmem>>, %arg6: memref<32x32xf32, #tpu.memory_space<vmem>>, %arg7: memref<96x32xf32, #tpu.memory_space<vmem>>, %arg8: memref<96x32xf32, #tpu.memory_space<vmem>>, %arg9: memref<96x32xf32, #tpu.memory_space<vmem>>, %arg10: memref<8x32xf32, #tpu.memory_space<vmem>>, %arg11: memref<8x32xf32, #tpu.memory_space<vmem>>, %arg12: memref<8x32xf32, #tpu.memory_space<vmem>>, %arg13: memref<1x8x32xf32, #tpu.memory_space<vmem>>) attributes {dimension_semantics = [#tpu.dimension_semantics<parallel>], iteration_bounds = array<i64: 2>, scalar_prefetch = 0 : i64, scratch_operands = 0 : i64, tpu.core_type = #tpu.core_type<tc>, window_params = [{transform_indices = @transform_0, window_bounds = array<i64: 1, 8, 32>}, {transform_indices = @transform_1, window_bounds = array<i64: 1, 8, 32>}, {transform_indices = @transform_2, window_bounds = array<i64: 1, 8, 32>}, {pipeline_mode = #tpu.pipeline_mode<synchronous>, transform_indices = @transform_3, window_bounds = array<i64: 32, 32>}, {pipeline_mode = #tpu.pipeline_mode<synchronous>, transform_indices = @transform_4, window_bounds = array<i64: 32, 32>}, {pipeline_mode = #tpu.pipeline_mode<synchronous>, transform_indices = @transform_5, window_bounds = array<i64: 32, 32>}, {pipeline_mode = #tpu.pipeline_mode<synchronous>, transform_indices = @transform_6, window_bounds = array<i64: 96, 32>}, {pipeline_mode = #tpu.pipeline_mode<synchronous>, transform_indices = @transform_7, window_bounds = array<i64: 96, 32>}, {pipeline_mode = #tpu.pipeline_mode<synchronous>, transform_indices = @transform_8, window_bounds = array<i64: 96, 32>}, {pipeline_mode = #tpu.pipeline_mode<synchronous>, transform_indices = @transform_9, window_bounds = array<i64: 8, 32>}, {pipeline_mode = #tpu.pipeline_mode<synchronous>, transform_indices = @transform_10, window_bounds = array<i64: 8, 32>}, {pipeline_mode = #tpu.pipeline_mode<synchronous>, transform_indices = @transform_11, window_bounds = array<i64: 8, 32>}, {transform_indices = @transform_12, window_bounds = array<i64: 1, 8, 32>}]} {
    %c0 = arith.constant 0 : index
    %c0_0 = arith.constant 0 : index
    %c0_1 = arith.constant 0 : index
    %0 = vector.load %arg1[%c0, %c0_0, %c0_1] : memref<1x8x32xf32, #tpu.memory_space<vmem>>, vector<1x8x32xf32>
    %1 = vector.shape_cast %0 : vector<1x8x32xf32> to vector<8x32xf32>
    %c0_2 = arith.constant 0 : index
    %c0_3 = arith.constant 0 : index
    %c0_4 = arith.constant 0 : index
    %2 = vector.load %arg2[%c0_2, %c0_3, %c0_4] : memref<1x8x32xf32, #tpu.memory_space<vmem>>, vector<1x8x32xf32>
    %3 = vector.shape_cast %2 : vector<1x8x32xf32> to vector<8x32xf32>
    %c0_5 = arith.constant 0 : index
    %c0_6 = arith.constant 0 : index
    %c0_7 = arith.constant 0 : index
    %4 = vector.load %arg3[%c0_5, %c0_6, %c0_7] : memref<1x8x32xf32, #tpu.memory_space<vmem>>, vector<1x8x32xf32>
    %5 = vector.shape_cast %4 : vector<1x8x32xf32> to vector<8x32xf32>
    %c0_8 = arith.constant 0 : index
    %c0_9 = arith.constant 0 : index
    %6 = vector.load %arg4[%c0_8, %c0_9] : memref<32x32xf32, #tpu.memory_space<vmem>>, vector<32x32xf32>
    %cst = arith.constant dense<0.000000e+00> : vector<8x32xf32>
    %7 = tpu.matmul %1, %6, %cst {dimension_numbers = #tpu.dot_dimension_numbers<[1], [0], [0], [1], [0, 0, 1, 1], [], []>} : vector<8x32xf32>, vector<32x32xf32>, vector<8x32xf32> -> vector<8x32xf32>
    %8 = math.tanh %7 : vector<8x32xf32>
    %c0_10 = arith.constant 0 : index
    %c0_11 = arith.constant 0 : index
    %9 = vector.load %arg5[%c0_10, %c0_11] : memref<32x32xf32, #tpu.memory_space<vmem>>, vector<32x32xf32>
    %cst_12 = arith.constant dense<0.000000e+00> : vector<8x32xf32>
    %10 = tpu.matmul %3, %9, %cst_12 {dimension_numbers = #tpu.dot_dimension_numbers<[1], [0], [0], [1], [0, 0, 1, 1], [], []>} : vector<8x32xf32>, vector<32x32xf32>, vector<8x32xf32> -> vector<8x32xf32>
    %11 = math.tanh %10 : vector<8x32xf32>
    %c0_13 = arith.constant 0 : index
    %c0_14 = arith.constant 0 : index
    %12 = vector.load %arg6[%c0_13, %c0_14] : memref<32x32xf32, #tpu.memory_space<vmem>>, vector<32x32xf32>
    %cst_15 = arith.constant dense<0.000000e+00> : vector<8x32xf32>
    %13 = tpu.matmul %5, %12, %cst_15 {dimension_numbers = #tpu.dot_dimension_numbers<[1], [0], [0], [1], [0, 0, 1, 1], [], []>} : vector<8x32xf32>, vector<32x32xf32>, vector<8x32xf32> -> vector<8x32xf32>
    %14 = math.tanh %13 : vector<8x32xf32>
    %c0_16 = arith.constant 0 : index
    %c0_17 = arith.constant 0 : index
    %15 = vector.load %arg7[%c0_16, %c0_17] : memref<96x32xf32, #tpu.memory_space<vmem>>, vector<96x32xf32>
    %16 = vector.extract_strided_slice %15 {offsets = [0, 0], sizes = [32, 32], strides = [1, 1]} : vector<96x32xf32> to vector<32x32xf32>
    %cst_18 = arith.constant dense<0.000000e+00> : vector<8x32xf32>
    %17 = tpu.matmul %1, %16, %cst_18 {dimension_numbers = #tpu.dot_dimension_numbers<[1], [0], [0], [1], [0, 0, 1, 1], [], []>} : vector<8x32xf32>, vector<32x32xf32>, vector<8x32xf32> -> vector<8x32xf32>
    %18 = vector.extract_strided_slice %15 {offsets = [32, 0], sizes = [32, 32], strides = [1, 1]} : vector<96x32xf32> to vector<32x32xf32>
    %cst_19 = arith.constant dense<0.000000e+00> : vector<8x32xf32>
    %19 = tpu.matmul %3, %18, %cst_19 {dimension_numbers = #tpu.dot_dimension_numbers<[1], [0], [0], [1], [0, 0, 1, 1], [], []>} : vector<8x32xf32>, vector<32x32xf32>, vector<8x32xf32> -> vector<8x32xf32>
    %20 = arith.addf %17, %19 : vector<8x32xf32>
    %21 = vector.extract_strided_slice %15 {offsets = [64, 0], sizes = [32, 32], strides = [1, 1]} : vector<96x32xf32> to vector<32x32xf32>
    %cst_20 = arith.constant dense<0.000000e+00> : vector<8x32xf32>
    %22 = tpu.matmul %5, %21, %cst_20 {dimension_numbers = #tpu.dot_dimension_numbers<[1], [0], [0], [1], [0, 0, 1, 1], [], []>} : vector<8x32xf32>, vector<32x32xf32>, vector<8x32xf32> -> vector<8x32xf32>
    %23 = arith.addf %20, %22 : vector<8x32xf32>
    %24 = arith.negf %23 : vector<8x32xf32>
    %25 = math.exp %24 : vector<8x32xf32>
    %cst_21 = arith.constant 1.000000e+00 : f32
    %26 = vector.broadcast %cst_21 : f32 to vector<8x32xf32>
    %27 = arith.addf %26, %25 : vector<8x32xf32>
    %28 = arith.divf %26, %27 : vector<8x32xf32>
    %29 = arith.mulf %28, %8 : vector<8x32xf32>
    %c0_22 = arith.constant 0 : index
    %c0_23 = arith.constant 0 : index
    %30 = vector.load %arg8[%c0_22, %c0_23] : memref<96x32xf32, #tpu.memory_space<vmem>>, vector<96x32xf32>
    %31 = vector.extract_strided_slice %30 {offsets = [0, 0], sizes = [32, 32], strides = [1, 1]} : vector<96x32xf32> to vector<32x32xf32>
    %cst_24 = arith.constant dense<0.000000e+00> : vector<8x32xf32>
    %32 = tpu.matmul %1, %31, %cst_24 {dimension_numbers = #tpu.dot_dimension_numbers<[1], [0], [0], [1], [0, 0, 1, 1], [], []>} : vector<8x32xf32>, vector<32x32xf32>, vector<8x32xf32> -> vector<8x32xf32>
    %33 = vector.extract_strided_slice %30 {offsets = [32, 0], sizes = [32, 32], strides = [1, 1]} : vector<96x32xf32> to vector<32x32xf32>
    %cst_25 = arith.constant dense<0.000000e+00> : vector<8x32xf32>
    %34 = tpu.matmul %3, %33, %cst_25 {dimension_numbers = #tpu.dot_dimension_numbers<[1], [0], [0], [1], [0, 0, 1, 1], [], []>} : vector<8x32xf32>, vector<32x32xf32>, vector<8x32xf32> -> vector<8x32xf32>
    %35 = arith.addf %32, %34 : vector<8x32xf32>
    %36 = vector.extract_strided_slice %30 {offsets = [64, 0], sizes = [32, 32], strides = [1, 1]} : vector<96x32xf32> to vector<32x32xf32>
    %cst_26 = arith.constant dense<0.000000e+00> : vector<8x32xf32>
    %37 = tpu.matmul %5, %36, %cst_26 {dimension_numbers = #tpu.dot_dimension_numbers<[1], [0], [0], [1], [0, 0, 1, 1], [], []>} : vector<8x32xf32>, vector<32x32xf32>, vector<8x32xf32> -> vector<8x32xf32>
    %38 = arith.addf %35, %37 : vector<8x32xf32>
    %39 = arith.negf %38 : vector<8x32xf32>
    %40 = math.exp %39 : vector<8x32xf32>
    %cst_27 = arith.constant 1.000000e+00 : f32
    %41 = vector.broadcast %cst_27 : f32 to vector<8x32xf32>
    %42 = arith.addf %41, %40 : vector<8x32xf32>
    %43 = arith.divf %41, %42 : vector<8x32xf32>
    %44 = arith.mulf %43, %11 : vector<8x32xf32>
    %c0_28 = arith.constant 0 : index
    %c0_29 = arith.constant 0 : index
    %45 = vector.load %arg9[%c0_28, %c0_29] : memref<96x32xf32, #tpu.memory_space<vmem>>, vector<96x32xf32>
    %46 = vector.extract_strided_slice %45 {offsets = [0, 0], sizes = [32, 32], strides = [1, 1]} : vector<96x32xf32> to vector<32x32xf32>
    %cst_30 = arith.constant dense<0.000000e+00> : vector<8x32xf32>
    %47 = tpu.matmul %1, %46, %cst_30 {dimension_numbers = #tpu.dot_dimension_numbers<[1], [0], [0], [1], [0, 0, 1, 1], [], []>} : vector<8x32xf32>, vector<32x32xf32>, vector<8x32xf32> -> vector<8x32xf32>
    %48 = vector.extract_strided_slice %45 {offsets = [32, 0], sizes = [32, 32], strides = [1, 1]} : vector<96x32xf32> to vector<32x32xf32>
    %cst_31 = arith.constant dense<0.000000e+00> : vector<8x32xf32>
    %49 = tpu.matmul %3, %48, %cst_31 {dimension_numbers = #tpu.dot_dimension_numbers<[1], [0], [0], [1], [0, 0, 1, 1], [], []>} : vector<8x32xf32>, vector<32x32xf32>, vector<8x32xf32> -> vector<8x32xf32>
    %50 = arith.addf %47, %49 : vector<8x32xf32>
    %51 = vector.extract_strided_slice %45 {offsets = [64, 0], sizes = [32, 32], strides = [1, 1]} : vector<96x32xf32> to vector<32x32xf32>
    %cst_32 = arith.constant dense<0.000000e+00> : vector<8x32xf32>
    %52 = tpu.matmul %5, %51, %cst_32 {dimension_numbers = #tpu.dot_dimension_numbers<[1], [0], [0], [1], [0, 0, 1, 1], [], []>} : vector<8x32xf32>, vector<32x32xf32>, vector<8x32xf32> -> vector<8x32xf32>
    %53 = arith.addf %50, %52 : vector<8x32xf32>
    %54 = arith.negf %53 : vector<8x32xf32>
    %55 = math.exp %54 : vector<8x32xf32>
    %cst_33 = arith.constant 1.000000e+00 : f32
    %56 = vector.broadcast %cst_33 : f32 to vector<8x32xf32>
    %57 = arith.addf %56, %55 : vector<8x32xf32>
    %58 = arith.divf %56, %57 : vector<8x32xf32>
    %59 = arith.mulf %58, %14 : vector<8x32xf32>
    %c0_34 = arith.constant 0 : index
    %c0_35 = arith.constant 0 : index
    %60 = vector.load %arg10[%c0_34, %c0_35] : memref<8x32xf32, #tpu.memory_space<vmem>>, vector<8x32xf32>
    %61 = arith.mulf %60, %29 : vector<8x32xf32>
    %c0_36 = arith.constant 0 : index
    %c0_37 = arith.constant 0 : index
    %62 = vector.load %arg11[%c0_36, %c0_37] : memref<8x32xf32, #tpu.memory_space<vmem>>, vector<8x32xf32>
    %63 = arith.mulf %62, %44 : vector<8x32xf32>
    %64 = arith.addf %61, %63 : vector<8x32xf32>
    %c0_38 = arith.constant 0 : index
    %c0_39 = arith.constant 0 : index
    %65 = vector.load %arg12[%c0_38, %c0_39] : memref<8x32xf32, #tpu.memory_space<vmem>>, vector<8x32xf32>
    %66 = arith.mulf %65, %59 : vector<8x32xf32>
    %67 = arith.addf %64, %66 : vector<8x32xf32>
    %68 = arith.negf %67 : vector<8x32xf32>
    %69 = math.exp %68 : vector<8x32xf32>
    %cst_40 = arith.constant 1.000000e+00 : f32
    %70 = vector.broadcast %cst_40 : f32 to vector<8x32xf32>
    %71 = arith.addf %70, %69 : vector<8x32xf32>
    %72 = arith.divf %70, %71 : vector<8x32xf32>
    %c0_41 = arith.constant 0 : index
    %c0_42 = arith.constant 0 : index
    %c0_43 = arith.constant 0 : index
    %73 = vector.load %arg13[%c0_41, %c0_42, %c0_43] : memref<1x8x32xf32, #tpu.memory_space<vmem>>, vector<1x8x32xf32>
    %74 = vector.shape_cast %73 : vector<1x8x32xf32> to vector<8x32xf32>
    %75 = vector.shape_cast %72 : vector<8x32xf32> to vector<1x8x32xf32>
    tpu.vector_store %arg13[%c0_41, %c0_42, %c0_43], %75 {strides = array<i32>} : memref<1x8x32xf32, #tpu.memory_space<vmem>>, vector<1x8x32xf32>,
    return
  }
  func.func @transform_0(%arg0: i32) -> (i32, i32, i32) {
    %c0_i32 = arith.constant 0 : i32
    %c0_i32_0 = arith.constant 0 : i32
    %c0_i32_1 = arith.constant 0 : i32
    return %arg0, %c0_i32, %c0_i32_0 : i32, i32, i32
  }
  func.func @transform_1(%arg0: i32) -> (i32, i32, i32) {
    %c0_i32 = arith.constant 0 : i32
    %c0_i32_0 = arith.constant 0 : i32
    %c0_i32_1 = arith.constant 0 : i32
    return %arg0, %c0_i32, %c0_i32_0 : i32, i32, i32
  }
  func.func @transform_2(%arg0: i32) -> (i32, i32, i32) {
    %c0_i32 = arith.constant 0 : i32
    %c0_i32_0 = arith.constant 0 : i32
    %c0_i32_1 = arith.constant 0 : i32
    return %arg0, %c0_i32, %c0_i32_0 : i32, i32, i32
  }
  func.func @transform_3(%arg0: i32) -> (i32, i32) {
    %c0_i32 = arith.constant 0 : i32
    %c0_i32_0 = arith.constant 0 : i32
    %c0_i32_1 = arith.constant 0 : i32
    return %c0_i32, %c0_i32_0 : i32, i32
  }
  func.func @transform_4(%arg0: i32) -> (i32, i32) {
    %c0_i32 = arith.constant 0 : i32
    %c0_i32_0 = arith.constant 0 : i32
    %c0_i32_1 = arith.constant 0 : i32
    return %c0_i32, %c0_i32_0 : i32, i32
  }
  func.func @transform_5(%arg0: i32) -> (i32, i32) {
    %c0_i32 = arith.constant 0 : i32
    %c0_i32_0 = arith.constant 0 : i32
    %c0_i32_1 = arith.constant 0 : i32
    return %c0_i32, %c0_i32_0 : i32, i32
  }
  func.func @transform_6(%arg0: i32) -> (i32, i32) {
    %c0_i32 = arith.constant 0 : i32
    %c0_i32_0 = arith.constant 0 : i32
    %c0_i32_1 = arith.constant 0 : i32
    return %c0_i32, %c0_i32_0 : i32, i32
  }
  func.func @transform_7(%arg0: i32) -> (i32, i32) {
    %c0_i32 = arith.constant 0 : i32
    %c0_i32_0 = arith.constant 0 : i32
    %c0_i32_1 = arith.constant 0 : i32
    return %c0_i32, %c0_i32_0 : i32, i32
  }
  func.func @transform_8(%arg0: i32) -> (i32, i32) {
    %c0_i32 = arith.constant 0 : i32
    %c0_i32_0 = arith.constant 0 : i32
    %c0_i32_1 = arith.constant 0 : i32
    return %c0_i32, %c0_i32_0 : i32, i32
  }
  func.func @transform_9(%arg0: i32) -> (i32, i32) {
    %c0_i32 = arith.constant 0 : i32
    %c0_i32_0 = arith.constant 0 : i32
    %c0_i32_1 = arith.constant 0 : i32
    return %c0_i32, %c0_i32_0 : i32, i32
  }
  func.func @transform_10(%arg0: i32) -> (i32, i32) {
    %c0_i32 = arith.constant 0 : i32
    %c0_i32_0 = arith.constant 0 : i32
    %c0_i32_1 = arith.constant 0 : i32
    return %c0_i32, %c0_i32_0 : i32, i32
  }
  func.func @transform_11(%arg0: i32) -> (i32, i32) {
    %c0_i32 = arith.constant 0 : i32
    %c0_i32_0 = arith.constant 0 : i32
    %c0_i32_1 = arith.constant 0 : i32
    return %c0_i32, %c0_i32_0 : i32, i32
  }
  func.func @transform_12(%arg0: i32) -> (i32, i32, i32) {
    %c0_i32 = arith.constant 0 : i32
    %c0_i32_0 = arith.constant 0 : i32
    %c0_i32_1 = arith.constant 0 : i32
    return %arg0, %c0_i32, %c0_i32_0 : i32, i32, i32
  }
}

module attributes {stable_mosaic.version = 11 : i64} {
  func.func @_decoder_layer_kernel(%arg0: i32, %arg1: memref<1x8x32xf32, #tpu.memory_space<vmem>>, %arg2: memref<1x8x32xf32, #tpu.memory_space<vmem>>, %arg3: memref<1x8x32xf32, #tpu.memory_space<vmem>>, %arg4: memref<1x8x8xf32, #tpu.memory_space<vmem>>, %arg5: memref<32x192xf32, #tpu.memory_space<vmem>>, %arg6: memref<32x192xf32, #tpu.memory_space<vmem>>, %arg7: memref<64x32xf32, #tpu.memory_space<vmem>>, %arg8: memref<1x32xf32, #tpu.memory_space<vmem>>, %arg9: memref<1x32xf32, #tpu.memory_space<vmem>>, %arg10: memref<32x64xf32, #tpu.memory_space<vmem>>, %arg11: memref<32x128xf32, #tpu.memory_space<vmem>>, %arg12: memref<64x32xf32, #tpu.memory_space<vmem>>, %arg13: memref<1x32xf32, #tpu.memory_space<vmem>>, %arg14: memref<1x32xf32, #tpu.memory_space<vmem>>, %arg15: memref<32x64xf32, #tpu.memory_space<vmem>>, %arg16: memref<1x64xf32, #tpu.memory_space<vmem>>, %arg17: memref<64x32xf32, #tpu.memory_space<vmem>>, %arg18: memref<1x32xf32, #tpu.memory_space<vmem>>, %arg19: memref<1x32xf32, #tpu.memory_space<vmem>>, %arg20: memref<1x32xf32, #tpu.memory_space<vmem>>, %arg21: memref<1x8x32xf32, #tpu.memory_space<vmem>>) attributes {dimension_semantics = [#tpu.dimension_semantics<parallel>], iteration_bounds = array<i64: 2>, scalar_prefetch = 0 : i64, scratch_operands = 0 : i64, tpu.core_type = #tpu.core_type<tc>, window_params = [{transform_indices = @transform_0, window_bounds = array<i64: 1, 8, 32>}, {transform_indices = @transform_1, window_bounds = array<i64: 1, 8, 32>}, {transform_indices = @transform_2, window_bounds = array<i64: 1, 8, 32>}, {transform_indices = @transform_3, window_bounds = array<i64: 1, 8, 8>}, {pipeline_mode = #tpu.pipeline_mode<synchronous>, transform_indices = @transform_4, window_bounds = array<i64: 32, 192>}, {pipeline_mode = #tpu.pipeline_mode<synchronous>, transform_indices = @transform_5, window_bounds = array<i64: 32, 192>}, {pipeline_mode = #tpu.pipeline_mode<synchronous>, transform_indices = @transform_6, window_bounds = array<i64: 64, 32>}, {pipeline_mode = #tpu.pipeline_mode<synchronous>, transform_indices = @transform_7, window_bounds = array<i64: 1, 32>}, {pipeline_mode = #tpu.pipeline_mode<synchronous>, transform_indices = @transform_8, window_bounds = array<i64: 1, 32>}, {pipeline_mode = #tpu.pipeline_mode<synchronous>, transform_indices = @transform_9, window_bounds = array<i64: 32, 64>}, {pipeline_mode = #tpu.pipeline_mode<synchronous>, transform_indices = @transform_10, window_bounds = array<i64: 32, 128>}, {pipeline_mode = #tpu.pipeline_mode<synchronous>, transform_indices = @transform_11, window_bounds = array<i64: 64, 32>}, {pipeline_mode = #tpu.pipeline_mode<synchronous>, transform_indices = @transform_12, window_bounds = array<i64: 1, 32>}, {pipeline_mode = #tpu.pipeline_mode<synchronous>, transform_indices = @transform_13, window_bounds = array<i64: 1, 32>}, {pipeline_mode = #tpu.pipeline_mode<synchronous>, transform_indices = @transform_14, window_bounds = array<i64: 32, 64>}, {pipeline_mode = #tpu.pipeline_mode<synchronous>, transform_indices = @transform_15, window_bounds = array<i64: 1, 64>}, {pipeline_mode = #tpu.pipeline_mode<synchronous>, transform_indices = @transform_16, window_bounds = array<i64: 64, 32>}, {pipeline_mode = #tpu.pipeline_mode<synchronous>, transform_indices = @transform_17, window_bounds = array<i64: 1, 32>}, {pipeline_mode = #tpu.pipeline_mode<synchronous>, transform_indices = @transform_18, window_bounds = array<i64: 1, 32>}, {pipeline_mode = #tpu.pipeline_mode<synchronous>, transform_indices = @transform_19, window_bounds = array<i64: 1, 32>}, {transform_indices = @transform_20, window_bounds = array<i64: 1, 8, 32>}]} {
    %c0 = arith.constant 0 : index
    %c0_0 = arith.constant 0 : index
    %c0_1 = arith.constant 0 : index
    %0 = vector.load %arg1[%c0, %c0_0, %c0_1] : memref<1x8x32xf32, #tpu.memory_space<vmem>>, vector<1x8x32xf32>
    %1 = vector.shape_cast %0 : vector<1x8x32xf32> to vector<8x32xf32>
    %c0_2 = arith.constant 0 : index
    %c0_3 = arith.constant 0 : index
    %c0_4 = arith.constant 0 : index
    %2 = vector.load %arg2[%c0_2, %c0_3, %c0_4] : memref<1x8x32xf32, #tpu.memory_space<vmem>>, vector<1x8x32xf32>
    %3 = vector.shape_cast %2 : vector<1x8x32xf32> to vector<8x32xf32>
    %c0_5 = arith.constant 0 : index
    %c0_6 = arith.constant 0 : index
    %c0_7 = arith.constant 0 : index
    %4 = vector.load %arg3[%c0_5, %c0_6, %c0_7] : memref<1x8x32xf32, #tpu.memory_space<vmem>>, vector<1x8x32xf32>
    %5 = vector.shape_cast %4 : vector<1x8x32xf32> to vector<8x32xf32>
    %c0_8 = arith.constant 0 : index
    %c0_9 = arith.constant 0 : index
    %c0_10 = arith.constant 0 : index
    %6 = vector.load %arg4[%c0_8, %c0_9, %c0_10] : memref<1x8x8xf32, #tpu.memory_space<vmem>>, vector<1x8x8xf32>
    %7 = vector.shape_cast %6 : vector<1x8x8xf32> to vector<8x8xf32>
    %c0_11 = arith.constant 0 : index
    %c0_12 = arith.constant 0 : index
    %8 = vector.load %arg5[%c0_11, %c0_12] : memref<32x192xf32, #tpu.memory_space<vmem>>, vector<32x192xf32>
    %cst = arith.constant dense<0.000000e+00> : vector<8x192xf32>
    %9 = tpu.matmul %1, %8, %cst {dimension_numbers = #tpu.dot_dimension_numbers<[1], [0], [0], [1], [0, 0, 1, 1], [], []>} : vector<8x32xf32>, vector<32x192xf32>, vector<8x192xf32> -> vector<8x192xf32>
    %c0_13 = arith.constant 0 : index
    %c0_14 = arith.constant 0 : index
    %10 = vector.load %arg6[%c0_13, %c0_14] : memref<32x192xf32, #tpu.memory_space<vmem>>, vector<32x192xf32>
    %cst_15 = arith.constant dense<0.000000e+00> : vector<8x192xf32>
    %11 = tpu.matmul %3, %10, %cst_15 {dimension_numbers = #tpu.dot_dimension_numbers<[1], [0], [0], [1], [0, 0, 1, 1], [], []>} : vector<8x32xf32>, vector<32x192xf32>, vector<8x192xf32> -> vector<8x192xf32>
    %12 = arith.addf %9, %11 : vector<8x192xf32>
    %13 = vector.extract_strided_slice %12 {offsets = [0, 0], sizes = [8, 64], strides = [1, 1]} : vector<8x192xf32> to vector<8x64xf32>
    %cst_16 = arith.constant 0.0883883461 : f32
    %14 = vector.broadcast %cst_16 : f32 to vector<8x64xf32>
    %15 = arith.mulf %13, %14 : vector<8x64xf32>
    %16 = vector.extract_strided_slice %12 {offsets = [0, 64], sizes = [8, 64], strides = [1, 1]} : vector<8x192xf32> to vector<8x64xf32>
    %17 = vector.extract_strided_slice %12 {offsets = [0, 128], sizes = [8, 64], strides = [1, 1]} : vector<8x192xf32> to vector<8x64xf32>
    %c0_17 = arith.constant 0 : index
    %c0_18 = arith.constant 0 : index
    %18 = vector.load %arg7[%c0_17, %c0_18] : memref<64x32xf32, #tpu.memory_space<vmem>>, vector<64x32xf32>
    %cst_19 = arith.constant 0.000000e+00 : f32
    %19 = vector.broadcast %cst_19 : f32 to vector<8x32xf32>
    %20 = vector.extract_strided_slice %15 {offsets = [0, 0], sizes = [8, 32], strides = [1, 1]} : vector<8x64xf32> to vector<8x32xf32>
    %21 = vector.extract_strided_slice %16 {offsets = [0, 0], sizes = [8, 32], strides = [1, 1]} : vector<8x64xf32> to vector<8x32xf32>
    %22 = vector.extract_strided_slice %17 {offsets = [0, 0], sizes = [8, 32], strides = [1, 1]} : vector<8x64xf32> to vector<8x32xf32>
    %cst_20 = arith.constant dense<0.000000e+00> : vector<8x8xf32>
    %23 = tpu.matmul %20, %21, %cst_20 {dimension_numbers = #tpu.dot_dimension_numbers<[1], [1], [0], [0], [0, 0, 1, 0], [], []>} : vector<8x32xf32>, vector<8x32xf32>, vector<8x8xf32> -> vector<8x8xf32>
    %cst_21 = arith.constant 0.000000e+00 : f32
    %24 = vector.broadcast %cst_21 : f32 to vector<8x8xf32>
    %25 = arith.cmpf oeq, %7, %24 : vector<8x8xf32>
    %cst_22 = arith.constant -1.000000e+09 : f32
    %26 = vector.broadcast %cst_22 : f32 to vector<8x8xf32>
    %27 = arith.select %25, %26, %23 : vector<8x8xi1>, vector<8x8xf32>
    %cst_23 = arith.constant dense<0xFF800000> : vector<8xf32>
    %28 = vector.multi_reduction <maximumf>, %27, %cst_23 [1] : vector<8x8xf32> to vector<8xf32>
    %29 = vector.shape_cast %28 : vector<8xf32> to vector<8x1xf32>
    %30 = vector.broadcast %29 : vector<8x1xf32> to vector<8x8xf32>
    %31 = arith.subf %27, %30 : vector<8x8xf32>
    %32 = math.exp %31 : vector<8x8xf32>
    %cst_24 = arith.constant dense<0.000000e+00> : vector<8xf32>
    %33 = vector.multi_reduction <add>, %32, %cst_24 [1] : vector<8x8xf32> to vector<8xf32>
    %34 = vector.shape_cast %33 : vector<8xf32> to vector<8x1xf32>
    %35 = tpu.reciprocal %34 {approx = true} : vector<8x1xf32> -> vector<8x1xf32>
    %36 = vector.broadcast %35 : vector<8x1xf32> to vector<8x8xf32>
    %37 = arith.mulf %32, %36 : vector<8x8xf32>
    %cst_25 = arith.constant dense<0.000000e+00> : vector<8x32xf32>
    %38 = tpu.matmul %37, %22, %cst_25 {dimension_numbers = #tpu.dot_dimension_numbers<[1], [0], [0], [1], [0, 0, 1, 1], [], []>} : vector<8x8xf32>, vector<8x32xf32>, vector<8x32xf32> -> vector<8x32xf32>
    %39 = vector.extract_strided_slice %18 {offsets = [0, 0], sizes = [32, 32], strides = [1, 1]} : vector<64x32xf32> to vector<32x32xf32>
    %cst_26 = arith.constant dense<0.000000e+00> : vector<8x32xf32>
    %40 = tpu.matmul %38, %39, %cst_26 {dimension_numbers = #tpu.dot_dimension_numbers<[1], [0], [0], [1], [0, 0, 1, 1], [], []>} : vector<8x32xf32>, vector<32x32xf32>, vector<8x32xf32> -> vector<8x32xf32>
    %41 = arith.addf %19, %40 : vector<8x32xf32>
    %42 = vector.extract_strided_slice %15 {offsets = [0, 32], sizes = [8, 32], strides = [1, 1]} : vector<8x64xf32> to vector<8x32xf32>
    %43 = vector.extract_strided_slice %16 {offsets = [0, 32], sizes = [8, 32], strides = [1, 1]} : vector<8x64xf32> to vector<8x32xf32>
    %44 = vector.extract_strided_slice %17 {offsets = [0, 32], sizes = [8, 32], strides = [1, 1]} : vector<8x64xf32> to vector<8x32xf32>
    %cst_27 = arith.constant dense<0.000000e+00> : vector<8x8xf32>
    %45 = tpu.matmul %42, %43, %cst_27 {dimension_numbers = #tpu.dot_dimension_numbers<[1], [1], [0], [0], [0, 0, 1, 0], [], []>} : vector<8x32xf32>, vector<8x32xf32>, vector<8x8xf32> -> vector<8x8xf32>
    %cst_28 = arith.constant 0.000000e+00 : f32
    %46 = vector.broadcast %cst_28 : f32 to vector<8x8xf32>
    %47 = arith.cmpf oeq, %7, %46 : vector<8x8xf32>
    %cst_29 = arith.constant -1.000000e+09 : f32
    %48 = vector.broadcast %cst_29 : f32 to vector<8x8xf32>
    %49 = arith.select %47, %48, %45 : vector<8x8xi1>, vector<8x8xf32>
    %cst_30 = arith.constant dense<0xFF800000> : vector<8xf32>
    %50 = vector.multi_reduction <maximumf>, %49, %cst_30 [1] : vector<8x8xf32> to vector<8xf32>
    %51 = vector.shape_cast %50 : vector<8xf32> to vector<8x1xf32>
    %52 = vector.broadcast %51 : vector<8x1xf32> to vector<8x8xf32>
    %53 = arith.subf %49, %52 : vector<8x8xf32>
    %54 = math.exp %53 : vector<8x8xf32>
    %cst_31 = arith.constant dense<0.000000e+00> : vector<8xf32>
    %55 = vector.multi_reduction <add>, %54, %cst_31 [1] : vector<8x8xf32> to vector<8xf32>
    %56 = vector.shape_cast %55 : vector<8xf32> to vector<8x1xf32>
    %57 = tpu.reciprocal %56 {approx = true} : vector<8x1xf32> -> vector<8x1xf32>
    %58 = vector.broadcast %57 : vector<8x1xf32> to vector<8x8xf32>
    %59 = arith.mulf %54, %58 : vector<8x8xf32>
    %cst_32 = arith.constant dense<0.000000e+00> : vector<8x32xf32>
    %60 = tpu.matmul %59, %44, %cst_32 {dimension_numbers = #tpu.dot_dimension_numbers<[1], [0], [0], [1], [0, 0, 1, 1], [], []>} : vector<8x8xf32>, vector<8x32xf32>, vector<8x32xf32> -> vector<8x32xf32>
    %61 = vector.extract_strided_slice %18 {offsets = [32, 0], sizes = [32, 32], strides = [1, 1]} : vector<64x32xf32> to vector<32x32xf32>
    %cst_33 = arith.constant dense<0.000000e+00> : vector<8x32xf32>
    %62 = tpu.matmul %60, %61, %cst_33 {dimension_numbers = #tpu.dot_dimension_numbers<[1], [0], [0], [1], [0, 0, 1, 1], [], []>} : vector<8x32xf32>, vector<32x32xf32>, vector<8x32xf32> -> vector<8x32xf32>
    %63 = arith.addf %41, %62 : vector<8x32xf32>
    %64 = arith.addf %63, %1 : vector<8x32xf32>
    %65 = arith.addf %64, %3 : vector<8x32xf32>
    %c0_34 = arith.constant 0 : index
    %c0_35 = arith.constant 0 : index
    %66 = vector.load %arg8[%c0_34, %c0_35] : memref<1x32xf32, #tpu.memory_space<vmem>>, vector<1x32xf32>
    %c0_36 = arith.constant 0 : index
    %c0_37 = arith.constant 0 : index
    %67 = vector.load %arg9[%c0_36, %c0_37] : memref<1x32xf32, #tpu.memory_space<vmem>>, vector<1x32xf32>
    %cst_38 = arith.constant dense<0.000000e+00> : vector<8xf32>
    %68 = vector.multi_reduction <add>, %65, %cst_38 [1] : vector<8x32xf32> to vector<8xf32>
    %69 = vector.shape_cast %68 : vector<8xf32> to vector<8x1xf32>
    %cst_39 = arith.constant 3.200000e+01 : f32
    %70 = vector.broadcast %cst_39 : f32 to vector<8x1xf32>
    %71 = arith.divf %69, %70 : vector<8x1xf32>
    %72 = vector.broadcast %71 : vector<8x1xf32> to vector<8x32xf32>
    %73 = arith.subf %65, %72 : vector<8x32xf32>
    %74 = arith.mulf %73, %73 : vector<8x32xf32>
    %cst_40 = arith.constant dense<0.000000e+00> : vector<8xf32>
    %75 = vector.multi_reduction <add>, %74, %cst_40 [1] : vector<8x32xf32> to vector<8xf32>
    %76 = vector.shape_cast %75 : vector<8xf32> to vector<8x1xf32>
    %cst_41 = arith.constant 3.200000e+01 : f32
    %77 = vector.broadcast %cst_41 : f32 to vector<8x1xf32>
    %78 = arith.divf %76, %77 : vector<8x1xf32>
    %79 = vector.broadcast %71 : vector<8x1xf32> to vector<8x32xf32>
    %80 = arith.subf %65, %79 : vector<8x32xf32>
    %cst_42 = arith.constant 9.99999974E-6 : f32
    %81 = vector.broadcast %cst_42 : f32 to vector<8x1xf32>
    %82 = arith.addf %78, %81 : vector<8x1xf32>
    %83 = math.rsqrt %82 : vector<8x1xf32>
    %84 = vector.broadcast %83 : vector<8x1xf32> to vector<8x32xf32>
    %85 = arith.mulf %80, %84 : vector<8x32xf32>
    %86 = vector.broadcast %66 : vector<1x32xf32> to vector<8x32xf32>
    %87 = arith.mulf %85, %86 : vector<8x32xf32>
    %88 = vector.broadcast %67 : vector<1x32xf32> to vector<8x32xf32>
    %89 = arith.addf %87, %88 : vector<8x32xf32>
    %c0_43 = arith.constant 0 : index
    %c0_44 = arith.constant 0 : index
    %90 = vector.load %arg10[%c0_43, %c0_44] : memref<32x64xf32, #tpu.memory_space<vmem>>, vector<32x64xf32>
    %cst_45 = arith.constant dense<0.000000e+00> : vector<8x64xf32>
    %91 = tpu.matmul %89, %90, %cst_45 {dimension_numbers = #tpu.dot_dimension_numbers<[1], [0], [0], [1], [0, 0, 1, 1], [], []>} : vector<8x32xf32>, vector<32x64xf32>, vector<8x64xf32> -> vector<8x64xf32>
    %cst_46 = arith.constant 0.176776692 : f32
    %92 = vector.broadcast %cst_46 : f32 to vector<8x64xf32>
    %93 = arith.mulf %91, %92 : vector<8x64xf32>
    %c0_47 = arith.constant 0 : index
    %c0_48 = arith.constant 0 : index
    %94 = vector.load %arg11[%c0_47, %c0_48] : memref<32x128xf32, #tpu.memory_space<vmem>>, vector<32x128xf32>
    %cst_49 = arith.constant dense<0.000000e+00> : vector<8x128xf32>
    %95 = tpu.matmul %5, %94, %cst_49 {dimension_numbers = #tpu.dot_dimension_numbers<[1], [0], [0], [1], [0, 0, 1, 1], [], []>} : vector<8x32xf32>, vector<32x128xf32>, vector<8x128xf32> -> vector<8x128xf32>
    %c0_50 = arith.constant 0 : index
    %c0_51 = arith.constant 0 : index
    %96 = vector.load %arg12[%c0_50, %c0_51] : memref<64x32xf32, #tpu.memory_space<vmem>>, vector<64x32xf32>
    %cst_52 = arith.constant 0.000000e+00 : f32
    %97 = vector.broadcast %cst_52 : f32 to vector<8x32xf32>
    %98 = vector.extract_strided_slice %93 {offsets = [0, 0], sizes = [8, 32], strides = [1, 1]} : vector<8x64xf32> to vector<8x32xf32>
    %99 = vector.extract_strided_slice %95 {offsets = [0, 0], sizes = [8, 32], strides = [1, 1]} : vector<8x128xf32> to vector<8x32xf32>
    %100 = vector.extract_strided_slice %95 {offsets = [0, 64], sizes = [8, 32], strides = [1, 1]} : vector<8x128xf32> to vector<8x32xf32>
    %cst_53 = arith.constant dense<0.000000e+00> : vector<8x8xf32>
    %101 = tpu.matmul %98, %99, %cst_53 {dimension_numbers = #tpu.dot_dimension_numbers<[1], [1], [0], [0], [0, 0, 1, 0], [], []>} : vector<8x32xf32>, vector<8x32xf32>, vector<8x8xf32> -> vector<8x8xf32>
    %cst_54 = arith.constant dense<0xFF800000> : vector<8xf32>
    %102 = vector.multi_reduction <maximumf>, %101, %cst_54 [1] : vector<8x8xf32> to vector<8xf32>
    %103 = vector.shape_cast %102 : vector<8xf32> to vector<8x1xf32>
    %104 = vector.broadcast %103 : vector<8x1xf32> to vector<8x8xf32>
    %105 = arith.subf %101, %104 : vector<8x8xf32>
    %106 = math.exp %105 : vector<8x8xf32>
    %cst_55 = arith.constant dense<0.000000e+00> : vector<8xf32>
    %107 = vector.multi_reduction <add>, %106, %cst_55 [1] : vector<8x8xf32> to vector<8xf32>
    %108 = vector.shape_cast %107 : vector<8xf32> to vector<8x1xf32>
    %109 = tpu.reciprocal %108 {approx = true} : vector<8x1xf32> -> vector<8x1xf32>
    %110 = vector.broadcast %109 : vector<8x1xf32> to vector<8x8xf32>
    %111 = arith.mulf %106, %110 : vector<8x8xf32>
    %cst_56 = arith.constant dense<0.000000e+00> : vector<8x32xf32>
    %112 = tpu.matmul %111, %100, %cst_56 {dimension_numbers = #tpu.dot_dimension_numbers<[1], [0], [0], [1], [0, 0, 1, 1], [], []>} : vector<8x8xf32>, vector<8x32xf32>, vector<8x32xf32> -> vector<8x32xf32>
    %113 = vector.extract_strided_slice %96 {offsets = [0, 0], sizes = [32, 32], strides = [1, 1]} : vector<64x32xf32> to vector<32x32xf32>
    %cst_57 = arith.constant dense<0.000000e+00> : vector<8x32xf32>
    %114 = tpu.matmul %112, %113, %cst_57 {dimension_numbers = #tpu.dot_dimension_numbers<[1], [0], [0], [1], [0, 0, 1, 1], [], []>} : vector<8x32xf32>, vector<32x32xf32>, vector<8x32xf32> -> vector<8x32xf32>
    %115 = arith.addf %97, %114 : vector<8x32xf32>
    %116 = vector.extract_strided_slice %93 {offsets = [0, 32], sizes = [8, 32], strides = [1, 1]} : vector<8x64xf32> to vector<8x32xf32>
    %117 = vector.extract_strided_slice %95 {offsets = [0, 32], sizes = [8, 32], strides = [1, 1]} : vector<8x128xf32> to vector<8x32xf32>
    %118 = vector.extract_strided_slice %95 {offsets = [0, 96], sizes = [8, 32], strides = [1, 1]} : vector<8x128xf32> to vector<8x32xf32>
    %cst_58 = arith.constant dense<0.000000e+00> : vector<8x8xf32>
    %119 = tpu.matmul %116, %117, %cst_58 {dimension_numbers = #tpu.dot_dimension_numbers<[1], [1], [0], [0], [0, 0, 1, 0], [], []>} : vector<8x32xf32>, vector<8x32xf32>, vector<8x8xf32> -> vector<8x8xf32>
    %cst_59 = arith.constant dense<0xFF800000> : vector<8xf32>
    %120 = vector.multi_reduction <maximumf>, %119, %cst_59 [1] : vector<8x8xf32> to vector<8xf32>
    %121 = vector.shape_cast %120 : vector<8xf32> to vector<8x1xf32>
    %122 = vector.broadcast %121 : vector<8x1xf32> to vector<8x8xf32>
    %123 = arith.subf %119, %122 : vector<8x8xf32>
    %124 = math.exp %123 : vector<8x8xf32>
    %cst_60 = arith.constant dense<0.000000e+00> : vector<8xf32>
    %125 = vector.multi_reduction <add>, %124, %cst_60 [1] : vector<8x8xf32> to vector<8xf32>
    %126 = vector.shape_cast %125 : vector<8xf32> to vector<8x1xf32>
    %127 = tpu.reciprocal %126 {approx = true} : vector<8x1xf32> -> vector<8x1xf32>
    %128 = vector.broadcast %127 : vector<8x1xf32> to vector<8x8xf32>
    %129 = arith.mulf %124, %128 : vector<8x8xf32>
    %cst_61 = arith.constant dense<0.000000e+00> : vector<8x32xf32>
    %130 = tpu.matmul %129, %118, %cst_61 {dimension_numbers = #tpu.dot_dimension_numbers<[1], [0], [0], [1], [0, 0, 1, 1], [], []>} : vector<8x8xf32>, vector<8x32xf32>, vector<8x32xf32> -> vector<8x32xf32>
    %131 = vector.extract_strided_slice %96 {offsets = [32, 0], sizes = [32, 32], strides = [1, 1]} : vector<64x32xf32> to vector<32x32xf32>
    %cst_62 = arith.constant dense<0.000000e+00> : vector<8x32xf32>
    %132 = tpu.matmul %130, %131, %cst_62 {dimension_numbers = #tpu.dot_dimension_numbers<[1], [0], [0], [1], [0, 0, 1, 1], [], []>} : vector<8x32xf32>, vector<32x32xf32>, vector<8x32xf32> -> vector<8x32xf32>
    %133 = arith.addf %115, %132 : vector<8x32xf32>
    %134 = arith.addf %133, %89 : vector<8x32xf32>
    %c0_63 = arith.constant 0 : index
    %c0_64 = arith.constant 0 : index
    %135 = vector.load %arg13[%c0_63, %c0_64] : memref<1x32xf32, #tpu.memory_space<vmem>>, vector<1x32xf32>
    %c0_65 = arith.constant 0 : index
    %c0_66 = arith.constant 0 : index
    %136 = vector.load %arg14[%c0_65, %c0_66] : memref<1x32xf32, #tpu.memory_space<vmem>>, vector<1x32xf32>
    %cst_67 = arith.constant dense<0.000000e+00> : vector<8xf32>
    %137 = vector.multi_reduction <add>, %134, %cst_67 [1] : vector<8x32xf32> to vector<8xf32>
    %138 = vector.shape_cast %137 : vector<8xf32> to vector<8x1xf32>
    %cst_68 = arith.constant 3.200000e+01 : f32
    %139 = vector.broadcast %cst_68 : f32 to vector<8x1xf32>
    %140 = arith.divf %138, %139 : vector<8x1xf32>
    %141 = vector.broadcast %140 : vector<8x1xf32> to vector<8x32xf32>
    %142 = arith.subf %134, %141 : vector<8x32xf32>
    %143 = arith.mulf %142, %142 : vector<8x32xf32>
    %cst_69 = arith.constant dense<0.000000e+00> : vector<8xf32>
    %144 = vector.multi_reduction <add>, %143, %cst_69 [1] : vector<8x32xf32> to vector<8xf32>
    %145 = vector.shape_cast %144 : vector<8xf32> to vector<8x1xf32>
    %cst_70 = arith.constant 3.200000e+01 : f32
    %146 = vector.broadcast %cst_70 : f32 to vector<8x1xf32>
    %147 = arith.divf %145, %146 : vector<8x1xf32>
    %148 = vector.broadcast %140 : vector<8x1xf32> to vector<8x32xf32>
    %149 = arith.subf %134, %148 : vector<8x32xf32>
    %cst_71 = arith.constant 9.99999974E-6 : f32
    %150 = vector.broadcast %cst_71 : f32 to vector<8x1xf32>
    %151 = arith.addf %147, %150 : vector<8x1xf32>
    %152 = math.rsqrt %151 : vector<8x1xf32>
    %153 = vector.broadcast %152 : vector<8x1xf32> to vector<8x32xf32>
    %154 = arith.mulf %149, %153 : vector<8x32xf32>
    %155 = vector.broadcast %135 : vector<1x32xf32> to vector<8x32xf32>
    %156 = arith.mulf %154, %155 : vector<8x32xf32>
    %157 = vector.broadcast %136 : vector<1x32xf32> to vector<8x32xf32>
    %158 = arith.addf %156, %157 : vector<8x32xf32>
    %c0_72 = arith.constant 0 : index
    %c0_73 = arith.constant 0 : index
    %159 = vector.load %arg15[%c0_72, %c0_73] : memref<32x64xf32, #tpu.memory_space<vmem>>, vector<32x64xf32>
    %cst_74 = arith.constant dense<0.000000e+00> : vector<8x64xf32>
    %160 = tpu.matmul %158, %159, %cst_74 {dimension_numbers = #tpu.dot_dimension_numbers<[1], [0], [0], [1], [0, 0, 1, 1], [], []>} : vector<8x32xf32>, vector<32x64xf32>, vector<8x64xf32> -> vector<8x64xf32>
    %c0_75 = arith.constant 0 : index
    %c0_76 = arith.constant 0 : index
    %161 = vector.load %arg16[%c0_75, %c0_76] : memref<1x64xf32, #tpu.memory_space<vmem>>, vector<1x64xf32>
    %162 = vector.broadcast %161 : vector<1x64xf32> to vector<8x64xf32>
    %163 = arith.addf %160, %162 : vector<8x64xf32>
    %cst_77 = arith.constant 0.000000e+00 : f32
    %164 = vector.broadcast %cst_77 : f32 to vector<8x64xf32>
    %165 = arith.maximumf %163, %164 : vector<8x64xf32>
    %c0_78 = arith.constant 0 : index
    %c0_79 = arith.constant 0 : index
    %166 = vector.load %arg17[%c0_78, %c0_79] : memref<64x32xf32, #tpu.memory_space<vmem>>, vector<64x32xf32>
    %cst_80 = arith.constant dense<0.000000e+00> : vector<8x32xf32>
    %167 = tpu.matmul %165, %166, %cst_80 {dimension_numbers = #tpu.dot_dimension_numbers<[1], [0], [0], [1], [0, 0, 1, 1], [], []>} : vector<8x64xf32>, vector<64x32xf32>, vector<8x32xf32> -> vector<8x32xf32>
    %c0_81 = arith.constant 0 : index
    %c0_82 = arith.constant 0 : index
    %168 = vector.load %arg18[%c0_81, %c0_82] : memref<1x32xf32, #tpu.memory_space<vmem>>, vector<1x32xf32>
    %169 = vector.broadcast %168 : vector<1x32xf32> to vector<8x32xf32>
    %170 = arith.addf %167, %169 : vector<8x32xf32>
    %171 = arith.addf %170, %158 : vector<8x32xf32>
    %c0_83 = arith.constant 0 : index
    %c0_84 = arith.constant 0 : index
    %172 = vector.load %arg19[%c0_83, %c0_84] : memref<1x32xf32, #tpu.memory_space<vmem>>, vector<1x32xf32>
    %c0_85 = arith.constant 0 : index
    %c0_86 = arith.constant 0 : index
    %173 = vector.load %arg20[%c0_85, %c0_86] : memref<1x32xf32, #tpu.memory_space<vmem>>, vector<1x32xf32>
    %cst_87 = arith.constant dense<0.000000e+00> : vector<8xf32>
    %174 = vector.multi_reduction <add>, %171, %cst_87 [1] : vector<8x32xf32> to vector<8xf32>
    %175 = vector.shape_cast %174 : vector<8xf32> to vector<8x1xf32>
    %cst_88 = arith.constant 3.200000e+01 : f32
    %176 = vector.broadcast %cst_88 : f32 to vector<8x1xf32>
    %177 = arith.divf %175, %176 : vector<8x1xf32>
    %178 = vector.broadcast %177 : vector<8x1xf32> to vector<8x32xf32>
    %179 = arith.subf %171, %178 : vector<8x32xf32>
    %180 = arith.mulf %179, %179 : vector<8x32xf32>
    %cst_89 = arith.constant dense<0.000000e+00> : vector<8xf32>
    %181 = vector.multi_reduction <add>, %180, %cst_89 [1] : vector<8x32xf32> to vector<8xf32>
    %182 = vector.shape_cast %181 : vector<8xf32> to vector<8x1xf32>
    %cst_90 = arith.constant 3.200000e+01 : f32
    %183 = vector.broadcast %cst_90 : f32 to vector<8x1xf32>
    %184 = arith.divf %182, %183 : vector<8x1xf32>
    %185 = vector.broadcast %177 : vector<8x1xf32> to vector<8x32xf32>
    %186 = arith.subf %171, %185 : vector<8x32xf32>
    %cst_91 = arith.constant 9.99999974E-6 : f32
    %187 = vector.broadcast %cst_91 : f32 to vector<8x1xf32>
    %188 = arith.addf %184, %187 : vector<8x1xf32>
    %189 = math.rsqrt %188 : vector<8x1xf32>
    %190 = vector.broadcast %189 : vector<8x1xf32> to vector<8x32xf32>
    %191 = arith.mulf %186, %190 : vector<8x32xf32>
    %192 = vector.broadcast %172 : vector<1x32xf32> to vector<8x32xf32>
    %193 = arith.mulf %191, %192 : vector<8x32xf32>
    %194 = vector.broadcast %173 : vector<1x32xf32> to vector<8x32xf32>
    %195 = arith.addf %193, %194 : vector<8x32xf32>
    %c0_92 = arith.constant 0 : index
    %c0_93 = arith.constant 0 : index
    %c0_94 = arith.constant 0 : index
    %196 = vector.load %arg21[%c0_92, %c0_93, %c0_94] : memref<1x8x32xf32, #tpu.memory_space<vmem>>, vector<1x8x32xf32>
    %197 = vector.shape_cast %196 : vector<1x8x32xf32> to vector<8x32xf32>
    %198 = vector.shape_cast %195 : vector<8x32xf32> to vector<1x8x32xf32>
    tpu.vector_store %arg21[%c0_92, %c0_93, %c0_94], %198 {strides = array<i32>} : memref<1x8x32xf32, #tpu.memory_space<vmem>>, vector<1x8x32xf32>,
    return
  }
  func.func @transform_0(%arg0: i32) -> (i32, i32, i32) {
    %c0_i32 = arith.constant 0 : i32
    %c0_i32_0 = arith.constant 0 : i32
    %c0_i32_1 = arith.constant 0 : i32
    return %arg0, %c0_i32, %c0_i32_0 : i32, i32, i32
  }
  func.func @transform_1(%arg0: i32) -> (i32, i32, i32) {
    %c0_i32 = arith.constant 0 : i32
    %c0_i32_0 = arith.constant 0 : i32
    %c0_i32_1 = arith.constant 0 : i32
    return %arg0, %c0_i32, %c0_i32_0 : i32, i32, i32
  }
  func.func @transform_2(%arg0: i32) -> (i32, i32, i32) {
    %c0_i32 = arith.constant 0 : i32
    %c0_i32_0 = arith.constant 0 : i32
    %c0_i32_1 = arith.constant 0 : i32
    return %arg0, %c0_i32, %c0_i32_0 : i32, i32, i32
  }
  func.func @transform_3(%arg0: i32) -> (i32, i32, i32) {
    %c0_i32 = arith.constant 0 : i32
    %c0_i32_0 = arith.constant 0 : i32
    %c0_i32_1 = arith.constant 0 : i32
    return %arg0, %c0_i32, %c0_i32_0 : i32, i32, i32
  }
  func.func @transform_4(%arg0: i32) -> (i32, i32) {
    %c0_i32 = arith.constant 0 : i32
    %c0_i32_0 = arith.constant 0 : i32
    %c0_i32_1 = arith.constant 0 : i32
    return %c0_i32, %c0_i32_0 : i32, i32
  }
  func.func @transform_5(%arg0: i32) -> (i32, i32) {
    %c0_i32 = arith.constant 0 : i32
    %c0_i32_0 = arith.constant 0 : i32
    %c0_i32_1 = arith.constant 0 : i32
    return %c0_i32, %c0_i32_0 : i32, i32
  }
  func.func @transform_6(%arg0: i32) -> (i32, i32) {
    %c0_i32 = arith.constant 0 : i32
    %c0_i32_0 = arith.constant 0 : i32
    %c0_i32_1 = arith.constant 0 : i32
    return %c0_i32, %c0_i32_0 : i32, i32
  }
  func.func @transform_7(%arg0: i32) -> (i32, i32) {
    %c0_i32 = arith.constant 0 : i32
    %c0_i32_0 = arith.constant 0 : i32
    %c0_i32_1 = arith.constant 0 : i32
    return %c0_i32, %c0_i32_0 : i32, i32
  }
  func.func @transform_8(%arg0: i32) -> (i32, i32) {
    %c0_i32 = arith.constant 0 : i32
    %c0_i32_0 = arith.constant 0 : i32
    %c0_i32_1 = arith.constant 0 : i32
    return %c0_i32, %c0_i32_0 : i32, i32
  }
  func.func @transform_9(%arg0: i32) -> (i32, i32) {
    %c0_i32 = arith.constant 0 : i32
    %c0_i32_0 = arith.constant 0 : i32
    %c0_i32_1 = arith.constant 0 : i32
    return %c0_i32, %c0_i32_0 : i32, i32
  }
  func.func @transform_10(%arg0: i32) -> (i32, i32) {
    %c0_i32 = arith.constant 0 : i32
    %c0_i32_0 = arith.constant 0 : i32
    %c0_i32_1 = arith.constant 0 : i32
    return %c0_i32, %c0_i32_0 : i32, i32
  }
  func.func @transform_11(%arg0: i32) -> (i32, i32) {
    %c0_i32 = arith.constant 0 : i32
    %c0_i32_0 = arith.constant 0 : i32
    %c0_i32_1 = arith.constant 0 : i32
    return %c0_i32, %c0_i32_0 : i32, i32
  }
  func.func @transform_12(%arg0: i32) -> (i32, i32) {
    %c0_i32 = arith.constant 0 : i32
    %c0_i32_0 = arith.constant 0 : i32
    %c0_i32_1 = arith.constant 0 : i32
    return %c0_i32, %c0_i32_0 : i32, i32
  }
  func.func @transform_13(%arg0: i32) -> (i32, i32) {
    %c0_i32 = arith.constant 0 : i32
    %c0_i32_0 = arith.constant 0 : i32
    %c0_i32_1 = arith.constant 0 : i32
    return %c0_i32, %c0_i32_0 : i32, i32
  }
  func.func @transform_14(%arg0: i32) -> (i32, i32) {
    %c0_i32 = arith.constant 0 : i32
    %c0_i32_0 = arith.constant 0 : i32
    %c0_i32_1 = arith.constant 0 : i32
    return %c0_i32, %c0_i32_0 : i32, i32
  }
  func.func @transform_15(%arg0: i32) -> (i32, i32) {
    %c0_i32 = arith.constant 0 : i32
    %c0_i32_0 = arith.constant 0 : i32
    %c0_i32_1 = arith.constant 0 : i32
    return %c0_i32, %c0_i32_0 : i32, i32
  }
  func.func @transform_16(%arg0: i32) -> (i32, i32) {
    %c0_i32 = arith.constant 0 : i32
    %c0_i32_0 = arith.constant 0 : i32
    %c0_i32_1 = arith.constant 0 : i32
    return %c0_i32, %c0_i32_0 : i32, i32
  }
  func.func @transform_17(%arg0: i32) -> (i32, i32) {
    %c0_i32 = arith.constant 0 : i32
    %c0_i32_0 = arith.constant 0 : i32
    %c0_i32_1 = arith.constant 0 : i32
    return %c0_i32, %c0_i32_0 : i32, i32
  }
  func.func @transform_18(%arg0: i32) -> (i32, i32) {
    %c0_i32 = arith.constant 0 : i32
    %c0_i32_0 = arith.constant 0 : i32
    %c0_i32_1 = arith.constant 0 : i32
    return %c0_i32, %c0_i32_0 : i32, i32
  }
  func.func @transform_19(%arg0: i32) -> (i32, i32) {
    %c0_i32 = arith.constant 0 : i32
    %c0_i32_0 = arith.constant 0 : i32
    %c0_i32_1 = arith.constant 0 : i32
    return %c0_i32, %c0_i32_0 : i32, i32
  }
  func.func @transform_20(%arg0: i32) -> (i32, i32, i32) {
    %c0_i32 = arith.constant 0 : i32
    %c0_i32_0 = arith.constant 0 : i32
    %c0_i32_1 = arith.constant 0 : i32
    return %arg0, %c0_i32, %c0_i32_0 : i32, i32, i32
  }
}

</mosaic_0001>

<llo_original>
// kernel: _lambda_.4
$region0: #{_lambda_.4}
  #allocation0 [shape = 'u32[]', space=smem, size = 0x4, offset = 0x4, fixed_abs, tag = 'smem constant byte address 0x4 - core index']
  #allocation1 [shape = 'u32[144,128]{1,0:T(1,128)}', space=vmem, size = 0x12000, scoped, tag = 'internal scratch']
  %s0 = inlined_call_operand.vmem [shape: f32[2,8,2], index: 0, kind: input, shape index: {}]
  %s1 = inlined_call_operand.vmem [shape: f32[2,8,2], index: 1, kind: input, shape index: {}]
  %s2 = inlined_call_operand.vmem [shape: f32[2,1,32], index: 2, kind: input, shape index: {}]
  %s3 = inlined_call_operand.vmem [shape: f32[2,1,32], index: 3, kind: input, shape index: {}]
  %s4 = inlined_call_operand.vmem [shape: f32[2,8,32], index: 4, kind: input, shape index: {}]
  %s5 = inlined_call_operand.vmem [shape: f32[2,8,32], index: 5, kind: input, shape index: {}]
  %s6 = inlined_call_operand.vmem [shape: f32[2,32], index: 6, kind: input, shape index: {}]
  %s7 = inlined_call_operand.vmem [shape: f32[1,32], index: 7, kind: input, shape index: {}]
  %s8 = inlined_call_operand.vmem [shape: f32[64,32], index: 8, kind: input, shape index: {}]
  %s9 = inlined_call_operand.vmem [shape: f32[1,32], index: 9, kind: input, shape index: {}]
  %s10 = inlined_call_operand.vmem [shape: f32[64,32], index: 10, kind: input, shape index: {}]
  %s11 = inlined_call_operand.vmem [shape: f32[1,32], index: 11, kind: input, shape index: {}]
  %s12 = inlined_call_operand.vmem [shape: f32[64,32], index: 12, kind: input, shape index: {}]
  %s13 = inlined_call_operand.vmem [shape: f32[1,32], index: 13, kind: input, shape index: {}]
  %s14 = inlined_call_operand.vmem [shape: f32[2,8,32], index: 14, kind: output, shape index: {0}]
  %s15 = inlined_call_operand.vmem [shape: f32[2,8,32], index: 15, kind: output, shape index: {1}]
  %16 = xla_tuple %s14, %s15
  %s17 = sld [smem:[#allocation0]]
  $region97: #{_lambda_.4} parent=0
    _
  %s19 = ssub.s32 1, %s17
  %s20 = scalar_select 0, %s19, %s17
  loop: start=0, step=1, limit=4
  $region2: #{_lambda_.4} parent=0 // loop_pre_header
    _
  $region3: #{_lambda_.4} parent=0 // loop_header
    %s22 = sphi 0, %s26
    %p23 = scmp.ge.s32.totalorder %s22, 4
    %s32 = sphi 0, %s34
    %s35 = sphi 0, %s32
    %s36 = sphi 0, %s35
    %s52 = sphi 0, %s36
    %s58 = sphi 0, %s60
    %s61 = sphi 0, %s58
    %s62 = sphi 0, %s61
    %s78 = sphi 0, %s62
    %s84 = sphi 0, %s86
    %s87 = sphi 0, %s84
    %s88 = sphi 0, %s87
    %s104 = sphi 0, %s88
    %s110 = sphi 0, %s112
    %s113 = sphi 0, %s110
    %s114 = sphi 0, %s113
    %s130 = sphi 0, %s114
    %s136 = sphi 0, %s138
    %s139 = sphi 0, %s136
    %s140 = sphi 0, %s139
    %s156 = sphi 0, %s140
    %s162 = sphi 0, %s164
    %s165 = sphi 0, %s162
    %s166 = sphi 0, %s165
    %s182 = sphi 0, %s166
    %s186 = sphi 0, %s186
    %s188 = sphi 0, %s186
    %s189 = sphi 0, %s188
    %s203 = sphi 0, %s189
    %s207 = sphi 0, %s207
    %s209 = sphi 0, %s207
    %s210 = sphi 0, %s209
    %s224 = sphi 0, %s210
    %s228 = sphi 0, %s228
    %s230 = sphi 0, %s228
    %s231 = sphi 0, %s230
    %s245 = sphi 0, %s231
    %s249 = sphi 0, %s249
    %s251 = sphi 0, %s249
    %s252 = sphi 0, %s251
    %s266 = sphi 0, %s252
    %s270 = sphi 0, %s270
    %s272 = sphi 0, %s270
    %s273 = sphi 0, %s272
    %s287 = sphi 0, %s273
    %s291 = sphi 0, %s291
    %s293 = sphi 0, %s291
    %s294 = sphi 0, %s293
    %s308 = sphi 0, %s294
    %s312 = sphi 0, %s312
    %s314 = sphi 0, %s312
    %s315 = sphi 0, %s314
    %s329 = sphi 0, %s315
    %s333 = sphi 0, %s333
    %s335 = sphi 0, %s333
    %s336 = sphi 0, %s335
    %s350 = sphi 0, %s336
    %s356 = sphi 0, %s358
    %s359 = sphi 0, %s356
    %s360 = sphi 0, %s359
    %s376 = sphi 0, %s360
    %s382 = sphi 0, %s384
    %s385 = sphi 0, %s382
    %s386 = sphi 0, %s385
    %s402 = sphi 0, %s386
  $region4: #{_lambda_.4} parent=0 // loop_header_branch
    %25 = sbr.rel (%p23) target = $region8
  $region5: #{_lambda_.4} parent=0 // loop_body
    %s27 = ssub.s32 %s22, 1
    %s28 = ssub.s32 %s22, 2
    %s29 = sadd.s32 %s22, 1
    %s30 = ssub.s32 %s22, %s29
    %p31 = scmp.eq.s32.totalorder %s30, 0
    %s33 = sadd.s32 %s32, 1
    %s34 = scalar_select %p31, %s32, %s33
    %p37 = pneg %p31
    %p38 = scmp.eq.s32.totalorder %s22, 1
    %p39 = por %p37, %p38
    %p40 = scmp.ne.s32.totalorder %s32, %s35
    %p41 = scmp.eq.s32.totalorder %s22, 0
    %p42 = por %p40, %p41
    %p43 = scmp.ne.s32.totalorder %s32, %s35
    %p44 = scmp.eq.s32.totalorder %s27, 1
    %p45 = por %p43, %p44
    %p46 = scmp.ne.s32.totalorder %s35, %s36
    %p47 = scmp.eq.s32.totalorder %s27, 0
    %p48 = por %p46, %p47
    %p49 = scmp.ne.s32.totalorder %s35, %s36
    %p50 = scmp.eq.s32.totalorder %s28, 1
    %p51 = por %p49, %p50
    %p53 = scmp.ne.s32.totalorder %s36, %s52
    %p54 = scmp.eq.s32.totalorder %s28, 0
    %p55 = por %p53, %p54
    %s56 = ssub.s32 %s22, %s29
    %p57 = scmp.eq.s32.totalorder %s56, 0
    %s59 = sadd.s32 %s58, 1
    %s60 = scalar_select %p57, %s58, %s59
    %p63 = pneg %p57
    %p64 = scmp.eq.s32.totalorder %s22, 1
    %p65 = por %p63, %p64
    %p66 = scmp.ne.s32.totalorder %s58, %s61
    %p67 = scmp.eq.s32.totalorder %s22, 0
    %p68 = por %p66, %p67
    %p69 = scmp.ne.s32.totalorder %s58, %s61
    %p70 = scmp.eq.s32.totalorder %s27, 1
    %p71 = por %p69, %p70
    %p72 = scmp.ne.s32.totalorder %s61, %s62
    %p73 = scmp.eq.s32.totalorder %s27, 0
    %p74 = por %p72, %p73
    %p75 = scmp.ne.s32.totalorder %s61, %s62
    %p76 = scmp.eq.s32.totalorder %s28, 1
    %p77 = por %p75, %p76
    %p79 = scmp.ne.s32.totalorder %s62, %s78
    %p80 = scmp.eq.s32.totalorder %s28, 0
    %p81 = por %p79, %p80
    %s82 = ssub.s32 %s22, %s29
    %p83 = scmp.eq.s32.totalorder %s82, 0
    %s85 = sadd.s32 %s84, 1
    %s86 = scalar_select %p83, %s84, %s85
    %p89 = pneg %p83
    %p90 = scmp.eq.s32.totalorder %s22, 1
    %p91 = por %p89, %p90
    %p92 = scmp.ne.s32.totalorder %s84, %s87
    %p93 = scmp.eq.s32.totalorder %s22, 0
    %p94 = por %p92, %p93
    %p95 = scmp.ne.s32.totalorder %s84, %s87
    %p96 = scmp.eq.s32.totalorder %s27, 1
    %p97 = por %p95, %p96
    %p98 = scmp.ne.s32.totalorder %s87, %s88
    %p99 = scmp.eq.s32.totalorder %s27, 0
    %p100 = por %p98, %p99
    %p101 = scmp.ne.s32.totalorder %s87, %s88
    %p102 = scmp.eq.s32.totalorder %s28, 1
    %p103 = por %p101, %p102
    %p105 = scmp.ne.s32.totalorder %s88, %s104
    %p106 = scmp.eq.s32.totalorder %s28, 0
    %p107 = por %p105, %p106
    %s108 = ssub.s32 %s22, %s29
    %p109 = scmp.eq.s32.totalorder %s108, 0
    %s111 = sadd.s32 %s110, 1
    %s112 = scalar_select %p109, %s110, %s111
    %p115 = pneg %p109
    %p116 = scmp.eq.s32.totalorder %s22, 1
    %p117 = por %p115, %p116
    %p118 = scmp.ne.s32.totalorder %s110, %s113
    %p119 = scmp.eq.s32.totalorder %s22, 0
    %p120 = por %p118, %p119
    %p121 = scmp.ne.s32.totalorder %s110, %s113
    %p122 = scmp.eq.s32.totalorder %s27, 1
    %p123 = por %p121, %p122
    %p124 = scmp.ne.s32.totalorder %s113, %s114
    %p125 = scmp.eq.s32.totalorder %s27, 0
    %p126 = por %p124, %p125
    %p127 = scmp.ne.s32.totalorder %s113, %s114
    %p128 = scmp.eq.s32.totalorder %s28, 1
    %p129 = por %p127, %p128
    %p131 = scmp.ne.s32.totalorder %s114, %s130
    %p132 = scmp.eq.s32.totalorder %s28, 0
    %p133 = por %p131, %p132
    %s134 = ssub.s32 %s22, %s29
    %p135 = scmp.eq.s32.totalorder %s134, 0
    %s137 = sadd.s32 %s136, 1
    %s138 = scalar_select %p135, %s136, %s137
    %p141 = pneg %p135
    %p142 = scmp.eq.s32.totalorder %s22, 1
    %p143 = por %p141, %p142
    %p144 = scmp.ne.s32.totalorder %s136, %s139
    %p145 = scmp.eq.s32.totalorder %s22, 0
    %p146 = por %p144, %p145
    %p147 = scmp.ne.s32.totalorder %s136, %s139
    %p148 = scmp.eq.s32.totalorder %s27, 1
    %p149 = por %p147, %p148
    %p150 = scmp.ne.s32.totalorder %s139, %s140
    %p151 = scmp.eq.s32.totalorder %s27, 0
    %p152 = por %p150, %p151
    %p153 = scmp.ne.s32.totalorder %s139, %s140
    %p154 = scmp.eq.s32.totalorder %s28, 1
    %p155 = por %p153, %p154
    %p157 = scmp.ne.s32.totalorder %s140, %s156
    %p158 = scmp.eq.s32.totalorder %s28, 0
    %p159 = por %p157, %p158
    %s160 = ssub.s32 %s22, %s29
    %p161 = scmp.eq.s32.totalorder %s160, 0
    %s163 = sadd.s32 %s162, 1
    %s164 = scalar_select %p161, %s162, %s163
    %p167 = pneg %p161
    %p168 = scmp.eq.s32.totalorder %s22, 1
    %p169 = por %p167, %p168
    %p170 = scmp.ne.s32.totalorder %s162, %s165
    %p171 = scmp.eq.s32.totalorder %s22, 0
    %p172 = por %p170, %p171
    %p173 = scmp.ne.s32.totalorder %s162, %s165
    %p174 = scmp.eq.s32.totalorder %s27, 1
    %p175 = por %p173, %p174
    %p176 = scmp.ne.s32.totalorder %s165, %s166
    %p177 = scmp.eq.s32.totalorder %s27, 0
    %p178 = por %p176, %p177
    %p179 = scmp.ne.s32.totalorder %s165, %s166
    %p180 = scmp.eq.s32.totalorder %s28, 1
    %p181 = por %p179, %p180
    %p183 = scmp.ne.s32.totalorder %s166, %s182
    %p184 = scmp.eq.s32.totalorder %s28, 0
    %p185 = por %p183, %p184
    %s187 = sadd.s32 %s186, 1
    %p190 = scmp.eq.s32.totalorder %s22, 1
    %p191 = scmp.ne.s32.totalorder %s186, %s188
    %p192 = scmp.eq.s32.totalorder %s22, 0
    %p193 = por %p191, %p192
    %p194 = scmp.ne.s32.totalorder %s186, %s188
    %p195 = scmp.eq.s32.totalorder %s27, 1
    %p196 = por %p194, %p195
    %p197 = scmp.ne.s32.totalorder %s188, %s189
    %p198 = scmp.eq.s32.totalorder %s27, 0
    %p199 = por %p197, %p198
    %p200 = scmp.ne.s32.totalorder %s188, %s189
    %p201 = scmp.eq.s32.totalorder %s28, 1
    %p202 = por %p200, %p201
    %p204 = scmp.ne.s32.totalorder %s189, %s203
    %p205 = scmp.eq.s32.totalorder %s28, 0
    %p206 = por %p204, %p205
    %s208 = sadd.s32 %s207, 1
    %p211 = scmp.eq.s32.totalorder %s22, 1
    %p212 = scmp.ne.s32.totalorder %s207, %s209
    %p213 = scmp.eq.s32.totalorder %s22, 0
    %p214 = por %p212, %p213
    %p215 = scmp.ne.s32.totalorder %s207, %s209
    %p216 = scmp.eq.s32.totalorder %s27, 1
    %p217 = por %p215, %p216
    %p218 = scmp.ne.s32.totalorder %s209, %s210
    %p219 = scmp.eq.s32.totalorder %s27, 0
    %p220 = por %p218, %p219
    %p221 = scmp.ne.s32.totalorder %s209, %s210
    %p222 = scmp.eq.s32.totalorder %s28, 1
    %p223 = por %p221, %p222
    %p225 = scmp.ne.s32.totalorder %s210, %s224
    %p226 = scmp.eq.s32.totalorder %s28, 0
    %p227 = por %p225, %p226
    %s229 = sadd.s32 %s228, 1
    %p232 = scmp.eq.s32.totalorder %s22, 1
    %p233 = scmp.ne.s32.totalorder %s228, %s230
    %p234 = scmp.eq.s32.totalorder %s22, 0
    %p235 = por %p233, %p234
    %p236 = scmp.ne.s32.totalorder %s228, %s230
    %p237 = scmp.eq.s32.totalorder %s27, 1
    %p238 = por %p236, %p237
    %p239 = scmp.ne.s32.totalorder %s230, %s231
    %p240 = scmp.eq.s32.totalorder %s27, 0
    %p241 = por %p239, %p240
    %p242 = scmp.ne.s32.totalorder %s230, %s231
    %p243 = scmp.eq.s32.totalorder %s28, 1
    %p244 = por %p242, %p243
    %p246 = scmp.ne.s32.totalorder %s231, %s245
    %p247 = scmp.eq.s32.totalorder %s28, 0
    %p248 = por %p246, %p247
    %s250 = sadd.s32 %s249, 1
    %p253 = scmp.eq.s32.totalorder %s22, 1
    %p254 = scmp.ne.s32.totalorder %s249, %s251
    %p255 = scmp.eq.s32.totalorder %s22, 0
    %p256 = por %p254, %p255
    %p257 = scmp.ne.s32.totalorder %s249, %s251
    %p258 = scmp.eq.s32.totalorder %s27, 1
    %p259 = por %p257, %p258
    %p260 = scmp.ne.s32.totalorder %s251, %s252
    %p261 = scmp.eq.s32.totalorder %s27, 0
    %p262 = por %p260, %p261
    %p263 = scmp.ne.s32.totalorder %s251, %s252
    %p264 = scmp.eq.s32.totalorder %s28, 1
    %p265 = por %p263, %p264
    %p267 = scmp.ne.s32.totalorder %s252, %s266
    %p268 = scmp.eq.s32.totalorder %s28, 0
    %p269 = por %p267, %p268
    %s271 = sadd.s32 %s270, 1
    %p274 = scmp.eq.s32.totalorder %s22, 1
    %p275 = scmp.ne.s32.totalorder %s270, %s272
    %p276 = scmp.eq.s32.totalorder %s22, 0
    %p277 = por %p275, %p276
    %p278 = scmp.ne.s32.totalorder %s270, %s272
    %p279 = scmp.eq.s32.totalorder %s27, 1
    %p280 = por %p278, %p279
    %p281 = scmp.ne.s32.totalorder %s272, %s273
    %p282 = scmp.eq.s32.totalorder %s27, 0
    %p283 = por %p281, %p282
    %p284 = scmp.ne.s32.totalorder %s272, %s273
    %p285 = scmp.eq.s32.totalorder %s28, 1
    %p286 = por %p284, %p285
    %p288 = scmp.ne.s32.totalorder %s273, %s287
    %p289 = scmp.eq.s32.totalorder %s28, 0
    %p290 = por %p288, %p289
    %s292 = sadd.s32 %s291, 1
    %p295 = scmp.eq.s32.totalorder %s22, 1
    %p296 = scmp.ne.s32.totalorder %s291, %s293
    %p297 = scmp.eq.s32.totalorder %s22, 0
    %p298 = por %p296, %p297
    %p299 = scmp.ne.s32.totalorder %s291, %s293
    %p300 = scmp.eq.s32.totalorder %s27, 1
    %p301 = por %p299, %p300
    %p302 = scmp.ne.s32.totalorder %s293, %s294
    %p303 = scmp.eq.s32.totalorder %s27, 0
    %p304 = por %p302, %p303
    %p305 = scmp.ne.s32.totalorder %s293, %s294
    %p306 = scmp.eq.s32.totalorder %s28, 1
    %p307 = por %p305, %p306
    %p309 = scmp.ne.s32.totalorder %s294, %s308
    %p310 = scmp.eq.s32.totalorder %s28, 0
    %p311 = por %p309, %p310
    %s313 = sadd.s32 %s312, 1
    %p316 = scmp.eq.s32.totalorder %s22, 1
    %p317 = scmp.ne.s32.totalorder %s312, %s314
    %p318 = scmp.eq.s32.totalorder %s22, 0
    %p319 = por %p317, %p318
    %p320 = scmp.ne.s32.totalorder %s312, %s314
    %p321 = scmp.eq.s32.totalorder %s27, 1
    %p322 = por %p320, %p321
    %p323 = scmp.ne.s32.totalorder %s314, %s315
    %p324 = scmp.eq.s32.totalorder %s27, 0
    %p325 = por %p323, %p324
    %p326 = scmp.ne.s32.totalorder %s314, %s315
    %p327 = scmp.eq.s32.totalorder %s28, 1
    %p328 = por %p326, %p327
    %p330 = scmp.ne.s32.totalorder %s315, %s329
    %p331 = scmp.eq.s32.totalorder %s28, 0
    %p332 = por %p330, %p331
    %s334 = sadd.s32 %s333, 1
    %p337 = scmp.eq.s32.totalorder %s22, 1
    %p338 = scmp.ne.s32.totalorder %s333, %s335
    %p339 = scmp.eq.s32.totalorder %s22, 0
    %p340 = por %p338, %p339
    %p341 = scmp.ne.s32.totalorder %s333, %s335
    %p342 = scmp.eq.s32.totalorder %s27, 1
    %p343 = por %p341, %p342
    %p344 = scmp.ne.s32.totalorder %s335, %s336
    %p345 = scmp.eq.s32.totalorder %s27, 0
    %p346 = por %p344, %p345
    %p347 = scmp.ne.s32.totalorder %s335, %s336
    %p348 = scmp.eq.s32.totalorder %s28, 1
    %p349 = por %p347, %p348
    %p351 = scmp.ne.s32.totalorder %s336, %s350
    %p352 = scmp.eq.s32.totalorder %s28, 0
    %p353 = por %p351, %p352
    %s354 = ssub.s32 %s22, %s29
    %p355 = scmp.eq.s32.totalorder %s354, 0
    %s357 = sadd.s32 %s356, 1
    %s358 = scalar_select %p355, %s356, %s357
    %p361 = pneg %p355
    %p362 = scmp.eq.s32.totalorder %s22, 1
    %p363 = por %p361, %p362
    %p364 = scmp.ne.s32.totalorder %s356, %s359
    %p365 = scmp.eq.s32.totalorder %s22, 0
    %p366 = por %p364, %p365
    %p367 = scmp.ne.s32.totalorder %s356, %s359
    %p368 = scmp.eq.s32.totalorder %s27, 1
    %p369 = por %p367, %p368
    %p370 = scmp.ne.s32.totalorder %s359, %s360
    %p371 = scmp.eq.s32.totalorder %s27, 0
    %p372 = por %p370, %p371
    %p373 = scmp.ne.s32.totalorder %s359, %s360
    %p374 = scmp.eq.s32.totalorder %s28, 1
    %p375 = por %p373, %p374
    %p377 = scmp.ne.s32.totalorder %s360, %s376
    %p378 = scmp.eq.s32.totalorder %s28, 0
    %p379 = por %p377, %p378
    %s380 = ssub.s32 %s22, %s29
    %p381 = scmp.eq.s32.totalorder %s380, 0
    %s383 = sadd.s32 %s382, 1
    %s384 = scalar_select %p381, %s382, %s383
    %p387 = pneg %p381
    %p388 = scmp.eq.s32.totalorder %s22, 1
    %p389 = por %p387, %p388
    %p390 = scmp.ne.s32.totalorder %s382, %s385
    %p391 = scmp.eq.s32.totalorder %s22, 0
    %p392 = por %p390, %p391
    %p393 = scmp.ne.s32.totalorder %s382, %s385
    %p394 = scmp.eq.s32.totalorder %s27, 1
    %p395 = por %p393, %p394
    %p396 = scmp.ne.s32.totalorder %s385, %s386
    %p397 = scmp.eq.s32.totalorder %s27, 0
    %p398 = por %p396, %p397
    %p399 = scmp.ne.s32.totalorder %s385, %s386
    %p400 = scmp.eq.s32.totalorder %s28, 1
    %p401 = por %p399, %p400
    %p403 = scmp.ne.s32.totalorder %s386, %s402
    %p404 = scmp.eq.s32.totalorder %s28, 0
    %p405 = por %p403, %p404
    %p406 = scmp.le.s32.totalorder 1, %s22
    %p407 = scmp.lt.s32.totalorder %s22, 3
    %p408 = pnand %p406, %p407
    %p409 = pneg %p408
    // Predicated region
    $region9: #{_lambda_.4} parent=5 // pred_check
      _
    $region10: #{_lambda_.4} parent=5 // pred_check_branch
      %411 = sbr.rel (%p408) target = $region12
    $region11: #{_lambda_.4} parent=5 // pred_region
      %s412 = ssub.s32 %s22, 1
      // Predicated region
      $region13: #{_lambda_.4} parent=11 // pred_check
        %p413 = pneg %p199
      $region14: #{_lambda_.4} parent=11 // pred_check_branch
        %415 = sbr.rel (%p413) target = $region16
      $region15: #{_lambda_.4} parent=11 // pred_region
        _
      $region16: #{_lambda_.4} parent=11 // pred_fallthru
        _
      // Predicated region
      $region17: #{_lambda_.4} parent=11 // pred_check
        %p416 = pneg %p220
      $region18: #{_lambda_.4} parent=11 // pred_check_branch
        %418 = sbr.rel (%p416) target = $region20
      $region19: #{_lambda_.4} parent=11 // pred_region
        _
      $region20: #{_lambda_.4} parent=11 // pred_fallthru
        _
      // Predicated region
      $region21: #{_lambda_.4} parent=11 // pred_check
        %p419 = pneg %p241
      $region22: #{_lambda_.4} parent=11 // pred_check_branch
        %421 = sbr.rel (%p419) target = $region24
      $region23: #{_lambda_.4} parent=11 // pred_region
        _
      $region24: #{_lambda_.4} parent=11 // pred_fallthru
        _
      // Predicated region
      $region25: #{_lambda_.4} parent=11 // pred_check
        %p422 = pneg %p262
      $region26: #{_lambda_.4} parent=11 // pred_check_branch
        %424 = sbr.rel (%p422) target = $region28
      $region27: #{_lambda_.4} parent=11 // pred_region
        _
      $region28: #{_lambda_.4} parent=11 // pred_fallthru
        _
      // Predicated region
      $region29: #{_lambda_.4} parent=11 // pred_check
        %p425 = pneg %p283
      $region30: #{_lambda_.4} parent=11 // pred_check_branch
        %427 = sbr.rel (%p425) target = $region32
      $region31: #{_lambda_.4} parent=11 // pred_region
        _
      $region32: #{_lambda_.4} parent=11 // pred_fallthru
        _
      // Predicated region
      $region33: #{_lambda_.4} parent=11 // pred_check
        %p428 = pneg %p304
      $region34: #{_lambda_.4} parent=11 // pred_check_branch
        %430 = sbr.rel (%p428) target = $region36
      $region35: #{_lambda_.4} parent=11 // pred_region
        _
      $region36: #{_lambda_.4} parent=11 // pred_fallthru
        _
      // Predicated region
      $region37: #{_lambda_.4} parent=11 // pred_check
        %p431 = pneg %p325
      $region38: #{_lambda_.4} parent=11 // pred_check_branch
        %433 = sbr.rel (%p431) target = $region40
      $region39: #{_lambda_.4} parent=11 // pred_region
        _
      $region40: #{_lambda_.4} parent=11 // pred_fallthru
        _
      // Predicated region
      $region41: #{_lambda_.4} parent=11 // pred_check
        %p434 = pneg %p346
      $region42: #{_lambda_.4} parent=11 // pred_check_branch
        %436 = sbr.rel (%p434) target = $region44
      $region43: #{_lambda_.4} parent=11 // pred_region
        _
      $region44: #{_lambda_.4} parent=11 // pred_fallthru
        _
    $region12: #{_lambda_.4} parent=5 // pred_fallthru
      _
    %p437 = scmp.lt.s32.totalorder %s22, 2
    // Predicated region
    $region45: #{_lambda_.4} parent=5 // pred_check
      %p438 = pneg %p437
    $region46: #{_lambda_.4} parent=5 // pred_check_branch
      %440 = sbr.rel (%p438) target = $region48
    $region47: #{_lambda_.4} parent=5 // pred_region
      // Predicated region
      $region49: #{_lambda_.4} parent=47 // pred_check
        %p441 = pneg %p42
      $region50: #{_lambda_.4} parent=47 // pred_check_branch
        %443 = sbr.rel (%p441) target = $region52
      $region51: #{_lambda_.4} parent=47 // pred_region
        %p444 = scmp.lt.s32.totalorder %s22, 1
        %s445 = scalar_select %p444, %s22, 1
        %s446 = smul.addr %s445, 8
        %s447 = scalar_lea.vmem %s0, %s446
      $region52: #{_lambda_.4} parent=47 // pred_fallthru
        _
      // Predicated region
      $region53: #{_lambda_.4} parent=47 // pred_check
        %p448 = pneg %p68
      $region54: #{_lambda_.4} parent=47 // pred_check_branch
        %450 = sbr.rel (%p448) target = $region56
      $region55: #{_lambda_.4} parent=47 // pred_region
        %p451 = scmp.lt.s32.totalorder %s22, 1
        %s452 = scalar_select %p451, %s22, 1
        %s453 = smul.addr %s452, 8
        %s454 = scalar_lea.vmem %s1, %s453
      $region56: #{_lambda_.4} parent=47 // pred_fallthru
        _
      // Predicated region
      $region57: #{_lambda_.4} parent=47 // pred_check
        %p455 = pneg %p94
      $region58: #{_lambda_.4} parent=47 // pred_check_branch
        %457 = sbr.rel (%p455) target = $region60
      $region59: #{_lambda_.4} parent=47 // pred_region
        %p458 = scmp.lt.s32.totalorder %s22, 1
        %s459 = scalar_select %p458, %s22, 1
        %s460 = scalar_lea.vmem %s2, %s459
      $region60: #{_lambda_.4} parent=47 // pred_fallthru
        _
      // Predicated region
      $region61: #{_lambda_.4} parent=47 // pred_check
        %p461 = pneg %p120
      $region62: #{_lambda_.4} parent=47 // pred_check_branch
        %463 = sbr.rel (%p461) target = $region64
      $region63: #{_lambda_.4} parent=47 // pred_region
        %p464 = scmp.lt.s32.totalorder %s22, 1
        %s465 = scalar_select %p464, %s22, 1
        %s466 = scalar_lea.vmem %s3, %s465
      $region64: #{_lambda_.4} parent=47 // pred_fallthru
        _
      // Predicated region
      $region65: #{_lambda_.4} parent=47 // pred_check
        %p467 = pneg %p146
      $region66: #{_lambda_.4} parent=47 // pred_check_branch
        %469 = sbr.rel (%p467) target = $region68
      $region67: #{_lambda_.4} parent=47 // pred_region
        %p470 = scmp.lt.s32.totalorder %s22, 1
        %s471 = scalar_select %p470, %s22, 1
        %s472 = smul.addr %s471, 8
        %s473 = scalar_lea.vmem %s4, %s472
      $region68: #{_lambda_.4} parent=47 // pred_fallthru
        _
      // Predicated region
      $region69: #{_lambda_.4} parent=47 // pred_check
        %p474 = pneg %p172
      $region70: #{_lambda_.4} parent=47 // pred_check_branch
        %476 = sbr.rel (%p474) target = $region72
      $region71: #{_lambda_.4} parent=47 // pred_region
        %p477 = scmp.lt.s32.totalorder %s22, 1
        %s478 = scalar_select %p477, %s22, 1
        %s479 = smul.addr %s478, 8
        %s480 = scalar_lea.vmem %s5, %s479
      $region72: #{_lambda_.4} parent=47 // pred_fallthru
        _
    $region48: #{_lambda_.4} parent=5 // pred_fallthru
      _
    %p481 = scmp.le.s32.totalorder 1, %s22
    %p482 = scmp.lt.s32.totalorder %s22, 3
    %p483 = pnand %p481, %p482
    %p484 = pneg %p483
    // Predicated region
    $region73: #{_lambda_.4} parent=5 // pred_check
      _
    $region74: #{_lambda_.4} parent=5 // pred_check_branch
      %486 = sbr.rel (%p483) target = $region76
    $region75: #{_lambda_.4} parent=5 // pred_region
      %s487 = ssub.s32 %s22, 1
      %p488 = scmp.lt.s32.totalorder %s27, 1
      %s489 = scalar_select %p488, %s27, 1
      %s490 = smul.addr %s489, 8
      %s491 = scalar_lea.vmem %s0, %s490
      %p492 = pneg %p48
      %p493 = pneg %p45
      %p494 = scmp.lt.s32.totalorder %s27, 1
      %s495 = scalar_select %p494, %s27, 1
      %s496 = smul.addr %s495, 8
      %s497 = scalar_lea.vmem %s1, %s496
      %p498 = pneg %p74
      %p499 = pneg %p71
      %p500 = scmp.lt.s32.totalorder %s27, 1
      %s501 = scalar_select %p500, %s27, 1
      %s502 = scalar_lea.vmem %s2, %s501
      %p503 = pneg %p100
      %p504 = pneg %p97
      %p505 = scmp.lt.s32.totalorder %s27, 1
      %s506 = scalar_select %p505, %s27, 1
      %s507 = scalar_lea.vmem %s3, %s506
      %p508 = pneg %p126
      %p509 = pneg %p123
      %p510 = scmp.lt.s32.totalorder %s27, 1
      %s511 = scalar_select %p510, %s27, 1
      %s512 = smul.addr %s511, 8
      %s513 = scalar_lea.vmem %s4, %s512
      %p514 = pneg %p152
      %p515 = pneg %p149
      %p516 = scmp.lt.s32.totalorder %s27, 1
      %s517 = scalar_select %p516, %s27, 1
      %s518 = smul.addr %s517, 8
      %s519 = scalar_lea.vmem %s5, %s518
      %p520 = pneg %p178
      %p521 = pneg %p175
      %p522 = pneg %p199
      %p523 = pneg %p196
      %p524 = pneg %p220
      %p525 = pneg %p217
      %p526 = pneg %p241
      %p527 = pneg %p238
      %p528 = pneg %p262
      %p529 = pneg %p259
      %p530 = pneg %p283
      %p531 = pneg %p280
      %p532 = pneg %p304
      %p533 = pneg %p301
      %p534 = pneg %p325
      %p535 = pneg %p322
      %p536 = pneg %p346
      %p537 = pneg %p343
      %p538 = pneg %p372
      %p539 = pneg %p369
      %p540 = scmp.lt.s32.totalorder %s27, 1
      %s541 = scalar_select %p540, %s27, 1
      %s542 = smul.addr %s541, 8
      %s543 = scalar_lea.vmem %s14, %s542
      %p544 = pneg %p398
      %p545 = pneg %p395
      %p546 = scmp.lt.s32.totalorder %s27, 1
      %s547 = scalar_select %p546, %s27, 1
      %s548 = smul.addr %s547, 8
      %s549 = scalar_lea.vmem %s15, %s548
      %p550 = scmp.lt.s32.totalorder %s27, 1
      %s551 = scalar_select %p550, %s27, 1
      %s552 = smul.addr %s551, 8
      %s553 = scalar_lea.vmem %s0, %s552
      %p554 = scmp.lt.s32.totalorder %s27, 1
      %s555 = scalar_select %p554, %s27, 1
      %s556 = smul.addr %s555, 8
      %s557 = scalar_lea.vmem %s1, %s556
      %p558 = scmp.lt.s32.totalorder %s27, 1
      %s559 = scalar_select %p558, %s27, 1
      %s560 = scalar_lea.vmem %s2, %s559
      %p561 = scmp.lt.s32.totalorder %s27, 1
      %s562 = scalar_select %p561, %s27, 1
      %s563 = scalar_lea.vmem %s3, %s562
      %p564 = scmp.lt.s32.totalorder %s27, 1
      %s565 = scalar_select %p564, %s27, 1
      %s566 = smul.addr %s565, 8
      %s567 = scalar_lea.vmem %s4, %s566
      %p568 = scmp.lt.s32.totalorder %s27, 1
      %s569 = scalar_select %p568, %s27, 1
      %s570 = smul.addr %s569, 8
      %s571 = scalar_lea.vmem %s5, %s570
      %p572 = scmp.lt.s32.totalorder %s27, 1
      %s573 = scalar_select %p572, %s27, 1
      %s574 = smul.addr %s573, 8
      %s575 = scalar_lea.vmem %s14, %s574
      %p576 = scmp.lt.s32.totalorder %s27, 1
      %s577 = scalar_select %p576, %s27, 1
      %s578 = smul.addr %s577, 8
      %s579 = scalar_lea.vmem %s15, %s578
      %v580 = vld [vmem:[%s6] sm:$0x3]
      %v581 = vld [vmem:[%s7] sm:$0x1]
      %v582 = vld [vmem:[%s553] sm:$0xff]
      %v584 = vlaneseq
      %v585 = vshrl.u32 %v584, 7
      %v586 = vsub.s32 0, %v585
      %v587 = vrot.slane %v581, %v586
      %vm589 = vcmask 15360
      %v591 = vsel %vm589, %v582, 0
      %vm593 = vcmask 1041408
      %v595 = vsel %vm593, %v580, 0
      %597 = vmatprep.subr.mxu0 0.0
      %598 = vmatpush1.msra.mxu0 %v595
      %599 = vmatprep.subr.mxu0 0.0
      %600 = vmatpush1.msra.mxu0 0.0
      %601 = vmatprep.subr.mxu0 0.0
      %602 = vmatpush1.msra.mxu0 0.0
      %603 = vmatprep.subr.mxu0 0.0
      %604 = vmatpush1.msra.mxu0 0.0
      %605 = vmatprep.subr.mxu0 0.0
      %606 = vmatpush1.msra.mxu0 0.0
      %607 = vmatprep.subr.mxu0 0.0
      %608 = vmatpush1.msra.mxu0 0.0
      %609 = vmatprep.subr.mxu0 0.0
      %610 = vmatpush1.msra.mxu0 0.0
      %611 = vmatprep.subr.mxu0 0.0
      %612 = vmatpush1.msra.mxu0 0.0
      %613 = vmatprep.subr.mxu0 0.0
      %614 = vmatpush1.msra.mxu0 0.0
      %615 = vmatprep.subr.mxu0 0.0
      %616 = vmatpush1.msra.mxu0 0.0
      %617 = vmatprep.subr.mxu0 0.0
      %618 = vmatpush1.msra.mxu0 0.0
      %619 = vmatprep.subr.mxu0 0.0
      %620 = vmatpush1.msra.mxu0 0.0
      %621 = vmatprep.subr.mxu0 0.0
      %622 = vmatpush1.msra.mxu0 0.0
      %623 = vmatprep.subr.mxu0 0.0
      %624 = vmatpush1.msra.mxu0 0.0
      %625 = vmatprep.subr.mxu0 0.0
      %626 = vmatpush1.msra.mxu0 0.0
      %627 = vmatprep.subr.mxu0 0.0
      %628 = vmatpush1.msra.mxu0 0.0
      %629 = vmatprep.subr.mxu0 0.0
      %630 = vmatpush1.msra.mxu0 0.0
      %631 = vmatprep.subr.mxu0 0.0
      %632 = vmatpush1.msra.mxu0 0.0
      %633 = vmatprep.subr.mxu0 0.0
      %634 = vmatpush1.msra.mxu0 0.0
      %635 = vmatprep.subr.mxu0 0.0
      %636 = vmatpush1.msra.mxu0 0.0
      %637 = vmatprep.subr.mxu0 0.0
      %638 = vmatpush1.msra.mxu0 0.0
      %639 = vmatprep.subr.mxu0 0.0
      %640 = vmatpush1.msra.mxu0 0.0
      %641 = vmatprep.subr.mxu0 0.0
      %642 = vmatpush1.msra.mxu0 0.0
      %643 = vmatprep.subr.mxu0 0.0
      %644 = vmatpush1.msra.mxu0 0.0
      %645 = vmatprep.subr.mxu0 0.0
      %646 = vmatpush1.msra.mxu0 0.0
      %647 = vmatprep.subr.mxu0 0.0
      %648 = vmatpush1.msra.mxu0 0.0
      %649 = vmatprep.subr.mxu0 0.0
      %650 = vmatpush1.msra.mxu0 0.0
      %651 = vmatprep.subr.mxu0 0.0
      %652 = vmatpush1.msra.mxu0 0.0
      %653 = vmatprep.subr.mxu0 0.0
      %654 = vmatpush1.msra.mxu0 0.0
      %655 = vmatprep.subr.mxu0 0.0
      %656 = vmatpush1.msra.mxu0 0.0
      %657 = vmatprep.subr.mxu0 0.0
      %658 = vmatpush1.msra.mxu0 0.0
      %659 = vmatprep.subr.mxu0 0.0
      %660 = vmatpush1.msra.mxu0 0.0
      %661 = vmatprep.mubr.f32.mxu0 0.0
      %662 = vmatmul.mubr.f32.gmra.mrb[0].mxu0 %v591
      %v663 = vpop.f32.mrb[0].mxu0
      %v664 = vadd.f32 %v587, %v663
      %v665 = vpop.f32.mrb[0].mxu0
      %666 = vdwg.mxu0
      %v667 = vmax.f32 %v664, 0.0
      %v668 = vld [vmem:[%s557] sm:$0xff]
      %v670 = vsel %vm589, %v668, 0
      %672 = vmatprep.subr.mxu0 0.0
      %673 = vmatpush1.msra.mxu0 %v595
      %674 = vmatprep.subr.mxu0 0.0
      %675 = vmatpush1.msra.mxu0 0.0
      %676 = vmatprep.subr.mxu0 0.0
      %677 = vmatpush1.msra.mxu0 0.0
      %678 = vmatprep.subr.mxu0 0.0
      %679 = vmatpush1.msra.mxu0 0.0
      %680 = vmatprep.subr.mxu0 0.0
      %681 = vmatpush1.msra.mxu0 0.0
      %682 = vmatprep.subr.mxu0 0.0
      %683 = vmatpush1.msra.mxu0 0.0
      %684 = vmatprep.subr.mxu0 0.0
      %685 = vmatpush1.msra.mxu0 0.0
      %686 = vmatprep.subr.mxu0 0.0
      %687 = vmatpush1.msra.mxu0 0.0
      %688 = vmatprep.subr.mxu0 0.0
      %689 = vmatpush1.msra.mxu0 0.0
      %690 = vmatprep.subr.mxu0 0.0
      %691 = vmatpush1.msra.mxu0 0.0
      %692 = vmatprep.subr.mxu0 0.0
      %693 = vmatpush1.msra.mxu0 0.0
      %694 = vmatprep.subr.mxu0 0.0
      %695 = vmatpush1.msra.mxu0 0.0
      %696 = vmatprep.subr.mxu0 0.0
      %697 = vmatpush1.msra.mxu0 0.0
      %698 = vmatprep.subr.mxu0 0.0
      %699 = vmatpush1.msra.mxu0 0.0
      %700 = vmatprep.subr.mxu0 0.0
      %701 = vmatpush1.msra.mxu0 0.0
      %702 = vmatprep.subr.mxu0 0.0
      %703 = vmatpush1.msra.mxu0 0.0
      %704 = vmatprep.subr.mxu0 0.0
      %705 = vmatpush1.msra.mxu0 0.0
      %706 = vmatprep.subr.mxu0 0.0
      %707 = vmatpush1.msra.mxu0 0.0
      %708 = vmatprep.subr.mxu0 0.0
      %709 = vmatpush1.msra.mxu0 0.0
      %710 = vmatprep.subr.mxu0 0.0
      %711 = vmatpush1.msra.mxu0 0.0
      %712 = vmatprep.subr.mxu0 0.0
      %713 = vmatpush1.msra.mxu0 0.0
      %714 = vmatprep.subr.mxu0 0.0
      %715 = vmatpush1.msra.mxu0 0.0
      %716 = vmatprep.subr.mxu0 0.0
      %717 = vmatpush1.msra.mxu0 0.0
      %718 = vmatprep.subr.mxu0 0.0
      %719 = vmatpush1.msra.mxu0 0.0
      %720 = vmatprep.subr.mxu0 0.0
      %721 = vmatpush1.msra.mxu0 0.0
      %722 = vmatprep.subr.mxu0 0.0
      %723 = vmatpush1.msra.mxu0 0.0
      %724 = vmatprep.subr.mxu0 0.0
      %725 = vmatpush1.msra.mxu0 0.0
      %726 = vmatprep.subr.mxu0 0.0
      %727 = vmatpush1.msra.mxu0 0.0
      %728 = vmatprep.subr.mxu0 0.0
      %729 = vmatpush1.msra.mxu0 0.0
      %730 = vmatprep.subr.mxu0 0.0
      %731 = vmatpush1.msra.mxu0 0.0
      %732 = vmatprep.subr.mxu0 0.0
      %733 = vmatpush1.msra.mxu0 0.0
      %734 = vmatprep.subr.mxu0 0.0
      %735 = vmatpush1.msra.mxu0 0.0
      %736 = vmatprep.mubr.f32.mxu0 0.0
      %737 = vmatmul.mubr.f32.gmra.mrb[0].mxu0 %v670
      %v738 = vpop.f32.mrb[0].mxu0
      %v739 = vadd.f32 %v587, %v738
      %v740 = vpop.f32.mrb[0].mxu0
      %741 = vdwg.mxu0
      %v742 = vmax.f32 %v739, 0.0
      %v743 = vld [vmem:[%s8] sm:$0xff]
      %v744 = vld [vmem:[%s8 + $0x8] sm:$0xff]
      %v745 = vld [vmem:[%s8 + $0x10] sm:$0xff]
      %v746 = vld [vmem:[%s8 + $0x18] sm:$0xff]
      %v747 = vld [vmem:[%s8 + $0x20] sm:$0xff]
      %v748 = vld [vmem:[%s8 + $0x28] sm:$0xff]
      %v749 = vld [vmem:[%s8 + $0x30] sm:$0xff]
      %v750 = vld [vmem:[%s8 + $0x38] sm:$0xff]
      %v751 = vld [vmem:[%s9] sm:$0x1]
      %v752 = vld [vmem:[%s560] sm:$0x1]
      %v754 = vlaneseq
      %v755 = vshrl.u32 %v754, 7
      %v756 = vsub.s32 0, %v755
      %v757 = vrot.slane %v752, %v756
      %v758 = vld [vmem:[%s563] sm:$0x1]
      %v760 = vlaneseq
      %v761 = vshrl.u32 %v760, 7
      %v762 = vsub.s32 0, %v761
      %v763 = vrot.slane %v758, %v762
      %vm764 = vcmask 261120
      %v765 = vsel %vm764, %v757, 0
      %767 = vmatprep.subr.mxu0 0.0
      %768 = vmatpush1.msra.mxu0 %v747
      %769 = vmatprep.subr.mxu0 0.0
      %770 = vmatpush1.msra.mxu0 %v748
      %771 = vmatprep.subr.mxu0 0.0
      %772 = vmatpush1.msra.mxu0 %v749
      %773 = vmatprep.subr.mxu0 0.0
      %774 = vmatpush1.msra.mxu0 %v750
      %775 = vmatprep.subr.mxu0 0.0
      %776 = vmatpush1.msra.mxu0 0.0
      %777 = vmatprep.subr.mxu0 0.0
      %778 = vmatpush1.msra.mxu0 0.0
      %779 = vmatprep.subr.mxu0 0.0
      %780 = vmatpush1.msra.mxu0 0.0
      %781 = vmatprep.subr.mxu0 0.0
      %782 = vmatpush1.msra.mxu0 0.0
      %783 = vmatprep.subr.mxu0 0.0
      %784 = vmatpush1.msra.mxu0 0.0
      %785 = vmatprep.subr.mxu0 0.0
      %786 = vmatpush1.msra.mxu0 0.0
      %787 = vmatprep.subr.mxu0 0.0
      %788 = vmatpush1.msra.mxu0 0.0
      %789 = vmatprep.subr.mxu0 0.0
      %790 = vmatpush1.msra.mxu0 0.0
      %791 = vmatprep.subr.mxu0 0.0
      %792 = vmatpush1.msra.mxu0 0.0
      %793 = vmatprep.subr.mxu0 0.0
      %794 = vmatpush1.msra.mxu0 0.0
      %795 = vmatprep.subr.mxu0 0.0
      %796 = vmatpush1.msra.mxu0 0.0
      %797 = vmatprep.subr.mxu0 0.0
      %798 = vmatpush1.msra.mxu0 0.0
      %799 = vmatprep.subr.mxu0 0.0
      %800 = vmatpush1.msra.mxu0 0.0
      %801 = vmatprep.subr.mxu0 0.0
      %802 = vmatpush1.msra.mxu0 0.0
      %803 = vmatprep.subr.mxu0 0.0
      %804 = vmatpush1.msra.mxu0 0.0
      %805 = vmatprep.subr.mxu0 0.0
      %806 = vmatpush1.msra.mxu0 0.0
      %807 = vmatprep.subr.mxu0 0.0
      %808 = vmatpush1.msra.mxu0 0.0
      %809 = vmatprep.subr.mxu0 0.0
      %810 = vmatpush1.msra.mxu0 0.0
      %811 = vmatprep.subr.mxu0 0.0
      %812 = vmatpush1.msra.mxu0 0.0
      %813 = vmatprep.subr.mxu0 0.0
      %814 = vmatpush1.msra.mxu0 0.0
      %815 = vmatprep.subr.mxu0 0.0
      %816 = vmatpush1.msra.mxu0 0.0
      %817 = vmatprep.subr.mxu0 0.0
      %818 = vmatpush1.msra.mxu0 0.0
      %819 = vmatprep.subr.mxu0 0.0
      %820 = vmatpush1.msra.mxu0 0.0
      %821 = vmatprep.subr.mxu0 0.0
      %822 = vmatpush1.msra.mxu0 0.0
      %823 = vmatprep.subr.mxu0 0.0
      %824 = vmatpush1.msra.mxu0 0.0
      %825 = vmatprep.subr.mxu0 0.0
      %826 = vmatpush1.msra.mxu0 0.0
      %827 = vmatprep.subr.mxu0 0.0
      %828 = vmatpush1.msra.mxu0 0.0
      %829 = vmatprep.subr.mxu0 0.0
      %830 = vmatpush1.msra.mxu0 0.0
      %831 = vmatprep.mubr.f32.mxu0 0.0
      %832 = vmatmul.mubr.f32.gmra.mrb[0].mxu0 %v765
      %v833 = vpop.f32.mrb[0].mxu0
      %v834 = vadd.f32 0.0, %v833
      %v835 = vpop.f32.mrb[0].mxu0
      %836 = vdwg.mxu0
      %v838 = vsel %vm764, %v667, 0
      %840 = vmatprep.subr.mxu0 0.0
      %841 = vmatpush1.msra.mxu0 %v743
      %842 = vmatprep.subr.mxu0 0.0
      %843 = vmatpush1.msra.mxu0 %v744
      %844 = vmatprep.subr.mxu0 0.0
      %845 = vmatpush1.msra.mxu0 %v745
      %846 = vmatprep.subr.mxu0 0.0
      %847 = vmatpush1.msra.mxu0 %v746
      %848 = vmatprep.subr.mxu0 0.0
      %849 = vmatpush1.msra.mxu0 0.0
      %850 = vmatprep.subr.mxu0 0.0
      %851 = vmatpush1.msra.mxu0 0.0
      %852 = vmatprep.subr.mxu0 0.0
      %853 = vmatpush1.msra.mxu0 0.0
      %854 = vmatprep.subr.mxu0 0.0
      %855 = vmatpush1.msra.mxu0 0.0
      %856 = vmatprep.subr.mxu0 0.0
      %857 = vmatpush1.msra.mxu0 0.0
      %858 = vmatprep.subr.mxu0 0.0
      %859 = vmatpush1.msra.mxu0 0.0
      %860 = vmatprep.subr.mxu0 0.0
      %861 = vmatpush1.msra.mxu0 0.0
      %862 = vmatprep.subr.mxu0 0.0
      %863 = vmatpush1.msra.mxu0 0.0
      %864 = vmatprep.subr.mxu0 0.0
      %865 = vmatpush1.msra.mxu0 0.0
      %866 = vmatprep.subr.mxu0 0.0
      %867 = vmatpush1.msra.mxu0 0.0
      %868 = vmatprep.subr.mxu0 0.0
      %869 = vmatpush1.msra.mxu0 0.0
      %870 = vmatprep.subr.mxu0 0.0
      %871 = vmatpush1.msra.mxu0 0.0
      %872 = vmatprep.subr.mxu0 0.0
      %873 = vmatpush1.msra.mxu0 0.0
      %874 = vmatprep.subr.mxu0 0.0
      %875 = vmatpush1.msra.mxu0 0.0
      %876 = vmatprep.subr.mxu0 0.0
      %877 = vmatpush1.msra.mxu0 0.0
      %878 = vmatprep.subr.mxu0 0.0
      %879 = vmatpush1.msra.mxu0 0.0
      %880 = vmatprep.subr.mxu0 0.0
      %881 = vmatpush1.msra.mxu0 0.0
      %882 = vmatprep.subr.mxu0 0.0
      %883 = vmatpush1.msra.mxu0 0.0
      %884 = vmatprep.subr.mxu0 0.0
      %885 = vmatpush1.msra.mxu0 0.0
      %886 = vmatprep.subr.mxu0 0.0
      %887 = vmatpush1.msra.mxu0 0.0
      %888 = vmatprep.subr.mxu0 0.0
      %889 = vmatpush1.msra.mxu0 0.0
      %890 = vmatprep.subr.mxu0 0.0
      %891 = vmatpush1.msra.mxu0 0.0
      %892 = vmatprep.subr.mxu0 0.0
      %893 = vmatpush1.msra.mxu0 0.0
      %894 = vmatprep.subr.mxu0 0.0
      %895 = vmatpush1.msra.mxu0 0.0
      %896 = vmatprep.subr.mxu0 0.0
      %897 = vmatpush1.msra.mxu0 0.0
      %898 = vmatprep.subr.mxu0 0.0
      %899 = vmatpush1.msra.mxu0 0.0
      %900 = vmatprep.subr.mxu0 0.0
      %901 = vmatpush1.msra.mxu0 0.0
      %902 = vmatprep.subr.mxu0 0.0
      %903 = vmatpush1.msra.mxu0 0.0
      %904 = vmatprep.mubr.f32.mxu0 0.0
      %905 = vmatmul.mubr.f32.gmra.mrb[0].mxu0 %v838
      %v906 = vpop.f32.mrb[0].mxu0
      %v907 = vadd.f32 %v834, %v906
      %v908 = vpop.f32.mrb[0].mxu0
      %909 = vdwg.mxu0
      %v911 = vlaneseq
      %v912 = vshrl.u32 %v911, 7
      %v913 = vsub.s32 0, %v912
      %v914 = vrot.slane %v751, %v913
      %v916 = vadd.f32 %v907, %v914
      %v917 = vsel %vm764, %v763, 0
      %919 = vmatprep.subr.mxu0 0.0
      %920 = vmatpush1.msra.mxu0 %v747
      %921 = vmatprep.subr.mxu0 0.0
      %922 = vmatpush1.msra.mxu0 %v748
      %923 = vmatprep.subr.mxu0 0.0
      %924 = vmatpush1.msra.mxu0 %v749
      %925 = vmatprep.subr.mxu0 0.0
      %926 = vmatpush1.msra.mxu0 %v750
      %927 = vmatprep.subr.mxu0 0.0
      %928 = vmatpush1.msra.mxu0 0.0
      %929 = vmatprep.subr.mxu0 0.0
      %930 = vmatpush1.msra.mxu0 0.0
      %931 = vmatprep.subr.mxu0 0.0
      %932 = vmatpush1.msra.mxu0 0.0
      %933 = vmatprep.subr.mxu0 0.0
      %934 = vmatpush1.msra.mxu0 0.0
      %935 = vmatprep.subr.mxu0 0.0
      %936 = vmatpush1.msra.mxu0 0.0
      %937 = vmatprep.subr.mxu0 0.0
      %938 = vmatpush1.msra.mxu0 0.0
      %939 = vmatprep.subr.mxu0 0.0
      %940 = vmatpush1.msra.mxu0 0.0
      %941 = vmatprep.subr.mxu0 0.0
      %942 = vmatpush1.msra.mxu0 0.0
      %943 = vmatprep.subr.mxu0 0.0
      %944 = vmatpush1.msra.mxu0 0.0
      %945 = vmatprep.subr.mxu0 0.0
      %946 = vmatpush1.msra.mxu0 0.0
      %947 = vmatprep.subr.mxu0 0.0
      %948 = vmatpush1.msra.mxu0 0.0
      %949 = vmatprep.subr.mxu0 0.0
      %950 = vmatpush1.msra.mxu0 0.0
      %951 = vmatprep.subr.mxu0 0.0
      %952 = vmatpush1.msra.mxu0 0.0
      %953 = vmatprep.subr.mxu0 0.0
      %954 = vmatpush1.msra.mxu0 0.0
      %955 = vmatprep.subr.mxu0 0.0
      %956 = vmatpush1.msra.mxu0 0.0
      %957 = vmatprep.subr.mxu0 0.0
      %958 = vmatpush1.msra.mxu0 0.0
      %959 = vmatprep.subr.mxu0 0.0
      %960 = vmatpush1.msra.mxu0 0.0
      %961 = vmatprep.subr.mxu0 0.0
      %962 = vmatpush1.msra.mxu0 0.0
      %963 = vmatprep.subr.mxu0 0.0
      %964 = vmatpush1.msra.mxu0 0.0
      %965 = vmatprep.subr.mxu0 0.0
      %966 = vmatpush1.msra.mxu0 0.0
      %967 = vmatprep.subr.mxu0 0.0
      %968 = vmatpush1.msra.mxu0 0.0
      %969 = vmatprep.subr.mxu0 0.0
      %970 = vmatpush1.msra.mxu0 0.0
      %971 = vmatprep.subr.mxu0 0.0
      %972 = vmatpush1.msra.mxu0 0.0
      %973 = vmatprep.subr.mxu0 0.0
      %974 = vmatpush1.msra.mxu0 0.0
      %975 = vmatprep.subr.mxu0 0.0
      %976 = vmatpush1.msra.mxu0 0.0
      %977 = vmatprep.subr.mxu0 0.0
      %978 = vmatpush1.msra.mxu0 0.0
      %979 = vmatprep.subr.mxu0 0.0
      %980 = vmatpush1.msra.mxu0 0.0
      %981 = vmatprep.subr.mxu0 0.0
      %982 = vmatpush1.msra.mxu0 0.0
      %983 = vmatprep.mubr.f32.mxu0 0.0
      %984 = vmatmul.mubr.f32.gmra.mrb[0].mxu0 %v917
      %v985 = vpop.f32.mrb[0].mxu0
      %v986 = vadd.f32 0.0, %v985
      %v987 = vpop.f32.mrb[0].mxu0
      %988 = vdwg.mxu0
      %v990 = vsel %vm764, %v742, 0
      %992 = vmatprep.subr.mxu0 0.0
      %993 = vmatpush1.msra.mxu0 %v743
      %994 = vmatprep.subr.mxu0 0.0
      %995 = vmatpush1.msra.mxu0 %v744
      %996 = vmatprep.subr.mxu0 0.0
      %997 = vmatpush1.msra.mxu0 %v745
      %998 = vmatprep.subr.mxu0 0.0
      %999 = vmatpush1.msra.mxu0 %v746
      %1000 = vmatprep.subr.mxu0 0.0
      %1001 = vmatpush1.msra.mxu0 0.0
      %1002 = vmatprep.subr.mxu0 0.0
      %1003 = vmatpush1.msra.mxu0 0.0
      %1004 = vmatprep.subr.mxu0 0.0
      %1005 = vmatpush1.msra.mxu0 0.0
      %1006 = vmatprep.subr.mxu0 0.0
      %1007 = vmatpush1.msra.mxu0 0.0
      %1008 = vmatprep.subr.mxu0 0.0
      %1009 = vmatpush1.msra.mxu0 0.0
      %1010 = vmatprep.subr.mxu0 0.0
      %1011 = vmatpush1.msra.mxu0 0.0
      %1012 = vmatprep.subr.mxu0 0.0
      %1013 = vmatpush1.msra.mxu0 0.0
      %1014 = vmatprep.subr.mxu0 0.0
      %1015 = vmatpush1.msra.mxu0 0.0
      %1016 = vmatprep.subr.mxu0 0.0
      %1017 = vmatpush1.msra.mxu0 0.0
      %1018 = vmatprep.subr.mxu0 0.0
      %1019 = vmatpush1.msra.mxu0 0.0
      %1020 = vmatprep.subr.mxu0 0.0
      %1021 = vmatpush1.msra.mxu0 0.0
      %1022 = vmatprep.subr.mxu0 0.0
      %1023 = vmatpush1.msra.mxu0 0.0
      %1024 = vmatprep.subr.mxu0 0.0
      %1025 = vmatpush1.msra.mxu0 0.0
      %1026 = vmatprep.subr.mxu0 0.0
      %1027 = vmatpush1.msra.mxu0 0.0
      %1028 = vmatprep.subr.mxu0 0.0
      %1029 = vmatpush1.msra.mxu0 0.0
      %1030 = vmatprep.subr.mxu0 0.0
      %1031 = vmatpush1.msra.mxu0 0.0
      %1032 = vmatprep.subr.mxu0 0.0
      %1033 = vmatpush1.msra.mxu0 0.0
      %1034 = vmatprep.subr.mxu0 0.0
      %1035 = vmatpush1.msra.mxu0 0.0
      %1036 = vmatprep.subr.mxu0 0.0
      %1037 = vmatpush1.msra.mxu0 0.0
      %1038 = vmatprep.subr.mxu0 0.0
      %1039 = vmatpush1.msra.mxu0 0.0
      %1040 = vmatprep.subr.mxu0 0.0
      %1041 = vmatpush1.msra.mxu0 0.0
      %1042 = vmatprep.subr.mxu0 0.0
      %1043 = vmatpush1.msra.mxu0 0.0
      %1044 = vmatprep.subr.mxu0 0.0
      %1045 = vmatpush1.msra.mxu0 0.0
      %1046 = vmatprep.subr.mxu0 0.0
      %1047 = vmatpush1.msra.mxu0 0.0
      %1048 = vmatprep.subr.mxu0 0.0
      %1049 = vmatpush1.msra.mxu0 0.0
      %1050 = vmatprep.subr.mxu0 0.0
      %1051 = vmatpush1.msra.mxu0 0.0
      %1052 = vmatprep.subr.mxu0 0.0
      %1053 = vmatpush1.msra.mxu0 0.0
      %1054 = vmatprep.subr.mxu0 0.0
      %1055 = vmatpush1.msra.mxu0 0.0
      %1056 = vmatprep.mubr.f32.mxu0 0.0
      %1057 = vmatmul.mubr.f32.gmra.mrb[0].mxu0 %v990
      %v1058 = vpop.f32.mrb[0].mxu0
      %v1059 = vadd.f32 %v986, %v1058
      %v1060 = vpop.f32.mrb[0].mxu0
      %1061 = vdwg.mxu0
      %v1062 = vadd.f32 %v1059, %v914
      %v1063 = vld [vmem:[%s10] sm:$0xff]
      %v1064 = vld [vmem:[%s10 + $0x8] sm:$0xff]
      %v1065 = vld [vmem:[%s10 + $0x10] sm:$0xff]
      %v1066 = vld [vmem:[%s10 + $0x18] sm:$0xff]
      %v1067 = vld [vmem:[%s10 + $0x20] sm:$0xff]
      %v1068 = vld [vmem:[%s10 + $0x28] sm:$0xff]
      %v1069 = vld [vmem:[%s10 + $0x30] sm:$0xff]
      %v1070 = vld [vmem:[%s10 + $0x38] sm:$0xff]
      %v1072 = vsel %vm764, %v1062, 0
      %1074 = vmatprep.subr.mxu0 0.0
      %1075 = vmatpush1.msra.mxu0 %v1067
      %1076 = vmatprep.subr.mxu0 0.0
      %1077 = vmatpush1.msra.mxu0 %v1068
      %1078 = vmatprep.subr.mxu0 0.0
      %1079 = vmatpush1.msra.mxu0 %v1069
      %1080 = vmatprep.subr.mxu0 0.0
      %1081 = vmatpush1.msra.mxu0 %v1070
      %1082 = vmatprep.subr.mxu0 0.0
      %1083 = vmatpush1.msra.mxu0 0.0
      %1084 = vmatprep.subr.mxu0 0.0
      %1085 = vmatpush1.msra.mxu0 0.0
      %1086 = vmatprep.subr.mxu0 0.0
      %1087 = vmatpush1.msra.mxu0 0.0
      %1088 = vmatprep.subr.mxu0 0.0
      %1089 = vmatpush1.msra.mxu0 0.0
      %1090 = vmatprep.subr.mxu0 0.0
      %1091 = vmatpush1.msra.mxu0 0.0
      %1092 = vmatprep.subr.mxu0 0.0
      %1093 = vmatpush1.msra.mxu0 0.0
      %1094 = vmatprep.subr.mxu0 0.0
      %1095 = vmatpush1.msra.mxu0 0.0
      %1096 = vmatprep.subr.mxu0 0.0
      %1097 = vmatpush1.msra.mxu0 0.0
      %1098 = vmatprep.subr.mxu0 0.0
      %1099 = vmatpush1.msra.mxu0 0.0
      %1100 = vmatprep.subr.mxu0 0.0
      %1101 = vmatpush1.msra.mxu0 0.0
      %1102 = vmatprep.subr.mxu0 0.0
      %1103 = vmatpush1.msra.mxu0 0.0
      %1104 = vmatprep.subr.mxu0 0.0
      %1105 = vmatpush1.msra.mxu0 0.0
      %1106 = vmatprep.subr.mxu0 0.0
      %1107 = vmatpush1.msra.mxu0 0.0
      %1108 = vmatprep.subr.mxu0 0.0
      %1109 = vmatpush1.msra.mxu0 0.0
      %1110 = vmatprep.subr.mxu0 0.0
      %1111 = vmatpush1.msra.mxu0 0.0
      %1112 = vmatprep.subr.mxu0 0.0
      %1113 = vmatpush1.msra.mxu0 0.0
      %1114 = vmatprep.subr.mxu0 0.0
      %1115 = vmatpush1.msra.mxu0 0.0
      %1116 = vmatprep.subr.mxu0 0.0
      %1117 = vmatpush1.msra.mxu0 0.0
      %1118 = vmatprep.subr.mxu0 0.0
      %1119 = vmatpush1.msra.mxu0 0.0
      %1120 = vmatprep.subr.mxu0 0.0
      %1121 = vmatpush1.msra.mxu0 0.0
      %1122 = vmatprep.subr.mxu0 0.0
      %1123 = vmatpush1.msra.mxu0 0.0
      %1124 = vmatprep.subr.mxu0 0.0
      %1125 = vmatpush1.msra.mxu0 0.0
      %1126 = vmatprep.subr.mxu0 0.0
      %1127 = vmatpush1.msra.mxu0 0.0
      %1128 = vmatprep.subr.mxu0 0.0
      %1129 = vmatpush1.msra.mxu0 0.0
      %1130 = vmatprep.subr.mxu0 0.0
      %1131 = vmatpush1.msra.mxu0 0.0
      %1132 = vmatprep.subr.mxu0 0.0
      %1133 = vmatpush1.msra.mxu0 0.0
      %1134 = vmatprep.subr.mxu0 0.0
      %1135 = vmatpush1.msra.mxu0 0.0
      %1136 = vmatprep.subr.mxu0 0.0
      %1137 = vmatpush1.msra.mxu0 0.0
      %1138 = vmatprep.mubr.f32.mxu0 0.0
      %1139 = vmatmul.mubr.f32.gmra.mrb[0].mxu0 %v1072
      %v1140 = vpop.f32.mrb[0].mxu0
      %v1141 = vadd.f32 0.0, %v1140
      %v1142 = vpop.f32.mrb[0].mxu0
      %1143 = vdwg.mxu0
      %v1145 = vsel %vm764, %v916, 0
      %1147 = vmatprep.subr.mxu0 0.0
      %1148 = vmatpush1.msra.mxu0 %v1063
      %1149 = vmatprep.subr.mxu0 0.0
      %1150 = vmatpush1.msra.mxu0 %v1064
      %1151 = vmatprep.subr.mxu0 0.0
      %1152 = vmatpush1.msra.mxu0 %v1065
      %1153 = vmatprep.subr.mxu0 0.0
      %1154 = vmatpush1.msra.mxu0 %v1066
      %1155 = vmatprep.subr.mxu0 0.0
      %1156 = vmatpush1.msra.mxu0 0.0
      %1157 = vmatprep.subr.mxu0 0.0
      %1158 = vmatpush1.msra.mxu0 0.0
      %1159 = vmatprep.subr.mxu0 0.0
      %1160 = vmatpush1.msra.mxu0 0.0
      %1161 = vmatprep.subr.mxu0 0.0
      %1162 = vmatpush1.msra.mxu0 0.0
      %1163 = vmatprep.subr.mxu0 0.0
      %1164 = vmatpush1.msra.mxu0 0.0
      %1165 = vmatprep.subr.mxu0 0.0
      %1166 = vmatpush1.msra.mxu0 0.0
      %1167 = vmatprep.subr.mxu0 0.0
      %1168 = vmatpush1.msra.mxu0 0.0
      %1169 = vmatprep.subr.mxu0 0.0
      %1170 = vmatpush1.msra.mxu0 0.0
      %1171 = vmatprep.subr.mxu0 0.0
      %1172 = vmatpush1.msra.mxu0 0.0
      %1173 = vmatprep.subr.mxu0 0.0
      %1174 = vmatpush1.msra.mxu0 0.0
      %1175 = vmatprep.subr.mxu0 0.0
      %1176 = vmatpush1.msra.mxu0 0.0
      %1177 = vmatprep.subr.mxu0 0.0
      %1178 = vmatpush1.msra.mxu0 0.0
      %1179 = vmatprep.subr.mxu0 0.0
      %1180 = vmatpush1.msra.mxu0 0.0
      %1181 = vmatprep.subr.mxu0 0.0
      %1182 = vmatpush1.msra.mxu0 0.0
      %1183 = vmatprep.subr.mxu0 0.0
      %1184 = vmatpush1.msra.mxu0 0.0
      %1185 = vmatprep.subr.mxu0 0.0
      %1186 = vmatpush1.msra.mxu0 0.0
      %1187 = vmatprep.subr.mxu0 0.0
      %1188 = vmatpush1.msra.mxu0 0.0
      %1189 = vmatprep.subr.mxu0 0.0
      %1190 = vmatpush1.msra.mxu0 0.0
      %1191 = vmatprep.subr.mxu0 0.0
      %1192 = vmatpush1.msra.mxu0 0.0
      %1193 = vmatprep.subr.mxu0 0.0
      %1194 = vmatpush1.msra.mxu0 0.0
      %1195 = vmatprep.subr.mxu0 0.0
      %1196 = vmatpush1.msra.mxu0 0.0
      %1197 = vmatprep.subr.mxu0 0.0
      %1198 = vmatpush1.msra.mxu0 0.0
      %1199 = vmatprep.subr.mxu0 0.0
      %1200 = vmatpush1.msra.mxu0 0.0
      %1201 = vmatprep.subr.mxu0 0.0
      %1202 = vmatpush1.msra.mxu0 0.0
      %1203 = vmatprep.subr.mxu0 0.0
      %1204 = vmatpush1.msra.mxu0 0.0
      %1205 = vmatprep.subr.mxu0 0.0
      %1206 = vmatpush1.msra.mxu0 0.0
      %1207 = vmatprep.subr.mxu0 0.0
      %1208 = vmatpush1.msra.mxu0 0.0
      %1209 = vmatprep.subr.mxu0 0.0
      %1210 = vmatpush1.msra.mxu0 0.0
      %1211 = vmatprep.mubr.f32.mxu0 0.0
      %1212 = vmatmul.mubr.f32.gmra.mrb[0].mxu0 %v1145
      %v1213 = vpop.f32.mrb[0].mxu0
      %v1214 = vadd.f32 %v1141, %v1213
      %v1215 = vpop.f32.mrb[0].mxu0
      %1216 = vdwg.mxu0
      %v1217 = vld [vmem:[%s11] sm:$0x1]
      %v1219 = vlaneseq
      %v1220 = vshrl.u32 %v1219, 7
      %v1221 = vsub.s32 0, %v1220
      %v1222 = vrot.slane %v1217, %v1221
      %v1224 = vadd.f32 %v1214, %v1222
      %1225 = vst.msk [vmem:[%s575] sm:$0xff] %vm764, %v1224
      %v1226 = vld [vmem:[%s12] sm:$0xff]
      %v1227 = vld [vmem:[%s12 + $0x8] sm:$0xff]
      %v1228 = vld [vmem:[%s12 + $0x10] sm:$0xff]
      %v1229 = vld [vmem:[%s12 + $0x18] sm:$0xff]
      %v1230 = vld [vmem:[%s12 + $0x20] sm:$0xff]
      %v1231 = vld [vmem:[%s12 + $0x28] sm:$0xff]
      %v1232 = vld [vmem:[%s12 + $0x30] sm:$0xff]
      %v1233 = vld [vmem:[%s12 + $0x38] sm:$0xff]
      %v1234 = vld [vmem:[%s567] sm:$0xff]
      %v1235 = vld [vmem:[%s571] sm:$0xff]
      %v1237 = vsel %vm764, %v1235, 0
      %1239 = vmatprep.subr.mxu0 0.0
      %1240 = vmatpush1.msra.mxu0 %v1230
      %1241 = vmatprep.subr.mxu0 0.0
      %1242 = vmatpush1.msra.mxu0 %v1231
      %1243 = vmatprep.subr.mxu0 0.0
      %1244 = vmatpush1.msra.mxu0 %v1232
      %1245 = vmatprep.subr.mxu0 0.0
      %1246 = vmatpush1.msra.mxu0 %v1233
      %1247 = vmatprep.subr.mxu0 0.0
      %1248 = vmatpush1.msra.mxu0 0.0
      %1249 = vmatprep.subr.mxu0 0.0
      %1250 = vmatpush1.msra.mxu0 0.0
      %1251 = vmatprep.subr.mxu0 0.0
      %1252 = vmatpush1.msra.mxu0 0.0
      %1253 = vmatprep.subr.mxu0 0.0
      %1254 = vmatpush1.msra.mxu0 0.0
      %1255 = vmatprep.subr.mxu0 0.0
      %1256 = vmatpush1.msra.mxu0 0.0
      %1257 = vmatprep.subr.mxu0 0.0
      %1258 = vmatpush1.msra.mxu0 0.0
      %1259 = vmatprep.subr.mxu0 0.0
      %1260 = vmatpush1.msra.mxu0 0.0
      %1261 = vmatprep.subr.mxu0 0.0
      %1262 = vmatpush1.msra.mxu0 0.0
      %1263 = vmatprep.subr.mxu0 0.0
      %1264 = vmatpush1.msra.mxu0 0.0
      %1265 = vmatprep.subr.mxu0 0.0
      %1266 = vmatpush1.msra.mxu0 0.0
      %1267 = vmatprep.subr.mxu0 0.0
      %1268 = vmatpush1.msra.mxu0 0.0
      %1269 = vmatprep.subr.mxu0 0.0
      %1270 = vmatpush1.msra.mxu0 0.0
      %1271 = vmatprep.subr.mxu0 0.0
      %1272 = vmatpush1.msra.mxu0 0.0
      %1273 = vmatprep.subr.mxu0 0.0
      %1274 = vmatpush1.msra.mxu0 0.0
      %1275 = vmatprep.subr.mxu0 0.0
      %1276 = vmatpush1.msra.mxu0 0.0
      %1277 = vmatprep.subr.mxu0 0.0
      %1278 = vmatpush1.msra.mxu0 0.0
      %1279 = vmatprep.subr.mxu0 0.0
      %1280 = vmatpush1.msra.mxu0 0.0
      %1281 = vmatprep.subr.mxu0 0.0
      %1282 = vmatpush1.msra.mxu0 0.0
      %1283 = vmatprep.subr.mxu0 0.0
      %1284 = vmatpush1.msra.mxu0 0.0
      %1285 = vmatprep.subr.mxu0 0.0
      %1286 = vmatpush1.msra.mxu0 0.0
      %1287 = vmatprep.subr.mxu0 0.0
      %1288 = vmatpush1.msra.mxu0 0.0
      %1289 = vmatprep.subr.mxu0 0.0
      %1290 = vmatpush1.msra.mxu0 0.0
      %1291 = vmatprep.subr.mxu0 0.0
      %1292 = vmatpush1.msra.mxu0 0.0
      %1293 = vmatprep.subr.mxu0 0.0
      %1294 = vmatpush1.msra.mxu0 0.0
      %1295 = vmatprep.subr.mxu0 0.0
      %1296 = vmatpush1.msra.mxu0 0.0
      %1297 = vmatprep.subr.mxu0 0.0
      %1298 = vmatpush1.msra.mxu0 0.0
      %1299 = vmatprep.subr.mxu0 0.0
      %1300 = vmatpush1.msra.mxu0 0.0
      %1301 = vmatprep.subr.mxu0 0.0
      %1302 = vmatpush1.msra.mxu0 0.0
      %1303 = vmatprep.mubr.f32.mxu0 0.0
      %1304 = vmatmul.mubr.f32.gmra.mrb[0].mxu0 %v1237
      %v1305 = vpop.f32.mrb[0].mxu0
      %v1306 = vadd.f32 0.0, %v1305
      %v1307 = vpop.f32.mrb[0].mxu0
      %1308 = vdwg.mxu0
      %v1310 = vsel %vm764, %v1234, 0
      %1312 = vmatprep.subr.mxu0 0.0
      %1313 = vmatpush1.msra.mxu0 %v1226
      %1314 = vmatprep.subr.mxu0 0.0
      %1315 = vmatpush1.msra.mxu0 %v1227
      %1316 = vmatprep.subr.mxu0 0.0
      %1317 = vmatpush1.msra.mxu0 %v1228
      %1318 = vmatprep.subr.mxu0 0.0
      %1319 = vmatpush1.msra.mxu0 %v1229
      %1320 = vmatprep.subr.mxu0 0.0
      %1321 = vmatpush1.msra.mxu0 0.0
      %1322 = vmatprep.subr.mxu0 0.0
      %1323 = vmatpush1.msra.mxu0 0.0
      %1324 = vmatprep.subr.mxu0 0.0
      %1325 = vmatpush1.msra.mxu0 0.0
      %1326 = vmatprep.subr.mxu0 0.0
      %1327 = vmatpush1.msra.mxu0 0.0
      %1328 = vmatprep.subr.mxu0 0.0
      %1329 = vmatpush1.msra.mxu0 0.0
      %1330 = vmatprep.subr.mxu0 0.0
      %1331 = vmatpush1.msra.mxu0 0.0
      %1332 = vmatprep.subr.mxu0 0.0
      %1333 = vmatpush1.msra.mxu0 0.0
      %1334 = vmatprep.subr.mxu0 0.0
      %1335 = vmatpush1.msra.mxu0 0.0
      %1336 = vmatprep.subr.mxu0 0.0
      %1337 = vmatpush1.msra.mxu0 0.0
      %1338 = vmatprep.subr.mxu0 0.0
      %1339 = vmatpush1.msra.mxu0 0.0
      %1340 = vmatprep.subr.mxu0 0.0
      %1341 = vmatpush1.msra.mxu0 0.0
      %1342 = vmatprep.subr.mxu0 0.0
      %1343 = vmatpush1.msra.mxu0 0.0
      %1344 = vmatprep.subr.mxu0 0.0
      %1345 = vmatpush1.msra.mxu0 0.0
      %1346 = vmatprep.subr.mxu0 0.0
      %1347 = vmatpush1.msra.mxu0 0.0
      %1348 = vmatprep.subr.mxu0 0.0
      %1349 = vmatpush1.msra.mxu0 0.0
      %1350 = vmatprep.subr.mxu0 0.0
      %1351 = vmatpush1.msra.mxu0 0.0
      %1352 = vmatprep.subr.mxu0 0.0
      %1353 = vmatpush1.msra.mxu0 0.0
      %1354 = vmatprep.subr.mxu0 0.0
      %1355 = vmatpush1.msra.mxu0 0.0
      %1356 = vmatprep.subr.mxu0 0.0
      %1357 = vmatpush1.msra.mxu0 0.0
      %1358 = vmatprep.subr.mxu0 0.0
      %1359 = vmatpush1.msra.mxu0 0.0
      %1360 = vmatprep.subr.mxu0 0.0
      %1361 = vmatpush1.msra.mxu0 0.0
      %1362 = vmatprep.subr.mxu0 0.0
      %1363 = vmatpush1.msra.mxu0 0.0
      %1364 = vmatprep.subr.mxu0 0.0
      %1365 = vmatpush1.msra.mxu0 0.0
      %1366 = vmatprep.subr.mxu0 0.0
      %1367 = vmatpush1.msra.mxu0 0.0
      %1368 = vmatprep.subr.mxu0 0.0
      %1369 = vmatpush1.msra.mxu0 0.0
      %1370 = vmatprep.subr.mxu0 0.0
      %1371 = vmatpush1.msra.mxu0 0.0
      %1372 = vmatprep.subr.mxu0 0.0
      %1373 = vmatpush1.msra.mxu0 0.0
      %1374 = vmatprep.subr.mxu0 0.0
      %1375 = vmatpush1.msra.mxu0 0.0
      %1376 = vmatprep.mubr.f32.mxu0 0.0
      %1377 = vmatmul.mubr.f32.gmra.mrb[0].mxu0 %v1310
      %v1378 = vpop.f32.mrb[0].mxu0
      %v1379 = vadd.f32 %v1306, %v1378
      %v1380 = vpop.f32.mrb[0].mxu0
      %1381 = vdwg.mxu0
      %v1382 = vld [vmem:[%s13] sm:$0x1]
      %v1384 = vlaneseq
      %v1385 = vshrl.u32 %v1384, 7
      %v1386 = vsub.s32 0, %v1385
      %v1387 = vrot.slane %v1382, %v1386
      %v1389 = vadd.f32 %v1379, %v1387
      %1390 = vst.msk [vmem:[%s579] sm:$0xff] %vm764, %v1389
      %p1391 = scmp.lt.s32.totalorder %s27, 1
      %s1392 = scalar_select %p1391, %s27, 1
      %s1393 = smul.addr %s1392, 8
      %s1394 = scalar_lea.vmem %s14, %s1393
      %p1395 = scmp.lt.s32.totalorder %s27, 1
      %s1396 = scalar_select %p1395, %s27, 1
      %s1397 = smul.addr %s1396, 8
      %s1398 = scalar_lea.vmem %s15, %s1397
      // Predicated region
      $region77: #{_lambda_.4} parent=75 // pred_check
        %p1399 = pneg %p369
      $region78: #{_lambda_.4} parent=75 // pred_check_branch
        %1401 = sbr.rel (%p1399) target = $region80
      $region79: #{_lambda_.4} parent=75 // pred_region
        _
      $region80: #{_lambda_.4} parent=75 // pred_fallthru
        _
      // Predicated region
      $region81: #{_lambda_.4} parent=75 // pred_check
        %p1402 = pneg %p395
      $region82: #{_lambda_.4} parent=75 // pred_check_branch
        %1404 = sbr.rel (%p1402) target = $region84
      $region83: #{_lambda_.4} parent=75 // pred_region
        _
      $region84: #{_lambda_.4} parent=75 // pred_fallthru
        _
    $region76: #{_lambda_.4} parent=5 // pred_fallthru
      _
    %p1405 = scmp.le.s32.totalorder 2, %s22
    // Predicated region
    $region85: #{_lambda_.4} parent=5 // pred_check
      %p1406 = pneg %p1405
    $region86: #{_lambda_.4} parent=5 // pred_check_branch
      %1408 = sbr.rel (%p1406) target = $region88
    $region87: #{_lambda_.4} parent=5 // pred_region
      %s1409 = ssub.s32 %s22, 2
      // Predicated region
      $region89: #{_lambda_.4} parent=87 // pred_check
        %p1410 = pneg %p375
      $region90: #{_lambda_.4} parent=87 // pred_check_branch
        %1412 = sbr.rel (%p1410) target = $region92
      $region91: #{_lambda_.4} parent=87 // pred_region
        %p1413 = scmp.lt.s32.totalorder %s28, 1
        %s1414 = scalar_select %p1413, %s28, 1
        %s1415 = smul.addr %s1414, 8
        %s1416 = scalar_lea.vmem %s14, %s1415
      $region92: #{_lambda_.4} parent=87 // pred_fallthru
        _
      // Predicated region
      $region93: #{_lambda_.4} parent=87 // pred_check
        %p1417 = pneg %p401
      $region94: #{_lambda_.4} parent=87 // pred_check_branch
        %1419 = sbr.rel (%p1417) target = $region96
      $region95: #{_lambda_.4} parent=87 // pred_region
        %p1420 = scmp.lt.s32.totalorder %s28, 1
        %s1421 = scalar_select %p1420, %s28, 1
        %s1422 = smul.addr %s1421, 8
        %s1423 = scalar_lea.vmem %s15, %s1422
      $region96: #{_lambda_.4} parent=87 // pred_fallthru
        _
    $region88: #{_lambda_.4} parent=5 // pred_fallthru
      _
  $region6: #{_lambda_.4} parent=0 // loop_footer
    %s26 = sadd.s32 1, %s22
  $region7: #{_lambda_.4} parent=0 // loop_footer_branch
    %21 = sbr.rel target = $region3
  $region8: #{_lambda_.4} parent=0 // loop_exit
    _

// kernel: _lambda_.5
$region0: #{_lambda_.5}
  #allocation0 [shape = 'u32[]', space=smem, size = 0x4, offset = 0x4, fixed_abs, tag = 'smem constant byte address 0x4 - core index']
  #allocation1 [shape = 'u32[144,128]{1,0:T(1,128)}', space=vmem, size = 0x12000, scoped, tag = 'internal scratch']
  %s0 = inlined_call_operand.vmem [shape: f32[4,4,32], index: 0, kind: input, shape index: {}]
  %s1 = inlined_call_operand.vmem [shape: f32[4,4,32], index: 1, kind: input, shape index: {}]
  %s2 = inlined_call_operand.vmem [shape: f32[4,4,32], index: 2, kind: input, shape index: {}]
  %s3 = inlined_call_operand.vmem [shape: f32[4,4,4], index: 3, kind: input, shape index: {}]
  %s4 = inlined_call_operand.vmem [shape: f32[32,192], index: 4, kind: input, shape index: {}]
  %s5 = inlined_call_operand.vmem [shape: f32[32,192], index: 5, kind: input, shape index: {}]
  %s6 = inlined_call_operand.vmem [shape: f32[64,32], index: 6, kind: input, shape index: {}]
  %s7 = inlined_call_operand.vmem [shape: f32[1,32], index: 7, kind: input, shape index: {}]
  %s8 = inlined_call_operand.vmem [shape: f32[1,32], index: 8, kind: input, shape index: {}]
  %s9 = inlined_call_operand.vmem [shape: f32[32,64], index: 9, kind: input, shape index: {}]
  %s10 = inlined_call_operand.vmem [shape: f32[32,128], index: 10, kind: input, shape index: {}]
  %s11 = inlined_call_operand.vmem [shape: f32[64,32], index: 11, kind: input, shape index: {}]
  %s12 = inlined_call_operand.vmem [shape: f32[1,32], index: 12, kind: input, shape index: {}]
  %s13 = inlined_call_operand.vmem [shape: f32[1,32], index: 13, kind: input, shape index: {}]
  %s14 = inlined_call_operand.vmem [shape: f32[32,64], index: 14, kind: input, shape index: {}]
  %s15 = inlined_call_operand.vmem [shape: f32[1,64], index: 15, kind: input, shape index: {}]
  %s16 = inlined_call_operand.vmem [shape: f32[64,32], index: 16, kind: input, shape index: {}]
  %s17 = inlined_call_operand.vmem [shape: f32[1,32], index: 17, kind: input, shape index: {}]
  %s18 = inlined_call_operand.vmem [shape: f32[1,32], index: 18, kind: input, shape index: {}]
  %s19 = inlined_call_operand.vmem [shape: f32[1,32], index: 19, kind: input, shape index: {}]
  %s20 = inlined_call_operand.vmem [shape: f32[4,4,32], index: 20, kind: output, shape index: {}]
  %s21 = sld [smem:[#allocation0]]
  $region113: #{_lambda_.5} parent=0
    _
  %s23 = ssub.s32 1, %s21
  %s24 = scalar_select 0, %s23, %s21
  loop: start=0, step=1, limit=6
  $region2: #{_lambda_.5} parent=0 // loop_pre_header
    _
  $region3: #{_lambda_.5} parent=0 // loop_header
    %s26 = sphi 0, %s30
    %p27 = scmp.ge.s32.totalorder %s26, 6
    %s36 = sphi 0, %s38
    %s39 = sphi 0, %s36
    %s40 = sphi 0, %s39
    %s56 = sphi 0, %s40
    %s62 = sphi 0, %s64
    %s65 = sphi 0, %s62
    %s66 = sphi 0, %s65
    %s82 = sphi 0, %s66
    %s88 = sphi 0, %s90
    %s91 = sphi 0, %s88
    %s92 = sphi 0, %s91
    %s108 = sphi 0, %s92
    %s114 = sphi 0, %s116
    %s117 = sphi 0, %s114
    %s118 = sphi 0, %s117
    %s134 = sphi 0, %s118
    %s138 = sphi 0, %s138
    %s140 = sphi 0, %s138
    %s141 = sphi 0, %s140
    %s155 = sphi 0, %s141
    %s159 = sphi 0, %s159
    %s161 = sphi 0, %s159
    %s162 = sphi 0, %s161
    %s176 = sphi 0, %s162
    %s180 = sphi 0, %s180
    %s182 = sphi 0, %s180
    %s183 = sphi 0, %s182
    %s197 = sphi 0, %s183
    %s201 = sphi 0, %s201
    %s203 = sphi 0, %s201
    %s204 = sphi 0, %s203
    %s218 = sphi 0, %s204
    %s222 = sphi 0, %s222
    %s224 = sphi 0, %s222
    %s225 = sphi 0, %s224
    %s239 = sphi 0, %s225
    %s243 = sphi 0, %s243
    %s245 = sphi 0, %s243
    %s246 = sphi 0, %s245
    %s260 = sphi 0, %s246
    %s264 = sphi 0, %s264
    %s266 = sphi 0, %s264
    %s267 = sphi 0, %s266
    %s281 = sphi 0, %s267
    %s285 = sphi 0, %s285
    %s287 = sphi 0, %s285
    %s288 = sphi 0, %s287
    %s302 = sphi 0, %s288
    %s306 = sphi 0, %s306
    %s308 = sphi 0, %s306
    %s309 = sphi 0, %s308
    %s323 = sphi 0, %s309
    %s327 = sphi 0, %s327
    %s329 = sphi 0, %s327
    %s330 = sphi 0, %s329
    %s344 = sphi 0, %s330
    %s348 = sphi 0, %s348
    %s350 = sphi 0, %s348
    %s351 = sphi 0, %s350
    %s365 = sphi 0, %s351
    %s369 = sphi 0, %s369
    %s371 = sphi 0, %s369
    %s372 = sphi 0, %s371
    %s386 = sphi 0, %s372
    %s390 = sphi 0, %s390
    %s392 = sphi 0, %s390
    %s393 = sphi 0, %s392
    %s407 = sphi 0, %s393
    %s411 = sphi 0, %s411
    %s413 = sphi 0, %s411
    %s414 = sphi 0, %s413
    %s428 = sphi 0, %s414
    %s432 = sphi 0, %s432
    %s434 = sphi 0, %s432
    %s435 = sphi 0, %s434
    %s449 = sphi 0, %s435
    %s453 = sphi 0, %s453
    %s455 = sphi 0, %s453
    %s456 = sphi 0, %s455
    %s470 = sphi 0, %s456
    %s476 = sphi 0, %s478
    %s479 = sphi 0, %s476
    %s480 = sphi 0, %s479
    %s496 = sphi 0, %s480
  $region4: #{_lambda_.5} parent=0 // loop_header_branch
    %29 = sbr.rel (%p27) target = $region8
  $region5: #{_lambda_.5} parent=0 // loop_body
    %s31 = ssub.s32 %s26, 1
    %s32 = ssub.s32 %s26, 2
    %s33 = sadd.s32 %s26, 1
    %s34 = ssub.s32 %s26, %s33
    %p35 = scmp.eq.s32.totalorder %s34, 0
    %s37 = sadd.s32 %s36, 1
    %s38 = scalar_select %p35, %s36, %s37
    %p41 = pneg %p35
    %p42 = scmp.eq.s32.totalorder %s26, 3
    %p43 = por %p41, %p42
    %p44 = scmp.ne.s32.totalorder %s36, %s39
    %p45 = scmp.eq.s32.totalorder %s26, 0
    %p46 = por %p44, %p45
    %p47 = scmp.ne.s32.totalorder %s36, %s39
    %p48 = scmp.eq.s32.totalorder %s31, 3
    %p49 = por %p47, %p48
    %p50 = scmp.ne.s32.totalorder %s39, %s40
    %p51 = scmp.eq.s32.totalorder %s31, 0
    %p52 = por %p50, %p51
    %p53 = scmp.ne.s32.totalorder %s39, %s40
    %p54 = scmp.eq.s32.totalorder %s32, 3
    %p55 = por %p53, %p54
    %p57 = scmp.ne.s32.totalorder %s40, %s56
    %p58 = scmp.eq.s32.totalorder %s32, 0
    %p59 = por %p57, %p58
    %s60 = ssub.s32 %s26, %s33
    %p61 = scmp.eq.s32.totalorder %s60, 0
    %s63 = sadd.s32 %s62, 1
    %s64 = scalar_select %p61, %s62, %s63
    %p67 = pneg %p61
    %p68 = scmp.eq.s32.totalorder %s26, 3
    %p69 = por %p67, %p68
    %p70 = scmp.ne.s32.totalorder %s62, %s65
    %p71 = scmp.eq.s32.totalorder %s26, 0
    %p72 = por %p70, %p71
    %p73 = scmp.ne.s32.totalorder %s62, %s65
    %p74 = scmp.eq.s32.totalorder %s31, 3
    %p75 = por %p73, %p74
    %p76 = scmp.ne.s32.totalorder %s65, %s66
    %p77 = scmp.eq.s32.totalorder %s31, 0
    %p78 = por %p76, %p77
    %p79 = scmp.ne.s32.totalorder %s65, %s66
    %p80 = scmp.eq.s32.totalorder %s32, 3
    %p81 = por %p79, %p80
    %p83 = scmp.ne.s32.totalorder %s66, %s82
    %p84 = scmp.eq.s32.totalorder %s32, 0
    %p85 = por %p83, %p84
    %s86 = ssub.s32 %s26, %s33
    %p87 = scmp.eq.s32.totalorder %s86, 0
    %s89 = sadd.s32 %s88, 1
    %s90 = scalar_select %p87, %s88, %s89
    %p93 = pneg %p87
    %p94 = scmp.eq.s32.totalorder %s26, 3
    %p95 = por %p93, %p94
    %p96 = scmp.ne.s32.totalorder %s88, %s91
    %p97 = scmp.eq.s32.totalorder %s26, 0
    %p98 = por %p96, %p97
    %p99 = scmp.ne.s32.totalorder %s88, %s91
    %p100 = scmp.eq.s32.totalorder %s31, 3
    %p101 = por %p99, %p100
    %p102 = scmp.ne.s32.totalorder %s91, %s92
    %p103 = scmp.eq.s32.totalorder %s31, 0
    %p104 = por %p102, %p103
    %p105 = scmp.ne.s32.totalorder %s91, %s92
    %p106 = scmp.eq.s32.totalorder %s32, 3
    %p107 = por %p105, %p106
    %p109 = scmp.ne.s32.totalorder %s92, %s108
    %p110 = scmp.eq.s32.totalorder %s32, 0
    %p111 = por %p109, %p110
    %s112 = ssub.s32 %s26, %s33
    %p113 = scmp.eq.s32.totalorder %s112, 0
    %s115 = sadd.s32 %s114, 1
    %s116 = scalar_select %p113, %s114, %s115
    %p119 = pneg %p113
    %p120 = scmp.eq.s32.totalorder %s26, 3
    %p121 = por %p119, %p120
    %p122 = scmp.ne.s32.totalorder %s114, %s117
    %p123 = scmp.eq.s32.totalorder %s26, 0
    %p124 = por %p122, %p123
    %p125 = scmp.ne.s32.totalorder %s114, %s117
    %p126 = scmp.eq.s32.totalorder %s31, 3
    %p127 = por %p125, %p126
    %p128 = scmp.ne.s32.totalorder %s117, %s118
    %p129 = scmp.eq.s32.totalorder %s31, 0
    %p130 = por %p128, %p129
    %p131 = scmp.ne.s32.totalorder %s117, %s118
    %p132 = scmp.eq.s32.totalorder %s32, 3
    %p133 = por %p131, %p132
    %p135 = scmp.ne.s32.totalorder %s118, %s134
    %p136 = scmp.eq.s32.totalorder %s32, 0
    %p137 = por %p135, %p136
    %s139 = sadd.s32 %s138, 1
    %p142 = scmp.eq.s32.totalorder %s26, 3
    %p143 = scmp.ne.s32.totalorder %s138, %s140
    %p144 = scmp.eq.s32.totalorder %s26, 0
    %p145 = por %p143, %p144
    %p146 = scmp.ne.s32.totalorder %s138, %s140
    %p147 = scmp.eq.s32.totalorder %s31, 3
    %p148 = por %p146, %p147
    %p149 = scmp.ne.s32.totalorder %s140, %s141
    %p150 = scmp.eq.s32.totalorder %s31, 0
    %p151 = por %p149, %p150
    %p152 = scmp.ne.s32.totalorder %s140, %s141
    %p153 = scmp.eq.s32.totalorder %s32, 3
    %p154 = por %p152, %p153
    %p156 = scmp.ne.s32.totalorder %s141, %s155
    %p157 = scmp.eq.s32.totalorder %s32, 0
    %p158 = por %p156, %p157
    %s160 = sadd.s32 %s159, 1
    %p163 = scmp.eq.s32.totalorder %s26, 3
    %p164 = scmp.ne.s32.totalorder %s159, %s161
    %p165 = scmp.eq.s32.totalorder %s26, 0
    %p166 = por %p164, %p165
    %p167 = scmp.ne.s32.totalorder %s159, %s161
    %p168 = scmp.eq.s32.totalorder %s31, 3
    %p169 = por %p167, %p168
    %p170 = scmp.ne.s32.totalorder %s161, %s162
    %p171 = scmp.eq.s32.totalorder %s31, 0
    %p172 = por %p170, %p171
    %p173 = scmp.ne.s32.totalorder %s161, %s162
    %p174 = scmp.eq.s32.totalorder %s32, 3
    %p175 = por %p173, %p174
    %p177 = scmp.ne.s32.totalorder %s162, %s176
    %p178 = scmp.eq.s32.totalorder %s32, 0
    %p179 = por %p177, %p178
    %s181 = sadd.s32 %s180, 1
    %p184 = scmp.eq.s32.totalorder %s26, 3
    %p185 = scmp.ne.s32.totalorder %s180, %s182
    %p186 = scmp.eq.s32.totalorder %s26, 0
    %p187 = por %p185, %p186
    %p188 = scmp.ne.s32.totalorder %s180, %s182
    %p189 = scmp.eq.s32.totalorder %s31, 3
    %p190 = por %p188, %p189
    %p191 = scmp.ne.s32.totalorder %s182, %s183
    %p192 = scmp.eq.s32.totalorder %s31, 0
    %p193 = por %p191, %p192
    %p194 = scmp.ne.s32.totalorder %s182, %s183
    %p195 = scmp.eq.s32.totalorder %s32, 3
    %p196 = por %p194, %p195
    %p198 = scmp.ne.s32.totalorder %s183, %s197
    %p199 = scmp.eq.s32.totalorder %s32, 0
    %p200 = por %p198, %p199
    %s202 = sadd.s32 %s201, 1
    %p205 = scmp.eq.s32.totalorder %s26, 3
    %p206 = scmp.ne.s32.totalorder %s201, %s203
    %p207 = scmp.eq.s32.totalorder %s26, 0
    %p208 = por %p206, %p207
    %p209 = scmp.ne.s32.totalorder %s201, %s203
    %p210 = scmp.eq.s32.totalorder %s31, 3
    %p211 = por %p209, %p210
    %p212 = scmp.ne.s32.totalorder %s203, %s204
    %p213 = scmp.eq.s32.totalorder %s31, 0
    %p214 = por %p212, %p213
    %p215 = scmp.ne.s32.totalorder %s203, %s204
    %p216 = scmp.eq.s32.totalorder %s32, 3
    %p217 = por %p215, %p216
    %p219 = scmp.ne.s32.totalorder %s204, %s218
    %p220 = scmp.eq.s32.totalorder %s32, 0
    %p221 = por %p219, %p220
    %s223 = sadd.s32 %s222, 1
    %p226 = scmp.eq.s32.totalorder %s26, 3
    %p227 = scmp.ne.s32.totalorder %s222, %s224
    %p228 = scmp.eq.s32.totalorder %s26, 0
    %p229 = por %p227, %p228
    %p230 = scmp.ne.s32.totalorder %s222, %s224
    %p231 = scmp.eq.s32.totalorder %s31, 3
    %p232 = por %p230, %p231
    %p233 = scmp.ne.s32.totalorder %s224, %s225
    %p234 = scmp.eq.s32.totalorder %s31, 0
    %p235 = por %p233, %p234
    %p236 = scmp.ne.s32.totalorder %s224, %s225
    %p237 = scmp.eq.s32.totalorder %s32, 3
    %p238 = por %p236, %p237
    %p240 = scmp.ne.s32.totalorder %s225, %s239
    %p241 = scmp.eq.s32.totalorder %s32, 0
    %p242 = por %p240, %p241
    %s244 = sadd.s32 %s243, 1
    %p247 = scmp.eq.s32.totalorder %s26, 3
    %p248 = scmp.ne.s32.totalorder %s243, %s245
    %p249 = scmp.eq.s32.totalorder %s26, 0
    %p250 = por %p248, %p249
    %p251 = scmp.ne.s32.totalorder %s243, %s245
    %p252 = scmp.eq.s32.totalorder %s31, 3
    %p253 = por %p251, %p252
    %p254 = scmp.ne.s32.totalorder %s245, %s246
    %p255 = scmp.eq.s32.totalorder %s31, 0
    %p256 = por %p254, %p255
    %p257 = scmp.ne.s32.totalorder %s245, %s246
    %p258 = scmp.eq.s32.totalorder %s32, 3
    %p259 = por %p257, %p258
    %p261 = scmp.ne.s32.totalorder %s246, %s260
    %p262 = scmp.eq.s32.totalorder %s32, 0
    %p263 = por %p261, %p262
    %s265 = sadd.s32 %s264, 1
    %p268 = scmp.eq.s32.totalorder %s26, 3
    %p269 = scmp.ne.s32.totalorder %s264, %s266
    %p270 = scmp.eq.s32.totalorder %s26, 0
    %p271 = por %p269, %p270
    %p272 = scmp.ne.s32.totalorder %s264, %s266
    %p273 = scmp.eq.s32.totalorder %s31, 3
    %p274 = por %p272, %p273
    %p275 = scmp.ne.s32.totalorder %s266, %s267
    %p276 = scmp.eq.s32.totalorder %s31, 0
    %p277 = por %p275, %p276
    %p278 = scmp.ne.s32.totalorder %s266, %s267
    %p279 = scmp.eq.s32.totalorder %s32, 3
    %p280 = por %p278, %p279
    %p282 = scmp.ne.s32.totalorder %s267, %s281
    %p283 = scmp.eq.s32.totalorder %s32, 0
    %p284 = por %p282, %p283
    %s286 = sadd.s32 %s285, 1
    %p289 = scmp.eq.s32.totalorder %s26, 3
    %p290 = scmp.ne.s32.totalorder %s285, %s287
    %p291 = scmp.eq.s32.totalorder %s26, 0
    %p292 = por %p290, %p291
    %p293 = scmp.ne.s32.totalorder %s285, %s287
    %p294 = scmp.eq.s32.totalorder %s31, 3
    %p295 = por %p293, %p294
    %p296 = scmp.ne.s32.totalorder %s287, %s288
    %p297 = scmp.eq.s32.totalorder %s31, 0
    %p298 = por %p296, %p297
    %p299 = scmp.ne.s32.totalorder %s287, %s288
    %p300 = scmp.eq.s32.totalorder %s32, 3
    %p301 = por %p299, %p300
    %p303 = scmp.ne.s32.totalorder %s288, %s302
    %p304 = scmp.eq.s32.totalorder %s32, 0
    %p305 = por %p303, %p304
    %s307 = sadd.s32 %s306, 1
    %p310 = scmp.eq.s32.totalorder %s26, 3
    %p311 = scmp.ne.s32.totalorder %s306, %s308
    %p312 = scmp.eq.s32.totalorder %s26, 0
    %p313 = por %p311, %p312
    %p314 = scmp.ne.s32.totalorder %s306, %s308
    %p315 = scmp.eq.s32.totalorder %s31, 3
    %p316 = por %p314, %p315
    %p317 = scmp.ne.s32.totalorder %s308, %s309
    %p318 = scmp.eq.s32.totalorder %s31, 0
    %p319 = por %p317, %p318
    %p320 = scmp.ne.s32.totalorder %s308, %s309
    %p321 = scmp.eq.s32.totalorder %s32, 3
    %p322 = por %p320, %p321
    %p324 = scmp.ne.s32.totalorder %s309, %s323
    %p325 = scmp.eq.s32.totalorder %s32, 0
    %p326 = por %p324, %p325
    %s328 = sadd.s32 %s327, 1
    %p331 = scmp.eq.s32.totalorder %s26, 3
    %p332 = scmp.ne.s32.totalorder %s327, %s329
    %p333 = scmp.eq.s32.totalorder %s26, 0
    %p334 = por %p332, %p333
    %p335 = scmp.ne.s32.totalorder %s327, %s329
    %p336 = scmp.eq.s32.totalorder %s31, 3
    %p337 = por %p335, %p336
    %p338 = scmp.ne.s32.totalorder %s329, %s330
    %p339 = scmp.eq.s32.totalorder %s31, 0
    %p340 = por %p338, %p339
    %p341 = scmp.ne.s32.totalorder %s329, %s330
    %p342 = scmp.eq.s32.totalorder %s32, 3
    %p343 = por %p341, %p342
    %p345 = scmp.ne.s32.totalorder %s330, %s344
    %p346 = scmp.eq.s32.totalorder %s32, 0
    %p347 = por %p345, %p346
    %s349 = sadd.s32 %s348, 1
    %p352 = scmp.eq.s32.totalorder %s26, 3
    %p353 = scmp.ne.s32.totalorder %s348, %s350
    %p354 = scmp.eq.s32.totalorder %s26, 0
    %p355 = por %p353, %p354
    %p356 = scmp.ne.s32.totalorder %s348, %s350
    %p357 = scmp.eq.s32.totalorder %s31, 3
    %p358 = por %p356, %p357
    %p359 = scmp.ne.s32.totalorder %s350, %s351
    %p360 = scmp.eq.s32.totalorder %s31, 0
    %p361 = por %p359, %p360
    %p362 = scmp.ne.s32.totalorder %s350, %s351
    %p363 = scmp.eq.s32.totalorder %s32, 3
    %p364 = por %p362, %p363
    %p366 = scmp.ne.s32.totalorder %s351, %s365
    %p367 = scmp.eq.s32.totalorder %s32, 0
    %p368 = por %p366, %p367
    %s370 = sadd.s32 %s369, 1
    %p373 = scmp.eq.s32.totalorder %s26, 3
    %p374 = scmp.ne.s32.totalorder %s369, %s371
    %p375 = scmp.eq.s32.totalorder %s26, 0
    %p376 = por %p374, %p375
    %p377 = scmp.ne.s32.totalorder %s369, %s371
    %p378 = scmp.eq.s32.totalorder %s31, 3
    %p379 = por %p377, %p378
    %p380 = scmp.ne.s32.totalorder %s371, %s372
    %p381 = scmp.eq.s32.totalorder %s31, 0
    %p382 = por %p380, %p381
    %p383 = scmp.ne.s32.totalorder %s371, %s372
    %p384 = scmp.eq.s32.totalorder %s32, 3
    %p385 = por %p383, %p384
    %p387 = scmp.ne.s32.totalorder %s372, %s386
    %p388 = scmp.eq.s32.totalorder %s32, 0
    %p389 = por %p387, %p388
    %s391 = sadd.s32 %s390, 1
    %p394 = scmp.eq.s32.totalorder %s26, 3
    %p395 = scmp.ne.s32.totalorder %s390, %s392
    %p396 = scmp.eq.s32.totalorder %s26, 0
    %p397 = por %p395, %p396
    %p398 = scmp.ne.s32.totalorder %s390, %s392
    %p399 = scmp.eq.s32.totalorder %s31, 3
    %p400 = por %p398, %p399
    %p401 = scmp.ne.s32.totalorder %s392, %s393
    %p402 = scmp.eq.s32.totalorder %s31, 0
    %p403 = por %p401, %p402
    %p404 = scmp.ne.s32.totalorder %s392, %s393
    %p405 = scmp.eq.s32.totalorder %s32, 3
    %p406 = por %p404, %p405
    %p408 = scmp.ne.s32.totalorder %s393, %s407
    %p409 = scmp.eq.s32.totalorder %s32, 0
    %p410 = por %p408, %p409
    %s412 = sadd.s32 %s411, 1
    %p415 = scmp.eq.s32.totalorder %s26, 3
    %p416 = scmp.ne.s32.totalorder %s411, %s413
    %p417 = scmp.eq.s32.totalorder %s26, 0
    %p418 = por %p416, %p417
    %p419 = scmp.ne.s32.totalorder %s411, %s413
    %p420 = scmp.eq.s32.totalorder %s31, 3
    %p421 = por %p419, %p420
    %p422 = scmp.ne.s32.totalorder %s413, %s414
    %p423 = scmp.eq.s32.totalorder %s31, 0
    %p424 = por %p422, %p423
    %p425 = scmp.ne.s32.totalorder %s413, %s414
    %p426 = scmp.eq.s32.totalorder %s32, 3
    %p427 = por %p425, %p426
    %p429 = scmp.ne.s32.totalorder %s414, %s428
    %p430 = scmp.eq.s32.totalorder %s32, 0
    %p431 = por %p429, %p430
    %s433 = sadd.s32 %s432, 1
    %p436 = scmp.eq.s32.totalorder %s26, 3
    %p437 = scmp.ne.s32.totalorder %s432, %s434
    %p438 = scmp.eq.s32.totalorder %s26, 0
    %p439 = por %p437, %p438
    %p440 = scmp.ne.s32.totalorder %s432, %s434
    %p441 = scmp.eq.s32.totalorder %s31, 3
    %p442 = por %p440, %p441
    %p443 = scmp.ne.s32.totalorder %s434, %s435
    %p444 = scmp.eq.s32.totalorder %s31, 0
    %p445 = por %p443, %p444
    %p446 = scmp.ne.s32.totalorder %s434, %s435
    %p447 = scmp.eq.s32.totalorder %s32, 3
    %p448 = por %p446, %p447
    %p450 = scmp.ne.s32.totalorder %s435, %s449
    %p451 = scmp.eq.s32.totalorder %s32, 0
    %p452 = por %p450, %p451
    %s454 = sadd.s32 %s453, 1
    %p457 = scmp.eq.s32.totalorder %s26, 3
    %p458 = scmp.ne.s32.totalorder %s453, %s455
    %p459 = scmp.eq.s32.totalorder %s26, 0
    %p460 = por %p458, %p459
    %p461 = scmp.ne.s32.totalorder %s453, %s455
    %p462 = scmp.eq.s32.totalorder %s31, 3
    %p463 = por %p461, %p462
    %p464 = scmp.ne.s32.totalorder %s455, %s456
    %p465 = scmp.eq.s32.totalorder %s31, 0
    %p466 = por %p464, %p465
    %p467 = scmp.ne.s32.totalorder %s455, %s456
    %p468 = scmp.eq.s32.totalorder %s32, 3
    %p469 = por %p467, %p468
    %p471 = scmp.ne.s32.totalorder %s456, %s470
    %p472 = scmp.eq.s32.totalorder %s32, 0
    %p473 = por %p471, %p472
    %s474 = ssub.s32 %s26, %s33
    %p475 = scmp.eq.s32.totalorder %s474, 0
    %s477 = sadd.s32 %s476, 1
    %s478 = scalar_select %p475, %s476, %s477
    %p481 = pneg %p475
    %p482 = scmp.eq.s32.totalorder %s26, 3
    %p483 = por %p481, %p482
    %p484 = scmp.ne.s32.totalorder %s476, %s479
    %p485 = scmp.eq.s32.totalorder %s26, 0
    %p486 = por %p484, %p485
    %p487 = scmp.ne.s32.totalorder %s476, %s479
    %p488 = scmp.eq.s32.totalorder %s31, 3
    %p489 = por %p487, %p488
    %p490 = scmp.ne.s32.totalorder %s479, %s480
    %p491 = scmp.eq.s32.totalorder %s31, 0
    %p492 = por %p490, %p491
    %p493 = scmp.ne.s32.totalorder %s479, %s480
    %p494 = scmp.eq.s32.totalorder %s32, 3
    %p495 = por %p493, %p494
    %p497 = scmp.ne.s32.totalorder %s480, %s496
    %p498 = scmp.eq.s32.totalorder %s32, 0
    %p499 = por %p497, %p498
    %p500 = scmp.le.s32.totalorder 1, %s26
    %p501 = scmp.lt.s32.totalorder %s26, 5
    %p502 = pnand %p500, %p501
    %p503 = pneg %p502
    // Predicated region
    $region9: #{_lambda_.5} parent=5 // pred_check
      _
    $region10: #{_lambda_.5} parent=5 // pred_check_branch
      %505 = sbr.rel (%p502) target = $region12
    $region11: #{_lambda_.5} parent=5 // pred_region
      %s506 = ssub.s32 %s26, 1
      // Predicated region
      $region13: #{_lambda_.5} parent=11 // pred_check
        %p507 = pneg %p151
      $region14: #{_lambda_.5} parent=11 // pred_check_branch
        %509 = sbr.rel (%p507) target = $region16
      $region15: #{_lambda_.5} parent=11 // pred_region
        _
      $region16: #{_lambda_.5} parent=11 // pred_fallthru
        _
      // Predicated region
      $region17: #{_lambda_.5} parent=11 // pred_check
        %p510 = pneg %p172
      $region18: #{_lambda_.5} parent=11 // pred_check_branch
        %512 = sbr.rel (%p510) target = $region20
      $region19: #{_lambda_.5} parent=11 // pred_region
        _
      $region20: #{_lambda_.5} parent=11 // pred_fallthru
        _
      // Predicated region
      $region21: #{_lambda_.5} parent=11 // pred_check
        %p513 = pneg %p193
      $region22: #{_lambda_.5} parent=11 // pred_check_branch
        %515 = sbr.rel (%p513) target = $region24
      $region23: #{_lambda_.5} parent=11 // pred_region
        _
      $region24: #{_lambda_.5} parent=11 // pred_fallthru
        _
      // Predicated region
      $region25: #{_lambda_.5} parent=11 // pred_check
        %p516 = pneg %p214
      $region26: #{_lambda_.5} parent=11 // pred_check_branch
        %518 = sbr.rel (%p516) target = $region28
      $region27: #{_lambda_.5} parent=11 // pred_region
        _
      $region28: #{_lambda_.5} parent=11 // pred_fallthru
        _
      // Predicated region
      $region29: #{_lambda_.5} parent=11 // pred_check
        %p519 = pneg %p235
      $region30: #{_lambda_.5} parent=11 // pred_check_branch
        %521 = sbr.rel (%p519) target = $region32
      $region31: #{_lambda_.5} parent=11 // pred_region
        _
      $region32: #{_lambda_.5} parent=11 // pred_fallthru
        _
      // Predicated region
      $region33: #{_lambda_.5} parent=11 // pred_check
        %p522 = pneg %p256
      $region34: #{_lambda_.5} parent=11 // pred_check_branch
        %524 = sbr.rel (%p522) target = $region36
      $region35: #{_lambda_.5} parent=11 // pred_region
        _
      $region36: #{_lambda_.5} parent=11 // pred_fallthru
        _
      // Predicated region
      $region37: #{_lambda_.5} parent=11 // pred_check
        %p525 = pneg %p277
      $region38: #{_lambda_.5} parent=11 // pred_check_branch
        %527 = sbr.rel (%p525) target = $region40
      $region39: #{_lambda_.5} parent=11 // pred_region
        _
      $region40: #{_lambda_.5} parent=11 // pred_fallthru
        _
      // Predicated region
      $region41: #{_lambda_.5} parent=11 // pred_check
        %p528 = pneg %p298
      $region42: #{_lambda_.5} parent=11 // pred_check_branch
        %530 = sbr.rel (%p528) target = $region44
      $region43: #{_lambda_.5} parent=11 // pred_region
        _
      $region44: #{_lambda_.5} parent=11 // pred_fallthru
        _
      // Predicated region
      $region45: #{_lambda_.5} parent=11 // pred_check
        %p531 = pneg %p319
      $region46: #{_lambda_.5} parent=11 // pred_check_branch
        %533 = sbr.rel (%p531) target = $region48
      $region47: #{_lambda_.5} parent=11 // pred_region
        _
      $region48: #{_lambda_.5} parent=11 // pred_fallthru
        _
      // Predicated region
      $region49: #{_lambda_.5} parent=11 // pred_check
        %p534 = pneg %p340
      $region50: #{_lambda_.5} parent=11 // pred_check_branch
        %536 = sbr.rel (%p534) target = $region52
      $region51: #{_lambda_.5} parent=11 // pred_region
        _
      $region52: #{_lambda_.5} parent=11 // pred_fallthru
        _
      // Predicated region
      $region53: #{_lambda_.5} parent=11 // pred_check
        %p537 = pneg %p361
      $region54: #{_lambda_.5} parent=11 // pred_check_branch
        %539 = sbr.rel (%p537) target = $region56
      $region55: #{_lambda_.5} parent=11 // pred_region
        _
      $region56: #{_lambda_.5} parent=11 // pred_fallthru
        _
      // Predicated region
      $region57: #{_lambda_.5} parent=11 // pred_check
        %p540 = pneg %p382
      $region58: #{_lambda_.5} parent=11 // pred_check_branch
        %542 = sbr.rel (%p540) target = $region60
      $region59: #{_lambda_.5} parent=11 // pred_region
        _
      $region60: #{_lambda_.5} parent=11 // pred_fallthru
        _
      // Predicated region
      $region61: #{_lambda_.5} parent=11 // pred_check
        %p543 = pneg %p403
      $region62: #{_lambda_.5} parent=11 // pred_check_branch
        %545 = sbr.rel (%p543) target = $region64
      $region63: #{_lambda_.5} parent=11 // pred_region
        _
      $region64: #{_lambda_.5} parent=11 // pred_fallthru
        _
      // Predicated region
      $region65: #{_lambda_.5} parent=11 // pred_check
        %p546 = pneg %p424
      $region66: #{_lambda_.5} parent=11 // pred_check_branch
        %548 = sbr.rel (%p546) target = $region68
      $region67: #{_lambda_.5} parent=11 // pred_region
        _
      $region68: #{_lambda_.5} parent=11 // pred_fallthru
        _
      // Predicated region
      $region69: #{_lambda_.5} parent=11 // pred_check
        %p549 = pneg %p445
      $region70: #{_lambda_.5} parent=11 // pred_check_branch
        %551 = sbr.rel (%p549) target = $region72
      $region71: #{_lambda_.5} parent=11 // pred_region
        _
      $region72: #{_lambda_.5} parent=11 // pred_fallthru
        _
      // Predicated region
      $region73: #{_lambda_.5} parent=11 // pred_check
        %p552 = pneg %p466
      $region74: #{_lambda_.5} parent=11 // pred_check_branch
        %554 = sbr.rel (%p552) target = $region76
      $region75: #{_lambda_.5} parent=11 // pred_region
        _
      $region76: #{_lambda_.5} parent=11 // pred_fallthru
        _
    $region12: #{_lambda_.5} parent=5 // pred_fallthru
      _
    %p555 = scmp.lt.s32.totalorder %s26, 4
    // Predicated region
    $region77: #{_lambda_.5} parent=5 // pred_check
      %p556 = pneg %p555
    $region78: #{_lambda_.5} parent=5 // pred_check_branch
      %558 = sbr.rel (%p556) target = $region80
    $region79: #{_lambda_.5} parent=5 // pred_region
      // Predicated region
      $region81: #{_lambda_.5} parent=79 // pred_check
        %p559 = pneg %p46
      $region82: #{_lambda_.5} parent=79 // pred_check_branch
        %561 = sbr.rel (%p559) target = $region84
      $region83: #{_lambda_.5} parent=79 // pred_region
        %p562 = scmp.lt.s32.totalorder %s26, 3
        %s563 = scalar_select %p562, %s26, 3
        %s564 = smul.addr %s563, 4
        %s565 = scalar_lea.vmem %s0, %s564
      $region84: #{_lambda_.5} parent=79 // pred_fallthru
        _
      // Predicated region
      $region85: #{_lambda_.5} parent=79 // pred_check
        %p566 = pneg %p72
      $region86: #{_lambda_.5} parent=79 // pred_check_branch
        %568 = sbr.rel (%p566) target = $region88
      $region87: #{_lambda_.5} parent=79 // pred_region
        %p569 = scmp.lt.s32.totalorder %s26, 3
        %s570 = scalar_select %p569, %s26, 3
        %s571 = smul.addr %s570, 4
        %s572 = scalar_lea.vmem %s1, %s571
      $region88: #{_lambda_.5} parent=79 // pred_fallthru
        _
      // Predicated region
      $region89: #{_lambda_.5} parent=79 // pred_check
        %p573 = pneg %p98
      $region90: #{_lambda_.5} parent=79 // pred_check_branch
        %575 = sbr.rel (%p573) target = $region92
      $region91: #{_lambda_.5} parent=79 // pred_region
        %p576 = scmp.lt.s32.totalorder %s26, 3
        %s577 = scalar_select %p576, %s26, 3
        %s578 = smul.addr %s577, 4
        %s579 = scalar_lea.vmem %s2, %s578
      $region92: #{_lambda_.5} parent=79 // pred_fallthru
        _
      // Predicated region
      $region93: #{_lambda_.5} parent=79 // pred_check
        %p580 = pneg %p124
      $region94: #{_lambda_.5} parent=79 // pred_check_branch
        %582 = sbr.rel (%p580) target = $region96
      $region95: #{_lambda_.5} parent=79 // pred_region
        %p583 = scmp.lt.s32.totalorder %s26, 3
        %s584 = scalar_select %p583, %s26, 3
        %s585 = smul.addr %s584, 4
        %s586 = scalar_lea.vmem %s3, %s585
      $region96: #{_lambda_.5} parent=79 // pred_fallthru
        _
    $region80: #{_lambda_.5} parent=5 // pred_fallthru
      _
    %p587 = scmp.le.s32.totalorder 1, %s26
    %p588 = scmp.lt.s32.totalorder %s26, 5
    %p589 = pnand %p587, %p588
    %p590 = pneg %p589
    // Predicated region
    $region97: #{_lambda_.5} parent=5 // pred_check
      _
    $region98: #{_lambda_.5} parent=5 // pred_check_branch
      %592 = sbr.rel (%p589) target = $region100
    $region99: #{_lambda_.5} parent=5 // pred_region
      %s593 = ssub.s32 %s26, 1
      %p594 = scmp.lt.s32.totalorder %s31, 3
      %s595 = scalar_select %p594, %s31, 3
      %s596 = smul.addr %s595, 4
      %s597 = scalar_lea.vmem %s0, %s596
      %p598 = pneg %p52
      %p599 = pneg %p49
      %p600 = scmp.lt.s32.totalorder %s31, 3
      %s601 = scalar_select %p600, %s31, 3
      %s602 = smul.addr %s601, 4
      %s603 = scalar_lea.vmem %s1, %s602
      %p604 = pneg %p78
      %p605 = pneg %p75
      %p606 = scmp.lt.s32.totalorder %s31, 3
      %s607 = scalar_select %p606, %s31, 3
      %s608 = smul.addr %s607, 4
      %s609 = scalar_lea.vmem %s2, %s608
      %p610 = pneg %p104
      %p611 = pneg %p101
      %p612 = scmp.lt.s32.totalorder %s31, 3
      %s613 = scalar_select %p612, %s31, 3
      %s614 = smul.addr %s613, 4
      %s615 = scalar_lea.vmem %s3, %s614
      %p616 = pneg %p130
      %p617 = pneg %p127
      %p618 = pneg %p151
      %p619 = pneg %p148
      %p620 = pneg %p172
      %p621 = pneg %p169
      %p622 = pneg %p193
      %p623 = pneg %p190
      %p624 = pneg %p214
      %p625 = pneg %p211
      %p626 = pneg %p235
      %p627 = pneg %p232
      %p628 = pneg %p256
      %p629 = pneg %p253
      %p630 = pneg %p277
      %p631 = pneg %p274
      %p632 = pneg %p298
      %p633 = pneg %p295
      %p634 = pneg %p319
      %p635 = pneg %p316
      %p636 = pneg %p340
      %p637 = pneg %p337
      %p638 = pneg %p361
      %p639 = pneg %p358
      %p640 = pneg %p382
      %p641 = pneg %p379
      %p642 = pneg %p403
      %p643 = pneg %p400
      %p644 = pneg %p424
      %p645 = pneg %p421
      %p646 = pneg %p445
      %p647 = pneg %p442
      %p648 = pneg %p466
      %p649 = pneg %p463
      %p650 = pneg %p492
      %p651 = pneg %p489
      %p652 = scmp.lt.s32.totalorder %s31, 3
      %s653 = scalar_select %p652, %s31, 3
      %s654 = smul.addr %s653, 4
      %s655 = scalar_lea.vmem %s20, %s654
      %p656 = scmp.lt.s32.totalorder %s31, 3
      %s657 = scalar_select %p656, %s31, 3
      %s658 = smul.addr %s657, 4
      %s659 = scalar_lea.vmem %s0, %s658
      %p660 = scmp.lt.s32.totalorder %s31, 3
      %s661 = scalar_select %p660, %s31, 3
      %s662 = smul.addr %s661, 4
      %s663 = scalar_lea.vmem %s1, %s662
      %p664 = scmp.lt.s32.totalorder %s31, 3
      %s665 = scalar_select %p664, %s31, 3
      %s666 = smul.addr %s665, 4
      %s667 = scalar_lea.vmem %s2, %s666
      %p668 = scmp.lt.s32.totalorder %s31, 3
      %s669 = scalar_select %p668, %s31, 3
      %s670 = smul.addr %s669, 4
      %s671 = scalar_lea.vmem %s3, %s670
      %p672 = scmp.lt.s32.totalorder %s31, 3
      %s673 = scalar_select %p672, %s31, 3
      %s674 = smul.addr %s673, 4
      %s675 = scalar_lea.vmem %s20, %s674
      %v676 = vld [vmem:[%s659] sm:$0xf]
      %v677 = vld [vmem:[%s663] sm:$0xf]
      %v678 = vld [vmem:[%s667] sm:$0xf]
      %v679 = vld [vmem:[%s671] sm:$0xf]
      %v680 = vld [vmem:[%s4] sm:$0xff]
      %v681 = vld [vmem:[%s4 + $0x8] sm:$0xff]
      %v682 = vld [vmem:[%s4 + $0x10] sm:$0xff]
      %v683 = vld [vmem:[%s4 + $0x18] sm:$0xff]
      %v684 = vld [vmem:[%s4 + $0x20] sm:$0xff]
      %v685 = vld [vmem:[%s4 + $0x28] sm:$0xff]
      %v686 = vld [vmem:[%s4 + $0x30] sm:$0xff]
      %v687 = vld [vmem:[%s4 + $0x38] sm:$0xff]
      %v688 = vld [vmem:[%s5] sm:$0xff]
      %v689 = vld [vmem:[%s5 + $0x8] sm:$0xff]
      %v690 = vld [vmem:[%s5 + $0x10] sm:$0xff]
      %v691 = vld [vmem:[%s5 + $0x18] sm:$0xff]
      %v692 = vld [vmem:[%s5 + $0x20] sm:$0xff]
      %v693 = vld [vmem:[%s5 + $0x28] sm:$0xff]
      %v694 = vld [vmem:[%s5 + $0x30] sm:$0xff]
      %v695 = vld [vmem:[%s5 + $0x38] sm:$0xff]
      %vm696 = vcmask 261120
      %v698 = vsel %vm696, %v677, 0
      %700 = vmatprep.subr.mxu0 %v689
      %701 = vmatpush1.msra.mxu0 %v688
      %702 = vmatprep.subr.mxu0 %v691
      %703 = vmatpush1.msra.mxu0 %v690
      %704 = vmatprep.subr.mxu0 %v693
      %705 = vmatpush1.msra.mxu0 %v692
      %706 = vmatprep.subr.mxu0 %v695
      %707 = vmatpush1.msra.mxu0 %v694
      %708 = vmatprep.subr.mxu0 0.0
      %709 = vmatpush1.msra.mxu0 0.0
      %710 = vmatprep.subr.mxu0 0.0
      %711 = vmatpush1.msra.mxu0 0.0
      %712 = vmatprep.subr.mxu0 0.0
      %713 = vmatpush1.msra.mxu0 0.0
      %714 = vmatprep.subr.mxu0 0.0
      %715 = vmatpush1.msra.mxu0 0.0
      %716 = vmatprep.subr.mxu0 0.0
      %717 = vmatpush1.msra.mxu0 0.0
      %718 = vmatprep.subr.mxu0 0.0
      %719 = vmatpush1.msra.mxu0 0.0
      %720 = vmatprep.subr.mxu0 0.0
      %721 = vmatpush1.msra.mxu0 0.0
      %722 = vmatprep.subr.mxu0 0.0
      %723 = vmatpush1.msra.mxu0 0.0
      %724 = vmatprep.subr.mxu0 0.0
      %725 = vmatpush1.msra.mxu0 0.0
      %726 = vmatprep.subr.mxu0 0.0
      %727 = vmatpush1.msra.mxu0 0.0
      %728 = vmatprep.subr.mxu0 0.0
      %729 = vmatpush1.msra.mxu0 0.0
      %730 = vmatprep.subr.mxu0 0.0
      %731 = vmatpush1.msra.mxu0 0.0
      %732 = vmatprep.subr.mxu0 0.0
      %733 = vmatpush1.msra.mxu0 0.0
      %734 = vmatprep.subr.mxu0 0.0
      %735 = vmatpush1.msra.mxu0 0.0
      %736 = vmatprep.subr.mxu0 0.0
      %737 = vmatpush1.msra.mxu0 0.0
      %738 = vmatprep.subr.mxu0 0.0
      %739 = vmatpush1.msra.mxu0 0.0
      %740 = vmatprep.subr.mxu0 0.0
      %741 = vmatpush1.msra.mxu0 0.0
      %742 = vmatprep.subr.mxu0 0.0
      %743 = vmatpush1.msra.mxu0 0.0
      %744 = vmatprep.subr.mxu0 0.0
      %745 = vmatpush1.msra.mxu0 0.0
      %746 = vmatprep.subr.mxu0 0.0
      %747 = vmatpush1.msra.mxu0 0.0
      %748 = vmatprep.subr.mxu0 0.0
      %749 = vmatpush1.msra.mxu0 0.0
      %750 = vmatprep.subr.mxu0 0.0
      %751 = vmatpush1.msra.mxu0 0.0
      %752 = vmatprep.subr.mxu0 0.0
      %753 = vmatpush1.msra.mxu0 0.0
      %754 = vmatprep.subr.mxu0 0.0
      %755 = vmatpush1.msra.mxu0 0.0
      %756 = vmatprep.subr.mxu0 0.0
      %757 = vmatpush1.msra.mxu0 0.0
      %758 = vmatprep.subr.mxu0 0.0
      %759 = vmatpush1.msra.mxu0 0.0
      %760 = vmatprep.subr.mxu0 0.0
      %761 = vmatpush1.msra.mxu0 0.0
      %762 = vmatprep.subr.mxu0 0.0
      %763 = vmatpush1.msra.mxu0 0.0
      %764 = vmatprep.mubr.f32.mxu0 0.0
      %765 = vmatmul.mubr.f32.gmra.mrb[0].mxu0 %v698
      %v766 = vpop.f32.mrb[0].mxu0
      %v767 = vadd.f32 0.0, %v766
      %v768 = vpop.f32.mrb[0].mxu0
      %v769 = vadd.f32 0.0, %v768
      %770 = vdwg.mxu0
      %v772 = vsel %vm696, %v676, 0
      %774 = vmatprep.subr.mxu0 %v681
      %775 = vmatpush1.msra.mxu0 %v680
      %776 = vmatprep.subr.mxu0 %v683
      %777 = vmatpush1.msra.mxu0 %v682
      %778 = vmatprep.subr.mxu0 %v685
      %779 = vmatpush1.msra.mxu0 %v684
      %780 = vmatprep.subr.mxu0 %v687
      %781 = vmatpush1.msra.mxu0 %v686
      %782 = vmatprep.subr.mxu0 0.0
      %783 = vmatpush1.msra.mxu0 0.0
      %784 = vmatprep.subr.mxu0 0.0
      %785 = vmatpush1.msra.mxu0 0.0
      %786 = vmatprep.subr.mxu0 0.0
      %787 = vmatpush1.msra.mxu0 0.0
      %788 = vmatprep.subr.mxu0 0.0
      %789 = vmatpush1.msra.mxu0 0.0
      %790 = vmatprep.subr.mxu0 0.0
      %791 = vmatpush1.msra.mxu0 0.0
      %792 = vmatprep.subr.mxu0 0.0
      %793 = vmatpush1.msra.mxu0 0.0
      %794 = vmatprep.subr.mxu0 0.0
      %795 = vmatpush1.msra.mxu0 0.0
      %796 = vmatprep.subr.mxu0 0.0
      %797 = vmatpush1.msra.mxu0 0.0
      %798 = vmatprep.subr.mxu0 0.0
      %799 = vmatpush1.msra.mxu0 0.0
      %800 = vmatprep.subr.mxu0 0.0
      %801 = vmatpush1.msra.mxu0 0.0
      %802 = vmatprep.subr.mxu0 0.0
      %803 = vmatpush1.msra.mxu0 0.0
      %804 = vmatprep.subr.mxu0 0.0
      %805 = vmatpush1.msra.mxu0 0.0
      %806 = vmatprep.subr.mxu0 0.0
      %807 = vmatpush1.msra.mxu0 0.0
      %808 = vmatprep.subr.mxu0 0.0
      %809 = vmatpush1.msra.mxu0 0.0
      %810 = vmatprep.subr.mxu0 0.0
      %811 = vmatpush1.msra.mxu0 0.0
      %812 = vmatprep.subr.mxu0 0.0
      %813 = vmatpush1.msra.mxu0 0.0
      %814 = vmatprep.subr.mxu0 0.0
      %815 = vmatpush1.msra.mxu0 0.0
      %816 = vmatprep.subr.mxu0 0.0
      %817 = vmatpush1.msra.mxu0 0.0
      %818 = vmatprep.subr.mxu0 0.0
      %819 = vmatpush1.msra.mxu0 0.0
      %820 = vmatprep.subr.mxu0 0.0
      %821 = vmatpush1.msra.mxu0 0.0
      %822 = vmatprep.subr.mxu0 0.0
      %823 = vmatpush1.msra.mxu0 0.0
      %824 = vmatprep.subr.mxu0 0.0
      %825 = vmatpush1.msra.mxu0 0.0
      %826 = vmatprep.subr.mxu0 0.0
      %827 = vmatpush1.msra.mxu0 0.0
      %828 = vmatprep.subr.mxu0 0.0
      %829 = vmatpush1.msra.mxu0 0.0
      %830 = vmatprep.subr.mxu0 0.0
      %831 = vmatpush1.msra.mxu0 0.0
      %832 = vmatprep.subr.mxu0 0.0
      %833 = vmatpush1.msra.mxu0 0.0
      %834 = vmatprep.subr.mxu0 0.0
      %835 = vmatpush1.msra.mxu0 0.0
      %836 = vmatprep.subr.mxu0 0.0
      %837 = vmatpush1.msra.mxu0 0.0
      %838 = vmatprep.mubr.f32.mxu0 0.0
      %839 = vmatmul.mubr.f32.gmra.mrb[0].mxu0 %v772
      %v840 = vpop.f32.mrb[0].mxu0
      %v841 = vadd.f32 %v767, %v840
      %v842 = vpop.f32.mrb[0].mxu0
      %v843 = vadd.f32 %v769, %v842
      %844 = vdwg.mxu0
      %v845 = vmul.f32 %v841, 0.088388346
      %v846 = vld [vmem:[%s6] sm:$0xff]
      %v847 = vld [vmem:[%s6 + $0x8] sm:$0xff]
      %v848 = vld [vmem:[%s6 + $0x10] sm:$0xff]
      %v849 = vld [vmem:[%s6 + $0x18] sm:$0xff]
      %v850 = vld [vmem:[%s6 + $0x20] sm:$0xff]
      %v851 = vld [vmem:[%s6 + $0x28] sm:$0xff]
      %v852 = vld [vmem:[%s6 + $0x30] sm:$0xff]
      %v853 = vld [vmem:[%s6 + $0x38] sm:$0xff]
      %855 = vrot.lane.b32.xlu0 %v841, 64
      %v856 = vpop.permute.xlu0 %855
      %v858 = vsel %vm696, %v845, 0
      %v860 = vsel %vm696, %v856, 0
      %862 = vmatprep.subr.mxu0 0.0
      %863 = vmatpush1.xpose.msra.mxu0 %v860
      %864 = vmatprep.subr.mxu0 0.0
      %865 = vmatpush1.xpose.msra.mxu0 0.0
      %866 = vmatprep.subr.mxu0 0.0
      %867 = vmatpush1.xpose.msra.mxu0 0.0
      %868 = vmatprep.subr.mxu0 0.0
      %869 = vmatpush1.xpose.msra.mxu0 0.0
      %870 = vmatprep.subr.mxu0 0.0
      %871 = vmatpush1.xpose.msra.mxu0 0.0
      %872 = vmatprep.subr.mxu0 0.0
      %873 = vmatpush1.xpose.msra.mxu0 0.0
      %874 = vmatprep.subr.mxu0 0.0
      %875 = vmatpush1.xpose.msra.mxu0 0.0
      %876 = vmatprep.subr.mxu0 0.0
      %877 = vmatpush1.xpose.msra.mxu0 0.0
      %878 = vmatprep.subr.mxu0 0.0
      %879 = vmatpush1.xpose.msra.mxu0 0.0
      %880 = vmatprep.subr.mxu0 0.0
      %881 = vmatpush1.xpose.msra.mxu0 0.0
      %882 = vmatprep.subr.mxu0 0.0
      %883 = vmatpush1.xpose.msra.mxu0 0.0
      %884 = vmatprep.subr.mxu0 0.0
      %885 = vmatpush1.xpose.msra.mxu0 0.0
      %886 = vmatprep.subr.mxu0 0.0
      %887 = vmatpush1.xpose.msra.mxu0 0.0
      %888 = vmatprep.subr.mxu0 0.0
      %889 = vmatpush1.xpose.msra.mxu0 0.0
      %890 = vmatprep.subr.mxu0 0.0
      %891 = vmatpush1.xpose.msra.mxu0 0.0
      %892 = vmatprep.subr.mxu0 0.0
      %893 = vmatpush1.xpose.msra.mxu0 0.0
      %894 = vmatprep.subr.mxu0 0.0
      %895 = vmatpush1.xpose.msra.mxu0 0.0
      %896 = vmatprep.subr.mxu0 0.0
      %897 = vmatpush1.xpose.msra.mxu0 0.0
      %898 = vmatprep.subr.mxu0 0.0
      %899 = vmatpush1.xpose.msra.mxu0 0.0
      %900 = vmatprep.subr.mxu0 0.0
      %901 = vmatpush1.xpose.msra.mxu0 0.0
      %902 = vmatprep.subr.mxu0 0.0
      %903 = vmatpush1.xpose.msra.mxu0 0.0
      %904 = vmatprep.subr.mxu0 0.0
      %905 = vmatpush1.xpose.msra.mxu0 0.0
      %906 = vmatprep.subr.mxu0 0.0
      %907 = vmatpush1.xpose.msra.mxu0 0.0
      %908 = vmatprep.subr.mxu0 0.0
      %909 = vmatpush1.xpose.msra.mxu0 0.0
      %910 = vmatprep.subr.mxu0 0.0
      %911 = vmatpush1.xpose.msra.mxu0 0.0
      %912 = vmatprep.subr.mxu0 0.0
      %913 = vmatpush1.xpose.msra.mxu0 0.0
      %914 = vmatprep.subr.mxu0 0.0
      %915 = vmatpush1.xpose.msra.mxu0 0.0
      %916 = vmatprep.subr.mxu0 0.0
      %917 = vmatpush1.xpose.msra.mxu0 0.0
      %918 = vmatprep.subr.mxu0 0.0
      %919 = vmatpush1.xpose.msra.mxu0 0.0
      %920 = vmatprep.subr.mxu0 0.0
      %921 = vmatpush1.xpose.msra.mxu0 0.0
      %922 = vmatprep.subr.mxu0 0.0
      %923 = vmatpush1.xpose.msra.mxu0 0.0
      %924 = vmatprep.subr.mxu0 0.0
      %925 = vmatpush1.xpose.msra.mxu0 0.0
      %926 = vmatprep.mubr.f32.mxu0 0.0
      %927 = vmatmul.mubr.f32.gmra.mrb[0].mxu0 %v858
      %v928 = vpop.f32.mrb[0].mxu0
      %v929 = vadd.f32 0.0, %v928
      %v930 = vpop.f32.mrb[0].mxu0
      %931 = vdwg.mxu0
      %vm932 = vcmp.eq.f32.partialorder %v679, 0.0
      %v933 = vsel %vm932, -1e+09, %v929
      %vm934 = vcmask 27648
      %v935 = vsel %vm934, %v933, -inf
      %936 = vmax.xlane.f32.xlu0 %v935
      %v937 = vpop.xlane.xlu0 %936
      %v938 = vsub.f32 %v933, %v937
      %v939 = vmul.f32 %v938, 1.442695
      %v940 = vpow.pop %v939
      %v941 = vsel %vm934, %v940, 0.0
      %942 = vadd.xlane.f32.xlu0 %v941
      %v943 = vpop.xlane.xlu0 %942
      %v944 = vrcp.pop %v943
      %v945 = vmul.f32 %v940, %v944
      %vm946 = vcmask 31744
      %v948 = vsel %vm946, %v945, 0
      %vm950 = vcmask 1043456
      %v952 = vsel %vm950, %v843, 0
      %954 = vmatprep.subr.mxu0 0.0
      %955 = vmatpush1.msra.mxu0 %v952
      %956 = vmatprep.subr.mxu0 0.0
      %957 = vmatpush1.msra.mxu0 0.0
      %958 = vmatprep.subr.mxu0 0.0
      %959 = vmatpush1.msra.mxu0 0.0
      %960 = vmatprep.subr.mxu0 0.0
      %961 = vmatpush1.msra.mxu0 0.0
      %962 = vmatprep.subr.mxu0 0.0
      %963 = vmatpush1.msra.mxu0 0.0
      %964 = vmatprep.subr.mxu0 0.0
      %965 = vmatpush1.msra.mxu0 0.0
      %966 = vmatprep.subr.mxu0 0.0
      %967 = vmatpush1.msra.mxu0 0.0
      %968 = vmatprep.subr.mxu0 0.0
      %969 = vmatpush1.msra.mxu0 0.0
      %970 = vmatprep.subr.mxu0 0.0
      %971 = vmatpush1.msra.mxu0 0.0
      %972 = vmatprep.subr.mxu0 0.0
      %973 = vmatpush1.msra.mxu0 0.0
      %974 = vmatprep.subr.mxu0 0.0
      %975 = vmatpush1.msra.mxu0 0.0
      %976 = vmatprep.subr.mxu0 0.0
      %977 = vmatpush1.msra.mxu0 0.0
      %978 = vmatprep.subr.mxu0 0.0
      %979 = vmatpush1.msra.mxu0 0.0
      %980 = vmatprep.subr.mxu0 0.0
      %981 = vmatpush1.msra.mxu0 0.0
      %982 = vmatprep.subr.mxu0 0.0
      %983 = vmatpush1.msra.mxu0 0.0
      %984 = vmatprep.subr.mxu0 0.0
      %985 = vmatpush1.msra.mxu0 0.0
      %986 = vmatprep.subr.mxu0 0.0
      %987 = vmatpush1.msra.mxu0 0.0
      %988 = vmatprep.subr.mxu0 0.0
      %989 = vmatpush1.msra.mxu0 0.0
      %990 = vmatprep.subr.mxu0 0.0
      %991 = vmatpush1.msra.mxu0 0.0
      %992 = vmatprep.subr.mxu0 0.0
      %993 = vmatpush1.msra.mxu0 0.0
      %994 = vmatprep.subr.mxu0 0.0
      %995 = vmatpush1.msra.mxu0 0.0
      %996 = vmatprep.subr.mxu0 0.0
      %997 = vmatpush1.msra.mxu0 0.0
      %998 = vmatprep.subr.mxu0 0.0
      %999 = vmatpush1.msra.mxu0 0.0
      %1000 = vmatprep.subr.mxu0 0.0
      %1001 = vmatpush1.msra.mxu0 0.0
      %1002 = vmatprep.subr.mxu0 0.0
      %1003 = vmatpush1.msra.mxu0 0.0
      %1004 = vmatprep.subr.mxu0 0.0
      %1005 = vmatpush1.msra.mxu0 0.0
      %1006 = vmatprep.subr.mxu0 0.0
      %1007 = vmatpush1.msra.mxu0 0.0
      %1008 = vmatprep.subr.mxu0 0.0
      %1009 = vmatpush1.msra.mxu0 0.0
      %1010 = vmatprep.subr.mxu0 0.0
      %1011 = vmatpush1.msra.mxu0 0.0
      %1012 = vmatprep.subr.mxu0 0.0
      %1013 = vmatpush1.msra.mxu0 0.0
      %1014 = vmatprep.subr.mxu0 0.0
      %1015 = vmatpush1.msra.mxu0 0.0
      %1016 = vmatprep.subr.mxu0 0.0
      %1017 = vmatpush1.msra.mxu0 0.0
      %1018 = vmatprep.mubr.f32.mxu0 0.0
      %1019 = vmatmul.mubr.f32.gmra.mrb[0].mxu0 %v948
      %v1020 = vpop.f32.mrb[0].mxu0
      %v1021 = vadd.f32 0.0, %v1020
      %v1022 = vpop.f32.mrb[0].mxu0
      %1023 = vdwg.mxu0
      %1024 = vrot.lane.b32.xlu0 %v845, 96
      %v1025 = vpop.permute.xlu0 %1024
      %1026 = vrot.lane.b32.xlu0 %v841, 32
      %v1027 = vpop.permute.xlu0 %1026
      %v1028 = vsel %vm696, %v1025, 0
      %v1030 = vsel %vm696, %v1027, 0
      %1032 = vmatprep.subr.mxu0 0.0
      %1033 = vmatpush1.xpose.msra.mxu0 %v1030
      %1034 = vmatprep.subr.mxu0 0.0
      %1035 = vmatpush1.xpose.msra.mxu0 0.0
      %1036 = vmatprep.subr.mxu0 0.0
      %1037 = vmatpush1.xpose.msra.mxu0 0.0
      %1038 = vmatprep.subr.mxu0 0.0
      %1039 = vmatpush1.xpose.msra.mxu0 0.0
      %1040 = vmatprep.subr.mxu0 0.0
      %1041 = vmatpush1.xpose.msra.mxu0 0.0
      %1042 = vmatprep.subr.mxu0 0.0
      %1043 = vmatpush1.xpose.msra.mxu0 0.0
      %1044 = vmatprep.subr.mxu0 0.0
      %1045 = vmatpush1.xpose.msra.mxu0 0.0
      %1046 = vmatprep.subr.mxu0 0.0
      %1047 = vmatpush1.xpose.msra.mxu0 0.0
      %1048 = vmatprep.subr.mxu0 0.0
      %1049 = vmatpush1.xpose.msra.mxu0 0.0
      %1050 = vmatprep.subr.mxu0 0.0
      %1051 = vmatpush1.xpose.msra.mxu0 0.0
      %1052 = vmatprep.subr.mxu0 0.0
      %1053 = vmatpush1.xpose.msra.mxu0 0.0
      %1054 = vmatprep.subr.mxu0 0.0
      %1055 = vmatpush1.xpose.msra.mxu0 0.0
      %1056 = vmatprep.subr.mxu0 0.0
      %1057 = vmatpush1.xpose.msra.mxu0 0.0
      %1058 = vmatprep.subr.mxu0 0.0
      %1059 = vmatpush1.xpose.msra.mxu0 0.0
      %1060 = vmatprep.subr.mxu0 0.0
      %1061 = vmatpush1.xpose.msra.mxu0 0.0
      %1062 = vmatprep.subr.mxu0 0.0
      %1063 = vmatpush1.xpose.msra.mxu0 0.0
      %1064 = vmatprep.subr.mxu0 0.0
      %1065 = vmatpush1.xpose.msra.mxu0 0.0
      %1066 = vmatprep.subr.mxu0 0.0
      %1067 = vmatpush1.xpose.msra.mxu0 0.0
      %1068 = vmatprep.subr.mxu0 0.0
      %1069 = vmatpush1.xpose.msra.mxu0 0.0
      %1070 = vmatprep.subr.mxu0 0.0
      %1071 = vmatpush1.xpose.msra.mxu0 0.0
      %1072 = vmatprep.subr.mxu0 0.0
      %1073 = vmatpush1.xpose.msra.mxu0 0.0
      %1074 = vmatprep.subr.mxu0 0.0
      %1075 = vmatpush1.xpose.msra.mxu0 0.0
      %1076 = vmatprep.subr.mxu0 0.0
      %1077 = vmatpush1.xpose.msra.mxu0 0.0
      %1078 = vmatprep.subr.mxu0 0.0
      %1079 = vmatpush1.xpose.msra.mxu0 0.0
      %1080 = vmatprep.subr.mxu0 0.0
      %1081 = vmatpush1.xpose.msra.mxu0 0.0
      %1082 = vmatprep.subr.mxu0 0.0
      %1083 = vmatpush1.xpose.msra.mxu0 0.0
      %1084 = vmatprep.subr.mxu0 0.0
      %1085 = vmatpush1.xpose.msra.mxu0 0.0
      %1086 = vmatprep.subr.mxu0 0.0
      %1087 = vmatpush1.xpose.msra.mxu0 0.0
      %1088 = vmatprep.subr.mxu0 0.0
      %1089 = vmatpush1.xpose.msra.mxu0 0.0
      %1090 = vmatprep.subr.mxu0 0.0
      %1091 = vmatpush1.xpose.msra.mxu0 0.0
      %1092 = vmatprep.subr.mxu0 0.0
      %1093 = vmatpush1.xpose.msra.mxu0 0.0
      %1094 = vmatprep.subr.mxu0 0.0
      %1095 = vmatpush1.xpose.msra.mxu0 0.0
      %1096 = vmatprep.mubr.f32.mxu0 0.0
      %1097 = vmatmul.mubr.f32.gmra.mrb[0].mxu0 %v1028
      %v1098 = vpop.f32.mrb[0].mxu0
      %v1099 = vadd.f32 0.0, %v1098
      %v1100 = vpop.f32.mrb[0].mxu0
      %1101 = vdwg.mxu0
      %v1102 = vsel %vm932, -1e+09, %v1099
      %v1103 = vsel %vm934, %v1102, -inf
      %1104 = vmax.xlane.f32.xlu0 %v1103
      %v1105 = vpop.xlane.xlu0 %1104
      %v1106 = vsub.f32 %v1102, %v1105
      %v1107 = vmul.f32 %v1106, 1.442695
      %v1108 = vpow.pop %v1107
      %v1109 = vsel %vm934, %v1108, 0.0
      %1110 = vadd.xlane.f32.xlu0 %v1109
      %v1111 = vpop.xlane.xlu0 %1110
      %v1112 = vrcp.pop %v1111
      %v1113 = vmul.f32 %v1108, %v1112
      %1114 = vrot.lane.b32.xlu0 %v843, 96
      %v1115 = vpop.permute.xlu0 %1114
      %v1117 = vsel %vm946, %v1113, 0
      %v1119 = vsel %vm950, %v1115, 0
      %1121 = vmatprep.subr.mxu0 0.0
      %1122 = vmatpush1.msra.mxu0 %v1119
      %1123 = vmatprep.subr.mxu0 0.0
      %1124 = vmatpush1.msra.mxu0 0.0
      %1125 = vmatprep.subr.mxu0 0.0
      %1126 = vmatpush1.msra.mxu0 0.0
      %1127 = vmatprep.subr.mxu0 0.0
      %1128 = vmatpush1.msra.mxu0 0.0
      %1129 = vmatprep.subr.mxu0 0.0
      %1130 = vmatpush1.msra.mxu0 0.0
      %1131 = vmatprep.subr.mxu0 0.0
      %1132 = vmatpush1.msra.mxu0 0.0
      %1133 = vmatprep.subr.mxu0 0.0
      %1134 = vmatpush1.msra.mxu0 0.0
      %1135 = vmatprep.subr.mxu0 0.0
      %1136 = vmatpush1.msra.mxu0 0.0
      %1137 = vmatprep.subr.mxu0 0.0
      %1138 = vmatpush1.msra.mxu0 0.0
      %1139 = vmatprep.subr.mxu0 0.0
      %1140 = vmatpush1.msra.mxu0 0.0
      %1141 = vmatprep.subr.mxu0 0.0
      %1142 = vmatpush1.msra.mxu0 0.0
      %1143 = vmatprep.subr.mxu0 0.0
      %1144 = vmatpush1.msra.mxu0 0.0
      %1145 = vmatprep.subr.mxu0 0.0
      %1146 = vmatpush1.msra.mxu0 0.0
      %1147 = vmatprep.subr.mxu0 0.0
      %1148 = vmatpush1.msra.mxu0 0.0
      %1149 = vmatprep.subr.mxu0 0.0
      %1150 = vmatpush1.msra.mxu0 0.0
      %1151 = vmatprep.subr.mxu0 0.0
      %1152 = vmatpush1.msra.mxu0 0.0
      %1153 = vmatprep.subr.mxu0 0.0
      %1154 = vmatpush1.msra.mxu0 0.0
      %1155 = vmatprep.subr.mxu0 0.0
      %1156 = vmatpush1.msra.mxu0 0.0
      %1157 = vmatprep.subr.mxu0 0.0
      %1158 = vmatpush1.msra.mxu0 0.0
      %1159 = vmatprep.subr.mxu0 0.0
      %1160 = vmatpush1.msra.mxu0 0.0
      %1161 = vmatprep.subr.mxu0 0.0
      %1162 = vmatpush1.msra.mxu0 0.0
      %1163 = vmatprep.subr.mxu0 0.0
      %1164 = vmatpush1.msra.mxu0 0.0
      %1165 = vmatprep.subr.mxu0 0.0
      %1166 = vmatpush1.msra.mxu0 0.0
      %1167 = vmatprep.subr.mxu0 0.0
      %1168 = vmatpush1.msra.mxu0 0.0
      %1169 = vmatprep.subr.mxu0 0.0
      %1170 = vmatpush1.msra.mxu0 0.0
      %1171 = vmatprep.subr.mxu0 0.0
      %1172 = vmatpush1.msra.mxu0 0.0
      %1173 = vmatprep.subr.mxu0 0.0
      %1174 = vmatpush1.msra.mxu0 0.0
      %1175 = vmatprep.subr.mxu0 0.0
      %1176 = vmatpush1.msra.mxu0 0.0
      %1177 = vmatprep.subr.mxu0 0.0
      %1178 = vmatpush1.msra.mxu0 0.0
      %1179 = vmatprep.subr.mxu0 0.0
      %1180 = vmatpush1.msra.mxu0 0.0
      %1181 = vmatprep.subr.mxu0 0.0
      %1182 = vmatpush1.msra.mxu0 0.0
      %1183 = vmatprep.subr.mxu0 0.0
      %1184 = vmatpush1.msra.mxu0 0.0
      %1185 = vmatprep.mubr.f32.mxu0 0.0
      %1186 = vmatmul.mubr.f32.gmra.mrb[0].mxu0 %v1117
      %v1187 = vpop.f32.mrb[0].mxu0
      %v1188 = vadd.f32 0.0, %v1187
      %v1189 = vpop.f32.mrb[0].mxu0
      %1190 = vdwg.mxu0
      %v1192 = vsel %vm696, %v1188, 0
      %1194 = vmatprep.subr.mxu0 0.0
      %1195 = vmatpush1.msra.mxu0 %v850
      %1196 = vmatprep.subr.mxu0 0.0
      %1197 = vmatpush1.msra.mxu0 %v851
      %1198 = vmatprep.subr.mxu0 0.0
      %1199 = vmatpush1.msra.mxu0 %v852
      %1200 = vmatprep.subr.mxu0 0.0
      %1201 = vmatpush1.msra.mxu0 %v853
      %1202 = vmatprep.subr.mxu0 0.0
      %1203 = vmatpush1.msra.mxu0 0.0
      %1204 = vmatprep.subr.mxu0 0.0
      %1205 = vmatpush1.msra.mxu0 0.0
      %1206 = vmatprep.subr.mxu0 0.0
      %1207 = vmatpush1.msra.mxu0 0.0
      %1208 = vmatprep.subr.mxu0 0.0
      %1209 = vmatpush1.msra.mxu0 0.0
      %1210 = vmatprep.subr.mxu0 0.0
      %1211 = vmatpush1.msra.mxu0 0.0
      %1212 = vmatprep.subr.mxu0 0.0
      %1213 = vmatpush1.msra.mxu0 0.0
      %1214 = vmatprep.subr.mxu0 0.0
      %1215 = vmatpush1.msra.mxu0 0.0
      %1216 = vmatprep.subr.mxu0 0.0
      %1217 = vmatpush1.msra.mxu0 0.0
      %1218 = vmatprep.subr.mxu0 0.0
      %1219 = vmatpush1.msra.mxu0 0.0
      %1220 = vmatprep.subr.mxu0 0.0
      %1221 = vmatpush1.msra.mxu0 0.0
      %1222 = vmatprep.subr.mxu0 0.0
      %1223 = vmatpush1.msra.mxu0 0.0
      %1224 = vmatprep.subr.mxu0 0.0
      %1225 = vmatpush1.msra.mxu0 0.0
      %1226 = vmatprep.subr.mxu0 0.0
      %1227 = vmatpush1.msra.mxu0 0.0
      %1228 = vmatprep.subr.mxu0 0.0
      %1229 = vmatpush1.msra.mxu0 0.0
      %1230 = vmatprep.subr.mxu0 0.0
      %1231 = vmatpush1.msra.mxu0 0.0
      %1232 = vmatprep.subr.mxu0 0.0
      %1233 = vmatpush1.msra.mxu0 0.0
      %1234 = vmatprep.subr.mxu0 0.0
      %1235 = vmatpush1.msra.mxu0 0.0
      %1236 = vmatprep.subr.mxu0 0.0
      %1237 = vmatpush1.msra.mxu0 0.0
      %1238 = vmatprep.subr.mxu0 0.0
      %1239 = vmatpush1.msra.mxu0 0.0
      %1240 = vmatprep.subr.mxu0 0.0
      %1241 = vmatpush1.msra.mxu0 0.0
      %1242 = vmatprep.subr.mxu0 0.0
      %1243 = vmatpush1.msra.mxu0 0.0
      %1244 = vmatprep.subr.mxu0 0.0
      %1245 = vmatpush1.msra.mxu0 0.0
      %1246 = vmatprep.subr.mxu0 0.0
      %1247 = vmatpush1.msra.mxu0 0.0
      %1248 = vmatprep.subr.mxu0 0.0
      %1249 = vmatpush1.msra.mxu0 0.0
      %1250 = vmatprep.subr.mxu0 0.0
      %1251 = vmatpush1.msra.mxu0 0.0
      %1252 = vmatprep.subr.mxu0 0.0
      %1253 = vmatpush1.msra.mxu0 0.0
      %1254 = vmatprep.subr.mxu0 0.0
      %1255 = vmatpush1.msra.mxu0 0.0
      %1256 = vmatprep.subr.mxu0 0.0
      %1257 = vmatpush1.msra.mxu0 0.0
      %1258 = vmatprep.mubr.f32.mxu0 0.0
      %1259 = vmatmul.mubr.f32.gmra.mrb[0].mxu0 %v1192
      %v1260 = vpop.f32.mrb[0].mxu0
      %v1261 = vadd.f32 0.0, %v1260
      %v1262 = vpop.f32.mrb[0].mxu0
      %1263 = vdwg.mxu0
      %v1265 = vsel %vm696, %v1021, 0
      %1267 = vmatprep.subr.mxu0 0.0
      %1268 = vmatpush1.msra.mxu0 %v846
      %1269 = vmatprep.subr.mxu0 0.0
      %1270 = vmatpush1.msra.mxu0 %v847
      %1271 = vmatprep.subr.mxu0 0.0
      %1272 = vmatpush1.msra.mxu0 %v848
      %1273 = vmatprep.subr.mxu0 0.0
      %1274 = vmatpush1.msra.mxu0 %v849
      %1275 = vmatprep.subr.mxu0 0.0
      %1276 = vmatpush1.msra.mxu0 0.0
      %1277 = vmatprep.subr.mxu0 0.0
      %1278 = vmatpush1.msra.mxu0 0.0
      %1279 = vmatprep.subr.mxu0 0.0
      %1280 = vmatpush1.msra.mxu0 0.0
      %1281 = vmatprep.subr.mxu0 0.0
      %1282 = vmatpush1.msra.mxu0 0.0
      %1283 = vmatprep.subr.mxu0 0.0
      %1284 = vmatpush1.msra.mxu0 0.0
      %1285 = vmatprep.subr.mxu0 0.0
      %1286 = vmatpush1.msra.mxu0 0.0
      %1287 = vmatprep.subr.mxu0 0.0
      %1288 = vmatpush1.msra.mxu0 0.0
      %1289 = vmatprep.subr.mxu0 0.0
      %1290 = vmatpush1.msra.mxu0 0.0
      %1291 = vmatprep.subr.mxu0 0.0
      %1292 = vmatpush1.msra.mxu0 0.0
      %1293 = vmatprep.subr.mxu0 0.0
      %1294 = vmatpush1.msra.mxu0 0.0
      %1295 = vmatprep.subr.mxu0 0.0
      %1296 = vmatpush1.msra.mxu0 0.0
      %1297 = vmatprep.subr.mxu0 0.0
      %1298 = vmatpush1.msra.mxu0 0.0
      %1299 = vmatprep.subr.mxu0 0.0
      %1300 = vmatpush1.msra.mxu0 0.0
      %1301 = vmatprep.subr.mxu0 0.0
      %1302 = vmatpush1.msra.mxu0 0.0
      %1303 = vmatprep.subr.mxu0 0.0
      %1304 = vmatpush1.msra.mxu0 0.0
      %1305 = vmatprep.subr.mxu0 0.0
      %1306 = vmatpush1.msra.mxu0 0.0
      %1307 = vmatprep.subr.mxu0 0.0
      %1308 = vmatpush1.msra.mxu0 0.0
      %1309 = vmatprep.subr.mxu0 0.0
      %1310 = vmatpush1.msra.mxu0 0.0
      %1311 = vmatprep.subr.mxu0 0.0
      %1312 = vmatpush1.msra.mxu0 0.0
      %1313 = vmatprep.subr.mxu0 0.0
      %1314 = vmatpush1.msra.mxu0 0.0
      %1315 = vmatprep.subr.mxu0 0.0
      %1316 = vmatpush1.msra.mxu0 0.0
      %1317 = vmatprep.subr.mxu0 0.0
      %1318 = vmatpush1.msra.mxu0 0.0
      %1319 = vmatprep.subr.mxu0 0.0
      %1320 = vmatpush1.msra.mxu0 0.0
      %1321 = vmatprep.subr.mxu0 0.0
      %1322 = vmatpush1.msra.mxu0 0.0
      %1323 = vmatprep.subr.mxu0 0.0
      %1324 = vmatpush1.msra.mxu0 0.0
      %1325 = vmatprep.subr.mxu0 0.0
      %1326 = vmatpush1.msra.mxu0 0.0
      %1327 = vmatprep.subr.mxu0 0.0
      %1328 = vmatpush1.msra.mxu0 0.0
      %1329 = vmatprep.subr.mxu0 0.0
      %1330 = vmatpush1.msra.mxu0 0.0
      %1331 = vmatprep.mubr.f32.mxu0 0.0
      %1332 = vmatmul.mubr.f32.gmra.mrb[0].mxu0 %v1265
      %v1333 = vpop.f32.mrb[0].mxu0
      %v1334 = vadd.f32 %v1261, %v1333
      %v1335 = vpop.f32.mrb[0].mxu0
      %1336 = vdwg.mxu0
      %v1337 = vadd.f32 %v1334, %v676
      %v1338 = vadd.f32 %v1337, %v677
      %v1339 = vld [vmem:[%s7] sm:$0x1]
      %v1340 = vld [vmem:[%s8] sm:$0x1]
      %vm1341 = vcmask 257024
      %v1342 = vsel %vm1341, %v1338, 0.0
      %1343 = vadd.xlane.f32.xlu0 %v1342
      %v1344 = vpop.xlane.xlu0 %1343
      %v1345 = vrcp.pop 32.0
      %v1346 = vmul.f32 %v1344, %v1345
      %v1347 = vsub.f32 %v1338, %v1346
      %v1348 = vmul.f32 %v1347, %v1347
      %v1349 = vsel %vm1341, %v1348, 0.0
      %1350 = vadd.xlane.f32.xlu0 %v1349
      %v1351 = vpop.xlane.xlu0 %1350
      %v1352 = vmul.f32 %v1351, %v1345
      %v1353 = vadd.f32 %v1352, 1e-05
      %v1354 = vrsqrt.pop %v1353
      %v1355 = vmul.f32 %v1347, %v1354
      %v1357 = vlaneseq
      %v1358 = vshrl.u32 %v1357, 7
      %v1359 = vsub.s32 0, %v1358
      %v1360 = vrot.slane %v1339, %v1359
      %v1362 = vmul.f32 %v1355, %v1360
      %v1364 = vlaneseq
      %v1365 = vshrl.u32 %v1364, 7
      %v1366 = vsub.s32 0, %v1365
      %v1367 = vrot.slane %v1340, %v1366
      %v1369 = vadd.f32 %v1362, %v1367
      %v1370 = vld [vmem:[%s9] sm:$0xff]
      %v1371 = vld [vmem:[%s9 + $0x8] sm:$0xff]
      %v1372 = vld [vmem:[%s9 + $0x10] sm:$0xff]
      %v1373 = vld [vmem:[%s9 + $0x18] sm:$0xff]
      %v1375 = vsel %vm696, %v1369, 0
      %1377 = vmatprep.subr.mxu0 0.0
      %1378 = vmatpush1.msra.mxu0 %v1370
      %1379 = vmatprep.subr.mxu0 0.0
      %1380 = vmatpush1.msra.mxu0 %v1371
      %1381 = vmatprep.subr.mxu0 0.0
      %1382 = vmatpush1.msra.mxu0 %v1372
      %1383 = vmatprep.subr.mxu0 0.0
      %1384 = vmatpush1.msra.mxu0 %v1373
      %1385 = vmatprep.subr.mxu0 0.0
      %1386 = vmatpush1.msra.mxu0 0.0
      %1387 = vmatprep.subr.mxu0 0.0
      %1388 = vmatpush1.msra.mxu0 0.0
      %1389 = vmatprep.subr.mxu0 0.0
      %1390 = vmatpush1.msra.mxu0 0.0
      %1391 = vmatprep.subr.mxu0 0.0
      %1392 = vmatpush1.msra.mxu0 0.0
      %1393 = vmatprep.subr.mxu0 0.0
      %1394 = vmatpush1.msra.mxu0 0.0
      %1395 = vmatprep.subr.mxu0 0.0
      %1396 = vmatpush1.msra.mxu0 0.0
      %1397 = vmatprep.subr.mxu0 0.0
      %1398 = vmatpush1.msra.mxu0 0.0
      %1399 = vmatprep.subr.mxu0 0.0
      %1400 = vmatpush1.msra.mxu0 0.0
      %1401 = vmatprep.subr.mxu0 0.0
      %1402 = vmatpush1.msra.mxu0 0.0
      %1403 = vmatprep.subr.mxu0 0.0
      %1404 = vmatpush1.msra.mxu0 0.0
      %1405 = vmatprep.subr.mxu0 0.0
      %1406 = vmatpush1.msra.mxu0 0.0
      %1407 = vmatprep.subr.mxu0 0.0
      %1408 = vmatpush1.msra.mxu0 0.0
      %1409 = vmatprep.subr.mxu0 0.0
      %1410 = vmatpush1.msra.mxu0 0.0
      %1411 = vmatprep.subr.mxu0 0.0
      %1412 = vmatpush1.msra.mxu0 0.0
      %1413 = vmatprep.subr.mxu0 0.0
      %1414 = vmatpush1.msra.mxu0 0.0
      %1415 = vmatprep.subr.mxu0 0.0
      %1416 = vmatpush1.msra.mxu0 0.0
      %1417 = vmatprep.subr.mxu0 0.0
      %1418 = vmatpush1.msra.mxu0 0.0
      %1419 = vmatprep.subr.mxu0 0.0
      %1420 = vmatpush1.msra.mxu0 0.0
      %1421 = vmatprep.subr.mxu0 0.0
      %1422 = vmatpush1.msra.mxu0 0.0
      %1423 = vmatprep.subr.mxu0 0.0
      %1424 = vmatpush1.msra.mxu0 0.0
      %1425 = vmatprep.subr.mxu0 0.0
      %1426 = vmatpush1.msra.mxu0 0.0
      %1427 = vmatprep.subr.mxu0 0.0
      %1428 = vmatpush1.msra.mxu0 0.0
      %1429 = vmatprep.subr.mxu0 0.0
      %1430 = vmatpush1.msra.mxu0 0.0
      %1431 = vmatprep.subr.mxu0 0.0
      %1432 = vmatpush1.msra.mxu0 0.0
      %1433 = vmatprep.subr.mxu0 0.0
      %1434 = vmatpush1.msra.mxu0 0.0
      %1435 = vmatprep.subr.mxu0 0.0
      %1436 = vmatpush1.msra.mxu0 0.0
      %1437 = vmatprep.subr.mxu0 0.0
      %1438 = vmatpush1.msra.mxu0 0.0
      %1439 = vmatprep.subr.mxu0 0.0
      %1440 = vmatpush1.msra.mxu0 0.0
      %1441 = vmatprep.mubr.f32.mxu0 0.0
      %1442 = vmatmul.mubr.f32.gmra.mrb[0].mxu0 %v1375
      %v1443 = vpop.f32.mrb[0].mxu0
      %v1444 = vadd.f32 0.0, %v1443
      %v1445 = vpop.f32.mrb[0].mxu0
      %1446 = vdwg.mxu0
      %v1447 = vmul.f32 %v1444, 0.17677669
      %v1448 = vld [vmem:[%s10] sm:$0xff]
      %v1449 = vld [vmem:[%s10 + $0x8] sm:$0xff]
      %v1450 = vld [vmem:[%s10 + $0x10] sm:$0xff]
      %v1451 = vld [vmem:[%s10 + $0x18] sm:$0xff]
      %v1453 = vsel %vm696, %v678, 0
      %1455 = vmatprep.subr.mxu0 0.0
      %1456 = vmatpush1.msra.mxu0 %v1448
      %1457 = vmatprep.subr.mxu0 0.0
      %1458 = vmatpush1.msra.mxu0 %v1449
      %1459 = vmatprep.subr.mxu0 0.0
      %1460 = vmatpush1.msra.mxu0 %v1450
      %1461 = vmatprep.subr.mxu0 0.0
      %1462 = vmatpush1.msra.mxu0 %v1451
      %1463 = vmatprep.subr.mxu0 0.0
      %1464 = vmatpush1.msra.mxu0 0.0
      %1465 = vmatprep.subr.mxu0 0.0
      %1466 = vmatpush1.msra.mxu0 0.0
      %1467 = vmatprep.subr.mxu0 0.0
      %1468 = vmatpush1.msra.mxu0 0.0
      %1469 = vmatprep.subr.mxu0 0.0
      %1470 = vmatpush1.msra.mxu0 0.0
      %1471 = vmatprep.subr.mxu0 0.0
      %1472 = vmatpush1.msra.mxu0 0.0
      %1473 = vmatprep.subr.mxu0 0.0
      %1474 = vmatpush1.msra.mxu0 0.0
      %1475 = vmatprep.subr.mxu0 0.0
      %1476 = vmatpush1.msra.mxu0 0.0
      %1477 = vmatprep.subr.mxu0 0.0
      %1478 = vmatpush1.msra.mxu0 0.0
      %1479 = vmatprep.subr.mxu0 0.0
      %1480 = vmatpush1.msra.mxu0 0.0
      %1481 = vmatprep.subr.mxu0 0.0
      %1482 = vmatpush1.msra.mxu0 0.0
      %1483 = vmatprep.subr.mxu0 0.0
      %1484 = vmatpush1.msra.mxu0 0.0
      %1485 = vmatprep.subr.mxu0 0.0
      %1486 = vmatpush1.msra.mxu0 0.0
      %1487 = vmatprep.subr.mxu0 0.0
      %1488 = vmatpush1.msra.mxu0 0.0
      %1489 = vmatprep.subr.mxu0 0.0
      %1490 = vmatpush1.msra.mxu0 0.0
      %1491 = vmatprep.subr.mxu0 0.0
      %1492 = vmatpush1.msra.mxu0 0.0
      %1493 = vmatprep.subr.mxu0 0.0
      %1494 = vmatpush1.msra.mxu0 0.0
      %1495 = vmatprep.subr.mxu0 0.0
      %1496 = vmatpush1.msra.mxu0 0.0
      %1497 = vmatprep.subr.mxu0 0.0
      %1498 = vmatpush1.msra.mxu0 0.0
      %1499 = vmatprep.subr.mxu0 0.0
      %1500 = vmatpush1.msra.mxu0 0.0
      %1501 = vmatprep.subr.mxu0 0.0
      %1502 = vmatpush1.msra.mxu0 0.0
      %1503 = vmatprep.subr.mxu0 0.0
      %1504 = vmatpush1.msra.mxu0 0.0
      %1505 = vmatprep.subr.mxu0 0.0
      %1506 = vmatpush1.msra.mxu0 0.0
      %1507 = vmatprep.subr.mxu0 0.0
      %1508 = vmatpush1.msra.mxu0 0.0
      %1509 = vmatprep.subr.mxu0 0.0
      %1510 = vmatpush1.msra.mxu0 0.0
      %1511 = vmatprep.subr.mxu0 0.0
      %1512 = vmatpush1.msra.mxu0 0.0
      %1513 = vmatprep.subr.mxu0 0.0
      %1514 = vmatpush1.msra.mxu0 0.0
      %1515 = vmatprep.subr.mxu0 0.0
      %1516 = vmatpush1.msra.mxu0 0.0
      %1517 = vmatprep.subr.mxu0 0.0
      %1518 = vmatpush1.msra.mxu0 0.0
      %1519 = vmatprep.mubr.f32.mxu0 0.0
      %1520 = vmatmul.mubr.f32.gmra.mrb[0].mxu0 %v1453
      %v1521 = vpop.f32.mrb[0].mxu0
      %v1522 = vadd.f32 0.0, %v1521
      %v1523 = vpop.f32.mrb[0].mxu0
      %1524 = vdwg.mxu0
      %v1525 = vld [vmem:[%s11] sm:$0xff]
      %v1526 = vld [vmem:[%s11 + $0x8] sm:$0xff]
      %v1527 = vld [vmem:[%s11 + $0x10] sm:$0xff]
      %v1528 = vld [vmem:[%s11 + $0x18] sm:$0xff]
      %v1529 = vld [vmem:[%s11 + $0x20] sm:$0xff]
      %v1530 = vld [vmem:[%s11 + $0x28] sm:$0xff]
      %v1531 = vld [vmem:[%s11 + $0x30] sm:$0xff]
      %v1532 = vld [vmem:[%s11 + $0x38] sm:$0xff]
      %v1534 = vsel %vm696, %v1447, 0
      %v1537 = vsel %vm696, %v1522, 0
      %1539 = vmatprep.subr.mxu0 0.0
      %1540 = vmatpush1.xpose.msra.mxu0 %v1537
      %1541 = vmatprep.subr.mxu0 0.0
      %1542 = vmatpush1.xpose.msra.mxu0 0.0
      %1543 = vmatprep.subr.mxu0 0.0
      %1544 = vmatpush1.xpose.msra.mxu0 0.0
      %1545 = vmatprep.subr.mxu0 0.0
      %1546 = vmatpush1.xpose.msra.mxu0 0.0
      %1547 = vmatprep.subr.mxu0 0.0
      %1548 = vmatpush1.xpose.msra.mxu0 0.0
      %1549 = vmatprep.subr.mxu0 0.0
      %1550 = vmatpush1.xpose.msra.mxu0 0.0
      %1551 = vmatprep.subr.mxu0 0.0
      %1552 = vmatpush1.xpose.msra.mxu0 0.0
      %1553 = vmatprep.subr.mxu0 0.0
      %1554 = vmatpush1.xpose.msra.mxu0 0.0
      %1555 = vmatprep.subr.mxu0 0.0
      %1556 = vmatpush1.xpose.msra.mxu0 0.0
      %1557 = vmatprep.subr.mxu0 0.0
      %1558 = vmatpush1.xpose.msra.mxu0 0.0
      %1559 = vmatprep.subr.mxu0 0.0
      %1560 = vmatpush1.xpose.msra.mxu0 0.0
      %1561 = vmatprep.subr.mxu0 0.0
      %1562 = vmatpush1.xpose.msra.mxu0 0.0
      %1563 = vmatprep.subr.mxu0 0.0
      %1564 = vmatpush1.xpose.msra.mxu0 0.0
      %1565 = vmatprep.subr.mxu0 0.0
      %1566 = vmatpush1.xpose.msra.mxu0 0.0
      %1567 = vmatprep.subr.mxu0 0.0
      %1568 = vmatpush1.xpose.msra.mxu0 0.0
      %1569 = vmatprep.subr.mxu0 0.0
      %1570 = vmatpush1.xpose.msra.mxu0 0.0
      %1571 = vmatprep.subr.mxu0 0.0
      %1572 = vmatpush1.xpose.msra.mxu0 0.0
      %1573 = vmatprep.subr.mxu0 0.0
      %1574 = vmatpush1.xpose.msra.mxu0 0.0
      %1575 = vmatprep.subr.mxu0 0.0
      %1576 = vmatpush1.xpose.msra.mxu0 0.0
      %1577 = vmatprep.subr.mxu0 0.0
      %1578 = vmatpush1.xpose.msra.mxu0 0.0
      %1579 = vmatprep.subr.mxu0 0.0
      %1580 = vmatpush1.xpose.msra.mxu0 0.0
      %1581 = vmatprep.subr.mxu0 0.0
      %1582 = vmatpush1.xpose.msra.mxu0 0.0
      %1583 = vmatprep.subr.mxu0 0.0
      %1584 = vmatpush1.xpose.msra.mxu0 0.0
      %1585 = vmatprep.subr.mxu0 0.0
      %1586 = vmatpush1.xpose.msra.mxu0 0.0
      %1587 = vmatprep.subr.mxu0 0.0
      %1588 = vmatpush1.xpose.msra.mxu0 0.0
      %1589 = vmatprep.subr.mxu0 0.0
      %1590 = vmatpush1.xpose.msra.mxu0 0.0
      %1591 = vmatprep.subr.mxu0 0.0
      %1592 = vmatpush1.xpose.msra.mxu0 0.0
      %1593 = vmatprep.subr.mxu0 0.0
      %1594 = vmatpush1.xpose.msra.mxu0 0.0
      %1595 = vmatprep.subr.mxu0 0.0
      %1596 = vmatpush1.xpose.msra.mxu0 0.0
      %1597 = vmatprep.subr.mxu0 0.0
      %1598 = vmatpush1.xpose.msra.mxu0 0.0
      %1599 = vmatprep.subr.mxu0 0.0
      %1600 = vmatpush1.xpose.msra.mxu0 0.0
      %1601 = vmatprep.subr.mxu0 0.0
      %1602 = vmatpush1.xpose.msra.mxu0 0.0
      %1603 = vmatprep.mubr.f32.mxu0 0.0
      %1604 = vmatmul.mubr.f32.gmra.mrb[0].mxu0 %v1534
      %v1605 = vpop.f32.mrb[0].mxu0
      %v1606 = vadd.f32 0.0, %v1605
      %v1607 = vpop.f32.mrb[0].mxu0
      %1608 = vdwg.mxu0
      %v1609 = vsel %vm934, %v1606, -inf
      %1610 = vmax.xlane.f32.xlu0 %v1609
      %v1611 = vpop.xlane.xlu0 %1610
      %v1612 = vsub.f32 %v1606, %v1611
      %v1613 = vmul.f32 %v1612, 1.442695
      %v1614 = vpow.pop %v1613
      %v1615 = vsel %vm934, %v1614, 0.0
      %1616 = vadd.xlane.f32.xlu0 %v1615
      %v1617 = vpop.xlane.xlu0 %1616
      %v1618 = vrcp.pop %v1617
      %v1619 = vmul.f32 %v1614, %v1618
      %1620 = vrot.lane.b32.xlu0 %v1522, 64
      %v1621 = vpop.permute.xlu0 %1620
      %v1623 = vsel %vm946, %v1619, 0
      %v1625 = vsel %vm950, %v1621, 0
      %1627 = vmatprep.subr.mxu0 0.0
      %1628 = vmatpush1.msra.mxu0 %v1625
      %1629 = vmatprep.subr.mxu0 0.0
      %1630 = vmatpush1.msra.mxu0 0.0
      %1631 = vmatprep.subr.mxu0 0.0
      %1632 = vmatpush1.msra.mxu0 0.0
      %1633 = vmatprep.subr.mxu0 0.0
      %1634 = vmatpush1.msra.mxu0 0.0
      %1635 = vmatprep.subr.mxu0 0.0
      %1636 = vmatpush1.msra.mxu0 0.0
      %1637 = vmatprep.subr.mxu0 0.0
      %1638 = vmatpush1.msra.mxu0 0.0
      %1639 = vmatprep.subr.mxu0 0.0
      %1640 = vmatpush1.msra.mxu0 0.0
      %1641 = vmatprep.subr.mxu0 0.0
      %1642 = vmatpush1.msra.mxu0 0.0
      %1643 = vmatprep.subr.mxu0 0.0
      %1644 = vmatpush1.msra.mxu0 0.0
      %1645 = vmatprep.subr.mxu0 0.0
      %1646 = vmatpush1.msra.mxu0 0.0
      %1647 = vmatprep.subr.mxu0 0.0
      %1648 = vmatpush1.msra.mxu0 0.0
      %1649 = vmatprep.subr.mxu0 0.0
      %1650 = vmatpush1.msra.mxu0 0.0
      %1651 = vmatprep.subr.mxu0 0.0
      %1652 = vmatpush1.msra.mxu0 0.0
      %1653 = vmatprep.subr.mxu0 0.0
      %1654 = vmatpush1.msra.mxu0 0.0
      %1655 = vmatprep.subr.mxu0 0.0
      %1656 = vmatpush1.msra.mxu0 0.0
      %1657 = vmatprep.subr.mxu0 0.0
      %1658 = vmatpush1.msra.mxu0 0.0
      %1659 = vmatprep.subr.mxu0 0.0
      %1660 = vmatpush1.msra.mxu0 0.0
      %1661 = vmatprep.subr.mxu0 0.0
      %1662 = vmatpush1.msra.mxu0 0.0
      %1663 = vmatprep.subr.mxu0 0.0
      %1664 = vmatpush1.msra.mxu0 0.0
      %1665 = vmatprep.subr.mxu0 0.0
      %1666 = vmatpush1.msra.mxu0 0.0
      %1667 = vmatprep.subr.mxu0 0.0
      %1668 = vmatpush1.msra.mxu0 0.0
      %1669 = vmatprep.subr.mxu0 0.0
      %1670 = vmatpush1.msra.mxu0 0.0
      %1671 = vmatprep.subr.mxu0 0.0
      %1672 = vmatpush1.msra.mxu0 0.0
      %1673 = vmatprep.subr.mxu0 0.0
      %1674 = vmatpush1.msra.mxu0 0.0
      %1675 = vmatprep.subr.mxu0 0.0
      %1676 = vmatpush1.msra.mxu0 0.0
      %1677 = vmatprep.subr.mxu0 0.0
      %1678 = vmatpush1.msra.mxu0 0.0
      %1679 = vmatprep.subr.mxu0 0.0
      %1680 = vmatpush1.msra.mxu0 0.0
      %1681 = vmatprep.subr.mxu0 0.0
      %1682 = vmatpush1.msra.mxu0 0.0
      %1683 = vmatprep.subr.mxu0 0.0
      %1684 = vmatpush1.msra.mxu0 0.0
      %1685 = vmatprep.subr.mxu0 0.0
      %1686 = vmatpush1.msra.mxu0 0.0
      %1687 = vmatprep.subr.mxu0 0.0
      %1688 = vmatpush1.msra.mxu0 0.0
      %1689 = vmatprep.subr.mxu0 0.0
      %1690 = vmatpush1.msra.mxu0 0.0
      %1691 = vmatprep.mubr.f32.mxu0 0.0
      %1692 = vmatmul.mubr.f32.gmra.mrb[0].mxu0 %v1623
      %v1693 = vpop.f32.mrb[0].mxu0
      %v1694 = vadd.f32 0.0, %v1693
      %v1695 = vpop.f32.mrb[0].mxu0
      %1696 = vdwg.mxu0
      %1697 = vrot.lane.b32.xlu0 %v1447, 96
      %v1698 = vpop.permute.xlu0 %1697
      %1699 = vrot.lane.b32.xlu0 %v1522, 96
      %v1700 = vpop.permute.xlu0 %1699
      %v1701 = vsel %vm696, %v1698, 0
      %v1703 = vsel %vm696, %v1700, 0
      %1705 = vmatprep.subr.mxu0 0.0
      %1706 = vmatpush1.xpose.msra.mxu0 %v1703
      %1707 = vmatprep.subr.mxu0 0.0
      %1708 = vmatpush1.xpose.msra.mxu0 0.0
      %1709 = vmatprep.subr.mxu0 0.0
      %1710 = vmatpush1.xpose.msra.mxu0 0.0
      %1711 = vmatprep.subr.mxu0 0.0
      %1712 = vmatpush1.xpose.msra.mxu0 0.0
      %1713 = vmatprep.subr.mxu0 0.0
      %1714 = vmatpush1.xpose.msra.mxu0 0.0
      %1715 = vmatprep.subr.mxu0 0.0
      %1716 = vmatpush1.xpose.msra.mxu0 0.0
      %1717 = vmatprep.subr.mxu0 0.0
      %1718 = vmatpush1.xpose.msra.mxu0 0.0
      %1719 = vmatprep.subr.mxu0 0.0
      %1720 = vmatpush1.xpose.msra.mxu0 0.0
      %1721 = vmatprep.subr.mxu0 0.0
      %1722 = vmatpush1.xpose.msra.mxu0 0.0
      %1723 = vmatprep.subr.mxu0 0.0
      %1724 = vmatpush1.xpose.msra.mxu0 0.0
      %1725 = vmatprep.subr.mxu0 0.0
      %1726 = vmatpush1.xpose.msra.mxu0 0.0
      %1727 = vmatprep.subr.mxu0 0.0
      %1728 = vmatpush1.xpose.msra.mxu0 0.0
      %1729 = vmatprep.subr.mxu0 0.0
      %1730 = vmatpush1.xpose.msra.mxu0 0.0
      %1731 = vmatprep.subr.mxu0 0.0
      %1732 = vmatpush1.xpose.msra.mxu0 0.0
      %1733 = vmatprep.subr.mxu0 0.0
      %1734 = vmatpush1.xpose.msra.mxu0 0.0
      %1735 = vmatprep.subr.mxu0 0.0
      %1736 = vmatpush1.xpose.msra.mxu0 0.0
      %1737 = vmatprep.subr.mxu0 0.0
      %1738 = vmatpush1.xpose.msra.mxu0 0.0
      %1739 = vmatprep.subr.mxu0 0.0
      %1740 = vmatpush1.xpose.msra.mxu0 0.0
      %1741 = vmatprep.subr.mxu0 0.0
      %1742 = vmatpush1.xpose.msra.mxu0 0.0
      %1743 = vmatprep.subr.mxu0 0.0
      %1744 = vmatpush1.xpose.msra.mxu0 0.0
      %1745 = vmatprep.subr.mxu0 0.0
      %1746 = vmatpush1.xpose.msra.mxu0 0.0
      %1747 = vmatprep.subr.mxu0 0.0
      %1748 = vmatpush1.xpose.msra.mxu0 0.0
      %1749 = vmatprep.subr.mxu0 0.0
      %1750 = vmatpush1.xpose.msra.mxu0 0.0
      %1751 = vmatprep.subr.mxu0 0.0
      %1752 = vmatpush1.xpose.msra.mxu0 0.0
      %1753 = vmatprep.subr.mxu0 0.0
      %1754 = vmatpush1.xpose.msra.mxu0 0.0
      %1755 = vmatprep.subr.mxu0 0.0
      %1756 = vmatpush1.xpose.msra.mxu0 0.0
      %1757 = vmatprep.subr.mxu0 0.0
      %1758 = vmatpush1.xpose.msra.mxu0 0.0
      %1759 = vmatprep.subr.mxu0 0.0
      %1760 = vmatpush1.xpose.msra.mxu0 0.0
      %1761 = vmatprep.subr.mxu0 0.0
      %1762 = vmatpush1.xpose.msra.mxu0 0.0
      %1763 = vmatprep.subr.mxu0 0.0
      %1764 = vmatpush1.xpose.msra.mxu0 0.0
      %1765 = vmatprep.subr.mxu0 0.0
      %1766 = vmatpush1.xpose.msra.mxu0 0.0
      %1767 = vmatprep.subr.mxu0 0.0
      %1768 = vmatpush1.xpose.msra.mxu0 0.0
      %1769 = vmatprep.mubr.f32.mxu0 0.0
      %1770 = vmatmul.mubr.f32.gmra.mrb[0].mxu0 %v1701
      %v1771 = vpop.f32.mrb[0].mxu0
      %v1772 = vadd.f32 0.0, %v1771
      %v1773 = vpop.f32.mrb[0].mxu0
      %1774 = vdwg.mxu0
      %v1775 = vsel %vm934, %v1772, -inf
      %1776 = vmax.xlane.f32.xlu0 %v1775
      %v1777 = vpop.xlane.xlu0 %1776
      %v1778 = vsub.f32 %v1772, %v1777
      %v1779 = vmul.f32 %v1778, 1.442695
      %v1780 = vpow.pop %v1779
      %v1781 = vsel %vm934, %v1780, 0.0
      %1782 = vadd.xlane.f32.xlu0 %v1781
      %v1783 = vpop.xlane.xlu0 %1782
      %v1784 = vrcp.pop %v1783
      %v1785 = vmul.f32 %v1780, %v1784
      %1786 = vrot.lane.b32.xlu0 %v1522, 32
      %v1787 = vpop.permute.xlu0 %1786
      %v1789 = vsel %vm946, %v1785, 0
      %v1791 = vsel %vm950, %v1787, 0
      %1793 = vmatprep.subr.mxu0 0.0
      %1794 = vmatpush1.msra.mxu0 %v1791
      %1795 = vmatprep.subr.mxu0 0.0
      %1796 = vmatpush1.msra.mxu0 0.0
      %1797 = vmatprep.subr.mxu0 0.0
      %1798 = vmatpush1.msra.mxu0 0.0
      %1799 = vmatprep.subr.mxu0 0.0
      %1800 = vmatpush1.msra.mxu0 0.0
      %1801 = vmatprep.subr.mxu0 0.0
      %1802 = vmatpush1.msra.mxu0 0.0
      %1803 = vmatprep.subr.mxu0 0.0
      %1804 = vmatpush1.msra.mxu0 0.0
      %1805 = vmatprep.subr.mxu0 0.0
      %1806 = vmatpush1.msra.mxu0 0.0
      %1807 = vmatprep.subr.mxu0 0.0
      %1808 = vmatpush1.msra.mxu0 0.0
      %1809 = vmatprep.subr.mxu0 0.0
      %1810 = vmatpush1.msra.mxu0 0.0
      %1811 = vmatprep.subr.mxu0 0.0
      %1812 = vmatpush1.msra.mxu0 0.0
      %1813 = vmatprep.subr.mxu0 0.0
      %1814 = vmatpush1.msra.mxu0 0.0
      %1815 = vmatprep.subr.mxu0 0.0
      %1816 = vmatpush1.msra.mxu0 0.0
      %1817 = vmatprep.subr.mxu0 0.0
      %1818 = vmatpush1.msra.mxu0 0.0
      %1819 = vmatprep.subr.mxu0 0.0
      %1820 = vmatpush1.msra.mxu0 0.0
      %1821 = vmatprep.subr.mxu0 0.0
      %1822 = vmatpush1.msra.mxu0 0.0
      %1823 = vmatprep.subr.mxu0 0.0
      %1824 = vmatpush1.msra.mxu0 0.0
      %1825 = vmatprep.subr.mxu0 0.0
      %1826 = vmatpush1.msra.mxu0 0.0
      %1827 = vmatprep.subr.mxu0 0.0
      %1828 = vmatpush1.msra.mxu0 0.0
      %1829 = vmatprep.subr.mxu0 0.0
      %1830 = vmatpush1.msra.mxu0 0.0
      %1831 = vmatprep.subr.mxu0 0.0
      %1832 = vmatpush1.msra.mxu0 0.0
      %1833 = vmatprep.subr.mxu0 0.0
      %1834 = vmatpush1.msra.mxu0 0.0
      %1835 = vmatprep.subr.mxu0 0.0
      %1836 = vmatpush1.msra.mxu0 0.0
      %1837 = vmatprep.subr.mxu0 0.0
      %1838 = vmatpush1.msra.mxu0 0.0
      %1839 = vmatprep.subr.mxu0 0.0
      %1840 = vmatpush1.msra.mxu0 0.0
      %1841 = vmatprep.subr.mxu0 0.0
      %1842 = vmatpush1.msra.mxu0 0.0
      %1843 = vmatprep.subr.mxu0 0.0
      %1844 = vmatpush1.msra.mxu0 0.0
      %1845 = vmatprep.subr.mxu0 0.0
      %1846 = vmatpush1.msra.mxu0 0.0
      %1847 = vmatprep.subr.mxu0 0.0
      %1848 = vmatpush1.msra.mxu0 0.0
      %1849 = vmatprep.subr.mxu0 0.0
      %1850 = vmatpush1.msra.mxu0 0.0
      %1851 = vmatprep.subr.mxu0 0.0
      %1852 = vmatpush1.msra.mxu0 0.0
      %1853 = vmatprep.subr.mxu0 0.0
      %1854 = vmatpush1.msra.mxu0 0.0
      %1855 = vmatprep.subr.mxu0 0.0
      %1856 = vmatpush1.msra.mxu0 0.0
      %1857 = vmatprep.mubr.f32.mxu0 0.0
      %1858 = vmatmul.mubr.f32.gmra.mrb[0].mxu0 %v1789
      %v1859 = vpop.f32.mrb[0].mxu0
      %v1860 = vadd.f32 0.0, %v1859
      %v1861 = vpop.f32.mrb[0].mxu0
      %1862 = vdwg.mxu0
      %v1864 = vsel %vm696, %v1860, 0
      %1866 = vmatprep.subr.mxu0 0.0
      %1867 = vmatpush1.msra.mxu0 %v1529
      %1868 = vmatprep.subr.mxu0 0.0
      %1869 = vmatpush1.msra.mxu0 %v1530
      %1870 = vmatprep.subr.mxu0 0.0
      %1871 = vmatpush1.msra.mxu0 %v1531
      %1872 = vmatprep.subr.mxu0 0.0
      %1873 = vmatpush1.msra.mxu0 %v1532
      %1874 = vmatprep.subr.mxu0 0.0
      %1875 = vmatpush1.msra.mxu0 0.0
      %1876 = vmatprep.subr.mxu0 0.0
      %1877 = vmatpush1.msra.mxu0 0.0
      %1878 = vmatprep.subr.mxu0 0.0
      %1879 = vmatpush1.msra.mxu0 0.0
      %1880 = vmatprep.subr.mxu0 0.0
      %1881 = vmatpush1.msra.mxu0 0.0
      %1882 = vmatprep.subr.mxu0 0.0
      %1883 = vmatpush1.msra.mxu0 0.0
      %1884 = vmatprep.subr.mxu0 0.0
      %1885 = vmatpush1.msra.mxu0 0.0
      %1886 = vmatprep.subr.mxu0 0.0
      %1887 = vmatpush1.msra.mxu0 0.0
      %1888 = vmatprep.subr.mxu0 0.0
      %1889 = vmatpush1.msra.mxu0 0.0
      %1890 = vmatprep.subr.mxu0 0.0
      %1891 = vmatpush1.msra.mxu0 0.0
      %1892 = vmatprep.subr.mxu0 0.0
      %1893 = vmatpush1.msra.mxu0 0.0
      %1894 = vmatprep.subr.mxu0 0.0
      %1895 = vmatpush1.msra.mxu0 0.0
      %1896 = vmatprep.subr.mxu0 0.0
      %1897 = vmatpush1.msra.mxu0 0.0
      %1898 = vmatprep.subr.mxu0 0.0
      %1899 = vmatpush1.msra.mxu0 0.0
      %1900 = vmatprep.subr.mxu0 0.0
      %1901 = vmatpush1.msra.mxu0 0.0
      %1902 = vmatprep.subr.mxu0 0.0
      %1903 = vmatpush1.msra.mxu0 0.0
      %1904 = vmatprep.subr.mxu0 0.0
      %1905 = vmatpush1.msra.mxu0 0.0
      %1906 = vmatprep.subr.mxu0 0.0
      %1907 = vmatpush1.msra.mxu0 0.0
      %1908 = vmatprep.subr.mxu0 0.0
      %1909 = vmatpush1.msra.mxu0 0.0
      %1910 = vmatprep.subr.mxu0 0.0
      %1911 = vmatpush1.msra.mxu0 0.0
      %1912 = vmatprep.subr.mxu0 0.0
      %1913 = vmatpush1.msra.mxu0 0.0
      %1914 = vmatprep.subr.mxu0 0.0
      %1915 = vmatpush1.msra.mxu0 0.0
      %1916 = vmatprep.subr.mxu0 0.0
      %1917 = vmatpush1.msra.mxu0 0.0
      %1918 = vmatprep.subr.mxu0 0.0
      %1919 = vmatpush1.msra.mxu0 0.0
      %1920 = vmatprep.subr.mxu0 0.0
      %1921 = vmatpush1.msra.mxu0 0.0
      %1922 = vmatprep.subr.mxu0 0.0
      %1923 = vmatpush1.msra.mxu0 0.0
      %1924 = vmatprep.subr.mxu0 0.0
      %1925 = vmatpush1.msra.mxu0 0.0
      %1926 = vmatprep.subr.mxu0 0.0
      %1927 = vmatpush1.msra.mxu0 0.0
      %1928 = vmatprep.subr.mxu0 0.0
      %1929 = vmatpush1.msra.mxu0 0.0
      %1930 = vmatprep.mubr.f32.mxu0 0.0
      %1931 = vmatmul.mubr.f32.gmra.mrb[0].mxu0 %v1864
      %v1932 = vpop.f32.mrb[0].mxu0
      %v1933 = vadd.f32 0.0, %v1932
      %v1934 = vpop.f32.mrb[0].mxu0
      %1935 = vdwg.mxu0
      %v1937 = vsel %vm696, %v1694, 0
      %1939 = vmatprep.subr.mxu0 0.0
      %1940 = vmatpush1.msra.mxu0 %v1525
      %1941 = vmatprep.subr.mxu0 0.0
      %1942 = vmatpush1.msra.mxu0 %v1526
      %1943 = vmatprep.subr.mxu0 0.0
      %1944 = vmatpush1.msra.mxu0 %v1527
      %1945 = vmatprep.subr.mxu0 0.0
      %1946 = vmatpush1.msra.mxu0 %v1528
      %1947 = vmatprep.subr.mxu0 0.0
      %1948 = vmatpush1.msra.mxu0 0.0
      %1949 = vmatprep.subr.mxu0 0.0
      %1950 = vmatpush1.msra.mxu0 0.0
      %1951 = vmatprep.subr.mxu0 0.0
      %1952 = vmatpush1.msra.mxu0 0.0
      %1953 = vmatprep.subr.mxu0 0.0
      %1954 = vmatpush1.msra.mxu0 0.0
      %1955 = vmatprep.subr.mxu0 0.0
      %1956 = vmatpush1.msra.mxu0 0.0
      %1957 = vmatprep.subr.mxu0 0.0
      %1958 = vmatpush1.msra.mxu0 0.0
      %1959 = vmatprep.subr.mxu0 0.0
      %1960 = vmatpush1.msra.mxu0 0.0
      %1961 = vmatprep.subr.mxu0 0.0
      %1962 = vmatpush1.msra.mxu0 0.0
      %1963 = vmatprep.subr.mxu0 0.0
      %1964 = vmatpush1.msra.mxu0 0.0
      %1965 = vmatprep.subr.mxu0 0.0
      %1966 = vmatpush1.msra.mxu0 0.0
      %1967 = vmatprep.subr.mxu0 0.0
      %1968 = vmatpush1.msra.mxu0 0.0
      %1969 = vmatprep.subr.mxu0 0.0
      %1970 = vmatpush1.msra.mxu0 0.0
      %1971 = vmatprep.subr.mxu0 0.0
      %1972 = vmatpush1.msra.mxu0 0.0
      %1973 = vmatprep.subr.mxu0 0.0
      %1974 = vmatpush1.msra.mxu0 0.0
      %1975 = vmatprep.subr.mxu0 0.0
      %1976 = vmatpush1.msra.mxu0 0.0
      %1977 = vmatprep.subr.mxu0 0.0
      %1978 = vmatpush1.msra.mxu0 0.0
      %1979 = vmatprep.subr.mxu0 0.0
      %1980 = vmatpush1.msra.mxu0 0.0
      %1981 = vmatprep.subr.mxu0 0.0
      %1982 = vmatpush1.msra.mxu0 0.0
      %1983 = vmatprep.subr.mxu0 0.0
      %1984 = vmatpush1.msra.mxu0 0.0
      %1985 = vmatprep.subr.mxu0 0.0
      %1986 = vmatpush1.msra.mxu0 0.0
      %1987 = vmatprep.subr.mxu0 0.0
      %1988 = vmatpush1.msra.mxu0 0.0
      %1989 = vmatprep.subr.mxu0 0.0
      %1990 = vmatpush1.msra.mxu0 0.0
      %1991 = vmatprep.subr.mxu0 0.0
      %1992 = vmatpush1.msra.mxu0 0.0
      %1993 = vmatprep.subr.mxu0 0.0
      %1994 = vmatpush1.msra.mxu0 0.0
      %1995 = vmatprep.subr.mxu0 0.0
      %1996 = vmatpush1.msra.mxu0 0.0
      %1997 = vmatprep.subr.mxu0 0.0
      %1998 = vmatpush1.msra.mxu0 0.0
      %1999 = vmatprep.subr.mxu0 0.0
      %2000 = vmatpush1.msra.mxu0 0.0
      %2001 = vmatprep.subr.mxu0 0.0
      %2002 = vmatpush1.msra.mxu0 0.0
      %2003 = vmatprep.mubr.f32.mxu0 0.0
      %2004 = vmatmul.mubr.f32.gmra.mrb[0].mxu0 %v1937
      %v2005 = vpop.f32.mrb[0].mxu0
      %v2006 = vadd.f32 %v1933, %v2005
      %v2007 = vpop.f32.mrb[0].mxu0
      %2008 = vdwg.mxu0
      %v2009 = vadd.f32 %v2006, %v1369
      %v2010 = vld [vmem:[%s12] sm:$0x1]
      %v2011 = vld [vmem:[%s13] sm:$0x1]
      %v2012 = vsel %vm1341, %v2009, 0.0
      %2013 = vadd.xlane.f32.xlu0 %v2012
      %v2014 = vpop.xlane.xlu0 %2013
      %v2015 = vmul.f32 %v2014, %v1345
      %v2016 = vsub.f32 %v2009, %v2015
      %v2017 = vmul.f32 %v2016, %v2016
      %v2018 = vsel %vm1341, %v2017, 0.0
      %2019 = vadd.xlane.f32.xlu0 %v2018
      %v2020 = vpop.xlane.xlu0 %2019
      %v2021 = vmul.f32 %v2020, %v1345
      %v2022 = vadd.f32 %v2021, 1e-05
      %v2023 = vrsqrt.pop %v2022
      %v2024 = vmul.f32 %v2016, %v2023
      %v2026 = vlaneseq
      %v2027 = vshrl.u32 %v2026, 7
      %v2028 = vsub.s32 0, %v2027
      %v2029 = vrot.slane %v2010, %v2028
      %v2031 = vmul.f32 %v2024, %v2029
      %v2033 = vlaneseq
      %v2034 = vshrl.u32 %v2033, 7
      %v2035 = vsub.s32 0, %v2034
      %v2036 = vrot.slane %v2011, %v2035
      %v2038 = vadd.f32 %v2031, %v2036
      %v2039 = vld [vmem:[%s14] sm:$0xff]
      %v2040 = vld [vmem:[%s14 + $0x8] sm:$0xff]
      %v2041 = vld [vmem:[%s14 + $0x10] sm:$0xff]
      %v2042 = vld [vmem:[%s14 + $0x18] sm:$0xff]
      %v2043 = vld [vmem:[%s15] sm:$0x1]
      %v2045 = vlaneseq
      %v2046 = vshrl.u32 %v2045, 7
      %v2047 = vsub.s32 0, %v2046
      %v2048 = vrot.slane %v2043, %v2047
      %v2051 = vsel %vm696, %v2038, 0
      %2053 = vmatprep.subr.mxu0 0.0
      %2054 = vmatpush1.msra.mxu0 %v2039
      %2055 = vmatprep.subr.mxu0 0.0
      %2056 = vmatpush1.msra.mxu0 %v2040
      %2057 = vmatprep.subr.mxu0 0.0
      %2058 = vmatpush1.msra.mxu0 %v2041
      %2059 = vmatprep.subr.mxu0 0.0
      %2060 = vmatpush1.msra.mxu0 %v2042
      %2061 = vmatprep.subr.mxu0 0.0
      %2062 = vmatpush1.msra.mxu0 0.0
      %2063 = vmatprep.subr.mxu0 0.0
      %2064 = vmatpush1.msra.mxu0 0.0
      %2065 = vmatprep.subr.mxu0 0.0
      %2066 = vmatpush1.msra.mxu0 0.0
      %2067 = vmatprep.subr.mxu0 0.0
      %2068 = vmatpush1.msra.mxu0 0.0
      %2069 = vmatprep.subr.mxu0 0.0
      %2070 = vmatpush1.msra.mxu0 0.0
      %2071 = vmatprep.subr.mxu0 0.0
      %2072 = vmatpush1.msra.mxu0 0.0
      %2073 = vmatprep.subr.mxu0 0.0
      %2074 = vmatpush1.msra.mxu0 0.0
      %2075 = vmatprep.subr.mxu0 0.0
      %2076 = vmatpush1.msra.mxu0 0.0
      %2077 = vmatprep.subr.mxu0 0.0
      %2078 = vmatpush1.msra.mxu0 0.0
      %2079 = vmatprep.subr.mxu0 0.0
      %2080 = vmatpush1.msra.mxu0 0.0
      %2081 = vmatprep.subr.mxu0 0.0
      %2082 = vmatpush1.msra.mxu0 0.0
      %2083 = vmatprep.subr.mxu0 0.0
      %2084 = vmatpush1.msra.mxu0 0.0
      %2085 = vmatprep.subr.mxu0 0.0
      %2086 = vmatpush1.msra.mxu0 0.0
      %2087 = vmatprep.subr.mxu0 0.0
      %2088 = vmatpush1.msra.mxu0 0.0
      %2089 = vmatprep.subr.mxu0 0.0
      %2090 = vmatpush1.msra.mxu0 0.0
      %2091 = vmatprep.subr.mxu0 0.0
      %2092 = vmatpush1.msra.mxu0 0.0
      %2093 = vmatprep.subr.mxu0 0.0
      %2094 = vmatpush1.msra.mxu0 0.0
      %2095 = vmatprep.subr.mxu0 0.0
      %2096 = vmatpush1.msra.mxu0 0.0
      %2097 = vmatprep.subr.mxu0 0.0
      %2098 = vmatpush1.msra.mxu0 0.0
      %2099 = vmatprep.subr.mxu0 0.0
      %2100 = vmatpush1.msra.mxu0 0.0
      %2101 = vmatprep.subr.mxu0 0.0
      %2102 = vmatpush1.msra.mxu0 0.0
      %2103 = vmatprep.subr.mxu0 0.0
      %2104 = vmatpush1.msra.mxu0 0.0
      %2105 = vmatprep.subr.mxu0 0.0
      %2106 = vmatpush1.msra.mxu0 0.0
      %2107 = vmatprep.subr.mxu0 0.0
      %2108 = vmatpush1.msra.mxu0 0.0
      %2109 = vmatprep.subr.mxu0 0.0
      %2110 = vmatpush1.msra.mxu0 0.0
      %2111 = vmatprep.subr.mxu0 0.0
      %2112 = vmatpush1.msra.mxu0 0.0
      %2113 = vmatprep.subr.mxu0 0.0
      %2114 = vmatpush1.msra.mxu0 0.0
      %2115 = vmatprep.subr.mxu0 0.0
      %2116 = vmatpush1.msra.mxu0 0.0
      %2117 = vmatprep.mubr.f32.mxu0 0.0
      %2118 = vmatmul.mubr.f32.gmra.mrb[0].mxu0 %v2051
      %v2119 = vpop.f32.mrb[0].mxu0
      %v2120 = vadd.f32 %v2048, %v2119
      %v2121 = vpop.f32.mrb[0].mxu0
      %2122 = vdwg.mxu0
      %v2123 = vmax.f32 %v2120, 0.0
      %v2124 = vld [vmem:[%s16] sm:$0xff]
      %v2125 = vld [vmem:[%s16 + $0x8] sm:$0xff]
      %v2126 = vld [vmem:[%s16 + $0x10] sm:$0xff]
      %v2127 = vld [vmem:[%s16 + $0x18] sm:$0xff]
      %v2128 = vld [vmem:[%s16 + $0x20] sm:$0xff]
      %v2129 = vld [vmem:[%s16 + $0x28] sm:$0xff]
      %v2130 = vld [vmem:[%s16 + $0x30] sm:$0xff]
      %v2131 = vld [vmem:[%s16 + $0x38] sm:$0xff]
      %v2132 = vld [vmem:[%s17] sm:$0x1]
      %v2134 = vlaneseq
      %v2135 = vshrl.u32 %v2134, 7
      %v2136 = vsub.s32 0, %v2135
      %v2137 = vrot.slane %v2132, %v2136
      %vm2139 = vcmask 523264
      %v2141 = vsel %vm2139, %v2123, 0
      %2143 = vmatprep.subr.mxu0 0.0
      %2144 = vmatpush1.msra.mxu0 %v2124
      %2145 = vmatprep.subr.mxu0 0.0
      %2146 = vmatpush1.msra.mxu0 %v2125
      %2147 = vmatprep.subr.mxu0 0.0
      %2148 = vmatpush1.msra.mxu0 %v2126
      %2149 = vmatprep.subr.mxu0 0.0
      %2150 = vmatpush1.msra.mxu0 %v2127
      %2151 = vmatprep.subr.mxu0 0.0
      %2152 = vmatpush1.msra.mxu0 %v2128
      %2153 = vmatprep.subr.mxu0 0.0
      %2154 = vmatpush1.msra.mxu0 %v2129
      %2155 = vmatprep.subr.mxu0 0.0
      %2156 = vmatpush1.msra.mxu0 %v2130
      %2157 = vmatprep.subr.mxu0 0.0
      %2158 = vmatpush1.msra.mxu0 %v2131
      %2159 = vmatprep.subr.mxu0 0.0
      %2160 = vmatpush1.msra.mxu0 0.0
      %2161 = vmatprep.subr.mxu0 0.0
      %2162 = vmatpush1.msra.mxu0 0.0
      %2163 = vmatprep.subr.mxu0 0.0
      %2164 = vmatpush1.msra.mxu0 0.0
      %2165 = vmatprep.subr.mxu0 0.0
      %2166 = vmatpush1.msra.mxu0 0.0
      %2167 = vmatprep.subr.mxu0 0.0
      %2168 = vmatpush1.msra.mxu0 0.0
      %2169 = vmatprep.subr.mxu0 0.0
      %2170 = vmatpush1.msra.mxu0 0.0
      %2171 = vmatprep.subr.mxu0 0.0
      %2172 = vmatpush1.msra.mxu0 0.0
      %2173 = vmatprep.subr.mxu0 0.0
      %2174 = vmatpush1.msra.mxu0 0.0
      %2175 = vmatprep.subr.mxu0 0.0
      %2176 = vmatpush1.msra.mxu0 0.0
      %2177 = vmatprep.subr.mxu0 0.0
      %2178 = vmatpush1.msra.mxu0 0.0
      %2179 = vmatprep.subr.mxu0 0.0
      %2180 = vmatpush1.msra.mxu0 0.0
      %2181 = vmatprep.subr.mxu0 0.0
      %2182 = vmatpush1.msra.mxu0 0.0
      %2183 = vmatprep.subr.mxu0 0.0
      %2184 = vmatpush1.msra.mxu0 0.0
      %2185 = vmatprep.subr.mxu0 0.0
      %2186 = vmatpush1.msra.mxu0 0.0
      %2187 = vmatprep.subr.mxu0 0.0
      %2188 = vmatpush1.msra.mxu0 0.0
      %2189 = vmatprep.subr.mxu0 0.0
      %2190 = vmatpush1.msra.mxu0 0.0
      %2191 = vmatprep.subr.mxu0 0.0
      %2192 = vmatpush1.msra.mxu0 0.0
      %2193 = vmatprep.subr.mxu0 0.0
      %2194 = vmatpush1.msra.mxu0 0.0
      %2195 = vmatprep.subr.mxu0 0.0
      %2196 = vmatpush1.msra.mxu0 0.0
      %2197 = vmatprep.subr.mxu0 0.0
      %2198 = vmatpush1.msra.mxu0 0.0
      %2199 = vmatprep.subr.mxu0 0.0
      %2200 = vmatpush1.msra.mxu0 0.0
      %2201 = vmatprep.subr.mxu0 0.0
      %2202 = vmatpush1.msra.mxu0 0.0
      %2203 = vmatprep.subr.mxu0 0.0
      %2204 = vmatpush1.msra.mxu0 0.0
      %2205 = vmatprep.subr.mxu0 0.0
      %2206 = vmatpush1.msra.mxu0 0.0
      %2207 = vmatprep.mubr.f32.mxu0 0.0
      %2208 = vmatmul.mubr.f32.gmra.mrb[0].mxu0 %v2141
      %v2209 = vpop.f32.mrb[0].mxu0
      %v2210 = vadd.f32 %v2137, %v2209
      %v2211 = vpop.f32.mrb[0].mxu0
      %2212 = vdwg.mxu0
      %v2213 = vadd.f32 %v2210, %v2038
      %v2214 = vld [vmem:[%s18] sm:$0x1]
      %v2215 = vld [vmem:[%s19] sm:$0x1]
      %v2216 = vsel %vm1341, %v2213, 0.0
      %2217 = vadd.xlane.f32.xlu0 %v2216
      %v2218 = vpop.xlane.xlu0 %2217
      %v2219 = vmul.f32 %v2218, %v1345
      %v2220 = vsub.f32 %v2213, %v2219
      %v2221 = vmul.f32 %v2220, %v2220
      %v2222 = vsel %vm1341, %v2221, 0.0
      %2223 = vadd.xlane.f32.xlu0 %v2222
      %v2224 = vpop.xlane.xlu0 %2223
      %v2225 = vmul.f32 %v2224, %v1345
      %v2226 = vadd.f32 %v2225, 1e-05
      %v2227 = vrsqrt.pop %v2226
      %v2228 = vmul.f32 %v2220, %v2227
      %v2230 = vlaneseq
      %v2231 = vshrl.u32 %v2230, 7
      %v2232 = vsub.s32 0, %v2231
      %v2233 = vrot.slane %v2214, %v2232
      %v2235 = vmul.f32 %v2228, %v2233
      %v2237 = vlaneseq
      %v2238 = vshrl.u32 %v2237, 7
      %v2239 = vsub.s32 0, %v2238
      %v2240 = vrot.slane %v2215, %v2239
      %v2242 = vadd.f32 %v2235, %v2240
      %2243 = vst.msk [vmem:[%s675] sm:$0xf] %vm1341, %v2242
      %p2244 = scmp.lt.s32.totalorder %s31, 3
      %s2245 = scalar_select %p2244, %s31, 3
      %s2246 = smul.addr %s2245, 4
      %s2247 = scalar_lea.vmem %s20, %s2246
      // Predicated region
      $region101: #{_lambda_.5} parent=99 // pred_check
        %p2248 = pneg %p489
      $region102: #{_lambda_.5} parent=99 // pred_check_branch
        %2250 = sbr.rel (%p2248) target = $region104
      $region103: #{_lambda_.5} parent=99 // pred_region
        _
      $region104: #{_lambda_.5} parent=99 // pred_fallthru
        _
    $region100: #{_lambda_.5} parent=5 // pred_fallthru
      _
    %p2251 = scmp.le.s32.totalorder 2, %s26
    // Predicated region
    $region105: #{_lambda_.5} parent=5 // pred_check
      %p2252 = pneg %p2251
    $region106: #{_lambda_.5} parent=5 // pred_check_branch
      %2254 = sbr.rel (%p2252) target = $region108
    $region107: #{_lambda_.5} parent=5 // pred_region
      %s2255 = ssub.s32 %s26, 2
      // Predicated region
      $region109: #{_lambda_.5} parent=107 // pred_check
        %p2256 = pneg %p495
      $region110: #{_lambda_.5} parent=107 // pred_check_branch
        %2258 = sbr.rel (%p2256) target = $region112
      $region111: #{_lambda_.5} parent=107 // pred_region
        %p2259 = scmp.lt.s32.totalorder %s32, 3
        %s2260 = scalar_select %p2259, %s32, 3
        %s2261 = smul.addr %s2260, 4
        %s2262 = scalar_lea.vmem %s20, %s2261
      $region112: #{_lambda_.5} parent=107 // pred_fallthru
        _
    $region108: #{_lambda_.5} parent=5 // pred_fallthru
      _
  $region6: #{_lambda_.5} parent=0 // loop_footer
    %s30 = sadd.s32 1, %s26
  $region7: #{_lambda_.5} parent=0 // loop_footer_branch
    %25 = sbr.rel target = $region3
  $region8: #{_lambda_.5} parent=0 // loop_exit
    _

// kernel: _lambda_.7
$region0: #{_lambda_.7}
  #allocation0 [shape = 'u32[]', space=smem, size = 0x4, offset = 0x4, fixed_abs, tag = 'smem constant byte address 0x4 - core index']
  #allocation1 [shape = 'u32[144,128]{1,0:T(1,128)}', space=vmem, size = 0x12000, scoped, tag = 'internal scratch']
  %s0 = inlined_call_operand.vmem [shape: f32[2,8,32], index: 0, kind: input, shape index: {}]
  %s1 = inlined_call_operand.vmem [shape: f32[2,8,32], index: 1, kind: input, shape index: {}]
  %s2 = inlined_call_operand.vmem [shape: f32[2,8,32], index: 2, kind: input, shape index: {}]
  %s3 = inlined_call_operand.vmem [shape: f32[32,32], index: 3, kind: input, shape index: {}]
  %s4 = inlined_call_operand.vmem [shape: f32[32,32], index: 4, kind: input, shape index: {}]
  %s5 = inlined_call_operand.vmem [shape: f32[32,32], index: 5, kind: input, shape index: {}]
  %s6 = inlined_call_operand.vmem [shape: f32[96,32], index: 6, kind: input, shape index: {}]
  %s7 = inlined_call_operand.vmem [shape: f32[96,32], index: 7, kind: input, shape index: {}]
  %s8 = inlined_call_operand.vmem [shape: f32[96,32], index: 8, kind: input, shape index: {}]
  %s9 = inlined_call_operand.vmem [shape: f32[8,32], index: 9, kind: input, shape index: {}]
  %s10 = inlined_call_operand.vmem [shape: f32[8,32], index: 10, kind: input, shape index: {}]
  %s11 = inlined_call_operand.vmem [shape: f32[8,32], index: 11, kind: input, shape index: {}]
  %s12 = inlined_call_operand.hbm [shape: f32[2,8,32], index: 12, kind: output, shape index: {}]
  %s13 = sld [smem:[#allocation0]]
  $region81: #{_lambda_.7} parent=0
    _
  %s15 = ssub.s32 1, %s13
  %s16 = scalar_select 0, %s15, %s13
  $region1: #{_lambda_.7} parent=0
    #allocation2 [shape = 'u8[8192]{0}', space=vmem, size = 0x2000, scoped, tag = 'output window, operand 0']
    #allocation3 [shape = 's32[2]{0}', space=sflag, size = 0x8, scoped, tag = 'scoped memory for _lambda_.7']
    %17 = vsyncpa [#allocation3], 0
    %s18 = scalar_lea.sflag [#allocation3], 1
    %19 = vsyncpa %s18, 0
    loop: start=0, step=1, limit=4
    $region2: #{_lambda_.7} parent=1 // loop_pre_header
      _
    $region3: #{_lambda_.7} parent=1 // loop_header
      %s21 = sphi 0, %s25
      %p22 = scmp.ge.s32.totalorder %s21, 4
      %s31 = sphi 0, %s33
      %s34 = sphi 0, %s31
      %s35 = sphi 0, %s34
      %s51 = sphi 0, %s35
      %s57 = sphi 0, %s59
      %s60 = sphi 0, %s57
      %s61 = sphi 0, %s60
      %s77 = sphi 0, %s61
      %s83 = sphi 0, %s85
      %s86 = sphi 0, %s83
      %s87 = sphi 0, %s86
      %s103 = sphi 0, %s87
      %s107 = sphi 0, %s107
      %s109 = sphi 0, %s107
      %s110 = sphi 0, %s109
      %s124 = sphi 0, %s110
      %s128 = sphi 0, %s128
      %s130 = sphi 0, %s128
      %s131 = sphi 0, %s130
      %s145 = sphi 0, %s131
      %s149 = sphi 0, %s149
      %s151 = sphi 0, %s149
      %s152 = sphi 0, %s151
      %s166 = sphi 0, %s152
      %s170 = sphi 0, %s170
      %s172 = sphi 0, %s170
      %s173 = sphi 0, %s172
      %s187 = sphi 0, %s173
      %s191 = sphi 0, %s191
      %s193 = sphi 0, %s191
      %s194 = sphi 0, %s193
      %s208 = sphi 0, %s194
      %s212 = sphi 0, %s212
      %s214 = sphi 0, %s212
      %s215 = sphi 0, %s214
      %s229 = sphi 0, %s215
      %s233 = sphi 0, %s233
      %s235 = sphi 0, %s233
      %s236 = sphi 0, %s235
      %s250 = sphi 0, %s236
      %s254 = sphi 0, %s254
      %s256 = sphi 0, %s254
      %s257 = sphi 0, %s256
      %s271 = sphi 0, %s257
      %s275 = sphi 0, %s275
      %s277 = sphi 0, %s275
      %s278 = sphi 0, %s277
      %s292 = sphi 0, %s278
      %s298 = sphi 0, %s300
      %s301 = sphi 0, %s298
      %s302 = sphi 0, %s301
      %s318 = sphi 0, %s302
    $region4: #{_lambda_.7} parent=1 // loop_header_branch
      %24 = sbr.rel (%p22) target = $region8
    $region5: #{_lambda_.7} parent=1 // loop_body
      %s26 = ssub.s32 %s21, 1
      %s27 = ssub.s32 %s21, 2
      %s28 = sadd.s32 %s21, 1
      %s29 = ssub.s32 %s21, %s28
      %p30 = scmp.eq.s32.totalorder %s29, 0
      %s32 = sadd.s32 %s31, 1
      %s33 = scalar_select %p30, %s31, %s32
      %p36 = pneg %p30
      %p37 = scmp.eq.s32.totalorder %s21, 1
      %p38 = por %p36, %p37
      %p39 = scmp.ne.s32.totalorder %s31, %s34
      %p40 = scmp.eq.s32.totalorder %s21, 0
      %p41 = por %p39, %p40
      %p42 = scmp.ne.s32.totalorder %s31, %s34
      %p43 = scmp.eq.s32.totalorder %s26, 1
      %p44 = por %p42, %p43
      %p45 = scmp.ne.s32.totalorder %s34, %s35
      %p46 = scmp.eq.s32.totalorder %s26, 0
      %p47 = por %p45, %p46
      %p48 = scmp.ne.s32.totalorder %s34, %s35
      %p49 = scmp.eq.s32.totalorder %s27, 1
      %p50 = por %p48, %p49
      %p52 = scmp.ne.s32.totalorder %s35, %s51
      %p53 = scmp.eq.s32.totalorder %s27, 0
      %p54 = por %p52, %p53
      %s55 = ssub.s32 %s21, %s28
      %p56 = scmp.eq.s32.totalorder %s55, 0
      %s58 = sadd.s32 %s57, 1
      %s59 = scalar_select %p56, %s57, %s58
      %p62 = pneg %p56
      %p63 = scmp.eq.s32.totalorder %s21, 1
      %p64 = por %p62, %p63
      %p65 = scmp.ne.s32.totalorder %s57, %s60
      %p66 = scmp.eq.s32.totalorder %s21, 0
      %p67 = por %p65, %p66
      %p68 = scmp.ne.s32.totalorder %s57, %s60
      %p69 = scmp.eq.s32.totalorder %s26, 1
      %p70 = por %p68, %p69
      %p71 = scmp.ne.s32.totalorder %s60, %s61
      %p72 = scmp.eq.s32.totalorder %s26, 0
      %p73 = por %p71, %p72
      %p74 = scmp.ne.s32.totalorder %s60, %s61
      %p75 = scmp.eq.s32.totalorder %s27, 1
      %p76 = por %p74, %p75
      %p78 = scmp.ne.s32.totalorder %s61, %s77
      %p79 = scmp.eq.s32.totalorder %s27, 0
      %p80 = por %p78, %p79
      %s81 = ssub.s32 %s21, %s28
      %p82 = scmp.eq.s32.totalorder %s81, 0
      %s84 = sadd.s32 %s83, 1
      %s85 = scalar_select %p82, %s83, %s84
      %p88 = pneg %p82
      %p89 = scmp.eq.s32.totalorder %s21, 1
      %p90 = por %p88, %p89
      %p91 = scmp.ne.s32.totalorder %s83, %s86
      %p92 = scmp.eq.s32.totalorder %s21, 0
      %p93 = por %p91, %p92
      %p94 = scmp.ne.s32.totalorder %s83, %s86
      %p95 = scmp.eq.s32.totalorder %s26, 1
      %p96 = por %p94, %p95
      %p97 = scmp.ne.s32.totalorder %s86, %s87
      %p98 = scmp.eq.s32.totalorder %s26, 0
      %p99 = por %p97, %p98
      %p100 = scmp.ne.s32.totalorder %s86, %s87
      %p101 = scmp.eq.s32.totalorder %s27, 1
      %p102 = por %p100, %p101
      %p104 = scmp.ne.s32.totalorder %s87, %s103
      %p105 = scmp.eq.s32.totalorder %s27, 0
      %p106 = por %p104, %p105
      %s108 = sadd.s32 %s107, 1
      %p111 = scmp.eq.s32.totalorder %s21, 1
      %p112 = scmp.ne.s32.totalorder %s107, %s109
      %p113 = scmp.eq.s32.totalorder %s21, 0
      %p114 = por %p112, %p113
      %p115 = scmp.ne.s32.totalorder %s107, %s109
      %p116 = scmp.eq.s32.totalorder %s26, 1
      %p117 = por %p115, %p116
      %p118 = scmp.ne.s32.totalorder %s109, %s110
      %p119 = scmp.eq.s32.totalorder %s26, 0
      %p120 = por %p118, %p119
      %p121 = scmp.ne.s32.totalorder %s109, %s110
      %p122 = scmp.eq.s32.totalorder %s27, 1
      %p123 = por %p121, %p122
      %p125 = scmp.ne.s32.totalorder %s110, %s124
      %p126 = scmp.eq.s32.totalorder %s27, 0
      %p127 = por %p125, %p126
      %s129 = sadd.s32 %s128, 1
      %p132 = scmp.eq.s32.totalorder %s21, 1
      %p133 = scmp.ne.s32.totalorder %s128, %s130
      %p134 = scmp.eq.s32.totalorder %s21, 0
      %p135 = por %p133, %p134
      %p136 = scmp.ne.s32.totalorder %s128, %s130
      %p137 = scmp.eq.s32.totalorder %s26, 1
      %p138 = por %p136, %p137
      %p139 = scmp.ne.s32.totalorder %s130, %s131
      %p140 = scmp.eq.s32.totalorder %s26, 0
      %p141 = por %p139, %p140
      %p142 = scmp.ne.s32.totalorder %s130, %s131
      %p143 = scmp.eq.s32.totalorder %s27, 1
      %p144 = por %p142, %p143
      %p146 = scmp.ne.s32.totalorder %s131, %s145
      %p147 = scmp.eq.s32.totalorder %s27, 0
      %p148 = por %p146, %p147
      %s150 = sadd.s32 %s149, 1
      %p153 = scmp.eq.s32.totalorder %s21, 1
      %p154 = scmp.ne.s32.totalorder %s149, %s151
      %p155 = scmp.eq.s32.totalorder %s21, 0
      %p156 = por %p154, %p155
      %p157 = scmp.ne.s32.totalorder %s149, %s151
      %p158 = scmp.eq.s32.totalorder %s26, 1
      %p159 = por %p157, %p158
      %p160 = scmp.ne.s32.totalorder %s151, %s152
      %p161 = scmp.eq.s32.totalorder %s26, 0
      %p162 = por %p160, %p161
      %p163 = scmp.ne.s32.totalorder %s151, %s152
      %p164 = scmp.eq.s32.totalorder %s27, 1
      %p165 = por %p163, %p164
      %p167 = scmp.ne.s32.totalorder %s152, %s166
      %p168 = scmp.eq.s32.totalorder %s27, 0
      %p169 = por %p167, %p168
      %s171 = sadd.s32 %s170, 1
      %p174 = scmp.eq.s32.totalorder %s21, 1
      %p175 = scmp.ne.s32.totalorder %s170, %s172
      %p176 = scmp.eq.s32.totalorder %s21, 0
      %p177 = por %p175, %p176
      %p178 = scmp.ne.s32.totalorder %s170, %s172
      %p179 = scmp.eq.s32.totalorder %s26, 1
      %p180 = por %p178, %p179
      %p181 = scmp.ne.s32.totalorder %s172, %s173
      %p182 = scmp.eq.s32.totalorder %s26, 0
      %p183 = por %p181, %p182
      %p184 = scmp.ne.s32.totalorder %s172, %s173
      %p185 = scmp.eq.s32.totalorder %s27, 1
      %p186 = por %p184, %p185
      %p188 = scmp.ne.s32.totalorder %s173, %s187
      %p189 = scmp.eq.s32.totalorder %s27, 0
      %p190 = por %p188, %p189
      %s192 = sadd.s32 %s191, 1
      %p195 = scmp.eq.s32.totalorder %s21, 1
      %p196 = scmp.ne.s32.totalorder %s191, %s193
      %p197 = scmp.eq.s32.totalorder %s21, 0
      %p198 = por %p196, %p197
      %p199 = scmp.ne.s32.totalorder %s191, %s193
      %p200 = scmp.eq.s32.totalorder %s26, 1
      %p201 = por %p199, %p200
      %p202 = scmp.ne.s32.totalorder %s193, %s194
      %p203 = scmp.eq.s32.totalorder %s26, 0
      %p204 = por %p202, %p203
      %p205 = scmp.ne.s32.totalorder %s193, %s194
      %p206 = scmp.eq.s32.totalorder %s27, 1
      %p207 = por %p205, %p206
      %p209 = scmp.ne.s32.totalorder %s194, %s208
      %p210 = scmp.eq.s32.totalorder %s27, 0
      %p211 = por %p209, %p210
      %s213 = sadd.s32 %s212, 1
      %p216 = scmp.eq.s32.totalorder %s21, 1
      %p217 = scmp.ne.s32.totalorder %s212, %s214
      %p218 = scmp.eq.s32.totalorder %s21, 0
      %p219 = por %p217, %p218
      %p220 = scmp.ne.s32.totalorder %s212, %s214
      %p221 = scmp.eq.s32.totalorder %s26, 1
      %p222 = por %p220, %p221
      %p223 = scmp.ne.s32.totalorder %s214, %s215
      %p224 = scmp.eq.s32.totalorder %s26, 0
      %p225 = por %p223, %p224
      %p226 = scmp.ne.s32.totalorder %s214, %s215
      %p227 = scmp.eq.s32.totalorder %s27, 1
      %p228 = por %p226, %p227
      %p230 = scmp.ne.s32.totalorder %s215, %s229
      %p231 = scmp.eq.s32.totalorder %s27, 0
      %p232 = por %p230, %p231
      %s234 = sadd.s32 %s233, 1
      %p237 = scmp.eq.s32.totalorder %s21, 1
      %p238 = scmp.ne.s32.totalorder %s233, %s235
      %p239 = scmp.eq.s32.totalorder %s21, 0
      %p240 = por %p238, %p239
      %p241 = scmp.ne.s32.totalorder %s233, %s235
      %p242 = scmp.eq.s32.totalorder %s26, 1
      %p243 = por %p241, %p242
      %p244 = scmp.ne.s32.totalorder %s235, %s236
      %p245 = scmp.eq.s32.totalorder %s26, 0
      %p246 = por %p244, %p245
      %p247 = scmp.ne.s32.totalorder %s235, %s236
      %p248 = scmp.eq.s32.totalorder %s27, 1
      %p249 = por %p247, %p248
      %p251 = scmp.ne.s32.totalorder %s236, %s250
      %p252 = scmp.eq.s32.totalorder %s27, 0
      %p253 = por %p251, %p252
      %s255 = sadd.s32 %s254, 1
      %p258 = scmp.eq.s32.totalorder %s21, 1
      %p259 = scmp.ne.s32.totalorder %s254, %s256
      %p260 = scmp.eq.s32.totalorder %s21, 0
      %p261 = por %p259, %p260
      %p262 = scmp.ne.s32.totalorder %s254, %s256
      %p263 = scmp.eq.s32.totalorder %s26, 1
      %p264 = por %p262, %p263
      %p265 = scmp.ne.s32.totalorder %s256, %s257
      %p266 = scmp.eq.s32.totalorder %s26, 0
      %p267 = por %p265, %p266
      %p268 = scmp.ne.s32.totalorder %s256, %s257
      %p269 = scmp.eq.s32.totalorder %s27, 1
      %p270 = por %p268, %p269
      %p272 = scmp.ne.s32.totalorder %s257, %s271
      %p273 = scmp.eq.s32.totalorder %s27, 0
      %p274 = por %p272, %p273
      %s276 = sadd.s32 %s275, 1
      %p279 = scmp.eq.s32.totalorder %s21, 1
      %p280 = scmp.ne.s32.totalorder %s275, %s277
      %p281 = scmp.eq.s32.totalorder %s21, 0
      %p282 = por %p280, %p281
      %p283 = scmp.ne.s32.totalorder %s275, %s277
      %p284 = scmp.eq.s32.totalorder %s26, 1
      %p285 = por %p283, %p284
      %p286 = scmp.ne.s32.totalorder %s277, %s278
      %p287 = scmp.eq.s32.totalorder %s26, 0
      %p288 = por %p286, %p287
      %p289 = scmp.ne.s32.totalorder %s277, %s278
      %p290 = scmp.eq.s32.totalorder %s27, 1
      %p291 = por %p289, %p290
      %p293 = scmp.ne.s32.totalorder %s278, %s292
      %p294 = scmp.eq.s32.totalorder %s27, 0
      %p295 = por %p293, %p294
      %s296 = ssub.s32 %s21, %s28
      %p297 = scmp.eq.s32.totalorder %s296, 0
      %s299 = sadd.s32 %s298, 1
      %s300 = scalar_select %p297, %s298, %s299
      %p303 = pneg %p297
      %p304 = scmp.eq.s32.totalorder %s21, 1
      %p305 = por %p303, %p304
      %p306 = scmp.ne.s32.totalorder %s298, %s301
      %p307 = scmp.eq.s32.totalorder %s21, 0
      %p308 = por %p306, %p307
      %p309 = scmp.ne.s32.totalorder %s298, %s301
      %p310 = scmp.eq.s32.totalorder %s26, 1
      %p311 = por %p309, %p310
      %p312 = scmp.ne.s32.totalorder %s301, %s302
      %p313 = scmp.eq.s32.totalorder %s26, 0
      %p314 = por %p312, %p313
      %p315 = scmp.ne.s32.totalorder %s301, %s302
      %p316 = scmp.eq.s32.totalorder %s27, 1
      %p317 = por %p315, %p316
      %p319 = scmp.ne.s32.totalorder %s302, %s318
      %p320 = scmp.eq.s32.totalorder %s27, 0
      %p321 = por %p319, %p320
      %p322 = scmp.le.s32.totalorder 1, %s21
      %p323 = scmp.lt.s32.totalorder %s21, 3
      %p324 = pnand %p322, %p323
      %p325 = pneg %p324
      // Predicated region
      $region9: #{_lambda_.7} parent=5 // pred_check
        _
      $region10: #{_lambda_.7} parent=5 // pred_check_branch
        %327 = sbr.rel (%p324) target = $region12
      $region11: #{_lambda_.7} parent=5 // pred_region
        %s328 = ssub.s32 %s21, 1
        // Predicated region
        $region13: #{_lambda_.7} parent=11 // pred_check
          %p329 = pneg %p120
        $region14: #{_lambda_.7} parent=11 // pred_check_branch
          %331 = sbr.rel (%p329) target = $region16
        $region15: #{_lambda_.7} parent=11 // pred_region
          _
        $region16: #{_lambda_.7} parent=11 // pred_fallthru
          _
        // Predicated region
        $region17: #{_lambda_.7} parent=11 // pred_check
          %p332 = pneg %p141
        $region18: #{_lambda_.7} parent=11 // pred_check_branch
          %334 = sbr.rel (%p332) target = $region20
        $region19: #{_lambda_.7} parent=11 // pred_region
          _
        $region20: #{_lambda_.7} parent=11 // pred_fallthru
          _
        // Predicated region
        $region21: #{_lambda_.7} parent=11 // pred_check
          %p335 = pneg %p162
        $region22: #{_lambda_.7} parent=11 // pred_check_branch
          %337 = sbr.rel (%p335) target = $region24
        $region23: #{_lambda_.7} parent=11 // pred_region
          _
        $region24: #{_lambda_.7} parent=11 // pred_fallthru
          _
        // Predicated region
        $region25: #{_lambda_.7} parent=11 // pred_check
          %p338 = pneg %p183
        $region26: #{_lambda_.7} parent=11 // pred_check_branch
          %340 = sbr.rel (%p338) target = $region28
        $region27: #{_lambda_.7} parent=11 // pred_region
          _
        $region28: #{_lambda_.7} parent=11 // pred_fallthru
          _
        // Predicated region
        $region29: #{_lambda_.7} parent=11 // pred_check
          %p341 = pneg %p204
        $region30: #{_lambda_.7} parent=11 // pred_check_branch
          %343 = sbr.rel (%p341) target = $region32
        $region31: #{_lambda_.7} parent=11 // pred_region
          _
        $region32: #{_lambda_.7} parent=11 // pred_fallthru
          _
        // Predicated region
        $region33: #{_lambda_.7} parent=11 // pred_check
          %p344 = pneg %p225
        $region34: #{_lambda_.7} parent=11 // pred_check_branch
          %346 = sbr.rel (%p344) target = $region36
        $region35: #{_lambda_.7} parent=11 // pred_region
          _
        $region36: #{_lambda_.7} parent=11 // pred_fallthru
          _
        // Predicated region
        $region37: #{_lambda_.7} parent=11 // pred_check
          %p347 = pneg %p246
        $region38: #{_lambda_.7} parent=11 // pred_check_branch
          %349 = sbr.rel (%p347) target = $region40
        $region39: #{_lambda_.7} parent=11 // pred_region
          _
        $region40: #{_lambda_.7} parent=11 // pred_fallthru
          _
        // Predicated region
        $region41: #{_lambda_.7} parent=11 // pred_check
          %p350 = pneg %p267
        $region42: #{_lambda_.7} parent=11 // pred_check_branch
          %352 = sbr.rel (%p350) target = $region44
        $region43: #{_lambda_.7} parent=11 // pred_region
          _
        $region44: #{_lambda_.7} parent=11 // pred_fallthru
          _
        // Predicated region
        $region45: #{_lambda_.7} parent=11 // pred_check
          %p353 = pneg %p288
        $region46: #{_lambda_.7} parent=11 // pred_check_branch
          %355 = sbr.rel (%p353) target = $region48
        $region47: #{_lambda_.7} parent=11 // pred_region
          _
        $region48: #{_lambda_.7} parent=11 // pred_fallthru
          _
      $region12: #{_lambda_.7} parent=5 // pred_fallthru
        _
      %p356 = scmp.lt.s32.totalorder %s21, 2
      // Predicated region
      $region49: #{_lambda_.7} parent=5 // pred_check
        %p357 = pneg %p356
      $region50: #{_lambda_.7} parent=5 // pred_check_branch
        %359 = sbr.rel (%p357) target = $region52
      $region51: #{_lambda_.7} parent=5 // pred_region
        // Predicated region
        $region53: #{_lambda_.7} parent=51 // pred_check
          %p360 = pneg %p41
        $region54: #{_lambda_.7} parent=51 // pred_check_branch
          %362 = sbr.rel (%p360) target = $region56
        $region55: #{_lambda_.7} parent=51 // pred_region
          %p363 = scmp.lt.s32.totalorder %s21, 1
          %s364 = scalar_select %p363, %s21, 1
          %s365 = smul.addr %s364, 8
          %s366 = scalar_lea.vmem %s0, %s365
        $region56: #{_lambda_.7} parent=51 // pred_fallthru
          _
        // Predicated region
        $region57: #{_lambda_.7} parent=51 // pred_check
          %p367 = pneg %p67
        $region58: #{_lambda_.7} parent=51 // pred_check_branch
          %369 = sbr.rel (%p367) target = $region60
        $region59: #{_lambda_.7} parent=51 // pred_region
          %p370 = scmp.lt.s32.totalorder %s21, 1
          %s371 = scalar_select %p370, %s21, 1
          %s372 = smul.addr %s371, 8
          %s373 = scalar_lea.vmem %s1, %s372
        $region60: #{_lambda_.7} parent=51 // pred_fallthru
          _
        // Predicated region
        $region61: #{_lambda_.7} parent=51 // pred_check
          %p374 = pneg %p93
        $region62: #{_lambda_.7} parent=51 // pred_check_branch
          %376 = sbr.rel (%p374) target = $region64
        $region63: #{_lambda_.7} parent=51 // pred_region
          %p377 = scmp.lt.s32.totalorder %s21, 1
          %s378 = scalar_select %p377, %s21, 1
          %s379 = smul.addr %s378, 8
          %s380 = scalar_lea.vmem %s2, %s379
        $region64: #{_lambda_.7} parent=51 // pred_fallthru
          _
      $region52: #{_lambda_.7} parent=5 // pred_fallthru
        _
      %p381 = scmp.le.s32.totalorder 1, %s21
      %p382 = scmp.lt.s32.totalorder %s21, 3
      %p383 = pnand %p381, %p382
      %p384 = pneg %p383
      // Predicated region
      $region65: #{_lambda_.7} parent=5 // pred_check
        _
      $region66: #{_lambda_.7} parent=5 // pred_check_branch
        %386 = sbr.rel (%p383) target = $region68
      $region67: #{_lambda_.7} parent=5 // pred_region
        %s387 = ssub.s32 %s21, 1
        %p388 = scmp.lt.s32.totalorder %s26, 1
        %s389 = scalar_select %p388, %s26, 1
        %s390 = smul.addr %s389, 8
        %s391 = scalar_lea.vmem %s0, %s390
        %p392 = pneg %p47
        %p393 = pneg %p44
        %p394 = scmp.lt.s32.totalorder %s26, 1
        %s395 = scalar_select %p394, %s26, 1
        %s396 = smul.addr %s395, 8
        %s397 = scalar_lea.vmem %s1, %s396
        %p398 = pneg %p73
        %p399 = pneg %p70
        %p400 = scmp.lt.s32.totalorder %s26, 1
        %s401 = scalar_select %p400, %s26, 1
        %s402 = smul.addr %s401, 8
        %s403 = scalar_lea.vmem %s2, %s402
        %p404 = pneg %p99
        %p405 = pneg %p96
        %p406 = pneg %p120
        %p407 = pneg %p117
        %p408 = pneg %p141
        %p409 = pneg %p138
        %p410 = pneg %p162
        %p411 = pneg %p159
        %p412 = pneg %p183
        %p413 = pneg %p180
        %p414 = pneg %p204
        %p415 = pneg %p201
        %p416 = pneg %p225
        %p417 = pneg %p222
        %p418 = pneg %p246
        %p419 = pneg %p243
        %p420 = pneg %p267
        %p421 = pneg %p264
        %p422 = pneg %p288
        %p423 = pneg %p285
        %p424 = pneg %p314
        %p425 = pneg %p311
        %s426 = sand.u32 %s301, 1
        %s427 = scalar_lea.sflag [#allocation3], %s426
        %s428 = sand.u32 %s301, 1
        %s429 = smul.addr %s428, 8
        %s430 = scalar_lea.vmem [#allocation2], %s429
        %p431 = scmp.lt.s32.totalorder %s26, 1
        %s432 = scalar_select %p431, %s26, 1
        %s433 = smul.addr %s432, 8
        %s434 = scalar_lea.vmem %s0, %s433
        %p435 = scmp.lt.s32.totalorder %s26, 1
        %s436 = scalar_select %p435, %s26, 1
        %s437 = smul.addr %s436, 8
        %s438 = scalar_lea.vmem %s1, %s437
        %p439 = scmp.lt.s32.totalorder %s26, 1
        %s440 = scalar_select %p439, %s26, 1
        %s441 = smul.addr %s440, 8
        %s442 = scalar_lea.vmem %s2, %s441
        %v443 = vld [vmem:[%s434] sm:$0xff]
        %v444 = vld [vmem:[%s438] sm:$0xff]
        %v445 = vld [vmem:[%s442] sm:$0xff]
        %v446 = vld [vmem:[%s3] sm:$0xff]
        %v447 = vld [vmem:[%s3 + $0x8] sm:$0xff]
        %v448 = vld [vmem:[%s3 + $0x10] sm:$0xff]
        %v449 = vld [vmem:[%s3 + $0x18] sm:$0xff]
        %vm450 = vcmask 261120
        %v452 = vsel %vm450, %v443, 0
        %454 = vmatprep.subr.mxu0 0.0
        %455 = vmatpush1.msra.mxu0 %v446
        %456 = vmatprep.subr.mxu0 0.0
        %457 = vmatpush1.msra.mxu0 %v447
        %458 = vmatprep.subr.mxu0 0.0
        %459 = vmatpush1.msra.mxu0 %v448
        %460 = vmatprep.subr.mxu0 0.0
        %461 = vmatpush1.msra.mxu0 %v449
        %462 = vmatprep.subr.mxu0 0.0
        %463 = vmatpush1.msra.mxu0 0.0
        %464 = vmatprep.subr.mxu0 0.0
        %465 = vmatpush1.msra.mxu0 0.0
        %466 = vmatprep.subr.mxu0 0.0
        %467 = vmatpush1.msra.mxu0 0.0
        %468 = vmatprep.subr.mxu0 0.0
        %469 = vmatpush1.msra.mxu0 0.0
        %470 = vmatprep.subr.mxu0 0.0
        %471 = vmatpush1.msra.mxu0 0.0
        %472 = vmatprep.subr.mxu0 0.0
        %473 = vmatpush1.msra.mxu0 0.0
        %474 = vmatprep.subr.mxu0 0.0
        %475 = vmatpush1.msra.mxu0 0.0
        %476 = vmatprep.subr.mxu0 0.0
        %477 = vmatpush1.msra.mxu0 0.0
        %478 = vmatprep.subr.mxu0 0.0
        %479 = vmatpush1.msra.mxu0 0.0
        %480 = vmatprep.subr.mxu0 0.0
        %481 = vmatpush1.msra.mxu0 0.0
        %482 = vmatprep.subr.mxu0 0.0
        %483 = vmatpush1.msra.mxu0 0.0
        %484 = vmatprep.subr.mxu0 0.0
        %485 = vmatpush1.msra.mxu0 0.0
        %486 = vmatprep.subr.mxu0 0.0
        %487 = vmatpush1.msra.mxu0 0.0
        %488 = vmatprep.subr.mxu0 0.0
        %489 = vmatpush1.msra.mxu0 0.0
        %490 = vmatprep.subr.mxu0 0.0
        %491 = vmatpush1.msra.mxu0 0.0
        %492 = vmatprep.subr.mxu0 0.0
        %493 = vmatpush1.msra.mxu0 0.0
        %494 = vmatprep.subr.mxu0 0.0
        %495 = vmatpush1.msra.mxu0 0.0
        %496 = vmatprep.subr.mxu0 0.0
        %497 = vmatpush1.msra.mxu0 0.0
        %498 = vmatprep.subr.mxu0 0.0
        %499 = vmatpush1.msra.mxu0 0.0
        %500 = vmatprep.subr.mxu0 0.0
        %501 = vmatpush1.msra.mxu0 0.0
        %502 = vmatprep.subr.mxu0 0.0
        %503 = vmatpush1.msra.mxu0 0.0
        %504 = vmatprep.subr.mxu0 0.0
        %505 = vmatpush1.msra.mxu0 0.0
        %506 = vmatprep.subr.mxu0 0.0
        %507 = vmatpush1.msra.mxu0 0.0
        %508 = vmatprep.subr.mxu0 0.0
        %509 = vmatpush1.msra.mxu0 0.0
        %510 = vmatprep.subr.mxu0 0.0
        %511 = vmatpush1.msra.mxu0 0.0
        %512 = vmatprep.subr.mxu0 0.0
        %513 = vmatpush1.msra.mxu0 0.0
        %514 = vmatprep.subr.mxu0 0.0
        %515 = vmatpush1.msra.mxu0 0.0
        %516 = vmatprep.subr.mxu0 0.0
        %517 = vmatpush1.msra.mxu0 0.0
        %518 = vmatprep.mubr.f32.mxu0 0.0
        %519 = vmatmul.mubr.f32.gmra.mrb[0].mxu0 %v452
        %v520 = vpop.f32.mrb[0].mxu0
        %v521 = vadd.f32 0.0, %v520
        %v522 = vpop.f32.mrb[0].mxu0
        %523 = vdwg.mxu0
        %v524 = vtanh.pop %v521
        %v525 = vld [vmem:[%s4] sm:$0xff]
        %v526 = vld [vmem:[%s4 + $0x8] sm:$0xff]
        %v527 = vld [vmem:[%s4 + $0x10] sm:$0xff]
        %v528 = vld [vmem:[%s4 + $0x18] sm:$0xff]
        %v530 = vsel %vm450, %v444, 0
        %532 = vmatprep.subr.mxu0 0.0
        %533 = vmatpush1.msra.mxu0 %v525
        %534 = vmatprep.subr.mxu0 0.0
        %535 = vmatpush1.msra.mxu0 %v526
        %536 = vmatprep.subr.mxu0 0.0
        %537 = vmatpush1.msra.mxu0 %v527
        %538 = vmatprep.subr.mxu0 0.0
        %539 = vmatpush1.msra.mxu0 %v528
        %540 = vmatprep.subr.mxu0 0.0
        %541 = vmatpush1.msra.mxu0 0.0
        %542 = vmatprep.subr.mxu0 0.0
        %543 = vmatpush1.msra.mxu0 0.0
        %544 = vmatprep.subr.mxu0 0.0
        %545 = vmatpush1.msra.mxu0 0.0
        %546 = vmatprep.subr.mxu0 0.0
        %547 = vmatpush1.msra.mxu0 0.0
        %548 = vmatprep.subr.mxu0 0.0
        %549 = vmatpush1.msra.mxu0 0.0
        %550 = vmatprep.subr.mxu0 0.0
        %551 = vmatpush1.msra.mxu0 0.0
        %552 = vmatprep.subr.mxu0 0.0
        %553 = vmatpush1.msra.mxu0 0.0
        %554 = vmatprep.subr.mxu0 0.0
        %555 = vmatpush1.msra.mxu0 0.0
        %556 = vmatprep.subr.mxu0 0.0
        %557 = vmatpush1.msra.mxu0 0.0
        %558 = vmatprep.subr.mxu0 0.0
        %559 = vmatpush1.msra.mxu0 0.0
        %560 = vmatprep.subr.mxu0 0.0
        %561 = vmatpush1.msra.mxu0 0.0
        %562 = vmatprep.subr.mxu0 0.0
        %563 = vmatpush1.msra.mxu0 0.0
        %564 = vmatprep.subr.mxu0 0.0
        %565 = vmatpush1.msra.mxu0 0.0
        %566 = vmatprep.subr.mxu0 0.0
        %567 = vmatpush1.msra.mxu0 0.0
        %568 = vmatprep.subr.mxu0 0.0
        %569 = vmatpush1.msra.mxu0 0.0
        %570 = vmatprep.subr.mxu0 0.0
        %571 = vmatpush1.msra.mxu0 0.0
        %572 = vmatprep.subr.mxu0 0.0
        %573 = vmatpush1.msra.mxu0 0.0
        %574 = vmatprep.subr.mxu0 0.0
        %575 = vmatpush1.msra.mxu0 0.0
        %576 = vmatprep.subr.mxu0 0.0
        %577 = vmatpush1.msra.mxu0 0.0
        %578 = vmatprep.subr.mxu0 0.0
        %579 = vmatpush1.msra.mxu0 0.0
        %580 = vmatprep.subr.mxu0 0.0
        %581 = vmatpush1.msra.mxu0 0.0
        %582 = vmatprep.subr.mxu0 0.0
        %583 = vmatpush1.msra.mxu0 0.0
        %584 = vmatprep.subr.mxu0 0.0
        %585 = vmatpush1.msra.mxu0 0.0
        %586 = vmatprep.subr.mxu0 0.0
        %587 = vmatpush1.msra.mxu0 0.0
        %588 = vmatprep.subr.mxu0 0.0
        %589 = vmatpush1.msra.mxu0 0.0
        %590 = vmatprep.subr.mxu0 0.0
        %591 = vmatpush1.msra.mxu0 0.0
        %592 = vmatprep.subr.mxu0 0.0
        %593 = vmatpush1.msra.mxu0 0.0
        %594 = vmatprep.subr.mxu0 0.0
        %595 = vmatpush1.msra.mxu0 0.0
        %596 = vmatprep.mubr.f32.mxu0 0.0
        %597 = vmatmul.mubr.f32.gmra.mrb[0].mxu0 %v530
        %v598 = vpop.f32.mrb[0].mxu0
        %v599 = vadd.f32 0.0, %v598
        %v600 = vpop.f32.mrb[0].mxu0
        %601 = vdwg.mxu0
        %v602 = vtanh.pop %v599
        %v603 = vld [vmem:[%s5] sm:$0xff]
        %v604 = vld [vmem:[%s5 + $0x8] sm:$0xff]
        %v605 = vld [vmem:[%s5 + $0x10] sm:$0xff]
        %v606 = vld [vmem:[%s5 + $0x18] sm:$0xff]
        %v608 = vsel %vm450, %v445, 0
        %610 = vmatprep.subr.mxu0 0.0
        %611 = vmatpush1.msra.mxu0 %v603
        %612 = vmatprep.subr.mxu0 0.0
        %613 = vmatpush1.msra.mxu0 %v604
        %614 = vmatprep.subr.mxu0 0.0
        %615 = vmatpush1.msra.mxu0 %v605
        %616 = vmatprep.subr.mxu0 0.0
        %617 = vmatpush1.msra.mxu0 %v606
        %618 = vmatprep.subr.mxu0 0.0
        %619 = vmatpush1.msra.mxu0 0.0
        %620 = vmatprep.subr.mxu0 0.0
        %621 = vmatpush1.msra.mxu0 0.0
        %622 = vmatprep.subr.mxu0 0.0
        %623 = vmatpush1.msra.mxu0 0.0
        %624 = vmatprep.subr.mxu0 0.0
        %625 = vmatpush1.msra.mxu0 0.0
        %626 = vmatprep.subr.mxu0 0.0
        %627 = vmatpush1.msra.mxu0 0.0
        %628 = vmatprep.subr.mxu0 0.0
        %629 = vmatpush1.msra.mxu0 0.0
        %630 = vmatprep.subr.mxu0 0.0
        %631 = vmatpush1.msra.mxu0 0.0
        %632 = vmatprep.subr.mxu0 0.0
        %633 = vmatpush1.msra.mxu0 0.0
        %634 = vmatprep.subr.mxu0 0.0
        %635 = vmatpush1.msra.mxu0 0.0
        %636 = vmatprep.subr.mxu0 0.0
        %637 = vmatpush1.msra.mxu0 0.0
        %638 = vmatprep.subr.mxu0 0.0
        %639 = vmatpush1.msra.mxu0 0.0
        %640 = vmatprep.subr.mxu0 0.0
        %641 = vmatpush1.msra.mxu0 0.0
        %642 = vmatprep.subr.mxu0 0.0
        %643 = vmatpush1.msra.mxu0 0.0
        %644 = vmatprep.subr.mxu0 0.0
        %645 = vmatpush1.msra.mxu0 0.0
        %646 = vmatprep.subr.mxu0 0.0
        %647 = vmatpush1.msra.mxu0 0.0
        %648 = vmatprep.subr.mxu0 0.0
        %649 = vmatpush1.msra.mxu0 0.0
        %650 = vmatprep.subr.mxu0 0.0
        %651 = vmatpush1.msra.mxu0 0.0
        %652 = vmatprep.subr.mxu0 0.0
        %653 = vmatpush1.msra.mxu0 0.0
        %654 = vmatprep.subr.mxu0 0.0
        %655 = vmatpush1.msra.mxu0 0.0
        %656 = vmatprep.subr.mxu0 0.0
        %657 = vmatpush1.msra.mxu0 0.0
        %658 = vmatprep.subr.mxu0 0.0
        %659 = vmatpush1.msra.mxu0 0.0
        %660 = vmatprep.subr.mxu0 0.0
        %661 = vmatpush1.msra.mxu0 0.0
        %662 = vmatprep.subr.mxu0 0.0
        %663 = vmatpush1.msra.mxu0 0.0
        %664 = vmatprep.subr.mxu0 0.0
        %665 = vmatpush1.msra.mxu0 0.0
        %666 = vmatprep.subr.mxu0 0.0
        %667 = vmatpush1.msra.mxu0 0.0
        %668 = vmatprep.subr.mxu0 0.0
        %669 = vmatpush1.msra.mxu0 0.0
        %670 = vmatprep.subr.mxu0 0.0
        %671 = vmatpush1.msra.mxu0 0.0
        %672 = vmatprep.subr.mxu0 0.0
        %673 = vmatpush1.msra.mxu0 0.0
        %674 = vmatprep.mubr.f32.mxu0 0.0
        %675 = vmatmul.mubr.f32.gmra.mrb[0].mxu0 %v608
        %v676 = vpop.f32.mrb[0].mxu0
        %v677 = vadd.f32 0.0, %v676
        %v678 = vpop.f32.mrb[0].mxu0
        %679 = vdwg.mxu0
        %v680 = vtanh.pop %v677
        %v681 = vld [vmem:[%s6] sm:$0xff]
        %v682 = vld [vmem:[%s6 + $0x8] sm:$0xff]
        %v683 = vld [vmem:[%s6 + $0x10] sm:$0xff]
        %v684 = vld [vmem:[%s6 + $0x18] sm:$0xff]
        %v685 = vld [vmem:[%s6 + $0x20] sm:$0xff]
        %v686 = vld [vmem:[%s6 + $0x28] sm:$0xff]
        %v687 = vld [vmem:[%s6 + $0x30] sm:$0xff]
        %v688 = vld [vmem:[%s6 + $0x38] sm:$0xff]
        %v689 = vld [vmem:[%s6 + $0x40] sm:$0xff]
        %v690 = vld [vmem:[%s6 + $0x48] sm:$0xff]
        %v691 = vld [vmem:[%s6 + $0x50] sm:$0xff]
        %v692 = vld [vmem:[%s6 + $0x58] sm:$0xff]
        %693 = vmatprep.subr.mxu0 0.0
        %694 = vmatpush1.msra.mxu0 %v685
        %695 = vmatprep.subr.mxu0 0.0
        %696 = vmatpush1.msra.mxu0 %v686
        %697 = vmatprep.subr.mxu0 0.0
        %698 = vmatpush1.msra.mxu0 %v687
        %699 = vmatprep.subr.mxu0 0.0
        %700 = vmatpush1.msra.mxu0 %v688
        %701 = vmatprep.subr.mxu0 0.0
        %702 = vmatpush1.msra.mxu0 0.0
        %703 = vmatprep.subr.mxu0 0.0
        %704 = vmatpush1.msra.mxu0 0.0
        %705 = vmatprep.subr.mxu0 0.0
        %706 = vmatpush1.msra.mxu0 0.0
        %707 = vmatprep.subr.mxu0 0.0
        %708 = vmatpush1.msra.mxu0 0.0
        %709 = vmatprep.subr.mxu0 0.0
        %710 = vmatpush1.msra.mxu0 0.0
        %711 = vmatprep.subr.mxu0 0.0
        %712 = vmatpush1.msra.mxu0 0.0
        %713 = vmatprep.subr.mxu0 0.0
        %714 = vmatpush1.msra.mxu0 0.0
        %715 = vmatprep.subr.mxu0 0.0
        %716 = vmatpush1.msra.mxu0 0.0
        %717 = vmatprep.subr.mxu0 0.0
        %718 = vmatpush1.msra.mxu0 0.0
        %719 = vmatprep.subr.mxu0 0.0
        %720 = vmatpush1.msra.mxu0 0.0
        %721 = vmatprep.subr.mxu0 0.0
        %722 = vmatpush1.msra.mxu0 0.0
        %723 = vmatprep.subr.mxu0 0.0
        %724 = vmatpush1.msra.mxu0 0.0
        %725 = vmatprep.subr.mxu0 0.0
        %726 = vmatpush1.msra.mxu0 0.0
        %727 = vmatprep.subr.mxu0 0.0
        %728 = vmatpush1.msra.mxu0 0.0
        %729 = vmatprep.subr.mxu0 0.0
        %730 = vmatpush1.msra.mxu0 0.0
        %731 = vmatprep.subr.mxu0 0.0
        %732 = vmatpush1.msra.mxu0 0.0
        %733 = vmatprep.subr.mxu0 0.0
        %734 = vmatpush1.msra.mxu0 0.0
        %735 = vmatprep.subr.mxu0 0.0
        %736 = vmatpush1.msra.mxu0 0.0
        %737 = vmatprep.subr.mxu0 0.0
        %738 = vmatpush1.msra.mxu0 0.0
        %739 = vmatprep.subr.mxu0 0.0
        %740 = vmatpush1.msra.mxu0 0.0
        %741 = vmatprep.subr.mxu0 0.0
        %742 = vmatpush1.msra.mxu0 0.0
        %743 = vmatprep.subr.mxu0 0.0
        %744 = vmatpush1.msra.mxu0 0.0
        %745 = vmatprep.subr.mxu0 0.0
        %746 = vmatpush1.msra.mxu0 0.0
        %747 = vmatprep.subr.mxu0 0.0
        %748 = vmatpush1.msra.mxu0 0.0
        %749 = vmatprep.subr.mxu0 0.0
        %750 = vmatpush1.msra.mxu0 0.0
        %751 = vmatprep.subr.mxu0 0.0
        %752 = vmatpush1.msra.mxu0 0.0
        %753 = vmatprep.subr.mxu0 0.0
        %754 = vmatpush1.msra.mxu0 0.0
        %755 = vmatprep.subr.mxu0 0.0
        %756 = vmatpush1.msra.mxu0 0.0
        %757 = vmatprep.mubr.f32.mxu0 0.0
        %758 = vmatmul.mubr.f32.gmra.mrb[0].mxu0 %v530
        %v759 = vpop.f32.mrb[0].mxu0
        %v760 = vadd.f32 0.0, %v759
        %v761 = vpop.f32.mrb[0].mxu0
        %762 = vdwg.mxu0
        %763 = vmatprep.subr.mxu0 0.0
        %764 = vmatpush1.msra.mxu0 %v681
        %765 = vmatprep.subr.mxu0 0.0
        %766 = vmatpush1.msra.mxu0 %v682
        %767 = vmatprep.subr.mxu0 0.0
        %768 = vmatpush1.msra.mxu0 %v683
        %769 = vmatprep.subr.mxu0 0.0
        %770 = vmatpush1.msra.mxu0 %v684
        %771 = vmatprep.subr.mxu0 0.0
        %772 = vmatpush1.msra.mxu0 0.0
        %773 = vmatprep.subr.mxu0 0.0
        %774 = vmatpush1.msra.mxu0 0.0
        %775 = vmatprep.subr.mxu0 0.0
        %776 = vmatpush1.msra.mxu0 0.0
        %777 = vmatprep.subr.mxu0 0.0
        %778 = vmatpush1.msra.mxu0 0.0
        %779 = vmatprep.subr.mxu0 0.0
        %780 = vmatpush1.msra.mxu0 0.0
        %781 = vmatprep.subr.mxu0 0.0
        %782 = vmatpush1.msra.mxu0 0.0
        %783 = vmatprep.subr.mxu0 0.0
        %784 = vmatpush1.msra.mxu0 0.0
        %785 = vmatprep.subr.mxu0 0.0
        %786 = vmatpush1.msra.mxu0 0.0
        %787 = vmatprep.subr.mxu0 0.0
        %788 = vmatpush1.msra.mxu0 0.0
        %789 = vmatprep.subr.mxu0 0.0
        %790 = vmatpush1.msra.mxu0 0.0
        %791 = vmatprep.subr.mxu0 0.0
        %792 = vmatpush1.msra.mxu0 0.0
        %793 = vmatprep.subr.mxu0 0.0
        %794 = vmatpush1.msra.mxu0 0.0
        %795 = vmatprep.subr.mxu0 0.0
        %796 = vmatpush1.msra.mxu0 0.0
        %797 = vmatprep.subr.mxu0 0.0
        %798 = vmatpush1.msra.mxu0 0.0
        %799 = vmatprep.subr.mxu0 0.0
        %800 = vmatpush1.msra.mxu0 0.0
        %801 = vmatprep.subr.mxu0 0.0
        %802 = vmatpush1.msra.mxu0 0.0
        %803 = vmatprep.subr.mxu0 0.0
        %804 = vmatpush1.msra.mxu0 0.0
        %805 = vmatprep.subr.mxu0 0.0
        %806 = vmatpush1.msra.mxu0 0.0
        %807 = vmatprep.subr.mxu0 0.0
        %808 = vmatpush1.msra.mxu0 0.0
        %809 = vmatprep.subr.mxu0 0.0
        %810 = vmatpush1.msra.mxu0 0.0
        %811 = vmatprep.subr.mxu0 0.0
        %812 = vmatpush1.msra.mxu0 0.0
        %813 = vmatprep.subr.mxu0 0.0
        %814 = vmatpush1.msra.mxu0 0.0
        %815 = vmatprep.subr.mxu0 0.0
        %816 = vmatpush1.msra.mxu0 0.0
        %817 = vmatprep.subr.mxu0 0.0
        %818 = vmatpush1.msra.mxu0 0.0
        %819 = vmatprep.subr.mxu0 0.0
        %820 = vmatpush1.msra.mxu0 0.0
        %821 = vmatprep.subr.mxu0 0.0
        %822 = vmatpush1.msra.mxu0 0.0
        %823 = vmatprep.subr.mxu0 0.0
        %824 = vmatpush1.msra.mxu0 0.0
        %825 = vmatprep.subr.mxu0 0.0
        %826 = vmatpush1.msra.mxu0 0.0
        %827 = vmatprep.mubr.f32.mxu0 0.0
        %828 = vmatmul.mubr.f32.gmra.mrb[0].mxu0 %v452
        %v829 = vpop.f32.mrb[0].mxu0
        %v830 = vadd.f32 %v760, %v829
        %v831 = vpop.f32.mrb[0].mxu0
        %832 = vdwg.mxu0
        %833 = vmatprep.subr.mxu0 0.0
        %834 = vmatpush1.msra.mxu0 %v689
        %835 = vmatprep.subr.mxu0 0.0
        %836 = vmatpush1.msra.mxu0 %v690
        %837 = vmatprep.subr.mxu0 0.0
        %838 = vmatpush1.msra.mxu0 %v691
        %839 = vmatprep.subr.mxu0 0.0
        %840 = vmatpush1.msra.mxu0 %v692
        %841 = vmatprep.subr.mxu0 0.0
        %842 = vmatpush1.msra.mxu0 0.0
        %843 = vmatprep.subr.mxu0 0.0
        %844 = vmatpush1.msra.mxu0 0.0
        %845 = vmatprep.subr.mxu0 0.0
        %846 = vmatpush1.msra.mxu0 0.0
        %847 = vmatprep.subr.mxu0 0.0
        %848 = vmatpush1.msra.mxu0 0.0
        %849 = vmatprep.subr.mxu0 0.0
        %850 = vmatpush1.msra.mxu0 0.0
        %851 = vmatprep.subr.mxu0 0.0
        %852 = vmatpush1.msra.mxu0 0.0
        %853 = vmatprep.subr.mxu0 0.0
        %854 = vmatpush1.msra.mxu0 0.0
        %855 = vmatprep.subr.mxu0 0.0
        %856 = vmatpush1.msra.mxu0 0.0
        %857 = vmatprep.subr.mxu0 0.0
        %858 = vmatpush1.msra.mxu0 0.0
        %859 = vmatprep.subr.mxu0 0.0
        %860 = vmatpush1.msra.mxu0 0.0
        %861 = vmatprep.subr.mxu0 0.0
        %862 = vmatpush1.msra.mxu0 0.0
        %863 = vmatprep.subr.mxu0 0.0
        %864 = vmatpush1.msra.mxu0 0.0
        %865 = vmatprep.subr.mxu0 0.0
        %866 = vmatpush1.msra.mxu0 0.0
        %867 = vmatprep.subr.mxu0 0.0
        %868 = vmatpush1.msra.mxu0 0.0
        %869 = vmatprep.subr.mxu0 0.0
        %870 = vmatpush1.msra.mxu0 0.0
        %871 = vmatprep.subr.mxu0 0.0
        %872 = vmatpush1.msra.mxu0 0.0
        %873 = vmatprep.subr.mxu0 0.0
        %874 = vmatpush1.msra.mxu0 0.0
        %875 = vmatprep.subr.mxu0 0.0
        %876 = vmatpush1.msra.mxu0 0.0
        %877 = vmatprep.subr.mxu0 0.0
        %878 = vmatpush1.msra.mxu0 0.0
        %879 = vmatprep.subr.mxu0 0.0
        %880 = vmatpush1.msra.mxu0 0.0
        %881 = vmatprep.subr.mxu0 0.0
        %882 = vmatpush1.msra.mxu0 0.0
        %883 = vmatprep.subr.mxu0 0.0
        %884 = vmatpush1.msra.mxu0 0.0
        %885 = vmatprep.subr.mxu0 0.0
        %886 = vmatpush1.msra.mxu0 0.0
        %887 = vmatprep.subr.mxu0 0.0
        %888 = vmatpush1.msra.mxu0 0.0
        %889 = vmatprep.subr.mxu0 0.0
        %890 = vmatpush1.msra.mxu0 0.0
        %891 = vmatprep.subr.mxu0 0.0
        %892 = vmatpush1.msra.mxu0 0.0
        %893 = vmatprep.subr.mxu0 0.0
        %894 = vmatpush1.msra.mxu0 0.0
        %895 = vmatprep.subr.mxu0 0.0
        %896 = vmatpush1.msra.mxu0 0.0
        %897 = vmatprep.mubr.f32.mxu0 0.0
        %898 = vmatmul.mubr.f32.gmra.mrb[0].mxu0 %v608
        %v899 = vpop.f32.mrb[0].mxu0
        %v900 = vadd.f32 0.0, %v899
        %v901 = vpop.f32.mrb[0].mxu0
        %902 = vdwg.mxu0
        %v903 = vadd.f32 %v830, %v900
        %v904 = vxor.u32 %v903, 2147483648
        %v905 = vmul.f32 %v904, 1.442695
        %v906 = vpow.pop %v905
        %v907 = vadd.f32 %v906, 1.0
        %v908 = vrcp.pop %v907
        %v909 = vmul.f32 1.0, %v908
        %v910 = vmul.f32 %v909, %v524
        %v911 = vld [vmem:[%s7] sm:$0xff]
        %v912 = vld [vmem:[%s7 + $0x8] sm:$0xff]
        %v913 = vld [vmem:[%s7 + $0x10] sm:$0xff]
        %v914 = vld [vmem:[%s7 + $0x18] sm:$0xff]
        %v915 = vld [vmem:[%s7 + $0x20] sm:$0xff]
        %v916 = vld [vmem:[%s7 + $0x28] sm:$0xff]
        %v917 = vld [vmem:[%s7 + $0x30] sm:$0xff]
        %v918 = vld [vmem:[%s7 + $0x38] sm:$0xff]
        %v919 = vld [vmem:[%s7 + $0x40] sm:$0xff]
        %v920 = vld [vmem:[%s7 + $0x48] sm:$0xff]
        %v921 = vld [vmem:[%s7 + $0x50] sm:$0xff]
        %v922 = vld [vmem:[%s7 + $0x58] sm:$0xff]
        %923 = vmatprep.subr.mxu0 0.0
        %924 = vmatpush1.msra.mxu0 %v915
        %925 = vmatprep.subr.mxu0 0.0
        %926 = vmatpush1.msra.mxu0 %v916
        %927 = vmatprep.subr.mxu0 0.0
        %928 = vmatpush1.msra.mxu0 %v917
        %929 = vmatprep.subr.mxu0 0.0
        %930 = vmatpush1.msra.mxu0 %v918
        %931 = vmatprep.subr.mxu0 0.0
        %932 = vmatpush1.msra.mxu0 0.0
        %933 = vmatprep.subr.mxu0 0.0
        %934 = vmatpush1.msra.mxu0 0.0
        %935 = vmatprep.subr.mxu0 0.0
        %936 = vmatpush1.msra.mxu0 0.0
        %937 = vmatprep.subr.mxu0 0.0
        %938 = vmatpush1.msra.mxu0 0.0
        %939 = vmatprep.subr.mxu0 0.0
        %940 = vmatpush1.msra.mxu0 0.0
        %941 = vmatprep.subr.mxu0 0.0
        %942 = vmatpush1.msra.mxu0 0.0
        %943 = vmatprep.subr.mxu0 0.0
        %944 = vmatpush1.msra.mxu0 0.0
        %945 = vmatprep.subr.mxu0 0.0
        %946 = vmatpush1.msra.mxu0 0.0
        %947 = vmatprep.subr.mxu0 0.0
        %948 = vmatpush1.msra.mxu0 0.0
        %949 = vmatprep.subr.mxu0 0.0
        %950 = vmatpush1.msra.mxu0 0.0
        %951 = vmatprep.subr.mxu0 0.0
        %952 = vmatpush1.msra.mxu0 0.0
        %953 = vmatprep.subr.mxu0 0.0
        %954 = vmatpush1.msra.mxu0 0.0
        %955 = vmatprep.subr.mxu0 0.0
        %956 = vmatpush1.msra.mxu0 0.0
        %957 = vmatprep.subr.mxu0 0.0
        %958 = vmatpush1.msra.mxu0 0.0
        %959 = vmatprep.subr.mxu0 0.0
        %960 = vmatpush1.msra.mxu0 0.0
        %961 = vmatprep.subr.mxu0 0.0
        %962 = vmatpush1.msra.mxu0 0.0
        %963 = vmatprep.subr.mxu0 0.0
        %964 = vmatpush1.msra.mxu0 0.0
        %965 = vmatprep.subr.mxu0 0.0
        %966 = vmatpush1.msra.mxu0 0.0
        %967 = vmatprep.subr.mxu0 0.0
        %968 = vmatpush1.msra.mxu0 0.0
        %969 = vmatprep.subr.mxu0 0.0
        %970 = vmatpush1.msra.mxu0 0.0
        %971 = vmatprep.subr.mxu0 0.0
        %972 = vmatpush1.msra.mxu0 0.0
        %973 = vmatprep.subr.mxu0 0.0
        %974 = vmatpush1.msra.mxu0 0.0
        %975 = vmatprep.subr.mxu0 0.0
        %976 = vmatpush1.msra.mxu0 0.0
        %977 = vmatprep.subr.mxu0 0.0
        %978 = vmatpush1.msra.mxu0 0.0
        %979 = vmatprep.subr.mxu0 0.0
        %980 = vmatpush1.msra.mxu0 0.0
        %981 = vmatprep.subr.mxu0 0.0
        %982 = vmatpush1.msra.mxu0 0.0
        %983 = vmatprep.subr.mxu0 0.0
        %984 = vmatpush1.msra.mxu0 0.0
        %985 = vmatprep.subr.mxu0 0.0
        %986 = vmatpush1.msra.mxu0 0.0
        %987 = vmatprep.mubr.f32.mxu0 0.0
        %988 = vmatmul.mubr.f32.gmra.mrb[0].mxu0 %v530
        %v989 = vpop.f32.mrb[0].mxu0
        %v990 = vadd.f32 0.0, %v989
        %v991 = vpop.f32.mrb[0].mxu0
        %992 = vdwg.mxu0
        %993 = vmatprep.subr.mxu0 0.0
        %994 = vmatpush1.msra.mxu0 %v911
        %995 = vmatprep.subr.mxu0 0.0
        %996 = vmatpush1.msra.mxu0 %v912
        %997 = vmatprep.subr.mxu0 0.0
        %998 = vmatpush1.msra.mxu0 %v913
        %999 = vmatprep.subr.mxu0 0.0
        %1000 = vmatpush1.msra.mxu0 %v914
        %1001 = vmatprep.subr.mxu0 0.0
        %1002 = vmatpush1.msra.mxu0 0.0
        %1003 = vmatprep.subr.mxu0 0.0
        %1004 = vmatpush1.msra.mxu0 0.0
        %1005 = vmatprep.subr.mxu0 0.0
        %1006 = vmatpush1.msra.mxu0 0.0
        %1007 = vmatprep.subr.mxu0 0.0
        %1008 = vmatpush1.msra.mxu0 0.0
        %1009 = vmatprep.subr.mxu0 0.0
        %1010 = vmatpush1.msra.mxu0 0.0
        %1011 = vmatprep.subr.mxu0 0.0
        %1012 = vmatpush1.msra.mxu0 0.0
        %1013 = vmatprep.subr.mxu0 0.0
        %1014 = vmatpush1.msra.mxu0 0.0
        %1015 = vmatprep.subr.mxu0 0.0
        %1016 = vmatpush1.msra.mxu0 0.0
        %1017 = vmatprep.subr.mxu0 0.0
        %1018 = vmatpush1.msra.mxu0 0.0
        %1019 = vmatprep.subr.mxu0 0.0
        %1020 = vmatpush1.msra.mxu0 0.0
        %1021 = vmatprep.subr.mxu0 0.0
        %1022 = vmatpush1.msra.mxu0 0.0
        %1023 = vmatprep.subr.mxu0 0.0
        %1024 = vmatpush1.msra.mxu0 0.0
        %1025 = vmatprep.subr.mxu0 0.0
        %1026 = vmatpush1.msra.mxu0 0.0
        %1027 = vmatprep.subr.mxu0 0.0
        %1028 = vmatpush1.msra.mxu0 0.0
        %1029 = vmatprep.subr.mxu0 0.0
        %1030 = vmatpush1.msra.mxu0 0.0
        %1031 = vmatprep.subr.mxu0 0.0
        %1032 = vmatpush1.msra.mxu0 0.0
        %1033 = vmatprep.subr.mxu0 0.0
        %1034 = vmatpush1.msra.mxu0 0.0
        %1035 = vmatprep.subr.mxu0 0.0
        %1036 = vmatpush1.msra.mxu0 0.0
        %1037 = vmatprep.subr.mxu0 0.0
        %1038 = vmatpush1.msra.mxu0 0.0
        %1039 = vmatprep.subr.mxu0 0.0
        %1040 = vmatpush1.msra.mxu0 0.0
        %1041 = vmatprep.subr.mxu0 0.0
        %1042 = vmatpush1.msra.mxu0 0.0
        %1043 = vmatprep.subr.mxu0 0.0
        %1044 = vmatpush1.msra.mxu0 0.0
        %1045 = vmatprep.subr.mxu0 0.0
        %1046 = vmatpush1.msra.mxu0 0.0
        %1047 = vmatprep.subr.mxu0 0.0
        %1048 = vmatpush1.msra.mxu0 0.0
        %1049 = vmatprep.subr.mxu0 0.0
        %1050 = vmatpush1.msra.mxu0 0.0
        %1051 = vmatprep.subr.mxu0 0.0
        %1052 = vmatpush1.msra.mxu0 0.0
        %1053 = vmatprep.subr.mxu0 0.0
        %1054 = vmatpush1.msra.mxu0 0.0
        %1055 = vmatprep.subr.mxu0 0.0
        %1056 = vmatpush1.msra.mxu0 0.0
        %1057 = vmatprep.mubr.f32.mxu0 0.0
        %1058 = vmatmul.mubr.f32.gmra.mrb[0].mxu0 %v452
        %v1059 = vpop.f32.mrb[0].mxu0
        %v1060 = vadd.f32 %v990, %v1059
        %v1061 = vpop.f32.mrb[0].mxu0
        %1062 = vdwg.mxu0
        %1063 = vmatprep.subr.mxu0 0.0
        %1064 = vmatpush1.msra.mxu0 %v919
        %1065 = vmatprep.subr.mxu0 0.0
        %1066 = vmatpush1.msra.mxu0 %v920
        %1067 = vmatprep.subr.mxu0 0.0
        %1068 = vmatpush1.msra.mxu0 %v921
        %1069 = vmatprep.subr.mxu0 0.0
        %1070 = vmatpush1.msra.mxu0 %v922
        %1071 = vmatprep.subr.mxu0 0.0
        %1072 = vmatpush1.msra.mxu0 0.0
        %1073 = vmatprep.subr.mxu0 0.0
        %1074 = vmatpush1.msra.mxu0 0.0
        %1075 = vmatprep.subr.mxu0 0.0
        %1076 = vmatpush1.msra.mxu0 0.0
        %1077 = vmatprep.subr.mxu0 0.0
        %1078 = vmatpush1.msra.mxu0 0.0
        %1079 = vmatprep.subr.mxu0 0.0
        %1080 = vmatpush1.msra.mxu0 0.0
        %1081 = vmatprep.subr.mxu0 0.0
        %1082 = vmatpush1.msra.mxu0 0.0
        %1083 = vmatprep.subr.mxu0 0.0
        %1084 = vmatpush1.msra.mxu0 0.0
        %1085 = vmatprep.subr.mxu0 0.0
        %1086 = vmatpush1.msra.mxu0 0.0
        %1087 = vmatprep.subr.mxu0 0.0
        %1088 = vmatpush1.msra.mxu0 0.0
        %1089 = vmatprep.subr.mxu0 0.0
        %1090 = vmatpush1.msra.mxu0 0.0
        %1091 = vmatprep.subr.mxu0 0.0
        %1092 = vmatpush1.msra.mxu0 0.0
        %1093 = vmatprep.subr.mxu0 0.0
        %1094 = vmatpush1.msra.mxu0 0.0
        %1095 = vmatprep.subr.mxu0 0.0
        %1096 = vmatpush1.msra.mxu0 0.0
        %1097 = vmatprep.subr.mxu0 0.0
        %1098 = vmatpush1.msra.mxu0 0.0
        %1099 = vmatprep.subr.mxu0 0.0
        %1100 = vmatpush1.msra.mxu0 0.0
        %1101 = vmatprep.subr.mxu0 0.0
        %1102 = vmatpush1.msra.mxu0 0.0
        %1103 = vmatprep.subr.mxu0 0.0
        %1104 = vmatpush1.msra.mxu0 0.0
        %1105 = vmatprep.subr.mxu0 0.0
        %1106 = vmatpush1.msra.mxu0 0.0
        %1107 = vmatprep.subr.mxu0 0.0
        %1108 = vmatpush1.msra.mxu0 0.0
        %1109 = vmatprep.subr.mxu0 0.0
        %1110 = vmatpush1.msra.mxu0 0.0
        %1111 = vmatprep.subr.mxu0 0.0
        %1112 = vmatpush1.msra.mxu0 0.0
        %1113 = vmatprep.subr.mxu0 0.0
        %1114 = vmatpush1.msra.mxu0 0.0
        %1115 = vmatprep.subr.mxu0 0.0
        %1116 = vmatpush1.msra.mxu0 0.0
        %1117 = vmatprep.subr.mxu0 0.0
        %1118 = vmatpush1.msra.mxu0 0.0
        %1119 = vmatprep.subr.mxu0 0.0
        %1120 = vmatpush1.msra.mxu0 0.0
        %1121 = vmatprep.subr.mxu0 0.0
        %1122 = vmatpush1.msra.mxu0 0.0
        %1123 = vmatprep.subr.mxu0 0.0
        %1124 = vmatpush1.msra.mxu0 0.0
        %1125 = vmatprep.subr.mxu0 0.0
        %1126 = vmatpush1.msra.mxu0 0.0
        %1127 = vmatprep.mubr.f32.mxu0 0.0
        %1128 = vmatmul.mubr.f32.gmra.mrb[0].mxu0 %v608
        %v1129 = vpop.f32.mrb[0].mxu0
        %v1130 = vadd.f32 0.0, %v1129
        %v1131 = vpop.f32.mrb[0].mxu0
        %1132 = vdwg.mxu0
        %v1133 = vadd.f32 %v1060, %v1130
        %v1134 = vxor.u32 %v1133, 2147483648
        %v1135 = vmul.f32 %v1134, 1.442695
        %v1136 = vpow.pop %v1135
        %v1137 = vadd.f32 %v1136, 1.0
        %v1138 = vrcp.pop %v1137
        %v1139 = vmul.f32 1.0, %v1138
        %v1140 = vmul.f32 %v1139, %v602
        %v1141 = vld [vmem:[%s8] sm:$0xff]
        %v1142 = vld [vmem:[%s8 + $0x8] sm:$0xff]
        %v1143 = vld [vmem:[%s8 + $0x10] sm:$0xff]
        %v1144 = vld [vmem:[%s8 + $0x18] sm:$0xff]
        %v1145 = vld [vmem:[%s8 + $0x20] sm:$0xff]
        %v1146 = vld [vmem:[%s8 + $0x28] sm:$0xff]
        %v1147 = vld [vmem:[%s8 + $0x30] sm:$0xff]
        %v1148 = vld [vmem:[%s8 + $0x38] sm:$0xff]
        %v1149 = vld [vmem:[%s8 + $0x40] sm:$0xff]
        %v1150 = vld [vmem:[%s8 + $0x48] sm:$0xff]
        %v1151 = vld [vmem:[%s8 + $0x50] sm:$0xff]
        %v1152 = vld [vmem:[%s8 + $0x58] sm:$0xff]
        %1153 = vmatprep.subr.mxu0 0.0
        %1154 = vmatpush1.msra.mxu0 %v1145
        %1155 = vmatprep.subr.mxu0 0.0
        %1156 = vmatpush1.msra.mxu0 %v1146
        %1157 = vmatprep.subr.mxu0 0.0
        %1158 = vmatpush1.msra.mxu0 %v1147
        %1159 = vmatprep.subr.mxu0 0.0
        %1160 = vmatpush1.msra.mxu0 %v1148
        %1161 = vmatprep.subr.mxu0 0.0
        %1162 = vmatpush1.msra.mxu0 0.0
        %1163 = vmatprep.subr.mxu0 0.0
        %1164 = vmatpush1.msra.mxu0 0.0
        %1165 = vmatprep.subr.mxu0 0.0
        %1166 = vmatpush1.msra.mxu0 0.0
        %1167 = vmatprep.subr.mxu0 0.0
        %1168 = vmatpush1.msra.mxu0 0.0
        %1169 = vmatprep.subr.mxu0 0.0
        %1170 = vmatpush1.msra.mxu0 0.0
        %1171 = vmatprep.subr.mxu0 0.0
        %1172 = vmatpush1.msra.mxu0 0.0
        %1173 = vmatprep.subr.mxu0 0.0
        %1174 = vmatpush1.msra.mxu0 0.0
        %1175 = vmatprep.subr.mxu0 0.0
        %1176 = vmatpush1.msra.mxu0 0.0
        %1177 = vmatprep.subr.mxu0 0.0
        %1178 = vmatpush1.msra.mxu0 0.0
        %1179 = vmatprep.subr.mxu0 0.0
        %1180 = vmatpush1.msra.mxu0 0.0
        %1181 = vmatprep.subr.mxu0 0.0
        %1182 = vmatpush1.msra.mxu0 0.0
        %1183 = vmatprep.subr.mxu0 0.0
        %1184 = vmatpush1.msra.mxu0 0.0
        %1185 = vmatprep.subr.mxu0 0.0
        %1186 = vmatpush1.msra.mxu0 0.0
        %1187 = vmatprep.subr.mxu0 0.0
        %1188 = vmatpush1.msra.mxu0 0.0
        %1189 = vmatprep.subr.mxu0 0.0
        %1190 = vmatpush1.msra.mxu0 0.0
        %1191 = vmatprep.subr.mxu0 0.0
        %1192 = vmatpush1.msra.mxu0 0.0
        %1193 = vmatprep.subr.mxu0 0.0
        %1194 = vmatpush1.msra.mxu0 0.0
        %1195 = vmatprep.subr.mxu0 0.0
        %1196 = vmatpush1.msra.mxu0 0.0
        %1197 = vmatprep.subr.mxu0 0.0
        %1198 = vmatpush1.msra.mxu0 0.0
        %1199 = vmatprep.subr.mxu0 0.0
        %1200 = vmatpush1.msra.mxu0 0.0
        %1201 = vmatprep.subr.mxu0 0.0
        %1202 = vmatpush1.msra.mxu0 0.0
        %1203 = vmatprep.subr.mxu0 0.0
        %1204 = vmatpush1.msra.mxu0 0.0
        %1205 = vmatprep.subr.mxu0 0.0
        %1206 = vmatpush1.msra.mxu0 0.0
        %1207 = vmatprep.subr.mxu0 0.0
        %1208 = vmatpush1.msra.mxu0 0.0
        %1209 = vmatprep.subr.mxu0 0.0
        %1210 = vmatpush1.msra.mxu0 0.0
        %1211 = vmatprep.subr.mxu0 0.0
        %1212 = vmatpush1.msra.mxu0 0.0
        %1213 = vmatprep.subr.mxu0 0.0
        %1214 = vmatpush1.msra.mxu0 0.0
        %1215 = vmatprep.subr.mxu0 0.0
        %1216 = vmatpush1.msra.mxu0 0.0
        %1217 = vmatprep.mubr.f32.mxu0 0.0
        %1218 = vmatmul.mubr.f32.gmra.mrb[0].mxu0 %v530
        %v1219 = vpop.f32.mrb[0].mxu0
        %v1220 = vadd.f32 0.0, %v1219
        %v1221 = vpop.f32.mrb[0].mxu0
        %1222 = vdwg.mxu0
        %1223 = vmatprep.subr.mxu0 0.0
        %1224 = vmatpush1.msra.mxu0 %v1141
        %1225 = vmatprep.subr.mxu0 0.0
        %1226 = vmatpush1.msra.mxu0 %v1142
        %1227 = vmatprep.subr.mxu0 0.0
        %1228 = vmatpush1.msra.mxu0 %v1143
        %1229 = vmatprep.subr.mxu0 0.0
        %1230 = vmatpush1.msra.mxu0 %v1144
        %1231 = vmatprep.subr.mxu0 0.0
        %1232 = vmatpush1.msra.mxu0 0.0
        %1233 = vmatprep.subr.mxu0 0.0
        %1234 = vmatpush1.msra.mxu0 0.0
        %1235 = vmatprep.subr.mxu0 0.0
        %1236 = vmatpush1.msra.mxu0 0.0
        %1237 = vmatprep.subr.mxu0 0.0
        %1238 = vmatpush1.msra.mxu0 0.0
        %1239 = vmatprep.subr.mxu0 0.0
        %1240 = vmatpush1.msra.mxu0 0.0
        %1241 = vmatprep.subr.mxu0 0.0
        %1242 = vmatpush1.msra.mxu0 0.0
        %1243 = vmatprep.subr.mxu0 0.0
        %1244 = vmatpush1.msra.mxu0 0.0
        %1245 = vmatprep.subr.mxu0 0.0
        %1246 = vmatpush1.msra.mxu0 0.0
        %1247 = vmatprep.subr.mxu0 0.0
        %1248 = vmatpush1.msra.mxu0 0.0
        %1249 = vmatprep.subr.mxu0 0.0
        %1250 = vmatpush1.msra.mxu0 0.0
        %1251 = vmatprep.subr.mxu0 0.0
        %1252 = vmatpush1.msra.mxu0 0.0
        %1253 = vmatprep.subr.mxu0 0.0
        %1254 = vmatpush1.msra.mxu0 0.0
        %1255 = vmatprep.subr.mxu0 0.0
        %1256 = vmatpush1.msra.mxu0 0.0
        %1257 = vmatprep.subr.mxu0 0.0
        %1258 = vmatpush1.msra.mxu0 0.0
        %1259 = vmatprep.subr.mxu0 0.0
        %1260 = vmatpush1.msra.mxu0 0.0
        %1261 = vmatprep.subr.mxu0 0.0
        %1262 = vmatpush1.msra.mxu0 0.0
        %1263 = vmatprep.subr.mxu0 0.0
        %1264 = vmatpush1.msra.mxu0 0.0
        %1265 = vmatprep.subr.mxu0 0.0
        %1266 = vmatpush1.msra.mxu0 0.0
        %1267 = vmatprep.subr.mxu0 0.0
        %1268 = vmatpush1.msra.mxu0 0.0
        %1269 = vmatprep.subr.mxu0 0.0
        %1270 = vmatpush1.msra.mxu0 0.0
        %1271 = vmatprep.subr.mxu0 0.0
        %1272 = vmatpush1.msra.mxu0 0.0
        %1273 = vmatprep.subr.mxu0 0.0
        %1274 = vmatpush1.msra.mxu0 0.0
        %1275 = vmatprep.subr.mxu0 0.0
        %1276 = vmatpush1.msra.mxu0 0.0
        %1277 = vmatprep.subr.mxu0 0.0
        %1278 = vmatpush1.msra.mxu0 0.0
        %1279 = vmatprep.subr.mxu0 0.0
        %1280 = vmatpush1.msra.mxu0 0.0
        %1281 = vmatprep.subr.mxu0 0.0
        %1282 = vmatpush1.msra.mxu0 0.0
        %1283 = vmatprep.subr.mxu0 0.0
        %1284 = vmatpush1.msra.mxu0 0.0
        %1285 = vmatprep.subr.mxu0 0.0
        %1286 = vmatpush1.msra.mxu0 0.0
        %1287 = vmatprep.mubr.f32.mxu0 0.0
        %1288 = vmatmul.mubr.f32.gmra.mrb[0].mxu0 %v452
        %v1289 = vpop.f32.mrb[0].mxu0
        %v1290 = vadd.f32 %v1220, %v1289
        %v1291 = vpop.f32.mrb[0].mxu0
        %1292 = vdwg.mxu0
        %1293 = vmatprep.subr.mxu0 0.0
        %1294 = vmatpush1.msra.mxu0 %v1149
        %1295 = vmatprep.subr.mxu0 0.0
        %1296 = vmatpush1.msra.mxu0 %v1150
        %1297 = vmatprep.subr.mxu0 0.0
        %1298 = vmatpush1.msra.mxu0 %v1151
        %1299 = vmatprep.subr.mxu0 0.0
        %1300 = vmatpush1.msra.mxu0 %v1152
        %1301 = vmatprep.subr.mxu0 0.0
        %1302 = vmatpush1.msra.mxu0 0.0
        %1303 = vmatprep.subr.mxu0 0.0
        %1304 = vmatpush1.msra.mxu0 0.0
        %1305 = vmatprep.subr.mxu0 0.0
        %1306 = vmatpush1.msra.mxu0 0.0
        %1307 = vmatprep.subr.mxu0 0.0
        %1308 = vmatpush1.msra.mxu0 0.0
        %1309 = vmatprep.subr.mxu0 0.0
        %1310 = vmatpush1.msra.mxu0 0.0
        %1311 = vmatprep.subr.mxu0 0.0
        %1312 = vmatpush1.msra.mxu0 0.0
        %1313 = vmatprep.subr.mxu0 0.0
        %1314 = vmatpush1.msra.mxu0 0.0
        %1315 = vmatprep.subr.mxu0 0.0
        %1316 = vmatpush1.msra.mxu0 0.0
        %1317 = vmatprep.subr.mxu0 0.0
        %1318 = vmatpush1.msra.mxu0 0.0
        %1319 = vmatprep.subr.mxu0 0.0
        %1320 = vmatpush1.msra.mxu0 0.0
        %1321 = vmatprep.subr.mxu0 0.0
        %1322 = vmatpush1.msra.mxu0 0.0
        %1323 = vmatprep.subr.mxu0 0.0
        %1324 = vmatpush1.msra.mxu0 0.0
        %1325 = vmatprep.subr.mxu0 0.0
        %1326 = vmatpush1.msra.mxu0 0.0
        %1327 = vmatprep.subr.mxu0 0.0
        %1328 = vmatpush1.msra.mxu0 0.0
        %1329 = vmatprep.subr.mxu0 0.0
        %1330 = vmatpush1.msra.mxu0 0.0
        %1331 = vmatprep.subr.mxu0 0.0
        %1332 = vmatpush1.msra.mxu0 0.0
        %1333 = vmatprep.subr.mxu0 0.0
        %1334 = vmatpush1.msra.mxu0 0.0
        %1335 = vmatprep.subr.mxu0 0.0
        %1336 = vmatpush1.msra.mxu0 0.0
        %1337 = vmatprep.subr.mxu0 0.0
        %1338 = vmatpush1.msra.mxu0 0.0
        %1339 = vmatprep.subr.mxu0 0.0
        %1340 = vmatpush1.msra.mxu0 0.0
        %1341 = vmatprep.subr.mxu0 0.0
        %1342 = vmatpush1.msra.mxu0 0.0
        %1343 = vmatprep.subr.mxu0 0.0
        %1344 = vmatpush1.msra.mxu0 0.0
        %1345 = vmatprep.subr.mxu0 0.0
        %1346 = vmatpush1.msra.mxu0 0.0
        %1347 = vmatprep.subr.mxu0 0.0
        %1348 = vmatpush1.msra.mxu0 0.0
        %1349 = vmatprep.subr.mxu0 0.0
        %1350 = vmatpush1.msra.mxu0 0.0
        %1351 = vmatprep.subr.mxu0 0.0
        %1352 = vmatpush1.msra.mxu0 0.0
        %1353 = vmatprep.subr.mxu0 0.0
        %1354 = vmatpush1.msra.mxu0 0.0
        %1355 = vmatprep.subr.mxu0 0.0
        %1356 = vmatpush1.msra.mxu0 0.0
        %1357 = vmatprep.mubr.f32.mxu0 0.0
        %1358 = vmatmul.mubr.f32.gmra.mrb[0].mxu0 %v608
        %v1359 = vpop.f32.mrb[0].mxu0
        %v1360 = vadd.f32 0.0, %v1359
        %v1361 = vpop.f32.mrb[0].mxu0
        %1362 = vdwg.mxu0
        %v1363 = vadd.f32 %v1290, %v1360
        %v1364 = vxor.u32 %v1363, 2147483648
        %v1365 = vmul.f32 %v1364, 1.442695
        %v1366 = vpow.pop %v1365
        %v1367 = vadd.f32 %v1366, 1.0
        %v1368 = vrcp.pop %v1367
        %v1369 = vmul.f32 1.0, %v1368
        %v1370 = vmul.f32 %v1369, %v680
        %v1371 = vld [vmem:[%s9] sm:$0xff]
        %v1372 = vmul.f32 %v1371, %v910
        %v1373 = vld [vmem:[%s10] sm:$0xff]
        %v1374 = vmul.f32 %v1373, %v1140
        %v1375 = vadd.f32 %v1372, %v1374
        %v1376 = vld [vmem:[%s11] sm:$0xff]
        %v1377 = vmul.f32 %v1376, %v1370
        %v1378 = vadd.f32 %v1375, %v1377
        %v1379 = vxor.u32 %v1378, 2147483648
        %v1380 = vmul.f32 %v1379, 1.442695
        %v1381 = vpow.pop %v1380
        %v1382 = vadd.f32 %v1381, 1.0
        %v1383 = vrcp.pop %v1382
        %v1384 = vmul.f32 1.0, %v1383
        %1385 = vst.msk [vmem:[%s430] sm:$0xff] %vm450, %v1384
        %s1386 = sand.u32 %s301, 1
        %s1387 = scalar_lea.sflag [#allocation3], %s1386
        %s1388 = sand.u32 %s301, 1
        %s1389 = smul.addr %s1388, 8
        %s1390 = scalar_lea.vmem [#allocation2], %s1389
        // Predicated region
        $region69: #{_lambda_.7} parent=67 // pred_check
          %p1391 = pneg %p311
        $region70: #{_lambda_.7} parent=67 // pred_check_branch
          %1393 = sbr.rel (%p1391) target = $region72
        $region71: #{_lambda_.7} parent=67 // pred_region
          %s1395 = ssub.s32 128, 128
          %1396 = vsyncadd %s1387, %s1395
          %s1397 = smul.addr %s26, 128
          %s1398 = scalar_lea.hbm %s12, %s1397
          %s1400 = sshll.u32 %s1390, 4
          %s1401 = int_to_ptr.vmem [resolvable:$true] %s1400
          %1403 = dma.vmem_to_hbm [thread:$0]  %s1401, 128, %s1398, %s1387
        $region72: #{_lambda_.7} parent=67 // pred_fallthru
          _
      $region68: #{_lambda_.7} parent=5 // pred_fallthru
        _
      %p1404 = scmp.le.s32.totalorder 2, %s21
      // Predicated region
      $region73: #{_lambda_.7} parent=5 // pred_check
        %p1405 = pneg %p1404
      $region74: #{_lambda_.7} parent=5 // pred_check_branch
        %1407 = sbr.rel (%p1405) target = $region76
      $region75: #{_lambda_.7} parent=5 // pred_region
        %s1408 = ssub.s32 %s21, 2
        // Predicated region
        $region77: #{_lambda_.7} parent=75 // pred_check
          %p1409 = pneg %p317
        $region78: #{_lambda_.7} parent=75 // pred_check_branch
          %1411 = sbr.rel (%p1409) target = $region80
        $region79: #{_lambda_.7} parent=75 // pred_region
          %s1412 = sand.u32 %s302, 1
          %s1413 = scalar_lea.sflag [#allocation3], %s1412
          %s1414 = sand.u32 %s302, 1
          %s1415 = smul.addr %s1414, 8
          %s1416 = scalar_lea.vmem [#allocation2], %s1415
          %1417 = dma.done %s1413, 128
        $region80: #{_lambda_.7} parent=75 // pred_fallthru
          _
      $region76: #{_lambda_.7} parent=5 // pred_fallthru
        _
    $region6: #{_lambda_.7} parent=1 // loop_footer
      %s25 = sadd.s32 1, %s21
    $region7: #{_lambda_.7} parent=1 // loop_footer_branch
      %20 = sbr.rel target = $region3
    $region8: #{_lambda_.7} parent=1 // loop_exit
      _
    %1418 = vsyncpa [#allocation3], 1
    %s1419 = scalar_lea.sflag [#allocation3], 1
    %1420 = vsyncpa %s1419, 1

// kernel: _lambda_.6
$region0: #{_lambda_.6}
  #allocation0 [shape = 'u32[]', space=smem, size = 0x4, offset = 0x4, fixed_abs, tag = 'smem constant byte address 0x4 - core index']
  #allocation1 [shape = 'u32[144,128]{1,0:T(1,128)}', space=vmem, size = 0x12000, scoped, tag = 'internal scratch']
  %s0 = inlined_call_operand.vmem [shape: f32[2,8,32], index: 0, kind: input, shape index: {}]
  %s1 = inlined_call_operand.vmem [shape: f32[2,8,32], index: 1, kind: input, shape index: {}]
  %s2 = inlined_call_operand.vmem [shape: f32[2,8,32], index: 2, kind: input, shape index: {}]
  %s3 = inlined_call_operand.vmem [shape: f32[2,8,8], index: 3, kind: input, shape index: {}]
  %s4 = inlined_call_operand.vmem [shape: f32[32,192], index: 4, kind: input, shape index: {}]
  %s5 = inlined_call_operand.vmem [shape: f32[32,192], index: 5, kind: input, shape index: {}]
  %s6 = inlined_call_operand.vmem [shape: f32[64,32], index: 6, kind: input, shape index: {}]
  %s7 = inlined_call_operand.vmem [shape: f32[1,32], index: 7, kind: input, shape index: {}]
  %s8 = inlined_call_operand.vmem [shape: f32[1,32], index: 8, kind: input, shape index: {}]
  %s9 = inlined_call_operand.vmem [shape: f32[32,64], index: 9, kind: input, shape index: {}]
  %s10 = inlined_call_operand.vmem [shape: f32[32,128], index: 10, kind: input, shape index: {}]
  %s11 = inlined_call_operand.vmem [shape: f32[64,32], index: 11, kind: input, shape index: {}]
  %s12 = inlined_call_operand.vmem [shape: f32[1,32], index: 12, kind: input, shape index: {}]
  %s13 = inlined_call_operand.vmem [shape: f32[1,32], index: 13, kind: input, shape index: {}]
  %s14 = inlined_call_operand.vmem [shape: f32[32,64], index: 14, kind: input, shape index: {}]
  %s15 = inlined_call_operand.vmem [shape: f32[1,64], index: 15, kind: input, shape index: {}]
  %s16 = inlined_call_operand.vmem [shape: f32[64,32], index: 16, kind: input, shape index: {}]
  %s17 = inlined_call_operand.vmem [shape: f32[1,32], index: 17, kind: input, shape index: {}]
  %s18 = inlined_call_operand.vmem [shape: f32[1,32], index: 18, kind: input, shape index: {}]
  %s19 = inlined_call_operand.vmem [shape: f32[1,32], index: 19, kind: input, shape index: {}]
  %s20 = inlined_call_operand.vmem [shape: f32[2,8,32], index: 20, kind: output, shape index: {}]
  %s21 = sld [smem:[#allocation0]]
  $region113: #{_lambda_.6} parent=0
    _
  %s23 = ssub.s32 1, %s21
  %s24 = scalar_select 0, %s23, %s21
  loop: start=0, step=1, limit=4
  $region2: #{_lambda_.6} parent=0 // loop_pre_header
    _
  $region3: #{_lambda_.6} parent=0 // loop_header
    %s26 = sphi 0, %s30
    %p27 = scmp.ge.s32.totalorder %s26, 4
    %s36 = sphi 0, %s38
    %s39 = sphi 0, %s36
    %s40 = sphi 0, %s39
    %s56 = sphi 0, %s40
    %s62 = sphi 0, %s64
    %s65 = sphi 0, %s62
    %s66 = sphi 0, %s65
    %s82 = sphi 0, %s66
    %s88 = sphi 0, %s90
    %s91 = sphi 0, %s88
    %s92 = sphi 0, %s91
    %s108 = sphi 0, %s92
    %s114 = sphi 0, %s116
    %s117 = sphi 0, %s114
    %s118 = sphi 0, %s117
    %s134 = sphi 0, %s118
    %s138 = sphi 0, %s138
    %s140 = sphi 0, %s138
    %s141 = sphi 0, %s140
    %s155 = sphi 0, %s141
    %s159 = sphi 0, %s159
    %s161 = sphi 0, %s159
    %s162 = sphi 0, %s161
    %s176 = sphi 0, %s162
    %s180 = sphi 0, %s180
    %s182 = sphi 0, %s180
    %s183 = sphi 0, %s182
    %s197 = sphi 0, %s183
    %s201 = sphi 0, %s201
    %s203 = sphi 0, %s201
    %s204 = sphi 0, %s203
    %s218 = sphi 0, %s204
    %s222 = sphi 0, %s222
    %s224 = sphi 0, %s222
    %s225 = sphi 0, %s224
    %s239 = sphi 0, %s225
    %s243 = sphi 0, %s243
    %s245 = sphi 0, %s243
    %s246 = sphi 0, %s245
    %s260 = sphi 0, %s246
    %s264 = sphi 0, %s264
    %s266 = sphi 0, %s264
    %s267 = sphi 0, %s266
    %s281 = sphi 0, %s267
    %s285 = sphi 0, %s285
    %s287 = sphi 0, %s285
    %s288 = sphi 0, %s287
    %s302 = sphi 0, %s288
    %s306 = sphi 0, %s306
    %s308 = sphi 0, %s306
    %s309 = sphi 0, %s308
    %s323 = sphi 0, %s309
    %s327 = sphi 0, %s327
    %s329 = sphi 0, %s327
    %s330 = sphi 0, %s329
    %s344 = sphi 0, %s330
    %s348 = sphi 0, %s348
    %s350 = sphi 0, %s348
    %s351 = sphi 0, %s350
    %s365 = sphi 0, %s351
    %s369 = sphi 0, %s369
    %s371 = sphi 0, %s369
    %s372 = sphi 0, %s371
    %s386 = sphi 0, %s372
    %s390 = sphi 0, %s390
    %s392 = sphi 0, %s390
    %s393 = sphi 0, %s392
    %s407 = sphi 0, %s393
    %s411 = sphi 0, %s411
    %s413 = sphi 0, %s411
    %s414 = sphi 0, %s413
    %s428 = sphi 0, %s414
    %s432 = sphi 0, %s432
    %s434 = sphi 0, %s432
    %s435 = sphi 0, %s434
    %s449 = sphi 0, %s435
    %s453 = sphi 0, %s453
    %s455 = sphi 0, %s453
    %s456 = sphi 0, %s455
    %s470 = sphi 0, %s456
    %s476 = sphi 0, %s478
    %s479 = sphi 0, %s476
    %s480 = sphi 0, %s479
    %s496 = sphi 0, %s480
  $region4: #{_lambda_.6} parent=0 // loop_header_branch
    %29 = sbr.rel (%p27) target = $region8
  $region5: #{_lambda_.6} parent=0 // loop_body
    %s31 = ssub.s32 %s26, 1
    %s32 = ssub.s32 %s26, 2
    %s33 = sadd.s32 %s26, 1
    %s34 = ssub.s32 %s26, %s33
    %p35 = scmp.eq.s32.totalorder %s34, 0
    %s37 = sadd.s32 %s36, 1
    %s38 = scalar_select %p35, %s36, %s37
    %p41 = pneg %p35
    %p42 = scmp.eq.s32.totalorder %s26, 1
    %p43 = por %p41, %p42
    %p44 = scmp.ne.s32.totalorder %s36, %s39
    %p45 = scmp.eq.s32.totalorder %s26, 0
    %p46 = por %p44, %p45
    %p47 = scmp.ne.s32.totalorder %s36, %s39
    %p48 = scmp.eq.s32.totalorder %s31, 1
    %p49 = por %p47, %p48
    %p50 = scmp.ne.s32.totalorder %s39, %s40
    %p51 = scmp.eq.s32.totalorder %s31, 0
    %p52 = por %p50, %p51
    %p53 = scmp.ne.s32.totalorder %s39, %s40
    %p54 = scmp.eq.s32.totalorder %s32, 1
    %p55 = por %p53, %p54
    %p57 = scmp.ne.s32.totalorder %s40, %s56
    %p58 = scmp.eq.s32.totalorder %s32, 0
    %p59 = por %p57, %p58
    %s60 = ssub.s32 %s26, %s33
    %p61 = scmp.eq.s32.totalorder %s60, 0
    %s63 = sadd.s32 %s62, 1
    %s64 = scalar_select %p61, %s62, %s63
    %p67 = pneg %p61
    %p68 = scmp.eq.s32.totalorder %s26, 1
    %p69 = por %p67, %p68
    %p70 = scmp.ne.s32.totalorder %s62, %s65
    %p71 = scmp.eq.s32.totalorder %s26, 0
    %p72 = por %p70, %p71
    %p73 = scmp.ne.s32.totalorder %s62, %s65
    %p74 = scmp.eq.s32.totalorder %s31, 1
    %p75 = por %p73, %p74
    %p76 = scmp.ne.s32.totalorder %s65, %s66
    %p77 = scmp.eq.s32.totalorder %s31, 0
    %p78 = por %p76, %p77
    %p79 = scmp.ne.s32.totalorder %s65, %s66
    %p80 = scmp.eq.s32.totalorder %s32, 1
    %p81 = por %p79, %p80
    %p83 = scmp.ne.s32.totalorder %s66, %s82
    %p84 = scmp.eq.s32.totalorder %s32, 0
    %p85 = por %p83, %p84
    %s86 = ssub.s32 %s26, %s33
    %p87 = scmp.eq.s32.totalorder %s86, 0
    %s89 = sadd.s32 %s88, 1
    %s90 = scalar_select %p87, %s88, %s89
    %p93 = pneg %p87
    %p94 = scmp.eq.s32.totalorder %s26, 1
    %p95 = por %p93, %p94
    %p96 = scmp.ne.s32.totalorder %s88, %s91
    %p97 = scmp.eq.s32.totalorder %s26, 0
    %p98 = por %p96, %p97
    %p99 = scmp.ne.s32.totalorder %s88, %s91
    %p100 = scmp.eq.s32.totalorder %s31, 1
    %p101 = por %p99, %p100
    %p102 = scmp.ne.s32.totalorder %s91, %s92
    %p103 = scmp.eq.s32.totalorder %s31, 0
    %p104 = por %p102, %p103
    %p105 = scmp.ne.s32.totalorder %s91, %s92
    %p106 = scmp.eq.s32.totalorder %s32, 1
    %p107 = por %p105, %p106
    %p109 = scmp.ne.s32.totalorder %s92, %s108
    %p110 = scmp.eq.s32.totalorder %s32, 0
    %p111 = por %p109, %p110
    %s112 = ssub.s32 %s26, %s33
    %p113 = scmp.eq.s32.totalorder %s112, 0
    %s115 = sadd.s32 %s114, 1
    %s116 = scalar_select %p113, %s114, %s115
    %p119 = pneg %p113
    %p120 = scmp.eq.s32.totalorder %s26, 1
    %p121 = por %p119, %p120
    %p122 = scmp.ne.s32.totalorder %s114, %s117
    %p123 = scmp.eq.s32.totalorder %s26, 0
    %p124 = por %p122, %p123
    %p125 = scmp.ne.s32.totalorder %s114, %s117
    %p126 = scmp.eq.s32.totalorder %s31, 1
    %p127 = por %p125, %p126
    %p128 = scmp.ne.s32.totalorder %s117, %s118
    %p129 = scmp.eq.s32.totalorder %s31, 0
    %p130 = por %p128, %p129
    %p131 = scmp.ne.s32.totalorder %s117, %s118
    %p132 = scmp.eq.s32.totalorder %s32, 1
    %p133 = por %p131, %p132
    %p135 = scmp.ne.s32.totalorder %s118, %s134
    %p136 = scmp.eq.s32.totalorder %s32, 0
    %p137 = por %p135, %p136
    %s139 = sadd.s32 %s138, 1
    %p142 = scmp.eq.s32.totalorder %s26, 1
    %p143 = scmp.ne.s32.totalorder %s138, %s140
    %p144 = scmp.eq.s32.totalorder %s26, 0
    %p145 = por %p143, %p144
    %p146 = scmp.ne.s32.totalorder %s138, %s140
    %p147 = scmp.eq.s32.totalorder %s31, 1
    %p148 = por %p146, %p147
    %p149 = scmp.ne.s32.totalorder %s140, %s141
    %p150 = scmp.eq.s32.totalorder %s31, 0
    %p151 = por %p149, %p150
    %p152 = scmp.ne.s32.totalorder %s140, %s141
    %p153 = scmp.eq.s32.totalorder %s32, 1
    %p154 = por %p152, %p153
    %p156 = scmp.ne.s32.totalorder %s141, %s155
    %p157 = scmp.eq.s32.totalorder %s32, 0
    %p158 = por %p156, %p157
    %s160 = sadd.s32 %s159, 1
    %p163 = scmp.eq.s32.totalorder %s26, 1
    %p164 = scmp.ne.s32.totalorder %s159, %s161
    %p165 = scmp.eq.s32.totalorder %s26, 0
    %p166 = por %p164, %p165
    %p167 = scmp.ne.s32.totalorder %s159, %s161
    %p168 = scmp.eq.s32.totalorder %s31, 1
    %p169 = por %p167, %p168
    %p170 = scmp.ne.s32.totalorder %s161, %s162
    %p171 = scmp.eq.s32.totalorder %s31, 0
    %p172 = por %p170, %p171
    %p173 = scmp.ne.s32.totalorder %s161, %s162
    %p174 = scmp.eq.s32.totalorder %s32, 1
    %p175 = por %p173, %p174
    %p177 = scmp.ne.s32.totalorder %s162, %s176
    %p178 = scmp.eq.s32.totalorder %s32, 0
    %p179 = por %p177, %p178
    %s181 = sadd.s32 %s180, 1
    %p184 = scmp.eq.s32.totalorder %s26, 1
    %p185 = scmp.ne.s32.totalorder %s180, %s182
    %p186 = scmp.eq.s32.totalorder %s26, 0
    %p187 = por %p185, %p186
    %p188 = scmp.ne.s32.totalorder %s180, %s182
    %p189 = scmp.eq.s32.totalorder %s31, 1
    %p190 = por %p188, %p189
    %p191 = scmp.ne.s32.totalorder %s182, %s183
    %p192 = scmp.eq.s32.totalorder %s31, 0
    %p193 = por %p191, %p192
    %p194 = scmp.ne.s32.totalorder %s182, %s183
    %p195 = scmp.eq.s32.totalorder %s32, 1
    %p196 = por %p194, %p195
    %p198 = scmp.ne.s32.totalorder %s183, %s197
    %p199 = scmp.eq.s32.totalorder %s32, 0
    %p200 = por %p198, %p199
    %s202 = sadd.s32 %s201, 1
    %p205 = scmp.eq.s32.totalorder %s26, 1
    %p206 = scmp.ne.s32.totalorder %s201, %s203
    %p207 = scmp.eq.s32.totalorder %s26, 0
    %p208 = por %p206, %p207
    %p209 = scmp.ne.s32.totalorder %s201, %s203
    %p210 = scmp.eq.s32.totalorder %s31, 1
    %p211 = por %p209, %p210
    %p212 = scmp.ne.s32.totalorder %s203, %s204
    %p213 = scmp.eq.s32.totalorder %s31, 0
    %p214 = por %p212, %p213
    %p215 = scmp.ne.s32.totalorder %s203, %s204
    %p216 = scmp.eq.s32.totalorder %s32, 1
    %p217 = por %p215, %p216
    %p219 = scmp.ne.s32.totalorder %s204, %s218
    %p220 = scmp.eq.s32.totalorder %s32, 0
    %p221 = por %p219, %p220
    %s223 = sadd.s32 %s222, 1
    %p226 = scmp.eq.s32.totalorder %s26, 1
    %p227 = scmp.ne.s32.totalorder %s222, %s224
    %p228 = scmp.eq.s32.totalorder %s26, 0
    %p229 = por %p227, %p228
    %p230 = scmp.ne.s32.totalorder %s222, %s224
    %p231 = scmp.eq.s32.totalorder %s31, 1
    %p232 = por %p230, %p231
    %p233 = scmp.ne.s32.totalorder %s224, %s225
    %p234 = scmp.eq.s32.totalorder %s31, 0
    %p235 = por %p233, %p234
    %p236 = scmp.ne.s32.totalorder %s224, %s225
    %p237 = scmp.eq.s32.totalorder %s32, 1
    %p238 = por %p236, %p237
    %p240 = scmp.ne.s32.totalorder %s225, %s239
    %p241 = scmp.eq.s32.totalorder %s32, 0
    %p242 = por %p240, %p241
    %s244 = sadd.s32 %s243, 1
    %p247 = scmp.eq.s32.totalorder %s26, 1
    %p248 = scmp.ne.s32.totalorder %s243, %s245
    %p249 = scmp.eq.s32.totalorder %s26, 0
    %p250 = por %p248, %p249
    %p251 = scmp.ne.s32.totalorder %s243, %s245
    %p252 = scmp.eq.s32.totalorder %s31, 1
    %p253 = por %p251, %p252
    %p254 = scmp.ne.s32.totalorder %s245, %s246
    %p255 = scmp.eq.s32.totalorder %s31, 0
    %p256 = por %p254, %p255
    %p257 = scmp.ne.s32.totalorder %s245, %s246
    %p258 = scmp.eq.s32.totalorder %s32, 1
    %p259 = por %p257, %p258
    %p261 = scmp.ne.s32.totalorder %s246, %s260
    %p262 = scmp.eq.s32.totalorder %s32, 0
    %p263 = por %p261, %p262
    %s265 = sadd.s32 %s264, 1
    %p268 = scmp.eq.s32.totalorder %s26, 1
    %p269 = scmp.ne.s32.totalorder %s264, %s266
    %p270 = scmp.eq.s32.totalorder %s26, 0
    %p271 = por %p269, %p270
    %p272 = scmp.ne.s32.totalorder %s264, %s266
    %p273 = scmp.eq.s32.totalorder %s31, 1
    %p274 = por %p272, %p273
    %p275 = scmp.ne.s32.totalorder %s266, %s267
    %p276 = scmp.eq.s32.totalorder %s31, 0
    %p277 = por %p275, %p276
    %p278 = scmp.ne.s32.totalorder %s266, %s267
    %p279 = scmp.eq.s32.totalorder %s32, 1
    %p280 = por %p278, %p279
    %p282 = scmp.ne.s32.totalorder %s267, %s281
    %p283 = scmp.eq.s32.totalorder %s32, 0
    %p284 = por %p282, %p283
    %s286 = sadd.s32 %s285, 1
    %p289 = scmp.eq.s32.totalorder %s26, 1
    %p290 = scmp.ne.s32.totalorder %s285, %s287
    %p291 = scmp.eq.s32.totalorder %s26, 0
    %p292 = por %p290, %p291
    %p293 = scmp.ne.s32.totalorder %s285, %s287
    %p294 = scmp.eq.s32.totalorder %s31, 1
    %p295 = por %p293, %p294
    %p296 = scmp.ne.s32.totalorder %s287, %s288
    %p297 = scmp.eq.s32.totalorder %s31, 0
    %p298 = por %p296, %p297
    %p299 = scmp.ne.s32.totalorder %s287, %s288
    %p300 = scmp.eq.s32.totalorder %s32, 1
    %p301 = por %p299, %p300
    %p303 = scmp.ne.s32.totalorder %s288, %s302
    %p304 = scmp.eq.s32.totalorder %s32, 0
    %p305 = por %p303, %p304
    %s307 = sadd.s32 %s306, 1
    %p310 = scmp.eq.s32.totalorder %s26, 1
    %p311 = scmp.ne.s32.totalorder %s306, %s308
    %p312 = scmp.eq.s32.totalorder %s26, 0
    %p313 = por %p311, %p312
    %p314 = scmp.ne.s32.totalorder %s306, %s308
    %p315 = scmp.eq.s32.totalorder %s31, 1
    %p316 = por %p314, %p315
    %p317 = scmp.ne.s32.totalorder %s308, %s309
    %p318 = scmp.eq.s32.totalorder %s31, 0
    %p319 = por %p317, %p318
    %p320 = scmp.ne.s32.totalorder %s308, %s309
    %p321 = scmp.eq.s32.totalorder %s32, 1
    %p322 = por %p320, %p321
    %p324 = scmp.ne.s32.totalorder %s309, %s323
    %p325 = scmp.eq.s32.totalorder %s32, 0
    %p326 = por %p324, %p325
    %s328 = sadd.s32 %s327, 1
    %p331 = scmp.eq.s32.totalorder %s26, 1
    %p332 = scmp.ne.s32.totalorder %s327, %s329
    %p333 = scmp.eq.s32.totalorder %s26, 0
    %p334 = por %p332, %p333
    %p335 = scmp.ne.s32.totalorder %s327, %s329
    %p336 = scmp.eq.s32.totalorder %s31, 1
    %p337 = por %p335, %p336
    %p338 = scmp.ne.s32.totalorder %s329, %s330
    %p339 = scmp.eq.s32.totalorder %s31, 0
    %p340 = por %p338, %p339
    %p341 = scmp.ne.s32.totalorder %s329, %s330
    %p342 = scmp.eq.s32.totalorder %s32, 1
    %p343 = por %p341, %p342
    %p345 = scmp.ne.s32.totalorder %s330, %s344
    %p346 = scmp.eq.s32.totalorder %s32, 0
    %p347 = por %p345, %p346
    %s349 = sadd.s32 %s348, 1
    %p352 = scmp.eq.s32.totalorder %s26, 1
    %p353 = scmp.ne.s32.totalorder %s348, %s350
    %p354 = scmp.eq.s32.totalorder %s26, 0
    %p355 = por %p353, %p354
    %p356 = scmp.ne.s32.totalorder %s348, %s350
    %p357 = scmp.eq.s32.totalorder %s31, 1
    %p358 = por %p356, %p357
    %p359 = scmp.ne.s32.totalorder %s350, %s351
    %p360 = scmp.eq.s32.totalorder %s31, 0
    %p361 = por %p359, %p360
    %p362 = scmp.ne.s32.totalorder %s350, %s351
    %p363 = scmp.eq.s32.totalorder %s32, 1
    %p364 = por %p362, %p363
    %p366 = scmp.ne.s32.totalorder %s351, %s365
    %p367 = scmp.eq.s32.totalorder %s32, 0
    %p368 = por %p366, %p367
    %s370 = sadd.s32 %s369, 1
    %p373 = scmp.eq.s32.totalorder %s26, 1
    %p374 = scmp.ne.s32.totalorder %s369, %s371
    %p375 = scmp.eq.s32.totalorder %s26, 0
    %p376 = por %p374, %p375
    %p377 = scmp.ne.s32.totalorder %s369, %s371
    %p378 = scmp.eq.s32.totalorder %s31, 1
    %p379 = por %p377, %p378
    %p380 = scmp.ne.s32.totalorder %s371, %s372
    %p381 = scmp.eq.s32.totalorder %s31, 0
    %p382 = por %p380, %p381
    %p383 = scmp.ne.s32.totalorder %s371, %s372
    %p384 = scmp.eq.s32.totalorder %s32, 1
    %p385 = por %p383, %p384
    %p387 = scmp.ne.s32.totalorder %s372, %s386
    %p388 = scmp.eq.s32.totalorder %s32, 0
    %p389 = por %p387, %p388
    %s391 = sadd.s32 %s390, 1
    %p394 = scmp.eq.s32.totalorder %s26, 1
    %p395 = scmp.ne.s32.totalorder %s390, %s392
    %p396 = scmp.eq.s32.totalorder %s26, 0
    %p397 = por %p395, %p396
    %p398 = scmp.ne.s32.totalorder %s390, %s392
    %p399 = scmp.eq.s32.totalorder %s31, 1
    %p400 = por %p398, %p399
    %p401 = scmp.ne.s32.totalorder %s392, %s393
    %p402 = scmp.eq.s32.totalorder %s31, 0
    %p403 = por %p401, %p402
    %p404 = scmp.ne.s32.totalorder %s392, %s393
    %p405 = scmp.eq.s32.totalorder %s32, 1
    %p406 = por %p404, %p405
    %p408 = scmp.ne.s32.totalorder %s393, %s407
    %p409 = scmp.eq.s32.totalorder %s32, 0
    %p410 = por %p408, %p409
    %s412 = sadd.s32 %s411, 1
    %p415 = scmp.eq.s32.totalorder %s26, 1
    %p416 = scmp.ne.s32.totalorder %s411, %s413
    %p417 = scmp.eq.s32.totalorder %s26, 0
    %p418 = por %p416, %p417
    %p419 = scmp.ne.s32.totalorder %s411, %s413
    %p420 = scmp.eq.s32.totalorder %s31, 1
    %p421 = por %p419, %p420
    %p422 = scmp.ne.s32.totalorder %s413, %s414
    %p423 = scmp.eq.s32.totalorder %s31, 0
    %p424 = por %p422, %p423
    %p425 = scmp.ne.s32.totalorder %s413, %s414
    %p426 = scmp.eq.s32.totalorder %s32, 1
    %p427 = por %p425, %p426
    %p429 = scmp.ne.s32.totalorder %s414, %s428
    %p430 = scmp.eq.s32.totalorder %s32, 0
    %p431 = por %p429, %p430
    %s433 = sadd.s32 %s432, 1
    %p436 = scmp.eq.s32.totalorder %s26, 1
    %p437 = scmp.ne.s32.totalorder %s432, %s434
    %p438 = scmp.eq.s32.totalorder %s26, 0
    %p439 = por %p437, %p438
    %p440 = scmp.ne.s32.totalorder %s432, %s434
    %p441 = scmp.eq.s32.totalorder %s31, 1
    %p442 = por %p440, %p441
    %p443 = scmp.ne.s32.totalorder %s434, %s435
    %p444 = scmp.eq.s32.totalorder %s31, 0
    %p445 = por %p443, %p444
    %p446 = scmp.ne.s32.totalorder %s434, %s435
    %p447 = scmp.eq.s32.totalorder %s32, 1
    %p448 = por %p446, %p447
    %p450 = scmp.ne.s32.totalorder %s435, %s449
    %p451 = scmp.eq.s32.totalorder %s32, 0
    %p452 = por %p450, %p451
    %s454 = sadd.s32 %s453, 1
    %p457 = scmp.eq.s32.totalorder %s26, 1
    %p458 = scmp.ne.s32.totalorder %s453, %s455
    %p459 = scmp.eq.s32.totalorder %s26, 0
    %p460 = por %p458, %p459
    %p461 = scmp.ne.s32.totalorder %s453, %s455
    %p462 = scmp.eq.s32.totalorder %s31, 1
    %p463 = por %p461, %p462
    %p464 = scmp.ne.s32.totalorder %s455, %s456
    %p465 = scmp.eq.s32.totalorder %s31, 0
    %p466 = por %p464, %p465
    %p467 = scmp.ne.s32.totalorder %s455, %s456
    %p468 = scmp.eq.s32.totalorder %s32, 1
    %p469 = por %p467, %p468
    %p471 = scmp.ne.s32.totalorder %s456, %s470
    %p472 = scmp.eq.s32.totalorder %s32, 0
    %p473 = por %p471, %p472
    %s474 = ssub.s32 %s26, %s33
    %p475 = scmp.eq.s32.totalorder %s474, 0
    %s477 = sadd.s32 %s476, 1
    %s478 = scalar_select %p475, %s476, %s477
    %p481 = pneg %p475
    %p482 = scmp.eq.s32.totalorder %s26, 1
    %p483 = por %p481, %p482
    %p484 = scmp.ne.s32.totalorder %s476, %s479
    %p485 = scmp.eq.s32.totalorder %s26, 0
    %p486 = por %p484, %p485
    %p487 = scmp.ne.s32.totalorder %s476, %s479
    %p488 = scmp.eq.s32.totalorder %s31, 1
    %p489 = por %p487, %p488
    %p490 = scmp.ne.s32.totalorder %s479, %s480
    %p491 = scmp.eq.s32.totalorder %s31, 0
    %p492 = por %p490, %p491
    %p493 = scmp.ne.s32.totalorder %s479, %s480
    %p494 = scmp.eq.s32.totalorder %s32, 1
    %p495 = por %p493, %p494
    %p497 = scmp.ne.s32.totalorder %s480, %s496
    %p498 = scmp.eq.s32.totalorder %s32, 0
    %p499 = por %p497, %p498
    %p500 = scmp.le.s32.totalorder 1, %s26
    %p501 = scmp.lt.s32.totalorder %s26, 3
    %p502 = pnand %p500, %p501
    %p503 = pneg %p502
    // Predicated region
    $region9: #{_lambda_.6} parent=5 // pred_check
      _
    $region10: #{_lambda_.6} parent=5 // pred_check_branch
      %505 = sbr.rel (%p502) target = $region12
    $region11: #{_lambda_.6} parent=5 // pred_region
      %s506 = ssub.s32 %s26, 1
      // Predicated region
      $region13: #{_lambda_.6} parent=11 // pred_check
        %p507 = pneg %p151
      $region14: #{_lambda_.6} parent=11 // pred_check_branch
        %509 = sbr.rel (%p507) target = $region16
      $region15: #{_lambda_.6} parent=11 // pred_region
        _
      $region16: #{_lambda_.6} parent=11 // pred_fallthru
        _
      // Predicated region
      $region17: #{_lambda_.6} parent=11 // pred_check
        %p510 = pneg %p172
      $region18: #{_lambda_.6} parent=11 // pred_check_branch
        %512 = sbr.rel (%p510) target = $region20
      $region19: #{_lambda_.6} parent=11 // pred_region
        _
      $region20: #{_lambda_.6} parent=11 // pred_fallthru
        _
      // Predicated region
      $region21: #{_lambda_.6} parent=11 // pred_check
        %p513 = pneg %p193
      $region22: #{_lambda_.6} parent=11 // pred_check_branch
        %515 = sbr.rel (%p513) target = $region24
      $region23: #{_lambda_.6} parent=11 // pred_region
        _
      $region24: #{_lambda_.6} parent=11 // pred_fallthru
        _
      // Predicated region
      $region25: #{_lambda_.6} parent=11 // pred_check
        %p516 = pneg %p214
      $region26: #{_lambda_.6} parent=11 // pred_check_branch
        %518 = sbr.rel (%p516) target = $region28
      $region27: #{_lambda_.6} parent=11 // pred_region
        _
      $region28: #{_lambda_.6} parent=11 // pred_fallthru
        _
      // Predicated region
      $region29: #{_lambda_.6} parent=11 // pred_check
        %p519 = pneg %p235
      $region30: #{_lambda_.6} parent=11 // pred_check_branch
        %521 = sbr.rel (%p519) target = $region32
      $region31: #{_lambda_.6} parent=11 // pred_region
        _
      $region32: #{_lambda_.6} parent=11 // pred_fallthru
        _
      // Predicated region
      $region33: #{_lambda_.6} parent=11 // pred_check
        %p522 = pneg %p256
      $region34: #{_lambda_.6} parent=11 // pred_check_branch
        %524 = sbr.rel (%p522) target = $region36
      $region35: #{_lambda_.6} parent=11 // pred_region
        _
      $region36: #{_lambda_.6} parent=11 // pred_fallthru
        _
      // Predicated region
      $region37: #{_lambda_.6} parent=11 // pred_check
        %p525 = pneg %p277
      $region38: #{_lambda_.6} parent=11 // pred_check_branch
        %527 = sbr.rel (%p525) target = $region40
      $region39: #{_lambda_.6} parent=11 // pred_region
        _
      $region40: #{_lambda_.6} parent=11 // pred_fallthru
        _
      // Predicated region
      $region41: #{_lambda_.6} parent=11 // pred_check
        %p528 = pneg %p298
      $region42: #{_lambda_.6} parent=11 // pred_check_branch
        %530 = sbr.rel (%p528) target = $region44
      $region43: #{_lambda_.6} parent=11 // pred_region
        _
      $region44: #{_lambda_.6} parent=11 // pred_fallthru
        _
      // Predicated region
      $region45: #{_lambda_.6} parent=11 // pred_check
        %p531 = pneg %p319
      $region46: #{_lambda_.6} parent=11 // pred_check_branch
        %533 = sbr.rel (%p531) target = $region48
      $region47: #{_lambda_.6} parent=11 // pred_region
        _
      $region48: #{_lambda_.6} parent=11 // pred_fallthru
        _
      // Predicated region
      $region49: #{_lambda_.6} parent=11 // pred_check
        %p534 = pneg %p340
      $region50: #{_lambda_.6} parent=11 // pred_check_branch
        %536 = sbr.rel (%p534) target = $region52
      $region51: #{_lambda_.6} parent=11 // pred_region
        _
      $region52: #{_lambda_.6} parent=11 // pred_fallthru
        _
      // Predicated region
      $region53: #{_lambda_.6} parent=11 // pred_check
        %p537 = pneg %p361
      $region54: #{_lambda_.6} parent=11 // pred_check_branch
        %539 = sbr.rel (%p537) target = $region56
      $region55: #{_lambda_.6} parent=11 // pred_region
        _
      $region56: #{_lambda_.6} parent=11 // pred_fallthru
        _
      // Predicated region
      $region57: #{_lambda_.6} parent=11 // pred_check
        %p540 = pneg %p382
      $region58: #{_lambda_.6} parent=11 // pred_check_branch
        %542 = sbr.rel (%p540) target = $region60
      $region59: #{_lambda_.6} parent=11 // pred_region
        _
      $region60: #{_lambda_.6} parent=11 // pred_fallthru
        _
      // Predicated region
      $region61: #{_lambda_.6} parent=11 // pred_check
        %p543 = pneg %p403
      $region62: #{_lambda_.6} parent=11 // pred_check_branch
        %545 = sbr.rel (%p543) target = $region64
      $region63: #{_lambda_.6} parent=11 // pred_region
        _
      $region64: #{_lambda_.6} parent=11 // pred_fallthru
        _
      // Predicated region
      $region65: #{_lambda_.6} parent=11 // pred_check
        %p546 = pneg %p424
      $region66: #{_lambda_.6} parent=11 // pred_check_branch
        %548 = sbr.rel (%p546) target = $region68
      $region67: #{_lambda_.6} parent=11 // pred_region
        _
      $region68: #{_lambda_.6} parent=11 // pred_fallthru
        _
      // Predicated region
      $region69: #{_lambda_.6} parent=11 // pred_check
        %p549 = pneg %p445
      $region70: #{_lambda_.6} parent=11 // pred_check_branch
        %551 = sbr.rel (%p549) target = $region72
      $region71: #{_lambda_.6} parent=11 // pred_region
        _
      $region72: #{_lambda_.6} parent=11 // pred_fallthru
        _
      // Predicated region
      $region73: #{_lambda_.6} parent=11 // pred_check
        %p552 = pneg %p466
      $region74: #{_lambda_.6} parent=11 // pred_check_branch
        %554 = sbr.rel (%p552) target = $region76
      $region75: #{_lambda_.6} parent=11 // pred_region
        _
      $region76: #{_lambda_.6} parent=11 // pred_fallthru
        _
    $region12: #{_lambda_.6} parent=5 // pred_fallthru
      _
    %p555 = scmp.lt.s32.totalorder %s26, 2
    // Predicated region
    $region77: #{_lambda_.6} parent=5 // pred_check
      %p556 = pneg %p555
    $region78: #{_lambda_.6} parent=5 // pred_check_branch
      %558 = sbr.rel (%p556) target = $region80
    $region79: #{_lambda_.6} parent=5 // pred_region
      // Predicated region
      $region81: #{_lambda_.6} parent=79 // pred_check
        %p559 = pneg %p46
      $region82: #{_lambda_.6} parent=79 // pred_check_branch
        %561 = sbr.rel (%p559) target = $region84
      $region83: #{_lambda_.6} parent=79 // pred_region
        %p562 = scmp.lt.s32.totalorder %s26, 1
        %s563 = scalar_select %p562, %s26, 1
        %s564 = smul.addr %s563, 8
        %s565 = scalar_lea.vmem %s0, %s564
      $region84: #{_lambda_.6} parent=79 // pred_fallthru
        _
      // Predicated region
      $region85: #{_lambda_.6} parent=79 // pred_check
        %p566 = pneg %p72
      $region86: #{_lambda_.6} parent=79 // pred_check_branch
        %568 = sbr.rel (%p566) target = $region88
      $region87: #{_lambda_.6} parent=79 // pred_region
        %p569 = scmp.lt.s32.totalorder %s26, 1
        %s570 = scalar_select %p569, %s26, 1
        %s571 = smul.addr %s570, 8
        %s572 = scalar_lea.vmem %s1, %s571
      $region88: #{_lambda_.6} parent=79 // pred_fallthru
        _
      // Predicated region
      $region89: #{_lambda_.6} parent=79 // pred_check
        %p573 = pneg %p98
      $region90: #{_lambda_.6} parent=79 // pred_check_branch
        %575 = sbr.rel (%p573) target = $region92
      $region91: #{_lambda_.6} parent=79 // pred_region
        %p576 = scmp.lt.s32.totalorder %s26, 1
        %s577 = scalar_select %p576, %s26, 1
        %s578 = smul.addr %s577, 8
        %s579 = scalar_lea.vmem %s2, %s578
      $region92: #{_lambda_.6} parent=79 // pred_fallthru
        _
      // Predicated region
      $region93: #{_lambda_.6} parent=79 // pred_check
        %p580 = pneg %p124
      $region94: #{_lambda_.6} parent=79 // pred_check_branch
        %582 = sbr.rel (%p580) target = $region96
      $region95: #{_lambda_.6} parent=79 // pred_region
        %p583 = scmp.lt.s32.totalorder %s26, 1
        %s584 = scalar_select %p583, %s26, 1
        %s585 = smul.addr %s584, 8
        %s586 = scalar_lea.vmem %s3, %s585
      $region96: #{_lambda_.6} parent=79 // pred_fallthru
        _
    $region80: #{_lambda_.6} parent=5 // pred_fallthru
      _
    %p587 = scmp.le.s32.totalorder 1, %s26
    %p588 = scmp.lt.s32.totalorder %s26, 3
    %p589 = pnand %p587, %p588
    %p590 = pneg %p589
    // Predicated region
    $region97: #{_lambda_.6} parent=5 // pred_check
      _
    $region98: #{_lambda_.6} parent=5 // pred_check_branch
      %592 = sbr.rel (%p589) target = $region100
    $region99: #{_lambda_.6} parent=5 // pred_region
      %s593 = ssub.s32 %s26, 1
      %p594 = scmp.lt.s32.totalorder %s31, 1
      %s595 = scalar_select %p594, %s31, 1
      %s596 = smul.addr %s595, 8
      %s597 = scalar_lea.vmem %s0, %s596
      %p598 = pneg %p52
      %p599 = pneg %p49
      %p600 = scmp.lt.s32.totalorder %s31, 1
      %s601 = scalar_select %p600, %s31, 1
      %s602 = smul.addr %s601, 8
      %s603 = scalar_lea.vmem %s1, %s602
      %p604 = pneg %p78
      %p605 = pneg %p75
      %p606 = scmp.lt.s32.totalorder %s31, 1
      %s607 = scalar_select %p606, %s31, 1
      %s608 = smul.addr %s607, 8
      %s609 = scalar_lea.vmem %s2, %s608
      %p610 = pneg %p104
      %p611 = pneg %p101
      %p612 = scmp.lt.s32.totalorder %s31, 1
      %s613 = scalar_select %p612, %s31, 1
      %s614 = smul.addr %s613, 8
      %s615 = scalar_lea.vmem %s3, %s614
      %p616 = pneg %p130
      %p617 = pneg %p127
      %p618 = pneg %p151
      %p619 = pneg %p148
      %p620 = pneg %p172
      %p621 = pneg %p169
      %p622 = pneg %p193
      %p623 = pneg %p190
      %p624 = pneg %p214
      %p625 = pneg %p211
      %p626 = pneg %p235
      %p627 = pneg %p232
      %p628 = pneg %p256
      %p629 = pneg %p253
      %p630 = pneg %p277
      %p631 = pneg %p274
      %p632 = pneg %p298
      %p633 = pneg %p295
      %p634 = pneg %p319
      %p635 = pneg %p316
      %p636 = pneg %p340
      %p637 = pneg %p337
      %p638 = pneg %p361
      %p639 = pneg %p358
      %p640 = pneg %p382
      %p641 = pneg %p379
      %p642 = pneg %p403
      %p643 = pneg %p400
      %p644 = pneg %p424
      %p645 = pneg %p421
      %p646 = pneg %p445
      %p647 = pneg %p442
      %p648 = pneg %p466
      %p649 = pneg %p463
      %p650 = pneg %p492
      %p651 = pneg %p489
      %p652 = scmp.lt.s32.totalorder %s31, 1
      %s653 = scalar_select %p652, %s31, 1
      %s654 = smul.addr %s653, 8
      %s655 = scalar_lea.vmem %s20, %s654
      %p656 = scmp.lt.s32.totalorder %s31, 1
      %s657 = scalar_select %p656, %s31, 1
      %s658 = smul.addr %s657, 8
      %s659 = scalar_lea.vmem %s0, %s658
      %p660 = scmp.lt.s32.totalorder %s31, 1
      %s661 = scalar_select %p660, %s31, 1
      %s662 = smul.addr %s661, 8
      %s663 = scalar_lea.vmem %s1, %s662
      %p664 = scmp.lt.s32.totalorder %s31, 1
      %s665 = scalar_select %p664, %s31, 1
      %s666 = smul.addr %s665, 8
      %s667 = scalar_lea.vmem %s2, %s666
      %p668 = scmp.lt.s32.totalorder %s31, 1
      %s669 = scalar_select %p668, %s31, 1
      %s670 = smul.addr %s669, 8
      %s671 = scalar_lea.vmem %s3, %s670
      %p672 = scmp.lt.s32.totalorder %s31, 1
      %s673 = scalar_select %p672, %s31, 1
      %s674 = smul.addr %s673, 8
      %s675 = scalar_lea.vmem %s20, %s674
      %v676 = vld [vmem:[%s659] sm:$0xff]
      %v677 = vld [vmem:[%s663] sm:$0xff]
      %v678 = vld [vmem:[%s667] sm:$0xff]
      %v679 = vld [vmem:[%s671] sm:$0xff]
      %v680 = vld [vmem:[%s4] sm:$0xff]
      %v681 = vld [vmem:[%s4 + $0x8] sm:$0xff]
      %v682 = vld [vmem:[%s4 + $0x10] sm:$0xff]
      %v683 = vld [vmem:[%s4 + $0x18] sm:$0xff]
      %v684 = vld [vmem:[%s4 + $0x20] sm:$0xff]
      %v685 = vld [vmem:[%s4 + $0x28] sm:$0xff]
      %v686 = vld [vmem:[%s4 + $0x30] sm:$0xff]
      %v687 = vld [vmem:[%s4 + $0x38] sm:$0xff]
      %v688 = vld [vmem:[%s5] sm:$0xff]
      %v689 = vld [vmem:[%s5 + $0x8] sm:$0xff]
      %v690 = vld [vmem:[%s5 + $0x10] sm:$0xff]
      %v691 = vld [vmem:[%s5 + $0x18] sm:$0xff]
      %v692 = vld [vmem:[%s5 + $0x20] sm:$0xff]
      %v693 = vld [vmem:[%s5 + $0x28] sm:$0xff]
      %v694 = vld [vmem:[%s5 + $0x30] sm:$0xff]
      %v695 = vld [vmem:[%s5 + $0x38] sm:$0xff]
      %vm696 = vcmask 261120
      %v698 = vsel %vm696, %v677, 0
      %700 = vmatprep.subr.mxu0 %v689
      %701 = vmatpush1.msra.mxu0 %v688
      %702 = vmatprep.subr.mxu0 %v691
      %703 = vmatpush1.msra.mxu0 %v690
      %704 = vmatprep.subr.mxu0 %v693
      %705 = vmatpush1.msra.mxu0 %v692
      %706 = vmatprep.subr.mxu0 %v695
      %707 = vmatpush1.msra.mxu0 %v694
      %708 = vmatprep.subr.mxu0 0.0
      %709 = vmatpush1.msra.mxu0 0.0
      %710 = vmatprep.subr.mxu0 0.0
      %711 = vmatpush1.msra.mxu0 0.0
      %712 = vmatprep.subr.mxu0 0.0
      %713 = vmatpush1.msra.mxu0 0.0
      %714 = vmatprep.subr.mxu0 0.0
      %715 = vmatpush1.msra.mxu0 0.0
      %716 = vmatprep.subr.mxu0 0.0
      %717 = vmatpush1.msra.mxu0 0.0
      %718 = vmatprep.subr.mxu0 0.0
      %719 = vmatpush1.msra.mxu0 0.0
      %720 = vmatprep.subr.mxu0 0.0
      %721 = vmatpush1.msra.mxu0 0.0
      %722 = vmatprep.subr.mxu0 0.0
      %723 = vmatpush1.msra.mxu0 0.0
      %724 = vmatprep.subr.mxu0 0.0
      %725 = vmatpush1.msra.mxu0 0.0
      %726 = vmatprep.subr.mxu0 0.0
      %727 = vmatpush1.msra.mxu0 0.0
      %728 = vmatprep.subr.mxu0 0.0
      %729 = vmatpush1.msra.mxu0 0.0
      %730 = vmatprep.subr.mxu0 0.0
      %731 = vmatpush1.msra.mxu0 0.0
      %732 = vmatprep.subr.mxu0 0.0
      %733 = vmatpush1.msra.mxu0 0.0
      %734 = vmatprep.subr.mxu0 0.0
      %735 = vmatpush1.msra.mxu0 0.0
      %736 = vmatprep.subr.mxu0 0.0
      %737 = vmatpush1.msra.mxu0 0.0
      %738 = vmatprep.subr.mxu0 0.0
      %739 = vmatpush1.msra.mxu0 0.0
      %740 = vmatprep.subr.mxu0 0.0
      %741 = vmatpush1.msra.mxu0 0.0
      %742 = vmatprep.subr.mxu0 0.0
      %743 = vmatpush1.msra.mxu0 0.0
      %744 = vmatprep.subr.mxu0 0.0
      %745 = vmatpush1.msra.mxu0 0.0
      %746 = vmatprep.subr.mxu0 0.0
      %747 = vmatpush1.msra.mxu0 0.0
      %748 = vmatprep.subr.mxu0 0.0
      %749 = vmatpush1.msra.mxu0 0.0
      %750 = vmatprep.subr.mxu0 0.0
      %751 = vmatpush1.msra.mxu0 0.0
      %752 = vmatprep.subr.mxu0 0.0
      %753 = vmatpush1.msra.mxu0 0.0
      %754 = vmatprep.subr.mxu0 0.0
      %755 = vmatpush1.msra.mxu0 0.0
      %756 = vmatprep.subr.mxu0 0.0
      %757 = vmatpush1.msra.mxu0 0.0
      %758 = vmatprep.subr.mxu0 0.0
      %759 = vmatpush1.msra.mxu0 0.0
      %760 = vmatprep.subr.mxu0 0.0
      %761 = vmatpush1.msra.mxu0 0.0
      %762 = vmatprep.subr.mxu0 0.0
      %763 = vmatpush1.msra.mxu0 0.0
      %764 = vmatprep.mubr.f32.mxu0 0.0
      %765 = vmatmul.mubr.f32.gmra.mrb[0].mxu0 %v698
      %v766 = vpop.f32.mrb[0].mxu0
      %v767 = vadd.f32 0.0, %v766
      %v768 = vpop.f32.mrb[0].mxu0
      %v769 = vadd.f32 0.0, %v768
      %770 = vdwg.mxu0
      %v772 = vsel %vm696, %v676, 0
      %774 = vmatprep.subr.mxu0 %v681
      %775 = vmatpush1.msra.mxu0 %v680
      %776 = vmatprep.subr.mxu0 %v683
      %777 = vmatpush1.msra.mxu0 %v682
      %778 = vmatprep.subr.mxu0 %v685
      %779 = vmatpush1.msra.mxu0 %v684
      %780 = vmatprep.subr.mxu0 %v687
      %781 = vmatpush1.msra.mxu0 %v686
      %782 = vmatprep.subr.mxu0 0.0
      %783 = vmatpush1.msra.mxu0 0.0
      %784 = vmatprep.subr.mxu0 0.0
      %785 = vmatpush1.msra.mxu0 0.0
      %786 = vmatprep.subr.mxu0 0.0
      %787 = vmatpush1.msra.mxu0 0.0
      %788 = vmatprep.subr.mxu0 0.0
      %789 = vmatpush1.msra.mxu0 0.0
      %790 = vmatprep.subr.mxu0 0.0
      %791 = vmatpush1.msra.mxu0 0.0
      %792 = vmatprep.subr.mxu0 0.0
      %793 = vmatpush1.msra.mxu0 0.0
      %794 = vmatprep.subr.mxu0 0.0
      %795 = vmatpush1.msra.mxu0 0.0
      %796 = vmatprep.subr.mxu0 0.0
      %797 = vmatpush1.msra.mxu0 0.0
      %798 = vmatprep.subr.mxu0 0.0
      %799 = vmatpush1.msra.mxu0 0.0
      %800 = vmatprep.subr.mxu0 0.0
      %801 = vmatpush1.msra.mxu0 0.0
      %802 = vmatprep.subr.mxu0 0.0
      %803 = vmatpush1.msra.mxu0 0.0
      %804 = vmatprep.subr.mxu0 0.0
      %805 = vmatpush1.msra.mxu0 0.0
      %806 = vmatprep.subr.mxu0 0.0
      %807 = vmatpush1.msra.mxu0 0.0
      %808 = vmatprep.subr.mxu0 0.0
      %809 = vmatpush1.msra.mxu0 0.0
      %810 = vmatprep.subr.mxu0 0.0
      %811 = vmatpush1.msra.mxu0 0.0
      %812 = vmatprep.subr.mxu0 0.0
      %813 = vmatpush1.msra.mxu0 0.0
      %814 = vmatprep.subr.mxu0 0.0
      %815 = vmatpush1.msra.mxu0 0.0
      %816 = vmatprep.subr.mxu0 0.0
      %817 = vmatpush1.msra.mxu0 0.0
      %818 = vmatprep.subr.mxu0 0.0
      %819 = vmatpush1.msra.mxu0 0.0
      %820 = vmatprep.subr.mxu0 0.0
      %821 = vmatpush1.msra.mxu0 0.0
      %822 = vmatprep.subr.mxu0 0.0
      %823 = vmatpush1.msra.mxu0 0.0
      %824 = vmatprep.subr.mxu0 0.0
      %825 = vmatpush1.msra.mxu0 0.0
      %826 = vmatprep.subr.mxu0 0.0
      %827 = vmatpush1.msra.mxu0 0.0
      %828 = vmatprep.subr.mxu0 0.0
      %829 = vmatpush1.msra.mxu0 0.0
      %830 = vmatprep.subr.mxu0 0.0
      %831 = vmatpush1.msra.mxu0 0.0
      %832 = vmatprep.subr.mxu0 0.0
      %833 = vmatpush1.msra.mxu0 0.0
      %834 = vmatprep.subr.mxu0 0.0
      %835 = vmatpush1.msra.mxu0 0.0
      %836 = vmatprep.subr.mxu0 0.0
      %837 = vmatpush1.msra.mxu0 0.0
      %838 = vmatprep.mubr.f32.mxu0 0.0
      %839 = vmatmul.mubr.f32.gmra.mrb[0].mxu0 %v772
      %v840 = vpop.f32.mrb[0].mxu0
      %v841 = vadd.f32 %v767, %v840
      %v842 = vpop.f32.mrb[0].mxu0
      %v843 = vadd.f32 %v769, %v842
      %844 = vdwg.mxu0
      %v845 = vmul.f32 %v841, 0.088388346
      %v846 = vld [vmem:[%s6] sm:$0xff]
      %v847 = vld [vmem:[%s6 + $0x8] sm:$0xff]
      %v848 = vld [vmem:[%s6 + $0x10] sm:$0xff]
      %v849 = vld [vmem:[%s6 + $0x18] sm:$0xff]
      %v850 = vld [vmem:[%s6 + $0x20] sm:$0xff]
      %v851 = vld [vmem:[%s6 + $0x28] sm:$0xff]
      %v852 = vld [vmem:[%s6 + $0x30] sm:$0xff]
      %v853 = vld [vmem:[%s6 + $0x38] sm:$0xff]
      %855 = vrot.lane.b32.xlu0 %v841, 64
      %v856 = vpop.permute.xlu0 %855
      %v858 = vsel %vm696, %v845, 0
      %v860 = vsel %vm696, %v856, 0
      %862 = vmatprep.subr.mxu0 0.0
      %863 = vmatpush1.xpose.msra.mxu0 %v860
      %864 = vmatprep.subr.mxu0 0.0
      %865 = vmatpush1.xpose.msra.mxu0 0.0
      %866 = vmatprep.subr.mxu0 0.0
      %867 = vmatpush1.xpose.msra.mxu0 0.0
      %868 = vmatprep.subr.mxu0 0.0
      %869 = vmatpush1.xpose.msra.mxu0 0.0
      %870 = vmatprep.subr.mxu0 0.0
      %871 = vmatpush1.xpose.msra.mxu0 0.0
      %872 = vmatprep.subr.mxu0 0.0
      %873 = vmatpush1.xpose.msra.mxu0 0.0
      %874 = vmatprep.subr.mxu0 0.0
      %875 = vmatpush1.xpose.msra.mxu0 0.0
      %876 = vmatprep.subr.mxu0 0.0
      %877 = vmatpush1.xpose.msra.mxu0 0.0
      %878 = vmatprep.subr.mxu0 0.0
      %879 = vmatpush1.xpose.msra.mxu0 0.0
      %880 = vmatprep.subr.mxu0 0.0
      %881 = vmatpush1.xpose.msra.mxu0 0.0
      %882 = vmatprep.subr.mxu0 0.0
      %883 = vmatpush1.xpose.msra.mxu0 0.0
      %884 = vmatprep.subr.mxu0 0.0
      %885 = vmatpush1.xpose.msra.mxu0 0.0
      %886 = vmatprep.subr.mxu0 0.0
      %887 = vmatpush1.xpose.msra.mxu0 0.0
      %888 = vmatprep.subr.mxu0 0.0
      %889 = vmatpush1.xpose.msra.mxu0 0.0
      %890 = vmatprep.subr.mxu0 0.0
      %891 = vmatpush1.xpose.msra.mxu0 0.0
      %892 = vmatprep.subr.mxu0 0.0
      %893 = vmatpush1.xpose.msra.mxu0 0.0
      %894 = vmatprep.subr.mxu0 0.0
      %895 = vmatpush1.xpose.msra.mxu0 0.0
      %896 = vmatprep.subr.mxu0 0.0
      %897 = vmatpush1.xpose.msra.mxu0 0.0
      %898 = vmatprep.subr.mxu0 0.0
      %899 = vmatpush1.xpose.msra.mxu0 0.0
      %900 = vmatprep.subr.mxu0 0.0
      %901 = vmatpush1.xpose.msra.mxu0 0.0
      %902 = vmatprep.subr.mxu0 0.0
      %903 = vmatpush1.xpose.msra.mxu0 0.0
      %904 = vmatprep.subr.mxu0 0.0
      %905 = vmatpush1.xpose.msra.mxu0 0.0
      %906 = vmatprep.subr.mxu0 0.0
      %907 = vmatpush1.xpose.msra.mxu0 0.0
      %908 = vmatprep.subr.mxu0 0.0
      %909 = vmatpush1.xpose.msra.mxu0 0.0
      %910 = vmatprep.subr.mxu0 0.0
      %911 = vmatpush1.xpose.msra.mxu0 0.0
      %912 = vmatprep.subr.mxu0 0.0
      %913 = vmatpush1.xpose.msra.mxu0 0.0
      %914 = vmatprep.subr.mxu0 0.0
      %915 = vmatpush1.xpose.msra.mxu0 0.0
      %916 = vmatprep.subr.mxu0 0.0
      %917 = vmatpush1.xpose.msra.mxu0 0.0
      %918 = vmatprep.subr.mxu0 0.0
      %919 = vmatpush1.xpose.msra.mxu0 0.0
      %920 = vmatprep.subr.mxu0 0.0
      %921 = vmatpush1.xpose.msra.mxu0 0.0
      %922 = vmatprep.subr.mxu0 0.0
      %923 = vmatpush1.xpose.msra.mxu0 0.0
      %924 = vmatprep.subr.mxu0 0.0
      %925 = vmatpush1.xpose.msra.mxu0 0.0
      %926 = vmatprep.mubr.f32.mxu0 0.0
      %927 = vmatmul.mubr.f32.gmra.mrb[0].mxu0 %v858
      %v928 = vpop.f32.mrb[0].mxu0
      %v929 = vadd.f32 0.0, %v928
      %v930 = vpop.f32.mrb[0].mxu0
      %931 = vdwg.mxu0
      %vm932 = vcmp.eq.f32.partialorder %v679, 0.0
      %v933 = vsel %vm932, -1e+09, %v929
      %vm934 = vcmask 64512
      %v935 = vsel %vm934, %v933, -inf
      %936 = vmax.xlane.f32.xlu0 %v935
      %v937 = vpop.xlane.xlu0 %936
      %v938 = vsub.f32 %v933, %v937
      %v939 = vmul.f32 %v938, 1.442695
      %v940 = vpow.pop %v939
      %v941 = vsel %vm934, %v940, 0.0
      %942 = vadd.xlane.f32.xlu0 %v941
      %v943 = vpop.xlane.xlu0 %942
      %v944 = vrcp.pop %v943
      %v945 = vmul.f32 %v940, %v944
      %v947 = vsel %vm934, %v945, 0
      %949 = vmatprep.subr.mxu0 0.0
      %950 = vmatpush1.msra.mxu0 %v843
      %951 = vmatprep.subr.mxu0 0.0
      %952 = vmatpush1.msra.mxu0 0.0
      %953 = vmatprep.subr.mxu0 0.0
      %954 = vmatpush1.msra.mxu0 0.0
      %955 = vmatprep.subr.mxu0 0.0
      %956 = vmatpush1.msra.mxu0 0.0
      %957 = vmatprep.subr.mxu0 0.0
      %958 = vmatpush1.msra.mxu0 0.0
      %959 = vmatprep.subr.mxu0 0.0
      %960 = vmatpush1.msra.mxu0 0.0
      %961 = vmatprep.subr.mxu0 0.0
      %962 = vmatpush1.msra.mxu0 0.0
      %963 = vmatprep.subr.mxu0 0.0
      %964 = vmatpush1.msra.mxu0 0.0
      %965 = vmatprep.subr.mxu0 0.0
      %966 = vmatpush1.msra.mxu0 0.0
      %967 = vmatprep.subr.mxu0 0.0
      %968 = vmatpush1.msra.mxu0 0.0
      %969 = vmatprep.subr.mxu0 0.0
      %970 = vmatpush1.msra.mxu0 0.0
      %971 = vmatprep.subr.mxu0 0.0
      %972 = vmatpush1.msra.mxu0 0.0
      %973 = vmatprep.subr.mxu0 0.0
      %974 = vmatpush1.msra.mxu0 0.0
      %975 = vmatprep.subr.mxu0 0.0
      %976 = vmatpush1.msra.mxu0 0.0
      %977 = vmatprep.subr.mxu0 0.0
      %978 = vmatpush1.msra.mxu0 0.0
      %979 = vmatprep.subr.mxu0 0.0
      %980 = vmatpush1.msra.mxu0 0.0
      %981 = vmatprep.subr.mxu0 0.0
      %982 = vmatpush1.msra.mxu0 0.0
      %983 = vmatprep.subr.mxu0 0.0
      %984 = vmatpush1.msra.mxu0 0.0
      %985 = vmatprep.subr.mxu0 0.0
      %986 = vmatpush1.msra.mxu0 0.0
      %987 = vmatprep.subr.mxu0 0.0
      %988 = vmatpush1.msra.mxu0 0.0
      %989 = vmatprep.subr.mxu0 0.0
      %990 = vmatpush1.msra.mxu0 0.0
      %991 = vmatprep.subr.mxu0 0.0
      %992 = vmatpush1.msra.mxu0 0.0
      %993 = vmatprep.subr.mxu0 0.0
      %994 = vmatpush1.msra.mxu0 0.0
      %995 = vmatprep.subr.mxu0 0.0
      %996 = vmatpush1.msra.mxu0 0.0
      %997 = vmatprep.subr.mxu0 0.0
      %998 = vmatpush1.msra.mxu0 0.0
      %999 = vmatprep.subr.mxu0 0.0
      %1000 = vmatpush1.msra.mxu0 0.0
      %1001 = vmatprep.subr.mxu0 0.0
      %1002 = vmatpush1.msra.mxu0 0.0
      %1003 = vmatprep.subr.mxu0 0.0
      %1004 = vmatpush1.msra.mxu0 0.0
      %1005 = vmatprep.subr.mxu0 0.0
      %1006 = vmatpush1.msra.mxu0 0.0
      %1007 = vmatprep.subr.mxu0 0.0
      %1008 = vmatpush1.msra.mxu0 0.0
      %1009 = vmatprep.subr.mxu0 0.0
      %1010 = vmatpush1.msra.mxu0 0.0
      %1011 = vmatprep.subr.mxu0 0.0
      %1012 = vmatpush1.msra.mxu0 0.0
      %1013 = vmatprep.mubr.f32.mxu0 0.0
      %1014 = vmatmul.mubr.f32.gmra.mrb[0].mxu0 %v947
      %v1015 = vpop.f32.mrb[0].mxu0
      %v1016 = vadd.f32 0.0, %v1015
      %v1017 = vpop.f32.mrb[0].mxu0
      %1018 = vdwg.mxu0
      %1019 = vrot.lane.b32.xlu0 %v845, 96
      %v1020 = vpop.permute.xlu0 %1019
      %1021 = vrot.lane.b32.xlu0 %v841, 32
      %v1022 = vpop.permute.xlu0 %1021
      %v1023 = vsel %vm696, %v1020, 0
      %v1025 = vsel %vm696, %v1022, 0
      %1027 = vmatprep.subr.mxu0 0.0
      %1028 = vmatpush1.xpose.msra.mxu0 %v1025
      %1029 = vmatprep.subr.mxu0 0.0
      %1030 = vmatpush1.xpose.msra.mxu0 0.0
      %1031 = vmatprep.subr.mxu0 0.0
      %1032 = vmatpush1.xpose.msra.mxu0 0.0
      %1033 = vmatprep.subr.mxu0 0.0
      %1034 = vmatpush1.xpose.msra.mxu0 0.0
      %1035 = vmatprep.subr.mxu0 0.0
      %1036 = vmatpush1.xpose.msra.mxu0 0.0
      %1037 = vmatprep.subr.mxu0 0.0
      %1038 = vmatpush1.xpose.msra.mxu0 0.0
      %1039 = vmatprep.subr.mxu0 0.0
      %1040 = vmatpush1.xpose.msra.mxu0 0.0
      %1041 = vmatprep.subr.mxu0 0.0
      %1042 = vmatpush1.xpose.msra.mxu0 0.0
      %1043 = vmatprep.subr.mxu0 0.0
      %1044 = vmatpush1.xpose.msra.mxu0 0.0
      %1045 = vmatprep.subr.mxu0 0.0
      %1046 = vmatpush1.xpose.msra.mxu0 0.0
      %1047 = vmatprep.subr.mxu0 0.0
      %1048 = vmatpush1.xpose.msra.mxu0 0.0
      %1049 = vmatprep.subr.mxu0 0.0
      %1050 = vmatpush1.xpose.msra.mxu0 0.0
      %1051 = vmatprep.subr.mxu0 0.0
      %1052 = vmatpush1.xpose.msra.mxu0 0.0
      %1053 = vmatprep.subr.mxu0 0.0
      %1054 = vmatpush1.xpose.msra.mxu0 0.0
      %1055 = vmatprep.subr.mxu0 0.0
      %1056 = vmatpush1.xpose.msra.mxu0 0.0
      %1057 = vmatprep.subr.mxu0 0.0
      %1058 = vmatpush1.xpose.msra.mxu0 0.0
      %1059 = vmatprep.subr.mxu0 0.0
      %1060 = vmatpush1.xpose.msra.mxu0 0.0
      %1061 = vmatprep.subr.mxu0 0.0
      %1062 = vmatpush1.xpose.msra.mxu0 0.0
      %1063 = vmatprep.subr.mxu0 0.0
      %1064 = vmatpush1.xpose.msra.mxu0 0.0
      %1065 = vmatprep.subr.mxu0 0.0
      %1066 = vmatpush1.xpose.msra.mxu0 0.0
      %1067 = vmatprep.subr.mxu0 0.0
      %1068 = vmatpush1.xpose.msra.mxu0 0.0
      %1069 = vmatprep.subr.mxu0 0.0
      %1070 = vmatpush1.xpose.msra.mxu0 0.0
      %1071 = vmatprep.subr.mxu0 0.0
      %1072 = vmatpush1.xpose.msra.mxu0 0.0
      %1073 = vmatprep.subr.mxu0 0.0
      %1074 = vmatpush1.xpose.msra.mxu0 0.0
      %1075 = vmatprep.subr.mxu0 0.0
      %1076 = vmatpush1.xpose.msra.mxu0 0.0
      %1077 = vmatprep.subr.mxu0 0.0
      %1078 = vmatpush1.xpose.msra.mxu0 0.0
      %1079 = vmatprep.subr.mxu0 0.0
      %1080 = vmatpush1.xpose.msra.mxu0 0.0
      %1081 = vmatprep.subr.mxu0 0.0
      %1082 = vmatpush1.xpose.msra.mxu0 0.0
      %1083 = vmatprep.subr.mxu0 0.0
      %1084 = vmatpush1.xpose.msra.mxu0 0.0
      %1085 = vmatprep.subr.mxu0 0.0
      %1086 = vmatpush1.xpose.msra.mxu0 0.0
      %1087 = vmatprep.subr.mxu0 0.0
      %1088 = vmatpush1.xpose.msra.mxu0 0.0
      %1089 = vmatprep.subr.mxu0 0.0
      %1090 = vmatpush1.xpose.msra.mxu0 0.0
      %1091 = vmatprep.mubr.f32.mxu0 0.0
      %1092 = vmatmul.mubr.f32.gmra.mrb[0].mxu0 %v1023
      %v1093 = vpop.f32.mrb[0].mxu0
      %v1094 = vadd.f32 0.0, %v1093
      %v1095 = vpop.f32.mrb[0].mxu0
      %1096 = vdwg.mxu0
      %v1097 = vsel %vm932, -1e+09, %v1094
      %v1098 = vsel %vm934, %v1097, -inf
      %1099 = vmax.xlane.f32.xlu0 %v1098
      %v1100 = vpop.xlane.xlu0 %1099
      %v1101 = vsub.f32 %v1097, %v1100
      %v1102 = vmul.f32 %v1101, 1.442695
      %v1103 = vpow.pop %v1102
      %v1104 = vsel %vm934, %v1103, 0.0
      %1105 = vadd.xlane.f32.xlu0 %v1104
      %v1106 = vpop.xlane.xlu0 %1105
      %v1107 = vrcp.pop %v1106
      %v1108 = vmul.f32 %v1103, %v1107
      %1110 = vrot.lane.b32.xlu0 %v843, 96
      %v1111 = vpop.permute.xlu0 %1110
      %v1114 = vsel %vm934, %v1108, 0
      %1116 = vmatprep.subr.mxu0 0.0
      %1117 = vmatpush1.msra.mxu0 %v1111
      %1118 = vmatprep.subr.mxu0 0.0
      %1119 = vmatpush1.msra.mxu0 0.0
      %1120 = vmatprep.subr.mxu0 0.0
      %1121 = vmatpush1.msra.mxu0 0.0
      %1122 = vmatprep.subr.mxu0 0.0
      %1123 = vmatpush1.msra.mxu0 0.0
      %1124 = vmatprep.subr.mxu0 0.0
      %1125 = vmatpush1.msra.mxu0 0.0
      %1126 = vmatprep.subr.mxu0 0.0
      %1127 = vmatpush1.msra.mxu0 0.0
      %1128 = vmatprep.subr.mxu0 0.0
      %1129 = vmatpush1.msra.mxu0 0.0
      %1130 = vmatprep.subr.mxu0 0.0
      %1131 = vmatpush1.msra.mxu0 0.0
      %1132 = vmatprep.subr.mxu0 0.0
      %1133 = vmatpush1.msra.mxu0 0.0
      %1134 = vmatprep.subr.mxu0 0.0
      %1135 = vmatpush1.msra.mxu0 0.0
      %1136 = vmatprep.subr.mxu0 0.0
      %1137 = vmatpush1.msra.mxu0 0.0
      %1138 = vmatprep.subr.mxu0 0.0
      %1139 = vmatpush1.msra.mxu0 0.0
      %1140 = vmatprep.subr.mxu0 0.0
      %1141 = vmatpush1.msra.mxu0 0.0
      %1142 = vmatprep.subr.mxu0 0.0
      %1143 = vmatpush1.msra.mxu0 0.0
      %1144 = vmatprep.subr.mxu0 0.0
      %1145 = vmatpush1.msra.mxu0 0.0
      %1146 = vmatprep.subr.mxu0 0.0
      %1147 = vmatpush1.msra.mxu0 0.0
      %1148 = vmatprep.subr.mxu0 0.0
      %1149 = vmatpush1.msra.mxu0 0.0
      %1150 = vmatprep.subr.mxu0 0.0
      %1151 = vmatpush1.msra.mxu0 0.0
      %1152 = vmatprep.subr.mxu0 0.0
      %1153 = vmatpush1.msra.mxu0 0.0
      %1154 = vmatprep.subr.mxu0 0.0
      %1155 = vmatpush1.msra.mxu0 0.0
      %1156 = vmatprep.subr.mxu0 0.0
      %1157 = vmatpush1.msra.mxu0 0.0
      %1158 = vmatprep.subr.mxu0 0.0
      %1159 = vmatpush1.msra.mxu0 0.0
      %1160 = vmatprep.subr.mxu0 0.0
      %1161 = vmatpush1.msra.mxu0 0.0
      %1162 = vmatprep.subr.mxu0 0.0
      %1163 = vmatpush1.msra.mxu0 0.0
      %1164 = vmatprep.subr.mxu0 0.0
      %1165 = vmatpush1.msra.mxu0 0.0
      %1166 = vmatprep.subr.mxu0 0.0
      %1167 = vmatpush1.msra.mxu0 0.0
      %1168 = vmatprep.subr.mxu0 0.0
      %1169 = vmatpush1.msra.mxu0 0.0
      %1170 = vmatprep.subr.mxu0 0.0
      %1171 = vmatpush1.msra.mxu0 0.0
      %1172 = vmatprep.subr.mxu0 0.0
      %1173 = vmatpush1.msra.mxu0 0.0
      %1174 = vmatprep.subr.mxu0 0.0
      %1175 = vmatpush1.msra.mxu0 0.0
      %1176 = vmatprep.subr.mxu0 0.0
      %1177 = vmatpush1.msra.mxu0 0.0
      %1178 = vmatprep.subr.mxu0 0.0
      %1179 = vmatpush1.msra.mxu0 0.0
      %1180 = vmatprep.mubr.f32.mxu0 0.0
      %1181 = vmatmul.mubr.f32.gmra.mrb[0].mxu0 %v1114
      %v1182 = vpop.f32.mrb[0].mxu0
      %v1183 = vadd.f32 0.0, %v1182
      %v1184 = vpop.f32.mrb[0].mxu0
      %1185 = vdwg.mxu0
      %v1187 = vsel %vm696, %v1183, 0
      %1189 = vmatprep.subr.mxu0 0.0
      %1190 = vmatpush1.msra.mxu0 %v850
      %1191 = vmatprep.subr.mxu0 0.0
      %1192 = vmatpush1.msra.mxu0 %v851
      %1193 = vmatprep.subr.mxu0 0.0
      %1194 = vmatpush1.msra.mxu0 %v852
      %1195 = vmatprep.subr.mxu0 0.0
      %1196 = vmatpush1.msra.mxu0 %v853
      %1197 = vmatprep.subr.mxu0 0.0
      %1198 = vmatpush1.msra.mxu0 0.0
      %1199 = vmatprep.subr.mxu0 0.0
      %1200 = vmatpush1.msra.mxu0 0.0
      %1201 = vmatprep.subr.mxu0 0.0
      %1202 = vmatpush1.msra.mxu0 0.0
      %1203 = vmatprep.subr.mxu0 0.0
      %1204 = vmatpush1.msra.mxu0 0.0
      %1205 = vmatprep.subr.mxu0 0.0
      %1206 = vmatpush1.msra.mxu0 0.0
      %1207 = vmatprep.subr.mxu0 0.0
      %1208 = vmatpush1.msra.mxu0 0.0
      %1209 = vmatprep.subr.mxu0 0.0
      %1210 = vmatpush1.msra.mxu0 0.0
      %1211 = vmatprep.subr.mxu0 0.0
      %1212 = vmatpush1.msra.mxu0 0.0
      %1213 = vmatprep.subr.mxu0 0.0
      %1214 = vmatpush1.msra.mxu0 0.0
      %1215 = vmatprep.subr.mxu0 0.0
      %1216 = vmatpush1.msra.mxu0 0.0
      %1217 = vmatprep.subr.mxu0 0.0
      %1218 = vmatpush1.msra.mxu0 0.0
      %1219 = vmatprep.subr.mxu0 0.0
      %1220 = vmatpush1.msra.mxu0 0.0
      %1221 = vmatprep.subr.mxu0 0.0
      %1222 = vmatpush1.msra.mxu0 0.0
      %1223 = vmatprep.subr.mxu0 0.0
      %1224 = vmatpush1.msra.mxu0 0.0
      %1225 = vmatprep.subr.mxu0 0.0
      %1226 = vmatpush1.msra.mxu0 0.0
      %1227 = vmatprep.subr.mxu0 0.0
      %1228 = vmatpush1.msra.mxu0 0.0
      %1229 = vmatprep.subr.mxu0 0.0
      %1230 = vmatpush1.msra.mxu0 0.0
      %1231 = vmatprep.subr.mxu0 0.0
      %1232 = vmatpush1.msra.mxu0 0.0
      %1233 = vmatprep.subr.mxu0 0.0
      %1234 = vmatpush1.msra.mxu0 0.0
      %1235 = vmatprep.subr.mxu0 0.0
      %1236 = vmatpush1.msra.mxu0 0.0
      %1237 = vmatprep.subr.mxu0 0.0
      %1238 = vmatpush1.msra.mxu0 0.0
      %1239 = vmatprep.subr.mxu0 0.0
      %1240 = vmatpush1.msra.mxu0 0.0
      %1241 = vmatprep.subr.mxu0 0.0
      %1242 = vmatpush1.msra.mxu0 0.0
      %1243 = vmatprep.subr.mxu0 0.0
      %1244 = vmatpush1.msra.mxu0 0.0
      %1245 = vmatprep.subr.mxu0 0.0
      %1246 = vmatpush1.msra.mxu0 0.0
      %1247 = vmatprep.subr.mxu0 0.0
      %1248 = vmatpush1.msra.mxu0 0.0
      %1249 = vmatprep.subr.mxu0 0.0
      %1250 = vmatpush1.msra.mxu0 0.0
      %1251 = vmatprep.subr.mxu0 0.0
      %1252 = vmatpush1.msra.mxu0 0.0
      %1253 = vmatprep.mubr.f32.mxu0 0.0
      %1254 = vmatmul.mubr.f32.gmra.mrb[0].mxu0 %v1187
      %v1255 = vpop.f32.mrb[0].mxu0
      %v1256 = vadd.f32 0.0, %v1255
      %v1257 = vpop.f32.mrb[0].mxu0
      %1258 = vdwg.mxu0
      %v1260 = vsel %vm696, %v1016, 0
      %1262 = vmatprep.subr.mxu0 0.0
      %1263 = vmatpush1.msra.mxu0 %v846
      %1264 = vmatprep.subr.mxu0 0.0
      %1265 = vmatpush1.msra.mxu0 %v847
      %1266 = vmatprep.subr.mxu0 0.0
      %1267 = vmatpush1.msra.mxu0 %v848
      %1268 = vmatprep.subr.mxu0 0.0
      %1269 = vmatpush1.msra.mxu0 %v849
      %1270 = vmatprep.subr.mxu0 0.0
      %1271 = vmatpush1.msra.mxu0 0.0
      %1272 = vmatprep.subr.mxu0 0.0
      %1273 = vmatpush1.msra.mxu0 0.0
      %1274 = vmatprep.subr.mxu0 0.0
      %1275 = vmatpush1.msra.mxu0 0.0
      %1276 = vmatprep.subr.mxu0 0.0
      %1277 = vmatpush1.msra.mxu0 0.0
      %1278 = vmatprep.subr.mxu0 0.0
      %1279 = vmatpush1.msra.mxu0 0.0
      %1280 = vmatprep.subr.mxu0 0.0
      %1281 = vmatpush1.msra.mxu0 0.0
      %1282 = vmatprep.subr.mxu0 0.0
      %1283 = vmatpush1.msra.mxu0 0.0
      %1284 = vmatprep.subr.mxu0 0.0
      %1285 = vmatpush1.msra.mxu0 0.0
      %1286 = vmatprep.subr.mxu0 0.0
      %1287 = vmatpush1.msra.mxu0 0.0
      %1288 = vmatprep.subr.mxu0 0.0
      %1289 = vmatpush1.msra.mxu0 0.0
      %1290 = vmatprep.subr.mxu0 0.0
      %1291 = vmatpush1.msra.mxu0 0.0
      %1292 = vmatprep.subr.mxu0 0.0
      %1293 = vmatpush1.msra.mxu0 0.0
      %1294 = vmatprep.subr.mxu0 0.0
      %1295 = vmatpush1.msra.mxu0 0.0
      %1296 = vmatprep.subr.mxu0 0.0
      %1297 = vmatpush1.msra.mxu0 0.0
      %1298 = vmatprep.subr.mxu0 0.0
      %1299 = vmatpush1.msra.mxu0 0.0
      %1300 = vmatprep.subr.mxu0 0.0
      %1301 = vmatpush1.msra.mxu0 0.0
      %1302 = vmatprep.subr.mxu0 0.0
      %1303 = vmatpush1.msra.mxu0 0.0
      %1304 = vmatprep.subr.mxu0 0.0
      %1305 = vmatpush1.msra.mxu0 0.0
      %1306 = vmatprep.subr.mxu0 0.0
      %1307 = vmatpush1.msra.mxu0 0.0
      %1308 = vmatprep.subr.mxu0 0.0
      %1309 = vmatpush1.msra.mxu0 0.0
      %1310 = vmatprep.subr.mxu0 0.0
      %1311 = vmatpush1.msra.mxu0 0.0
      %1312 = vmatprep.subr.mxu0 0.0
      %1313 = vmatpush1.msra.mxu0 0.0
      %1314 = vmatprep.subr.mxu0 0.0
      %1315 = vmatpush1.msra.mxu0 0.0
      %1316 = vmatprep.subr.mxu0 0.0
      %1317 = vmatpush1.msra.mxu0 0.0
      %1318 = vmatprep.subr.mxu0 0.0
      %1319 = vmatpush1.msra.mxu0 0.0
      %1320 = vmatprep.subr.mxu0 0.0
      %1321 = vmatpush1.msra.mxu0 0.0
      %1322 = vmatprep.subr.mxu0 0.0
      %1323 = vmatpush1.msra.mxu0 0.0
      %1324 = vmatprep.subr.mxu0 0.0
      %1325 = vmatpush1.msra.mxu0 0.0
      %1326 = vmatprep.mubr.f32.mxu0 0.0
      %1327 = vmatmul.mubr.f32.gmra.mrb[0].mxu0 %v1260
      %v1328 = vpop.f32.mrb[0].mxu0
      %v1329 = vadd.f32 %v1256, %v1328
      %v1330 = vpop.f32.mrb[0].mxu0
      %1331 = vdwg.mxu0
      %v1332 = vadd.f32 %v1329, %v676
      %v1333 = vadd.f32 %v1332, %v677
      %v1334 = vld [vmem:[%s7] sm:$0x1]
      %v1335 = vld [vmem:[%s8] sm:$0x1]
      %v1336 = vsel %vm696, %v1333, 0.0
      %1337 = vadd.xlane.f32.xlu0 %v1336
      %v1338 = vpop.xlane.xlu0 %1337
      %v1339 = vrcp.pop 32.0
      %v1340 = vmul.f32 %v1338, %v1339
      %v1341 = vsub.f32 %v1333, %v1340
      %v1342 = vmul.f32 %v1341, %v1341
      %v1343 = vsel %vm696, %v1342, 0.0
      %1344 = vadd.xlane.f32.xlu0 %v1343
      %v1345 = vpop.xlane.xlu0 %1344
      %v1346 = vmul.f32 %v1345, %v1339
      %v1347 = vadd.f32 %v1346, 1e-05
      %v1348 = vrsqrt.pop %v1347
      %v1349 = vmul.f32 %v1341, %v1348
      %v1351 = vlaneseq
      %v1352 = vshrl.u32 %v1351, 7
      %v1353 = vsub.s32 0, %v1352
      %v1354 = vrot.slane %v1334, %v1353
      %v1356 = vmul.f32 %v1349, %v1354
      %v1358 = vlaneseq
      %v1359 = vshrl.u32 %v1358, 7
      %v1360 = vsub.s32 0, %v1359
      %v1361 = vrot.slane %v1335, %v1360
      %v1363 = vadd.f32 %v1356, %v1361
      %v1364 = vld [vmem:[%s9] sm:$0xff]
      %v1365 = vld [vmem:[%s9 + $0x8] sm:$0xff]
      %v1366 = vld [vmem:[%s9 + $0x10] sm:$0xff]
      %v1367 = vld [vmem:[%s9 + $0x18] sm:$0xff]
      %v1369 = vsel %vm696, %v1363, 0
      %1371 = vmatprep.subr.mxu0 0.0
      %1372 = vmatpush1.msra.mxu0 %v1364
      %1373 = vmatprep.subr.mxu0 0.0
      %1374 = vmatpush1.msra.mxu0 %v1365
      %1375 = vmatprep.subr.mxu0 0.0
      %1376 = vmatpush1.msra.mxu0 %v1366
      %1377 = vmatprep.subr.mxu0 0.0
      %1378 = vmatpush1.msra.mxu0 %v1367
      %1379 = vmatprep.subr.mxu0 0.0
      %1380 = vmatpush1.msra.mxu0 0.0
      %1381 = vmatprep.subr.mxu0 0.0
      %1382 = vmatpush1.msra.mxu0 0.0
      %1383 = vmatprep.subr.mxu0 0.0
      %1384 = vmatpush1.msra.mxu0 0.0
      %1385 = vmatprep.subr.mxu0 0.0
      %1386 = vmatpush1.msra.mxu0 0.0
      %1387 = vmatprep.subr.mxu0 0.0
      %1388 = vmatpush1.msra.mxu0 0.0
      %1389 = vmatprep.subr.mxu0 0.0
      %1390 = vmatpush1.msra.mxu0 0.0
      %1391 = vmatprep.subr.mxu0 0.0
      %1392 = vmatpush1.msra.mxu0 0.0
      %1393 = vmatprep.subr.mxu0 0.0
      %1394 = vmatpush1.msra.mxu0 0.0
      %1395 = vmatprep.subr.mxu0 0.0
      %1396 = vmatpush1.msra.mxu0 0.0
      %1397 = vmatprep.subr.mxu0 0.0
      %1398 = vmatpush1.msra.mxu0 0.0
      %1399 = vmatprep.subr.mxu0 0.0
      %1400 = vmatpush1.msra.mxu0 0.0
      %1401 = vmatprep.subr.mxu0 0.0
      %1402 = vmatpush1.msra.mxu0 0.0
      %1403 = vmatprep.subr.mxu0 0.0
      %1404 = vmatpush1.msra.mxu0 0.0
      %1405 = vmatprep.subr.mxu0 0.0
      %1406 = vmatpush1.msra.mxu0 0.0
      %1407 = vmatprep.subr.mxu0 0.0
      %1408 = vmatpush1.msra.mxu0 0.0
      %1409 = vmatprep.subr.mxu0 0.0
      %1410 = vmatpush1.msra.mxu0 0.0
      %1411 = vmatprep.subr.mxu0 0.0
      %1412 = vmatpush1.msra.mxu0 0.0
      %1413 = vmatprep.subr.mxu0 0.0
      %1414 = vmatpush1.msra.mxu0 0.0
      %1415 = vmatprep.subr.mxu0 0.0
      %1416 = vmatpush1.msra.mxu0 0.0
      %1417 = vmatprep.subr.mxu0 0.0
      %1418 = vmatpush1.msra.mxu0 0.0
      %1419 = vmatprep.subr.mxu0 0.0
      %1420 = vmatpush1.msra.mxu0 0.0
      %1421 = vmatprep.subr.mxu0 0.0
      %1422 = vmatpush1.msra.mxu0 0.0
      %1423 = vmatprep.subr.mxu0 0.0
      %1424 = vmatpush1.msra.mxu0 0.0
      %1425 = vmatprep.subr.mxu0 0.0
      %1426 = vmatpush1.msra.mxu0 0.0
      %1427 = vmatprep.subr.mxu0 0.0
      %1428 = vmatpush1.msra.mxu0 0.0
      %1429 = vmatprep.subr.mxu0 0.0
      %1430 = vmatpush1.msra.mxu0 0.0
      %1431 = vmatprep.subr.mxu0 0.0
      %1432 = vmatpush1.msra.mxu0 0.0
      %1433 = vmatprep.subr.mxu0 0.0
      %1434 = vmatpush1.msra.mxu0 0.0
      %1435 = vmatprep.mubr.f32.mxu0 0.0
      %1436 = vmatmul.mubr.f32.gmra.mrb[0].mxu0 %v1369
      %v1437 = vpop.f32.mrb[0].mxu0
      %v1438 = vadd.f32 0.0, %v1437
      %v1439 = vpop.f32.mrb[0].mxu0
      %1440 = vdwg.mxu0
      %v1441 = vmul.f32 %v1438, 0.17677669
      %v1442 = vld [vmem:[%s10] sm:$0xff]
      %v1443 = vld [vmem:[%s10 + $0x8] sm:$0xff]
      %v1444 = vld [vmem:[%s10 + $0x10] sm:$0xff]
      %v1445 = vld [vmem:[%s10 + $0x18] sm:$0xff]
      %v1447 = vsel %vm696, %v678, 0
      %1449 = vmatprep.subr.mxu0 0.0
      %1450 = vmatpush1.msra.mxu0 %v1442
      %1451 = vmatprep.subr.mxu0 0.0
      %1452 = vmatpush1.msra.mxu0 %v1443
      %1453 = vmatprep.subr.mxu0 0.0
      %1454 = vmatpush1.msra.mxu0 %v1444
      %1455 = vmatprep.subr.mxu0 0.0
      %1456 = vmatpush1.msra.mxu0 %v1445
      %1457 = vmatprep.subr.mxu0 0.0
      %1458 = vmatpush1.msra.mxu0 0.0
      %1459 = vmatprep.subr.mxu0 0.0
      %1460 = vmatpush1.msra.mxu0 0.0
      %1461 = vmatprep.subr.mxu0 0.0
      %1462 = vmatpush1.msra.mxu0 0.0
      %1463 = vmatprep.subr.mxu0 0.0
      %1464 = vmatpush1.msra.mxu0 0.0
      %1465 = vmatprep.subr.mxu0 0.0
      %1466 = vmatpush1.msra.mxu0 0.0
      %1467 = vmatprep.subr.mxu0 0.0
      %1468 = vmatpush1.msra.mxu0 0.0
      %1469 = vmatprep.subr.mxu0 0.0
      %1470 = vmatpush1.msra.mxu0 0.0
      %1471 = vmatprep.subr.mxu0 0.0
      %1472 = vmatpush1.msra.mxu0 0.0
      %1473 = vmatprep.subr.mxu0 0.0
      %1474 = vmatpush1.msra.mxu0 0.0
      %1475 = vmatprep.subr.mxu0 0.0
      %1476 = vmatpush1.msra.mxu0 0.0
      %1477 = vmatprep.subr.mxu0 0.0
      %1478 = vmatpush1.msra.mxu0 0.0
      %1479 = vmatprep.subr.mxu0 0.0
      %1480 = vmatpush1.msra.mxu0 0.0
      %1481 = vmatprep.subr.mxu0 0.0
      %1482 = vmatpush1.msra.mxu0 0.0
      %1483 = vmatprep.subr.mxu0 0.0
      %1484 = vmatpush1.msra.mxu0 0.0
      %1485 = vmatprep.subr.mxu0 0.0
      %1486 = vmatpush1.msra.mxu0 0.0
      %1487 = vmatprep.subr.mxu0 0.0
      %1488 = vmatpush1.msra.mxu0 0.0
      %1489 = vmatprep.subr.mxu0 0.0
      %1490 = vmatpush1.msra.mxu0 0.0
      %1491 = vmatprep.subr.mxu0 0.0
      %1492 = vmatpush1.msra.mxu0 0.0
      %1493 = vmatprep.subr.mxu0 0.0
      %1494 = vmatpush1.msra.mxu0 0.0
      %1495 = vmatprep.subr.mxu0 0.0
      %1496 = vmatpush1.msra.mxu0 0.0
      %1497 = vmatprep.subr.mxu0 0.0
      %1498 = vmatpush1.msra.mxu0 0.0
      %1499 = vmatprep.subr.mxu0 0.0
      %1500 = vmatpush1.msra.mxu0 0.0
      %1501 = vmatprep.subr.mxu0 0.0
      %1502 = vmatpush1.msra.mxu0 0.0
      %1503 = vmatprep.subr.mxu0 0.0
      %1504 = vmatpush1.msra.mxu0 0.0
      %1505 = vmatprep.subr.mxu0 0.0
      %1506 = vmatpush1.msra.mxu0 0.0
      %1507 = vmatprep.subr.mxu0 0.0
      %1508 = vmatpush1.msra.mxu0 0.0
      %1509 = vmatprep.subr.mxu0 0.0
      %1510 = vmatpush1.msra.mxu0 0.0
      %1511 = vmatprep.subr.mxu0 0.0
      %1512 = vmatpush1.msra.mxu0 0.0
      %1513 = vmatprep.mubr.f32.mxu0 0.0
      %1514 = vmatmul.mubr.f32.gmra.mrb[0].mxu0 %v1447
      %v1515 = vpop.f32.mrb[0].mxu0
      %v1516 = vadd.f32 0.0, %v1515
      %v1517 = vpop.f32.mrb[0].mxu0
      %1518 = vdwg.mxu0
      %v1519 = vld [vmem:[%s11] sm:$0xff]
      %v1520 = vld [vmem:[%s11 + $0x8] sm:$0xff]
      %v1521 = vld [vmem:[%s11 + $0x10] sm:$0xff]
      %v1522 = vld [vmem:[%s11 + $0x18] sm:$0xff]
      %v1523 = vld [vmem:[%s11 + $0x20] sm:$0xff]
      %v1524 = vld [vmem:[%s11 + $0x28] sm:$0xff]
      %v1525 = vld [vmem:[%s11 + $0x30] sm:$0xff]
      %v1526 = vld [vmem:[%s11 + $0x38] sm:$0xff]
      %v1528 = vsel %vm696, %v1441, 0
      %v1531 = vsel %vm696, %v1516, 0
      %1533 = vmatprep.subr.mxu0 0.0
      %1534 = vmatpush1.xpose.msra.mxu0 %v1531
      %1535 = vmatprep.subr.mxu0 0.0
      %1536 = vmatpush1.xpose.msra.mxu0 0.0
      %1537 = vmatprep.subr.mxu0 0.0
      %1538 = vmatpush1.xpose.msra.mxu0 0.0
      %1539 = vmatprep.subr.mxu0 0.0
      %1540 = vmatpush1.xpose.msra.mxu0 0.0
      %1541 = vmatprep.subr.mxu0 0.0
      %1542 = vmatpush1.xpose.msra.mxu0 0.0
      %1543 = vmatprep.subr.mxu0 0.0
      %1544 = vmatpush1.xpose.msra.mxu0 0.0
      %1545 = vmatprep.subr.mxu0 0.0
      %1546 = vmatpush1.xpose.msra.mxu0 0.0
      %1547 = vmatprep.subr.mxu0 0.0
      %1548 = vmatpush1.xpose.msra.mxu0 0.0
      %1549 = vmatprep.subr.mxu0 0.0
      %1550 = vmatpush1.xpose.msra.mxu0 0.0
      %1551 = vmatprep.subr.mxu0 0.0
      %1552 = vmatpush1.xpose.msra.mxu0 0.0
      %1553 = vmatprep.subr.mxu0 0.0
      %1554 = vmatpush1.xpose.msra.mxu0 0.0
      %1555 = vmatprep.subr.mxu0 0.0
      %1556 = vmatpush1.xpose.msra.mxu0 0.0
      %1557 = vmatprep.subr.mxu0 0.0
      %1558 = vmatpush1.xpose.msra.mxu0 0.0
      %1559 = vmatprep.subr.mxu0 0.0
      %1560 = vmatpush1.xpose.msra.mxu0 0.0
      %1561 = vmatprep.subr.mxu0 0.0
      %1562 = vmatpush1.xpose.msra.mxu0 0.0
      %1563 = vmatprep.subr.mxu0 0.0
      %1564 = vmatpush1.xpose.msra.mxu0 0.0
      %1565 = vmatprep.subr.mxu0 0.0
      %1566 = vmatpush1.xpose.msra.mxu0 0.0
      %1567 = vmatprep.subr.mxu0 0.0
      %1568 = vmatpush1.xpose.msra.mxu0 0.0
      %1569 = vmatprep.subr.mxu0 0.0
      %1570 = vmatpush1.xpose.msra.mxu0 0.0
      %1571 = vmatprep.subr.mxu0 0.0
      %1572 = vmatpush1.xpose.msra.mxu0 0.0
      %1573 = vmatprep.subr.mxu0 0.0
      %1574 = vmatpush1.xpose.msra.mxu0 0.0
      %1575 = vmatprep.subr.mxu0 0.0
      %1576 = vmatpush1.xpose.msra.mxu0 0.0
      %1577 = vmatprep.subr.mxu0 0.0
      %1578 = vmatpush1.xpose.msra.mxu0 0.0
      %1579 = vmatprep.subr.mxu0 0.0
      %1580 = vmatpush1.xpose.msra.mxu0 0.0
      %1581 = vmatprep.subr.mxu0 0.0
      %1582 = vmatpush1.xpose.msra.mxu0 0.0
      %1583 = vmatprep.subr.mxu0 0.0
      %1584 = vmatpush1.xpose.msra.mxu0 0.0
      %1585 = vmatprep.subr.mxu0 0.0
      %1586 = vmatpush1.xpose.msra.mxu0 0.0
      %1587 = vmatprep.subr.mxu0 0.0
      %1588 = vmatpush1.xpose.msra.mxu0 0.0
      %1589 = vmatprep.subr.mxu0 0.0
      %1590 = vmatpush1.xpose.msra.mxu0 0.0
      %1591 = vmatprep.subr.mxu0 0.0
      %1592 = vmatpush1.xpose.msra.mxu0 0.0
      %1593 = vmatprep.subr.mxu0 0.0
      %1594 = vmatpush1.xpose.msra.mxu0 0.0
      %1595 = vmatprep.subr.mxu0 0.0
      %1596 = vmatpush1.xpose.msra.mxu0 0.0
      %1597 = vmatprep.mubr.f32.mxu0 0.0
      %1598 = vmatmul.mubr.f32.gmra.mrb[0].mxu0 %v1528
      %v1599 = vpop.f32.mrb[0].mxu0
      %v1600 = vadd.f32 0.0, %v1599
      %v1601 = vpop.f32.mrb[0].mxu0
      %1602 = vdwg.mxu0
      %v1603 = vsel %vm934, %v1600, -inf
      %1604 = vmax.xlane.f32.xlu0 %v1603
      %v1605 = vpop.xlane.xlu0 %1604
      %v1606 = vsub.f32 %v1600, %v1605
      %v1607 = vmul.f32 %v1606, 1.442695
      %v1608 = vpow.pop %v1607
      %v1609 = vsel %vm934, %v1608, 0.0
      %1610 = vadd.xlane.f32.xlu0 %v1609
      %v1611 = vpop.xlane.xlu0 %1610
      %v1612 = vrcp.pop %v1611
      %v1613 = vmul.f32 %v1608, %v1612
      %1614 = vrot.lane.b32.xlu0 %v1516, 64
      %v1615 = vpop.permute.xlu0 %1614
      %v1618 = vsel %vm934, %v1613, 0
      %1620 = vmatprep.subr.mxu0 0.0
      %1621 = vmatpush1.msra.mxu0 %v1615
      %1622 = vmatprep.subr.mxu0 0.0
      %1623 = vmatpush1.msra.mxu0 0.0
      %1624 = vmatprep.subr.mxu0 0.0
      %1625 = vmatpush1.msra.mxu0 0.0
      %1626 = vmatprep.subr.mxu0 0.0
      %1627 = vmatpush1.msra.mxu0 0.0
      %1628 = vmatprep.subr.mxu0 0.0
      %1629 = vmatpush1.msra.mxu0 0.0
      %1630 = vmatprep.subr.mxu0 0.0
      %1631 = vmatpush1.msra.mxu0 0.0
      %1632 = vmatprep.subr.mxu0 0.0
      %1633 = vmatpush1.msra.mxu0 0.0
      %1634 = vmatprep.subr.mxu0 0.0
      %1635 = vmatpush1.msra.mxu0 0.0
      %1636 = vmatprep.subr.mxu0 0.0
      %1637 = vmatpush1.msra.mxu0 0.0
      %1638 = vmatprep.subr.mxu0 0.0
      %1639 = vmatpush1.msra.mxu0 0.0
      %1640 = vmatprep.subr.mxu0 0.0
      %1641 = vmatpush1.msra.mxu0 0.0
      %1642 = vmatprep.subr.mxu0 0.0
      %1643 = vmatpush1.msra.mxu0 0.0
      %1644 = vmatprep.subr.mxu0 0.0
      %1645 = vmatpush1.msra.mxu0 0.0
      %1646 = vmatprep.subr.mxu0 0.0
      %1647 = vmatpush1.msra.mxu0 0.0
      %1648 = vmatprep.subr.mxu0 0.0
      %1649 = vmatpush1.msra.mxu0 0.0
      %1650 = vmatprep.subr.mxu0 0.0
      %1651 = vmatpush1.msra.mxu0 0.0
      %1652 = vmatprep.subr.mxu0 0.0
      %1653 = vmatpush1.msra.mxu0 0.0
      %1654 = vmatprep.subr.mxu0 0.0
      %1655 = vmatpush1.msra.mxu0 0.0
      %1656 = vmatprep.subr.mxu0 0.0
      %1657 = vmatpush1.msra.mxu0 0.0
      %1658 = vmatprep.subr.mxu0 0.0
      %1659 = vmatpush1.msra.mxu0 0.0
      %1660 = vmatprep.subr.mxu0 0.0
      %1661 = vmatpush1.msra.mxu0 0.0
      %1662 = vmatprep.subr.mxu0 0.0
      %1663 = vmatpush1.msra.mxu0 0.0
      %1664 = vmatprep.subr.mxu0 0.0
      %1665 = vmatpush1.msra.mxu0 0.0
      %1666 = vmatprep.subr.mxu0 0.0
      %1667 = vmatpush1.msra.mxu0 0.0
      %1668 = vmatprep.subr.mxu0 0.0
      %1669 = vmatpush1.msra.mxu0 0.0
      %1670 = vmatprep.subr.mxu0 0.0
      %1671 = vmatpush1.msra.mxu0 0.0
      %1672 = vmatprep.subr.mxu0 0.0
      %1673 = vmatpush1.msra.mxu0 0.0
      %1674 = vmatprep.subr.mxu0 0.0
      %1675 = vmatpush1.msra.mxu0 0.0
      %1676 = vmatprep.subr.mxu0 0.0
      %1677 = vmatpush1.msra.mxu0 0.0
      %1678 = vmatprep.subr.mxu0 0.0
      %1679 = vmatpush1.msra.mxu0 0.0
      %1680 = vmatprep.subr.mxu0 0.0
      %1681 = vmatpush1.msra.mxu0 0.0
      %1682 = vmatprep.subr.mxu0 0.0
      %1683 = vmatpush1.msra.mxu0 0.0
      %1684 = vmatprep.mubr.f32.mxu0 0.0
      %1685 = vmatmul.mubr.f32.gmra.mrb[0].mxu0 %v1618
      %v1686 = vpop.f32.mrb[0].mxu0
      %v1687 = vadd.f32 0.0, %v1686
      %v1688 = vpop.f32.mrb[0].mxu0
      %1689 = vdwg.mxu0
      %1690 = vrot.lane.b32.xlu0 %v1441, 96
      %v1691 = vpop.permute.xlu0 %1690
      %1692 = vrot.lane.b32.xlu0 %v1516, 96
      %v1693 = vpop.permute.xlu0 %1692
      %v1694 = vsel %vm696, %v1691, 0
      %v1696 = vsel %vm696, %v1693, 0
      %1698 = vmatprep.subr.mxu0 0.0
      %1699 = vmatpush1.xpose.msra.mxu0 %v1696
      %1700 = vmatprep.subr.mxu0 0.0
      %1701 = vmatpush1.xpose.msra.mxu0 0.0
      %1702 = vmatprep.subr.mxu0 0.0
      %1703 = vmatpush1.xpose.msra.mxu0 0.0
      %1704 = vmatprep.subr.mxu0 0.0
      %1705 = vmatpush1.xpose.msra.mxu0 0.0
      %1706 = vmatprep.subr.mxu0 0.0
      %1707 = vmatpush1.xpose.msra.mxu0 0.0
      %1708 = vmatprep.subr.mxu0 0.0
      %1709 = vmatpush1.xpose.msra.mxu0 0.0
      %1710 = vmatprep.subr.mxu0 0.0
      %1711 = vmatpush1.xpose.msra.mxu0 0.0
      %1712 = vmatprep.subr.mxu0 0.0
      %1713 = vmatpush1.xpose.msra.mxu0 0.0
      %1714 = vmatprep.subr.mxu0 0.0
      %1715 = vmatpush1.xpose.msra.mxu0 0.0
      %1716 = vmatprep.subr.mxu0 0.0
      %1717 = vmatpush1.xpose.msra.mxu0 0.0
      %1718 = vmatprep.subr.mxu0 0.0
      %1719 = vmatpush1.xpose.msra.mxu0 0.0
      %1720 = vmatprep.subr.mxu0 0.0
      %1721 = vmatpush1.xpose.msra.mxu0 0.0
      %1722 = vmatprep.subr.mxu0 0.0
      %1723 = vmatpush1.xpose.msra.mxu0 0.0
      %1724 = vmatprep.subr.mxu0 0.0
      %1725 = vmatpush1.xpose.msra.mxu0 0.0
      %1726 = vmatprep.subr.mxu0 0.0
      %1727 = vmatpush1.xpose.msra.mxu0 0.0
      %1728 = vmatprep.subr.mxu0 0.0
      %1729 = vmatpush1.xpose.msra.mxu0 0.0
      %1730 = vmatprep.subr.mxu0 0.0
      %1731 = vmatpush1.xpose.msra.mxu0 0.0
      %1732 = vmatprep.subr.mxu0 0.0
      %1733 = vmatpush1.xpose.msra.mxu0 0.0
      %1734 = vmatprep.subr.mxu0 0.0
      %1735 = vmatpush1.xpose.msra.mxu0 0.0
      %1736 = vmatprep.subr.mxu0 0.0
      %1737 = vmatpush1.xpose.msra.mxu0 0.0
      %1738 = vmatprep.subr.mxu0 0.0
      %1739 = vmatpush1.xpose.msra.mxu0 0.0
      %1740 = vmatprep.subr.mxu0 0.0
      %1741 = vmatpush1.xpose.msra.mxu0 0.0
      %1742 = vmatprep.subr.mxu0 0.0
      %1743 = vmatpush1.xpose.msra.mxu0 0.0
      %1744 = vmatprep.subr.mxu0 0.0
      %1745 = vmatpush1.xpose.msra.mxu0 0.0
      %1746 = vmatprep.subr.mxu0 0.0
      %1747 = vmatpush1.xpose.msra.mxu0 0.0
      %1748 = vmatprep.subr.mxu0 0.0
      %1749 = vmatpush1.xpose.msra.mxu0 0.0
      %1750 = vmatprep.subr.mxu0 0.0
      %1751 = vmatpush1.xpose.msra.mxu0 0.0
      %1752 = vmatprep.subr.mxu0 0.0
      %1753 = vmatpush1.xpose.msra.mxu0 0.0
      %1754 = vmatprep.subr.mxu0 0.0
      %1755 = vmatpush1.xpose.msra.mxu0 0.0
      %1756 = vmatprep.subr.mxu0 0.0
      %1757 = vmatpush1.xpose.msra.mxu0 0.0
      %1758 = vmatprep.subr.mxu0 0.0
      %1759 = vmatpush1.xpose.msra.mxu0 0.0
      %1760 = vmatprep.subr.mxu0 0.0
      %1761 = vmatpush1.xpose.msra.mxu0 0.0
      %1762 = vmatprep.mubr.f32.mxu0 0.0
      %1763 = vmatmul.mubr.f32.gmra.mrb[0].mxu0 %v1694
      %v1764 = vpop.f32.mrb[0].mxu0
      %v1765 = vadd.f32 0.0, %v1764
      %v1766 = vpop.f32.mrb[0].mxu0
      %1767 = vdwg.mxu0
      %v1768 = vsel %vm934, %v1765, -inf
      %1769 = vmax.xlane.f32.xlu0 %v1768
      %v1770 = vpop.xlane.xlu0 %1769
      %v1771 = vsub.f32 %v1765, %v1770
      %v1772 = vmul.f32 %v1771, 1.442695
      %v1773 = vpow.pop %v1772
      %v1774 = vsel %vm934, %v1773, 0.0
      %1775 = vadd.xlane.f32.xlu0 %v1774
      %v1776 = vpop.xlane.xlu0 %1775
      %v1777 = vrcp.pop %v1776
      %v1778 = vmul.f32 %v1773, %v1777
      %1779 = vrot.lane.b32.xlu0 %v1516, 32
      %v1780 = vpop.permute.xlu0 %1779
      %v1783 = vsel %vm934, %v1778, 0
      %1785 = vmatprep.subr.mxu0 0.0
      %1786 = vmatpush1.msra.mxu0 %v1780
      %1787 = vmatprep.subr.mxu0 0.0
      %1788 = vmatpush1.msra.mxu0 0.0
      %1789 = vmatprep.subr.mxu0 0.0
      %1790 = vmatpush1.msra.mxu0 0.0
      %1791 = vmatprep.subr.mxu0 0.0
      %1792 = vmatpush1.msra.mxu0 0.0
      %1793 = vmatprep.subr.mxu0 0.0
      %1794 = vmatpush1.msra.mxu0 0.0
      %1795 = vmatprep.subr.mxu0 0.0
      %1796 = vmatpush1.msra.mxu0 0.0
      %1797 = vmatprep.subr.mxu0 0.0
      %1798 = vmatpush1.msra.mxu0 0.0
      %1799 = vmatprep.subr.mxu0 0.0
      %1800 = vmatpush1.msra.mxu0 0.0
      %1801 = vmatprep.subr.mxu0 0.0
      %1802 = vmatpush1.msra.mxu0 0.0
      %1803 = vmatprep.subr.mxu0 0.0
      %1804 = vmatpush1.msra.mxu0 0.0
      %1805 = vmatprep.subr.mxu0 0.0
      %1806 = vmatpush1.msra.mxu0 0.0
      %1807 = vmatprep.subr.mxu0 0.0
      %1808 = vmatpush1.msra.mxu0 0.0
      %1809 = vmatprep.subr.mxu0 0.0
      %1810 = vmatpush1.msra.mxu0 0.0
      %1811 = vmatprep.subr.mxu0 0.0
      %1812 = vmatpush1.msra.mxu0 0.0
      %1813 = vmatprep.subr.mxu0 0.0
      %1814 = vmatpush1.msra.mxu0 0.0
      %1815 = vmatprep.subr.mxu0 0.0
      %1816 = vmatpush1.msra.mxu0 0.0
      %1817 = vmatprep.subr.mxu0 0.0
      %1818 = vmatpush1.msra.mxu0 0.0
      %1819 = vmatprep.subr.mxu0 0.0
      %1820 = vmatpush1.msra.mxu0 0.0
      %1821 = vmatprep.subr.mxu0 0.0
      %1822 = vmatpush1.msra.mxu0 0.0
      %1823 = vmatprep.subr.mxu0 0.0
      %1824 = vmatpush1.msra.mxu0 0.0
      %1825 = vmatprep.subr.mxu0 0.0
      %1826 = vmatpush1.msra.mxu0 0.0
      %1827 = vmatprep.subr.mxu0 0.0
      %1828 = vmatpush1.msra.mxu0 0.0
      %1829 = vmatprep.subr.mxu0 0.0
      %1830 = vmatpush1.msra.mxu0 0.0
      %1831 = vmatprep.subr.mxu0 0.0
      %1832 = vmatpush1.msra.mxu0 0.0
      %1833 = vmatprep.subr.mxu0 0.0
      %1834 = vmatpush1.msra.mxu0 0.0
      %1835 = vmatprep.subr.mxu0 0.0
      %1836 = vmatpush1.msra.mxu0 0.0
      %1837 = vmatprep.subr.mxu0 0.0
      %1838 = vmatpush1.msra.mxu0 0.0
      %1839 = vmatprep.subr.mxu0 0.0
      %1840 = vmatpush1.msra.mxu0 0.0
      %1841 = vmatprep.subr.mxu0 0.0
      %1842 = vmatpush1.msra.mxu0 0.0
      %1843 = vmatprep.subr.mxu0 0.0
      %1844 = vmatpush1.msra.mxu0 0.0
      %1845 = vmatprep.subr.mxu0 0.0
      %1846 = vmatpush1.msra.mxu0 0.0
      %1847 = vmatprep.subr.mxu0 0.0
      %1848 = vmatpush1.msra.mxu0 0.0
      %1849 = vmatprep.mubr.f32.mxu0 0.0
      %1850 = vmatmul.mubr.f32.gmra.mrb[0].mxu0 %v1783
      %v1851 = vpop.f32.mrb[0].mxu0
      %v1852 = vadd.f32 0.0, %v1851
      %v1853 = vpop.f32.mrb[0].mxu0
      %1854 = vdwg.mxu0
      %v1856 = vsel %vm696, %v1852, 0
      %1858 = vmatprep.subr.mxu0 0.0
      %1859 = vmatpush1.msra.mxu0 %v1523
      %1860 = vmatprep.subr.mxu0 0.0
      %1861 = vmatpush1.msra.mxu0 %v1524
      %1862 = vmatprep.subr.mxu0 0.0
      %1863 = vmatpush1.msra.mxu0 %v1525
      %1864 = vmatprep.subr.mxu0 0.0
      %1865 = vmatpush1.msra.mxu0 %v1526
      %1866 = vmatprep.subr.mxu0 0.0
      %1867 = vmatpush1.msra.mxu0 0.0
      %1868 = vmatprep.subr.mxu0 0.0
      %1869 = vmatpush1.msra.mxu0 0.0
      %1870 = vmatprep.subr.mxu0 0.0
      %1871 = vmatpush1.msra.mxu0 0.0
      %1872 = vmatprep.subr.mxu0 0.0
      %1873 = vmatpush1.msra.mxu0 0.0
      %1874 = vmatprep.subr.mxu0 0.0
      %1875 = vmatpush1.msra.mxu0 0.0
      %1876 = vmatprep.subr.mxu0 0.0
      %1877 = vmatpush1.msra.mxu0 0.0
      %1878 = vmatprep.subr.mxu0 0.0
      %1879 = vmatpush1.msra.mxu0 0.0
      %1880 = vmatprep.subr.mxu0 0.0
      %1881 = vmatpush1.msra.mxu0 0.0
      %1882 = vmatprep.subr.mxu0 0.0
      %1883 = vmatpush1.msra.mxu0 0.0
      %1884 = vmatprep.subr.mxu0 0.0
      %1885 = vmatpush1.msra.mxu0 0.0
      %1886 = vmatprep.subr.mxu0 0.0
      %1887 = vmatpush1.msra.mxu0 0.0
      %1888 = vmatprep.subr.mxu0 0.0
      %1889 = vmatpush1.msra.mxu0 0.0
      %1890 = vmatprep.subr.mxu0 0.0
      %1891 = vmatpush1.msra.mxu0 0.0
      %1892 = vmatprep.subr.mxu0 0.0
      %1893 = vmatpush1.msra.mxu0 0.0
      %1894 = vmatprep.subr.mxu0 0.0
      %1895 = vmatpush1.msra.mxu0 0.0
      %1896 = vmatprep.subr.mxu0 0.0
      %1897 = vmatpush1.msra.mxu0 0.0
      %1898 = vmatprep.subr.mxu0 0.0
      %1899 = vmatpush1.msra.mxu0 0.0
      %1900 = vmatprep.subr.mxu0 0.0
      %1901 = vmatpush1.msra.mxu0 0.0
      %1902 = vmatprep.subr.mxu0 0.0
      %1903 = vmatpush1.msra.mxu0 0.0
      %1904 = vmatprep.subr.mxu0 0.0
      %1905 = vmatpush1.msra.mxu0 0.0
      %1906 = vmatprep.subr.mxu0 0.0
      %1907 = vmatpush1.msra.mxu0 0.0
      %1908 = vmatprep.subr.mxu0 0.0
      %1909 = vmatpush1.msra.mxu0 0.0
      %1910 = vmatprep.subr.mxu0 0.0
      %1911 = vmatpush1.msra.mxu0 0.0
      %1912 = vmatprep.subr.mxu0 0.0
      %1913 = vmatpush1.msra.mxu0 0.0
      %1914 = vmatprep.subr.mxu0 0.0
      %1915 = vmatpush1.msra.mxu0 0.0
      %1916 = vmatprep.subr.mxu0 0.0
      %1917 = vmatpush1.msra.mxu0 0.0
      %1918 = vmatprep.subr.mxu0 0.0
      %1919 = vmatpush1.msra.mxu0 0.0
      %1920 = vmatprep.subr.mxu0 0.0
      %1921 = vmatpush1.msra.mxu0 0.0
      %1922 = vmatprep.mubr.f32.mxu0 0.0
      %1923 = vmatmul.mubr.f32.gmra.mrb[0].mxu0 %v1856
      %v1924 = vpop.f32.mrb[0].mxu0
      %v1925 = vadd.f32 0.0, %v1924
      %v1926 = vpop.f32.mrb[0].mxu0
      %1927 = vdwg.mxu0
      %v1929 = vsel %vm696, %v1687, 0
      %1931 = vmatprep.subr.mxu0 0.0
      %1932 = vmatpush1.msra.mxu0 %v1519
      %1933 = vmatprep.subr.mxu0 0.0
      %1934 = vmatpush1.msra.mxu0 %v1520
      %1935 = vmatprep.subr.mxu0 0.0
      %1936 = vmatpush1.msra.mxu0 %v1521
      %1937 = vmatprep.subr.mxu0 0.0
      %1938 = vmatpush1.msra.mxu0 %v1522
      %1939 = vmatprep.subr.mxu0 0.0
      %1940 = vmatpush1.msra.mxu0 0.0
      %1941 = vmatprep.subr.mxu0 0.0
      %1942 = vmatpush1.msra.mxu0 0.0
      %1943 = vmatprep.subr.mxu0 0.0
      %1944 = vmatpush1.msra.mxu0 0.0
      %1945 = vmatprep.subr.mxu0 0.0
      %1946 = vmatpush1.msra.mxu0 0.0
      %1947 = vmatprep.subr.mxu0 0.0
      %1948 = vmatpush1.msra.mxu0 0.0
      %1949 = vmatprep.subr.mxu0 0.0
      %1950 = vmatpush1.msra.mxu0 0.0
      %1951 = vmatprep.subr.mxu0 0.0
      %1952 = vmatpush1.msra.mxu0 0.0
      %1953 = vmatprep.subr.mxu0 0.0
      %1954 = vmatpush1.msra.mxu0 0.0
      %1955 = vmatprep.subr.mxu0 0.0
      %1956 = vmatpush1.msra.mxu0 0.0
      %1957 = vmatprep.subr.mxu0 0.0
      %1958 = vmatpush1.msra.mxu0 0.0
      %1959 = vmatprep.subr.mxu0 0.0
      %1960 = vmatpush1.msra.mxu0 0.0
      %1961 = vmatprep.subr.mxu0 0.0
      %1962 = vmatpush1.msra.mxu0 0.0
      %1963 = vmatprep.subr.mxu0 0.0
      %1964 = vmatpush1.msra.mxu0 0.0
      %1965 = vmatprep.subr.mxu0 0.0
      %1966 = vmatpush1.msra.mxu0 0.0
      %1967 = vmatprep.subr.mxu0 0.0
      %1968 = vmatpush1.msra.mxu0 0.0
      %1969 = vmatprep.subr.mxu0 0.0
      %1970 = vmatpush1.msra.mxu0 0.0
      %1971 = vmatprep.subr.mxu0 0.0
      %1972 = vmatpush1.msra.mxu0 0.0
      %1973 = vmatprep.subr.mxu0 0.0
      %1974 = vmatpush1.msra.mxu0 0.0
      %1975 = vmatprep.subr.mxu0 0.0
      %1976 = vmatpush1.msra.mxu0 0.0
      %1977 = vmatprep.subr.mxu0 0.0
      %1978 = vmatpush1.msra.mxu0 0.0
      %1979 = vmatprep.subr.mxu0 0.0
      %1980 = vmatpush1.msra.mxu0 0.0
      %1981 = vmatprep.subr.mxu0 0.0
      %1982 = vmatpush1.msra.mxu0 0.0
      %1983 = vmatprep.subr.mxu0 0.0
      %1984 = vmatpush1.msra.mxu0 0.0
      %1985 = vmatprep.subr.mxu0 0.0
      %1986 = vmatpush1.msra.mxu0 0.0
      %1987 = vmatprep.subr.mxu0 0.0
      %1988 = vmatpush1.msra.mxu0 0.0
      %1989 = vmatprep.subr.mxu0 0.0
      %1990 = vmatpush1.msra.mxu0 0.0
      %1991 = vmatprep.subr.mxu0 0.0
      %1992 = vmatpush1.msra.mxu0 0.0
      %1993 = vmatprep.subr.mxu0 0.0
      %1994 = vmatpush1.msra.mxu0 0.0
      %1995 = vmatprep.mubr.f32.mxu0 0.0
      %1996 = vmatmul.mubr.f32.gmra.mrb[0].mxu0 %v1929
      %v1997 = vpop.f32.mrb[0].mxu0
      %v1998 = vadd.f32 %v1925, %v1997
      %v1999 = vpop.f32.mrb[0].mxu0
      %2000 = vdwg.mxu0
      %v2001 = vadd.f32 %v1998, %v1363
      %v2002 = vld [vmem:[%s12] sm:$0x1]
      %v2003 = vld [vmem:[%s13] sm:$0x1]
      %v2004 = vsel %vm696, %v2001, 0.0
      %2005 = vadd.xlane.f32.xlu0 %v2004
      %v2006 = vpop.xlane.xlu0 %2005
      %v2007 = vmul.f32 %v2006, %v1339
      %v2008 = vsub.f32 %v2001, %v2007
      %v2009 = vmul.f32 %v2008, %v2008
      %v2010 = vsel %vm696, %v2009, 0.0
      %2011 = vadd.xlane.f32.xlu0 %v2010
      %v2012 = vpop.xlane.xlu0 %2011
      %v2013 = vmul.f32 %v2012, %v1339
      %v2014 = vadd.f32 %v2013, 1e-05
      %v2015 = vrsqrt.pop %v2014
      %v2016 = vmul.f32 %v2008, %v2015
      %v2018 = vlaneseq
      %v2019 = vshrl.u32 %v2018, 7
      %v2020 = vsub.s32 0, %v2019
      %v2021 = vrot.slane %v2002, %v2020
      %v2023 = vmul.f32 %v2016, %v2021
      %v2025 = vlaneseq
      %v2026 = vshrl.u32 %v2025, 7
      %v2027 = vsub.s32 0, %v2026
      %v2028 = vrot.slane %v2003, %v2027
      %v2030 = vadd.f32 %v2023, %v2028
      %v2031 = vld [vmem:[%s14] sm:$0xff]
      %v2032 = vld [vmem:[%s14 + $0x8] sm:$0xff]
      %v2033 = vld [vmem:[%s14 + $0x10] sm:$0xff]
      %v2034 = vld [vmem:[%s14 + $0x18] sm:$0xff]
      %v2035 = vld [vmem:[%s15] sm:$0x1]
      %v2037 = vlaneseq
      %v2038 = vshrl.u32 %v2037, 7
      %v2039 = vsub.s32 0, %v2038
      %v2040 = vrot.slane %v2035, %v2039
      %v2043 = vsel %vm696, %v2030, 0
      %2045 = vmatprep.subr.mxu0 0.0
      %2046 = vmatpush1.msra.mxu0 %v2031
      %2047 = vmatprep.subr.mxu0 0.0
      %2048 = vmatpush1.msra.mxu0 %v2032
      %2049 = vmatprep.subr.mxu0 0.0
      %2050 = vmatpush1.msra.mxu0 %v2033
      %2051 = vmatprep.subr.mxu0 0.0
      %2052 = vmatpush1.msra.mxu0 %v2034
      %2053 = vmatprep.subr.mxu0 0.0
      %2054 = vmatpush1.msra.mxu0 0.0
      %2055 = vmatprep.subr.mxu0 0.0
      %2056 = vmatpush1.msra.mxu0 0.0
      %2057 = vmatprep.subr.mxu0 0.0
      %2058 = vmatpush1.msra.mxu0 0.0
      %2059 = vmatprep.subr.mxu0 0.0
      %2060 = vmatpush1.msra.mxu0 0.0
      %2061 = vmatprep.subr.mxu0 0.0
      %2062 = vmatpush1.msra.mxu0 0.0
      %2063 = vmatprep.subr.mxu0 0.0
      %2064 = vmatpush1.msra.mxu0 0.0
      %2065 = vmatprep.subr.mxu0 0.0
      %2066 = vmatpush1.msra.mxu0 0.0
      %2067 = vmatprep.subr.mxu0 0.0
      %2068 = vmatpush1.msra.mxu0 0.0
      %2069 = vmatprep.subr.mxu0 0.0
      %2070 = vmatpush1.msra.mxu0 0.0
      %2071 = vmatprep.subr.mxu0 0.0
      %2072 = vmatpush1.msra.mxu0 0.0
      %2073 = vmatprep.subr.mxu0 0.0
      %2074 = vmatpush1.msra.mxu0 0.0
      %2075 = vmatprep.subr.mxu0 0.0
      %2076 = vmatpush1.msra.mxu0 0.0
      %2077 = vmatprep.subr.mxu0 0.0
      %2078 = vmatpush1.msra.mxu0 0.0
      %2079 = vmatprep.subr.mxu0 0.0
      %2080 = vmatpush1.msra.mxu0 0.0
      %2081 = vmatprep.subr.mxu0 0.0
      %2082 = vmatpush1.msra.mxu0 0.0
      %2083 = vmatprep.subr.mxu0 0.0
      %2084 = vmatpush1.msra.mxu0 0.0
      %2085 = vmatprep.subr.mxu0 0.0
      %2086 = vmatpush1.msra.mxu0 0.0
      %2087 = vmatprep.subr.mxu0 0.0
      %2088 = vmatpush1.msra.mxu0 0.0
      %2089 = vmatprep.subr.mxu0 0.0
      %2090 = vmatpush1.msra.mxu0 0.0
      %2091 = vmatprep.subr.mxu0 0.0
      %2092 = vmatpush1.msra.mxu0 0.0
      %2093 = vmatprep.subr.mxu0 0.0
      %2094 = vmatpush1.msra.mxu0 0.0
      %2095 = vmatprep.subr.mxu0 0.0
      %2096 = vmatpush1.msra.mxu0 0.0
      %2097 = vmatprep.subr.mxu0 0.0
      %2098 = vmatpush1.msra.mxu0 0.0
      %2099 = vmatprep.subr.mxu0 0.0
      %2100 = vmatpush1.msra.mxu0 0.0
      %2101 = vmatprep.subr.mxu0 0.0
      %2102 = vmatpush1.msra.mxu0 0.0
      %2103 = vmatprep.subr.mxu0 0.0
      %2104 = vmatpush1.msra.mxu0 0.0
      %2105 = vmatprep.subr.mxu0 0.0
      %2106 = vmatpush1.msra.mxu0 0.0
      %2107 = vmatprep.subr.mxu0 0.0
      %2108 = vmatpush1.msra.mxu0 0.0
      %2109 = vmatprep.mubr.f32.mxu0 0.0
      %2110 = vmatmul.mubr.f32.gmra.mrb[0].mxu0 %v2043
      %v2111 = vpop.f32.mrb[0].mxu0
      %v2112 = vadd.f32 %v2040, %v2111
      %v2113 = vpop.f32.mrb[0].mxu0
      %2114 = vdwg.mxu0
      %v2115 = vmax.f32 %v2112, 0.0
      %v2116 = vld [vmem:[%s16] sm:$0xff]
      %v2117 = vld [vmem:[%s16 + $0x8] sm:$0xff]
      %v2118 = vld [vmem:[%s16 + $0x10] sm:$0xff]
      %v2119 = vld [vmem:[%s16 + $0x18] sm:$0xff]
      %v2120 = vld [vmem:[%s16 + $0x20] sm:$0xff]
      %v2121 = vld [vmem:[%s16 + $0x28] sm:$0xff]
      %v2122 = vld [vmem:[%s16 + $0x30] sm:$0xff]
      %v2123 = vld [vmem:[%s16 + $0x38] sm:$0xff]
      %v2124 = vld [vmem:[%s17] sm:$0x1]
      %v2126 = vlaneseq
      %v2127 = vshrl.u32 %v2126, 7
      %v2128 = vsub.s32 0, %v2127
      %v2129 = vrot.slane %v2124, %v2128
      %vm2131 = vcmask 523264
      %v2133 = vsel %vm2131, %v2115, 0
      %2135 = vmatprep.subr.mxu0 0.0
      %2136 = vmatpush1.msra.mxu0 %v2116
      %2137 = vmatprep.subr.mxu0 0.0
      %2138 = vmatpush1.msra.mxu0 %v2117
      %2139 = vmatprep.subr.mxu0 0.0
      %2140 = vmatpush1.msra.mxu0 %v2118
      %2141 = vmatprep.subr.mxu0 0.0
      %2142 = vmatpush1.msra.mxu0 %v2119
      %2143 = vmatprep.subr.mxu0 0.0
      %2144 = vmatpush1.msra.mxu0 %v2120
      %2145 = vmatprep.subr.mxu0 0.0
      %2146 = vmatpush1.msra.mxu0 %v2121
      %2147 = vmatprep.subr.mxu0 0.0
      %2148 = vmatpush1.msra.mxu0 %v2122
      %2149 = vmatprep.subr.mxu0 0.0
      %2150 = vmatpush1.msra.mxu0 %v2123
      %2151 = vmatprep.subr.mxu0 0.0
      %2152 = vmatpush1.msra.mxu0 0.0
      %2153 = vmatprep.subr.mxu0 0.0
      %2154 = vmatpush1.msra.mxu0 0.0
      %2155 = vmatprep.subr.mxu0 0.0
      %2156 = vmatpush1.msra.mxu0 0.0
      %2157 = vmatprep.subr.mxu0 0.0
      %2158 = vmatpush1.msra.mxu0 0.0
      %2159 = vmatprep.subr.mxu0 0.0
      %2160 = vmatpush1.msra.mxu0 0.0
      %2161 = vmatprep.subr.mxu0 0.0
      %2162 = vmatpush1.msra.mxu0 0.0
      %2163 = vmatprep.subr.mxu0 0.0
      %2164 = vmatpush1.msra.mxu0 0.0
      %2165 = vmatprep.subr.mxu0 0.0
      %2166 = vmatpush1.msra.mxu0 0.0
      %2167 = vmatprep.subr.mxu0 0.0
      %2168 = vmatpush1.msra.mxu0 0.0
      %2169 = vmatprep.subr.mxu0 0.0
      %2170 = vmatpush1.msra.mxu0 0.0
      %2171 = vmatprep.subr.mxu0 0.0
      %2172 = vmatpush1.msra.mxu0 0.0
      %2173 = vmatprep.subr.mxu0 0.0
      %2174 = vmatpush1.msra.mxu0 0.0
      %2175 = vmatprep.subr.mxu0 0.0
      %2176 = vmatpush1.msra.mxu0 0.0
      %2177 = vmatprep.subr.mxu0 0.0
      %2178 = vmatpush1.msra.mxu0 0.0
      %2179 = vmatprep.subr.mxu0 0.0
      %2180 = vmatpush1.msra.mxu0 0.0
      %2181 = vmatprep.subr.mxu0 0.0
      %2182 = vmatpush1.msra.mxu0 0.0
      %2183 = vmatprep.subr.mxu0 0.0
      %2184 = vmatpush1.msra.mxu0 0.0
      %2185 = vmatprep.subr.mxu0 0.0
      %2186 = vmatpush1.msra.mxu0 0.0
      %2187 = vmatprep.subr.mxu0 0.0
      %2188 = vmatpush1.msra.mxu0 0.0
      %2189 = vmatprep.subr.mxu0 0.0
      %2190 = vmatpush1.msra.mxu0 0.0
      %2191 = vmatprep.subr.mxu0 0.0
      %2192 = vmatpush1.msra.mxu0 0.0
      %2193 = vmatprep.subr.mxu0 0.0
      %2194 = vmatpush1.msra.mxu0 0.0
      %2195 = vmatprep.subr.mxu0 0.0
      %2196 = vmatpush1.msra.mxu0 0.0
      %2197 = vmatprep.subr.mxu0 0.0
      %2198 = vmatpush1.msra.mxu0 0.0
      %2199 = vmatprep.mubr.f32.mxu0 0.0
      %2200 = vmatmul.mubr.f32.gmra.mrb[0].mxu0 %v2133
      %v2201 = vpop.f32.mrb[0].mxu0
      %v2202 = vadd.f32 %v2129, %v2201
      %v2203 = vpop.f32.mrb[0].mxu0
      %2204 = vdwg.mxu0
      %v2205 = vadd.f32 %v2202, %v2030
      %v2206 = vld [vmem:[%s18] sm:$0x1]
      %v2207 = vld [vmem:[%s19] sm:$0x1]
      %v2208 = vsel %vm696, %v2205, 0.0
      %2209 = vadd.xlane.f32.xlu0 %v2208
      %v2210 = vpop.xlane.xlu0 %2209
      %v2211 = vmul.f32 %v2210, %v1339
      %v2212 = vsub.f32 %v2205, %v2211
      %v2213 = vmul.f32 %v2212, %v2212
      %v2214 = vsel %vm696, %v2213, 0.0
      %2215 = vadd.xlane.f32.xlu0 %v2214
      %v2216 = vpop.xlane.xlu0 %2215
      %v2217 = vmul.f32 %v2216, %v1339
      %v2218 = vadd.f32 %v2217, 1e-05
      %v2219 = vrsqrt.pop %v2218
      %v2220 = vmul.f32 %v2212, %v2219
      %v2222 = vlaneseq
      %v2223 = vshrl.u32 %v2222, 7
      %v2224 = vsub.s32 0, %v2223
      %v2225 = vrot.slane %v2206, %v2224
      %v2227 = vmul.f32 %v2220, %v2225
      %v2229 = vlaneseq
      %v2230 = vshrl.u32 %v2229, 7
      %v2231 = vsub.s32 0, %v2230
      %v2232 = vrot.slane %v2207, %v2231
      %v2234 = vadd.f32 %v2227, %v2232
      %2235 = vst.msk [vmem:[%s675] sm:$0xff] %vm696, %v2234
      %p2236 = scmp.lt.s32.totalorder %s31, 1
      %s2237 = scalar_select %p2236, %s31, 1
      %s2238 = smul.addr %s2237, 8
      %s2239 = scalar_lea.vmem %s20, %s2238
      // Predicated region
      $region101: #{_lambda_.6} parent=99 // pred_check
        %p2240 = pneg %p489
      $region102: #{_lambda_.6} parent=99 // pred_check_branch
        %2242 = sbr.rel (%p2240) target = $region104
      $region103: #{_lambda_.6} parent=99 // pred_region
        _
      $region104: #{_lambda_.6} parent=99 // pred_fallthru
        _
    $region100: #{_lambda_.6} parent=5 // pred_fallthru
      _
    %p2243 = scmp.le.s32.totalorder 2, %s26
    // Predicated region
    $region105: #{_lambda_.6} parent=5 // pred_check
      %p2244 = pneg %p2243
    $region106: #{_lambda_.6} parent=5 // pred_check_branch
      %2246 = sbr.rel (%p2244) target = $region108
    $region107: #{_lambda_.6} parent=5 // pred_region
      %s2247 = ssub.s32 %s26, 2
      // Predicated region
      $region109: #{_lambda_.6} parent=107 // pred_check
        %p2248 = pneg %p495
      $region110: #{_lambda_.6} parent=107 // pred_check_branch
        %2250 = sbr.rel (%p2248) target = $region112
      $region111: #{_lambda_.6} parent=107 // pred_region
        %p2251 = scmp.lt.s32.totalorder %s32, 1
        %s2252 = scalar_select %p2251, %s32, 1
        %s2253 = smul.addr %s2252, 8
        %s2254 = scalar_lea.vmem %s20, %s2253
      $region112: #{_lambda_.6} parent=107 // pred_fallthru
        _
    $region108: #{_lambda_.6} parent=5 // pred_fallthru
      _
  $region6: #{_lambda_.6} parent=0 // loop_footer
    %s30 = sadd.s32 1, %s26
  $region7: #{_lambda_.6} parent=0 // loop_footer_branch
    %25 = sbr.rel target = $region3
  $region8: #{_lambda_.6} parent=0 // loop_exit
    _

</llo_original>
